<compile_context>
chip_gen: v6e
topology: v6e:2x2x1
jax: 0.10.0
libtpu: 0.0.40
codegen_flags: <defaults>
</compile_context>

<pallas_src>
import functools

import jax
import jax.numpy as jnp
import numpy as np
from jax.experimental import pallas as pl
from jax.experimental.pallas import tpu as pltpu


# ------------------------------ fused kernel ------------------------------

def _attention_kernel(x_ref, w_qkv_ref, b_qkv_ref, w_pe_ref, b_pe_ref,
                      w_proj_ref, b_proj_ref, o_ref, vpad_ref, *,
                      num_heads, key_dim, head_dim, width, scale):
    nh, kd, hd, W = num_heads, key_dim, head_dim, width
    C = o_ref.shape[1]
    N = o_ref.shape[2]

    x = x_ref[0]                                                    # (C, N)

    # ---- qkv 1x1 conv (+folded BN): one MXU matmul over all tokens ----
    qkv = (jnp.dot(w_qkv_ref[...], x, preferred_element_type=jnp.float32)
           + b_qkv_ref[...])                                        # (h, N)

    nq = nh * kd
    v = qkv[2 * nq:]                                                # (C, N), NCHW channel order

    # ---- scores for all heads at once; tiny-K (kd) contraction on the VPU ----
    s = None
    for d in range(kd):
        q_d = qkv[d * nh:(d + 1) * nh]                              # (nh, N)
        k_d = qkv[nq + d * nh: nq + (d + 1) * nh]                   # (nh, N)
        term = q_d[:, :, None] * k_d[:, None, :]                    # (nh, N, N)
        s = term if s is None else s + term
    s = s * scale

    # ---- softmax over keys; 1/row_sum folded into the (hd, N) output ----
    m = jnp.max(s, axis=-1, keepdims=True)                          # (nh, N, 1)
    p = jnp.exp(s - m)                                              # (nh, N, N)
    l = jnp.sum(p, axis=-1)                                         # (nh, N)

    v3 = v.reshape(nh, hd, N)
    # xo3[h, e, i] = sum_j v[h, e, j] * p[h, i, j]   (head-batched, K = N)
    xo3 = jnp.einsum("hej,hij->hei", v3, p,
                     preferred_element_type=jnp.float32)            # (nh, hd, N)
    inv_l = pl.reciprocal(l, approx=False)      # approx=True possible if tolerance allows
    xo = (xo3 * inv_l[:, None, :]).reshape(C, N)                    # attention out, channel-major

    # ---- 3x3 depthwise "pe" conv on v (zero SAME padding, +folded BN) fused with add ----
    pad = W + 1
    vpad_ref[...] = jnp.zeros_like(vpad_ref)
    vpad_ref[:, pad:pad + N] = v                                    # zero-padded flat image
    lane = jax.lax.broadcasted_iota(jnp.int32, (C, N), 1)
    col = lane % W
    w_pe = w_pe_ref[...]                                            # (C, 9)
    acc = xo + b_pe_ref[...]
    for dy in range(3):
        for dx in range(3):
            off = (dy - 1) * W + (dx - 1)
            shifted = vpad_ref[:, pad + off: pad + off + N]         # shifted-with-zero-fill rows
            if dx == 0:                                             # mask left-column wraparound
                shifted = jnp.where(col >= 1, shifted, 0.0)
            elif dx == 2:                                           # mask right-column wraparound
                shifted = jnp.where(col <= W - 2, shifted, 0.0)
            t = dy * 3 + dx
            acc = acc + shifted * w_pe[:, t:t + 1]                  # per-channel tap broadcast

    # ---- proj 1x1 conv (+folded BN) and lane-dense store ----
    o_ref[0] = (jnp.dot(w_proj_ref[...], acc, preferred_element_type=jnp.float32)
                + b_proj_ref[...])


# ------------------------- module (params + forward) -------------------------

class AttentionPallas:
    def __init__(self, dim, num_heads=8, attn_ratio=0.5, *, key):
        self.num_heads = nh = num_heads
        self.head_dim = hd = dim // num_heads
        self.key_dim = kd = int(hd * attn_ratio)
        self.scale = float(kd) ** (-0.5)
        nh_kd = kd * nh
        h = dim + nh_kd * 2
        self.dim, self.h = dim, h

        def conv_bn(k, cout, cin, ksz):
            # Conv2d(cout, cin/groups, ksz, ksz, bias=False) + BatchNorm2d(cout), folded (eval).
            kw, kg, kb, km, kv = jax.random.split(k, 5)
            w = jax.random.normal(kw, (cout, cin, ksz, ksz), jnp.float32) * 0.1
            gamma = 1.0 + 0.1 * jax.random.normal(kg, (cout,), jnp.float32)
            beta = 0.1 * jax.random.normal(kb, (cout,), jnp.float32)
            mean = 0.1 * jax.random.normal(km, (cout,), jnp.float32)
            var = jnp.abs(jax.random.normal(kv, (cout,), jnp.float32)) + 0.5
            s = gamma / jnp.sqrt(var + 1e-5)
            return w * s[:, None, None, None], beta - mean * s

        k_qkv, k_pe, k_proj = jax.random.split(key, 3)
        w_qkv, b_qkv = conv_bn(k_qkv, h, dim, 1)          # (h, dim, 1, 1)
        w_pe, b_pe = conv_bn(k_pe, dim, 1, 3)             # depthwise: (dim, 1, 3, 3)
        w_proj, b_proj = conv_bn(k_proj, dim, dim, 1)     # (dim, dim, 1, 1)

        # Original layouts (for the pure-JAX reference).
        self.w_qkv_ref_ = w_qkv[:, :, 0, 0]               # (h, dim)
        self.b_qkv_ref_ = b_qkv
        self.w_pe_torch = w_pe
        self.b_pe_ref_ = b_pe
        self.w_proj_ref_ = w_proj[:, :, 0, 0]
        self.b_proj_ref_ = b_proj

        # Kernel layouts: permute qkv output rows so the fused matmul emits
        #   q as (kd, nh, N), k as (kd, nh, N), v as (nh*hd = C, N) in NCHW channel order.
        per = 2 * kd + hd
        old_q = np.asarray([[head * per + d for head in range(nh)]
                            for d in range(kd)]).reshape(-1)
        old_k = np.asarray([[head * per + kd + d for head in range(nh)]
                            for d in range(kd)]).reshape(-1)
        old_v = np.asarray([[head * per + 2 * kd + e for e in range(hd)]
                            for head in range(nh)]).reshape(-1)
        perm = np.concatenate([old_q, old_k, old_v])

        self.w_qkv_k = jnp.asarray(self.w_qkv_ref_)[perm, :]          # (h, dim)
        self.b_qkv_k = jnp.asarray(b_qkv)[perm][:, None]              # (h, 1)
        self.w_pe_k = w_pe[:, 0].reshape(dim, 9)                      # (C, 9), taps row-major (dy, dx)
        self.b_pe_k = b_pe[:, None]                                   # (C, 1)
        self.w_proj_k = self.w_proj_ref_                              # (C, C)
        self.b_proj_k = b_proj[:, None]                               # (C, 1)

    def __call__(self, x):
        B, C, H, W = x.shape
        N = H * W
        x_cn = x.reshape(B, C, N)                       # free reshape; no host transpose

        kern = functools.partial(
            _attention_kernel,
            num_heads=self.num_heads, key_dim=self.key_dim,
            head_dim=self.head_dim, width=W, scale=self.scale)

        out = pl.pallas_call(
            kern,
            out_shape=jax.ShapeDtypeStruct((B, C, N), jnp.float32),
            grid=(B,),
            in_specs=[
                pl.BlockSpec((1, C, N), lambda b: (b, 0, 0)),
                pl.BlockSpec((self.h, C), lambda b: (0, 0)),
                pl.BlockSpec((self.h, 1), lambda b: (0, 0)),
                pl.BlockSpec((C, 9), lambda b: (0, 0)),
                pl.BlockSpec((C, 1), lambda b: (0, 0)),
                pl.BlockSpec((C, C), lambda b: (0, 0)),
                pl.BlockSpec((C, 1), lambda b: (0, 0)),
            ],
            out_specs=pl.BlockSpec((1, C, N), lambda b: (b, 0, 0)),
            scratch_shapes=[pltpu.VMEM((C, N + 2 * (W + 1)), jnp.float32)],
            compiler_params=pltpu.CompilerParams(
                dimension_semantics=("parallel",),
                vmem_limit_bytes=48 * 1024 * 1024),
        )(x_cn, self.w_qkv_k, self.b_qkv_k, self.w_pe_k, self.b_pe_k,
          self.w_proj_k, self.b_proj_k)

        return out.reshape(B, C, H, W)


# --------------------------- pure-JAX reference ---------------------------

def reference_forward(x, m):
    B, C, H, W = x.shape
    N = H * W
    qkv = jnp.einsum("bchw,oc->bohw", x, m.w_qkv_ref_) + m.b_qkv_ref_[None, :, None, None]
    qkv = qkv.reshape(B, m.num_heads, -1, N)
    q, k, v = jnp.split(qkv, [m.key_dim, 2 * m.key_dim], axis=2)
    attn = jnp.einsum("bhkn,bhkm->bhnm", q, k) * m.scale
    attn = jax.nn.softmax(attn, axis=-1)
    xo = jnp.einsum("bhdm,bhnm->bhdn", v, attn).reshape(B, C, H, W)
    v_img = v.reshape(B, C, H, W)
    pe = jax.lax.conv_general_dilated(
        v_img, m.w_pe_torch, (1, 1), "SAME",
        feature_group_count=C, dimension_numbers=("NCHW", "OIHW", "NCHW"),
    ) + m.b_pe_ref_[None, :, None, None]
    xo = xo + pe
    out = jnp.einsum("bchw,oc->bohw", xo, m.w_proj_ref_) + m.b_proj_ref_[None, :, None, None]
    return out


if __name__ == "__main__":
    key = jax.random.PRNGKey(0)
    k_param, k_x = jax.random.split(key)

    # dim=32, heads=8 -> head_dim=4, key_dim=2, qkv channels h=64; H=W=16 -> N=256 (lane-dense I/O).
    dim, num_heads, B, H, W = 32, 8, 2, 16, 16
    model = AttentionPallas(dim, num_heads=num_heads, attn_ratio=0.5, key=k_param)
    x = jax.random.normal(k_x, (B, dim, H, W), jnp.float32)

    out = jax.jit(model.__call__)(x)
    out = jax.block_until_ready(out)

    ref = reference_forward(x, model)
    assert out.shape == (B, dim, H, W)
    np.testing.assert_allclose(np.asarray(out), np.asarray(ref), rtol=1e-4, atol=1e-4)
    print("KERNEL_OK")
</pallas_src>

<mosaic_0001>
module attributes {stable_mosaic.version = 11 : i64} {
  func.func @_attention_kernel(%arg0: i32, %arg1: memref<1x32x256xf32, #tpu.memory_space<vmem>>, %arg2: memref<64x32xf32, #tpu.memory_space<vmem>>, %arg3: memref<64x1xf32, #tpu.memory_space<vmem>>, %arg4: memref<32x9xf32, #tpu.memory_space<vmem>>, %arg5: memref<32x1xf32, #tpu.memory_space<vmem>>, %arg6: memref<32x32xf32, #tpu.memory_space<vmem>>, %arg7: memref<32x1xf32, #tpu.memory_space<vmem>>, %arg8: memref<1x32x256xf32, #tpu.memory_space<vmem>>, %arg9: memref<32x290xf32, #tpu.memory_space<vmem>>) attributes {dimension_semantics = [#tpu.dimension_semantics<parallel>], iteration_bounds = array<i64: 2>, scalar_prefetch = 0 : i64, scratch_operands = 1 : i64, tpu.core_type = #tpu.core_type<tc>, window_params = [{transform_indices = @transform_0, window_bounds = array<i64: 1, 32, 256>}, {pipeline_mode = #tpu.pipeline_mode<synchronous>, transform_indices = @transform_1, window_bounds = array<i64: 64, 32>}, {pipeline_mode = #tpu.pipeline_mode<synchronous>, transform_indices = @transform_2, window_bounds = array<i64: 64, 1>}, {pipeline_mode = #tpu.pipeline_mode<synchronous>, transform_indices = @transform_3, window_bounds = array<i64: 32, 9>}, {pipeline_mode = #tpu.pipeline_mode<synchronous>, transform_indices = @transform_4, window_bounds = array<i64: 32, 1>}, {pipeline_mode = #tpu.pipeline_mode<synchronous>, transform_indices = @transform_5, window_bounds = array<i64: 32, 32>}, {pipeline_mode = #tpu.pipeline_mode<synchronous>, transform_indices = @transform_6, window_bounds = array<i64: 32, 1>}, {transform_indices = @transform_7, window_bounds = array<i64: 1, 32, 256>}]} {
    %c0 = arith.constant 0 : index
    %c0_0 = arith.constant 0 : index
    %c0_1 = arith.constant 0 : index
    %0 = vector.load %arg1[%c0, %c0_0, %c0_1] : memref<1x32x256xf32, #tpu.memory_space<vmem>>, vector<1x32x256xf32>
    %1 = vector.shape_cast %0 : vector<1x32x256xf32> to vector<32x256xf32>
    %c0_2 = arith.constant 0 : index
    %c0_3 = arith.constant 0 : index
    %2 = vector.load %arg2[%c0_2, %c0_3] : memref<64x32xf32, #tpu.memory_space<vmem>>, vector<64x32xf32>
    %cst = arith.constant dense<0.000000e+00> : vector<64x256xf32>
    %3 = tpu.matmul %2, %1, %cst {dimension_numbers = #tpu.dot_dimension_numbers<[1], [0], [0], [1], [0, 0, 1, 1], [], []>} : vector<64x32xf32>, vector<32x256xf32>, vector<64x256xf32> -> vector<64x256xf32>
    %c0_4 = arith.constant 0 : index
    %c0_5 = arith.constant 0 : index
    %4 = vector.load %arg3[%c0_4, %c0_5] : memref<64x1xf32, #tpu.memory_space<vmem>>, vector<64x1xf32>
    %5 = vector.broadcast %4 : vector<64x1xf32> to vector<64x256xf32>
    %6 = arith.addf %3, %5 : vector<64x256xf32>
    %7 = vector.extract_strided_slice %6 {offsets = [32, 0], sizes = [32, 256], strides = [1, 1]} : vector<64x256xf32> to vector<32x256xf32>
    %8 = vector.extract_strided_slice %6 {offsets = [0, 0], sizes = [8, 256], strides = [1, 1]} : vector<64x256xf32> to vector<8x256xf32>
    %9 = vector.extract_strided_slice %6 {offsets = [16, 0], sizes = [8, 256], strides = [1, 1]} : vector<64x256xf32> to vector<8x256xf32>
    %10 = vector.shape_cast %8 : vector<8x256xf32> to vector<8x256x1xf32>
    %11 = vector.shape_cast %9 : vector<8x256xf32> to vector<8x1x256xf32>
    %12 = vector.broadcast %10 : vector<8x256x1xf32> to vector<8x256x256xf32>
    %13 = vector.broadcast %11 : vector<8x1x256xf32> to vector<8x256x256xf32>
    %14 = arith.mulf %12, %13 : vector<8x256x256xf32>
    %15 = vector.extract_strided_slice %6 {offsets = [8, 0], sizes = [8, 256], strides = [1, 1]} : vector<64x256xf32> to vector<8x256xf32>
    %16 = vector.extract_strided_slice %6 {offsets = [24, 0], sizes = [8, 256], strides = [1, 1]} : vector<64x256xf32> to vector<8x256xf32>
    %17 = vector.shape_cast %15 : vector<8x256xf32> to vector<8x256x1xf32>
    %18 = vector.shape_cast %16 : vector<8x256xf32> to vector<8x1x256xf32>
    %19 = vector.broadcast %17 : vector<8x256x1xf32> to vector<8x256x256xf32>
    %20 = vector.broadcast %18 : vector<8x1x256xf32> to vector<8x256x256xf32>
    %21 = arith.mulf %19, %20 : vector<8x256x256xf32>
    %22 = arith.addf %14, %21 : vector<8x256x256xf32>
    %cst_6 = arith.constant 0.707106769 : f32
    %23 = vector.broadcast %cst_6 : f32 to vector<8x256x256xf32>
    %24 = arith.mulf %22, %23 : vector<8x256x256xf32>
    %cst_7 = arith.constant dense<0xFF800000> : vector<8x256xf32>
    %25 = vector.multi_reduction <maximumf>, %24, %cst_7 [2] : vector<8x256x256xf32> to vector<8x256xf32>
    %26 = vector.shape_cast %25 : vector<8x256xf32> to vector<8x256x1xf32>
    %27 = vector.broadcast %26 : vector<8x256x1xf32> to vector<8x256x256xf32>
    %28 = arith.subf %24, %27 : vector<8x256x256xf32>
    %29 = math.exp %28 : vector<8x256x256xf32>
    %cst_8 = arith.constant dense<0.000000e+00> : vector<8x256xf32>
    %30 = vector.multi_reduction <add>, %29, %cst_8 [2] : vector<8x256x256xf32> to vector<8x256xf32>
    %31 = vector.shape_cast %7 : vector<32x256xf32> to vector<8x4x256xf32>
    "tpu.trace_start"() <{level = 10 : i32, message = "hej,hij->hei"}> : () -> ()
    %cst_9 = arith.constant dense<0.000000e+00> : vector<8x4x256xf32>
    %32 = tpu.matmul %31, %29, %cst_9 {dimension_numbers = #tpu.dot_dimension_numbers<[2], [2], [1], [1], [0, 0, 0, 1, 1, 1], [0], [0]>} : vector<8x4x256xf32>, vector<8x256x256xf32>, vector<8x4x256xf32> -> vector<8x4x256xf32>
    "tpu.trace_stop"() : () -> ()
    %33 = tpu.reciprocal %30 : vector<8x256xf32> -> vector<8x256xf32>
    %34 = vector.shape_cast %33 : vector<8x256xf32> to vector<8x1x256xf32>
    %35 = vector.broadcast %34 : vector<8x1x256xf32> to vector<8x4x256xf32>
    %36 = arith.mulf %32, %35 : vector<8x4x256xf32>
    %37 = vector.shape_cast %36 : vector<8x4x256xf32> to vector<32x256xf32>
    %cst_10 = arith.constant 0.000000e+00 : f32
    %38 = vector.broadcast %cst_10 : f32 to vector<32x290xf32>
    %c0_11 = arith.constant 0 : index
    %c0_12 = arith.constant 0 : index
    %39 = vector.load %arg9[%c0_11, %c0_12] : memref<32x290xf32, #tpu.memory_space<vmem>>, vector<32x290xf32>
    tpu.vector_store %arg9[%c0_11, %c0_12], %38 {strides = array<i32>} : memref<32x290xf32, #tpu.memory_space<vmem>>, vector<32x290xf32>,
    %c0_13 = arith.constant 0 : index
    %c17 = arith.constant 17 : index
    %40 = vector.load %arg9[%c0_13, %c17] : memref<32x290xf32, #tpu.memory_space<vmem>>, vector<32x256xf32>
    tpu.vector_store %arg9[%c0_13, %c17], %7 {strides = array<i32>} : memref<32x290xf32, #tpu.memory_space<vmem>>, vector<32x256xf32>,
    %41 = tpu.iota {dimensions = array<i32: 1>} : vector<32x256xi32>
    %c16_i32 = arith.constant 16 : i32
    %c0_i32 = arith.constant 0 : i32
    %42 = arith.cmpi eq, %c16_i32, %c0_i32 : i32
    %c1_i32 = arith.constant 1 : i32
    %43 = arith.select %42, %c1_i32, %c16_i32 : i32
    %44 = vector.broadcast %43 : i32 to vector<32x256xi32>
    %45 = arith.remsi %41, %44 : vector<32x256xi32>
    %c0_i32_14 = arith.constant 0 : i32
    %46 = vector.broadcast %c0_i32_14 : i32 to vector<32x256xi32>
    %47 = arith.cmpi ne, %45, %46 : vector<32x256xi32>
    %c0_i32_15 = arith.constant 0 : i32
    %48 = vector.broadcast %c0_i32_15 : i32 to vector<32x256xi32>
    %49 = arith.cmpi slt, %45, %48 : vector<32x256xi32>
    %c0_i32_16 = arith.constant 0 : i32
    %50 = arith.cmpi slt, %43, %c0_i32_16 : i32
    %51 = vector.broadcast %50 : i1 to vector<32x256xi1>
    %52 = vector.broadcast %51 : vector<32x256xi1> to vector<32x256xi1>
    %53 = arith.xori %49, %52 : vector<32x256xi1>
    %54 = arith.andi %53, %47 : vector<32x256xi1>
    %55 = vector.broadcast %43 : i32 to vector<32x256xi32>
    %56 = arith.addi %45, %55 : vector<32x256xi32>
    %57 = arith.select %54, %56, %45 : vector<32x256xi1>, vector<32x256xi32>
    %c0_17 = arith.constant 0 : index
    %c0_18 = arith.constant 0 : index
    %58 = vector.load %arg4[%c0_17, %c0_18] : memref<32x9xf32, #tpu.memory_space<vmem>>, vector<32x9xf32>
    %c0_19 = arith.constant 0 : index
    %c0_20 = arith.constant 0 : index
    %59 = vector.load %arg5[%c0_19, %c0_20] : memref<32x1xf32, #tpu.memory_space<vmem>>, vector<32x1xf32>
    %60 = vector.broadcast %59 : vector<32x1xf32> to vector<32x256xf32>
    %61 = arith.addf %37, %60 : vector<32x256xf32>
    %c0_21 = arith.constant 0 : index
    %c0_22 = arith.constant 0 : index
    %62 = vector.load %arg9[%c0_21, %c0_22] : memref<32x290xf32, #tpu.memory_space<vmem>>, vector<32x256xf32>
    %c1_i32_23 = arith.constant 1 : i32
    %63 = vector.broadcast %c1_i32_23 : i32 to vector<32x256xi32>
    %64 = arith.cmpi sge, %57, %63 : vector<32x256xi32>
    %cst_24 = arith.constant 0.000000e+00 : f32
    %65 = vector.broadcast %cst_24 : f32 to vector<32x256xf32>
    %66 = arith.select %64, %62, %65 : vector<32x256xi1>, vector<32x256xf32>
    %67 = vector.extract_strided_slice %58 {offsets = [0, 0], sizes = [32, 1], strides = [1, 1]} : vector<32x9xf32> to vector<32x1xf32>
    %68 = vector.broadcast %67 : vector<32x1xf32> to vector<32x256xf32>
    %69 = arith.mulf %66, %68 : vector<32x256xf32>
    %70 = arith.addf %61, %69 : vector<32x256xf32>
    %c0_25 = arith.constant 0 : index
    %c1 = arith.constant 1 : index
    %71 = vector.load %arg9[%c0_25, %c1] : memref<32x290xf32, #tpu.memory_space<vmem>>, vector<32x256xf32>
    %72 = vector.extract_strided_slice %58 {offsets = [0, 1], sizes = [32, 1], strides = [1, 1]} : vector<32x9xf32> to vector<32x1xf32>
    %73 = vector.broadcast %72 : vector<32x1xf32> to vector<32x256xf32>
    %74 = arith.mulf %71, %73 : vector<32x256xf32>
    %75 = arith.addf %70, %74 : vector<32x256xf32>
    %c0_26 = arith.constant 0 : index
    %c2 = arith.constant 2 : index
    %76 = vector.load %arg9[%c0_26, %c2] : memref<32x290xf32, #tpu.memory_space<vmem>>, vector<32x256xf32>
    %c14_i32 = arith.constant 14 : i32
    %77 = vector.broadcast %c14_i32 : i32 to vector<32x256xi32>
    %78 = arith.cmpi sle, %57, %77 : vector<32x256xi32>
    %cst_27 = arith.constant 0.000000e+00 : f32
    %79 = vector.broadcast %cst_27 : f32 to vector<32x256xf32>
    %80 = arith.select %78, %76, %79 : vector<32x256xi1>, vector<32x256xf32>
    %81 = vector.extract_strided_slice %58 {offsets = [0, 2], sizes = [32, 1], strides = [1, 1]} : vector<32x9xf32> to vector<32x1xf32>
    %82 = vector.broadcast %81 : vector<32x1xf32> to vector<32x256xf32>
    %83 = arith.mulf %80, %82 : vector<32x256xf32>
    %84 = arith.addf %75, %83 : vector<32x256xf32>
    %c0_28 = arith.constant 0 : index
    %c16 = arith.constant 16 : index
    %85 = vector.load %arg9[%c0_28, %c16] : memref<32x290xf32, #tpu.memory_space<vmem>>, vector<32x256xf32>
    %c1_i32_29 = arith.constant 1 : i32
    %86 = vector.broadcast %c1_i32_29 : i32 to vector<32x256xi32>
    %87 = arith.cmpi sge, %57, %86 : vector<32x256xi32>
    %cst_30 = arith.constant 0.000000e+00 : f32
    %88 = vector.broadcast %cst_30 : f32 to vector<32x256xf32>
    %89 = arith.select %87, %85, %88 : vector<32x256xi1>, vector<32x256xf32>
    %90 = vector.extract_strided_slice %58 {offsets = [0, 3], sizes = [32, 1], strides = [1, 1]} : vector<32x9xf32> to vector<32x1xf32>
    %91 = vector.broadcast %90 : vector<32x1xf32> to vector<32x256xf32>
    %92 = arith.mulf %89, %91 : vector<32x256xf32>
    %93 = arith.addf %84, %92 : vector<32x256xf32>
    %c0_31 = arith.constant 0 : index
    %c17_32 = arith.constant 17 : index
    %94 = vector.load %arg9[%c0_31, %c17_32] : memref<32x290xf32, #tpu.memory_space<vmem>>, vector<32x256xf32>
    %95 = vector.extract_strided_slice %58 {offsets = [0, 4], sizes = [32, 1], strides = [1, 1]} : vector<32x9xf32> to vector<32x1xf32>
    %96 = vector.broadcast %95 : vector<32x1xf32> to vector<32x256xf32>
    %97 = arith.mulf %94, %96 : vector<32x256xf32>
    %98 = arith.addf %93, %97 : vector<32x256xf32>
    %c0_33 = arith.constant 0 : index
    %c18 = arith.constant 18 : index
    %99 = vector.load %arg9[%c0_33, %c18] : memref<32x290xf32, #tpu.memory_space<vmem>>, vector<32x256xf32>
    %c14_i32_34 = arith.constant 14 : i32
    %100 = vector.broadcast %c14_i32_34 : i32 to vector<32x256xi32>
    %101 = arith.cmpi sle, %57, %100 : vector<32x256xi32>
    %cst_35 = arith.constant 0.000000e+00 : f32
    %102 = vector.broadcast %cst_35 : f32 to vector<32x256xf32>
    %103 = arith.select %101, %99, %102 : vector<32x256xi1>, vector<32x256xf32>
    %104 = vector.extract_strided_slice %58 {offsets = [0, 5], sizes = [32, 1], strides = [1, 1]} : vector<32x9xf32> to vector<32x1xf32>
    %105 = vector.broadcast %104 : vector<32x1xf32> to vector<32x256xf32>
    %106 = arith.mulf %103, %105 : vector<32x256xf32>
    %107 = arith.addf %98, %106 : vector<32x256xf32>
    %c0_36 = arith.constant 0 : index
    %c32 = arith.constant 32 : index
    %108 = vector.load %arg9[%c0_36, %c32] : memref<32x290xf32, #tpu.memory_space<vmem>>, vector<32x256xf32>
    %c1_i32_37 = arith.constant 1 : i32
    %109 = vector.broadcast %c1_i32_37 : i32 to vector<32x256xi32>
    %110 = arith.cmpi sge, %57, %109 : vector<32x256xi32>
    %cst_38 = arith.constant 0.000000e+00 : f32
    %111 = vector.broadcast %cst_38 : f32 to vector<32x256xf32>
    %112 = arith.select %110, %108, %111 : vector<32x256xi1>, vector<32x256xf32>
    %113 = vector.extract_strided_slice %58 {offsets = [0, 6], sizes = [32, 1], strides = [1, 1]} : vector<32x9xf32> to vector<32x1xf32>
    %114 = vector.broadcast %113 : vector<32x1xf32> to vector<32x256xf32>
    %115 = arith.mulf %112, %114 : vector<32x256xf32>
    %116 = arith.addf %107, %115 : vector<32x256xf32>
    %c0_39 = arith.constant 0 : index
    %c33 = arith.constant 33 : index
    %117 = vector.load %arg9[%c0_39, %c33] : memref<32x290xf32, #tpu.memory_space<vmem>>, vector<32x256xf32>
    %118 = vector.extract_strided_slice %58 {offsets = [0, 7], sizes = [32, 1], strides = [1, 1]} : vector<32x9xf32> to vector<32x1xf32>
    %119 = vector.broadcast %118 : vector<32x1xf32> to vector<32x256xf32>
    %120 = arith.mulf %117, %119 : vector<32x256xf32>
    %121 = arith.addf %116, %120 : vector<32x256xf32>
    %c0_40 = arith.constant 0 : index
    %c34 = arith.constant 34 : index
    %122 = vector.load %arg9[%c0_40, %c34] : memref<32x290xf32, #tpu.memory_space<vmem>>, vector<32x256xf32>
    %c14_i32_41 = arith.constant 14 : i32
    %123 = vector.broadcast %c14_i32_41 : i32 to vector<32x256xi32>
    %124 = arith.cmpi sle, %57, %123 : vector<32x256xi32>
    %cst_42 = arith.constant 0.000000e+00 : f32
    %125 = vector.broadcast %cst_42 : f32 to vector<32x256xf32>
    %126 = arith.select %124, %122, %125 : vector<32x256xi1>, vector<32x256xf32>
    %127 = vector.extract_strided_slice %58 {offsets = [0, 8], sizes = [32, 1], strides = [1, 1]} : vector<32x9xf32> to vector<32x1xf32>
    %128 = vector.broadcast %127 : vector<32x1xf32> to vector<32x256xf32>
    %129 = arith.mulf %126, %128 : vector<32x256xf32>
    %130 = arith.addf %121, %129 : vector<32x256xf32>
    %c0_43 = arith.constant 0 : index
    %c0_44 = arith.constant 0 : index
    %131 = vector.load %arg6[%c0_43, %c0_44] : memref<32x32xf32, #tpu.memory_space<vmem>>, vector<32x32xf32>
    %cst_45 = arith.constant dense<0.000000e+00> : vector<32x256xf32>
    %132 = tpu.matmul %131, %130, %cst_45 {dimension_numbers = #tpu.dot_dimension_numbers<[1], [0], [0], [1], [0, 0, 1, 1], [], []>} : vector<32x32xf32>, vector<32x256xf32>, vector<32x256xf32> -> vector<32x256xf32>
    %c0_46 = arith.constant 0 : index
    %c0_47 = arith.constant 0 : index
    %133 = vector.load %arg7[%c0_46, %c0_47] : memref<32x1xf32, #tpu.memory_space<vmem>>, vector<32x1xf32>
    %134 = vector.broadcast %133 : vector<32x1xf32> to vector<32x256xf32>
    %135 = arith.addf %132, %134 : vector<32x256xf32>
    %c0_48 = arith.constant 0 : index
    %c0_49 = arith.constant 0 : index
    %c0_50 = arith.constant 0 : index
    %136 = vector.load %arg8[%c0_48, %c0_49, %c0_50] : memref<1x32x256xf32, #tpu.memory_space<vmem>>, vector<1x32x256xf32>
    %137 = vector.shape_cast %136 : vector<1x32x256xf32> to vector<32x256xf32>
    %138 = vector.shape_cast %135 : vector<32x256xf32> to vector<1x32x256xf32>
    tpu.vector_store %arg8[%c0_48, %c0_49, %c0_50], %138 {strides = array<i32>} : memref<1x32x256xf32, #tpu.memory_space<vmem>>, vector<1x32x256xf32>,
    return
  }
  func.func @transform_0(%arg0: i32) -> (i32, i32, i32) {
    %c0_i32 = arith.constant 0 : i32
    %c0_i32_0 = arith.constant 0 : i32
    %c0_i32_1 = arith.constant 0 : i32
    return %arg0, %c0_i32, %c0_i32_0 : i32, i32, i32
  }
  func.func @transform_1(%arg0: i32) -> (i32, i32) {
    %c0_i32 = arith.constant 0 : i32
    %c0_i32_0 = arith.constant 0 : i32
    %c0_i32_1 = arith.constant 0 : i32
    return %c0_i32, %c0_i32_0 : i32, i32
  }
  func.func @transform_2(%arg0: i32) -> (i32, i32) {
    %c0_i32 = arith.constant 0 : i32
    %c0_i32_0 = arith.constant 0 : i32
    %c0_i32_1 = arith.constant 0 : i32
    return %c0_i32, %c0_i32_0 : i32, i32
  }
  func.func @transform_3(%arg0: i32) -> (i32, i32) {
    %c0_i32 = arith.constant 0 : i32
    %c0_i32_0 = arith.constant 0 : i32
    %c0_i32_1 = arith.constant 0 : i32
    return %c0_i32, %c0_i32_0 : i32, i32
  }
  func.func @transform_4(%arg0: i32) -> (i32, i32) {
    %c0_i32 = arith.constant 0 : i32
    %c0_i32_0 = arith.constant 0 : i32
    %c0_i32_1 = arith.constant 0 : i32
    return %c0_i32, %c0_i32_0 : i32, i32
  }
  func.func @transform_5(%arg0: i32) -> (i32, i32) {
    %c0_i32 = arith.constant 0 : i32
    %c0_i32_0 = arith.constant 0 : i32
    %c0_i32_1 = arith.constant 0 : i32
    return %c0_i32, %c0_i32_0 : i32, i32
  }
  func.func @transform_6(%arg0: i32) -> (i32, i32) {
    %c0_i32 = arith.constant 0 : i32
    %c0_i32_0 = arith.constant 0 : i32
    %c0_i32_1 = arith.constant 0 : i32
    return %c0_i32, %c0_i32_0 : i32, i32
  }
  func.func @transform_7(%arg0: i32) -> (i32, i32, i32) {
    %c0_i32 = arith.constant 0 : i32
    %c0_i32_0 = arith.constant 0 : i32
    %c0_i32_1 = arith.constant 0 : i32
    return %arg0, %c0_i32, %c0_i32_0 : i32, i32, i32
  }
}

</mosaic_0001>

<llo_original>
// kernel: a_call__.1
$region0: #{a_call__.1}
  #allocation0 [shape = 'u32[]', space=smem, size = 0x4, offset = 0x4, fixed_abs, tag = 'smem constant byte address 0x4 - core index']
  #allocation1 [shape = 'u32[144,128]{1,0:T(1,128)}', space=vmem, size = 0x12000, scoped, tag = 'internal scratch']
  #allocation2 [shape = 'f32[32,290]{1,0:T(8,128)}', space=vmem, size = 0xc000, scoped, tag = 'scratch operand']
  %s0 = inlined_call_operand.vmem [shape: f32[2,32,256], index: 0, kind: input, shape index: {}]
  %s1 = inlined_call_operand.vmem [shape: f32[64,32], index: 1, kind: input, shape index: {}]
  %s2 = inlined_call_operand.vmem [shape: f32[64,1], index: 2, kind: input, shape index: {}]
  %s3 = inlined_call_operand.vmem [shape: f32[32,9], index: 3, kind: input, shape index: {}]
  %s4 = inlined_call_operand.vmem [shape: f32[32,1], index: 4, kind: input, shape index: {}]
  %s5 = inlined_call_operand.vmem [shape: f32[32,32], index: 5, kind: input, shape index: {}]
  %s6 = inlined_call_operand.vmem [shape: f32[32,1], index: 6, kind: input, shape index: {}]
  %s7 = inlined_call_operand.vmem [shape: f32[2,32,256], index: 7, kind: output, shape index: {}]
  %s8 = sld [smem:[#allocation0]]
  $region61: #{a_call__.1} parent=0
    _
  %s10 = ssub.s32 1, %s8
  %s11 = scalar_select 0, %s10, %s8
  loop: start=0, step=1, limit=4
  $region2: #{a_call__.1} parent=0 // loop_pre_header
    _
  $region3: #{a_call__.1} parent=0 // loop_header
    %s13 = sphi 0, %s17
    %p14 = scmp.ge.s32.totalorder %s13, 4
    %s23 = sphi 0, %s25
    %s26 = sphi 0, %s23
    %s27 = sphi 0, %s26
    %s43 = sphi 0, %s27
    %s47 = sphi 0, %s47
    %s49 = sphi 0, %s47
    %s50 = sphi 0, %s49
    %s64 = sphi 0, %s50
    %s68 = sphi 0, %s68
    %s70 = sphi 0, %s68
    %s71 = sphi 0, %s70
    %s85 = sphi 0, %s71
    %s89 = sphi 0, %s89
    %s91 = sphi 0, %s89
    %s92 = sphi 0, %s91
    %s106 = sphi 0, %s92
    %s110 = sphi 0, %s110
    %s112 = sphi 0, %s110
    %s113 = sphi 0, %s112
    %s127 = sphi 0, %s113
    %s131 = sphi 0, %s131
    %s133 = sphi 0, %s131
    %s134 = sphi 0, %s133
    %s148 = sphi 0, %s134
    %s152 = sphi 0, %s152
    %s154 = sphi 0, %s152
    %s155 = sphi 0, %s154
    %s169 = sphi 0, %s155
    %s175 = sphi 0, %s177
    %s178 = sphi 0, %s175
    %s179 = sphi 0, %s178
    %s195 = sphi 0, %s179
  $region4: #{a_call__.1} parent=0 // loop_header_branch
    %16 = sbr.rel (%p14) target = $region8
  $region5: #{a_call__.1} parent=0 // loop_body
    %s18 = ssub.s32 %s13, 1
    %s19 = ssub.s32 %s13, 2
    %s20 = sadd.s32 %s13, 1
    %s21 = ssub.s32 %s13, %s20
    %p22 = scmp.eq.s32.totalorder %s21, 0
    %s24 = sadd.s32 %s23, 1
    %s25 = scalar_select %p22, %s23, %s24
    %p28 = pneg %p22
    %p29 = scmp.eq.s32.totalorder %s13, 1
    %p30 = por %p28, %p29
    %p31 = scmp.ne.s32.totalorder %s23, %s26
    %p32 = scmp.eq.s32.totalorder %s13, 0
    %p33 = por %p31, %p32
    %p34 = scmp.ne.s32.totalorder %s23, %s26
    %p35 = scmp.eq.s32.totalorder %s18, 1
    %p36 = por %p34, %p35
    %p37 = scmp.ne.s32.totalorder %s26, %s27
    %p38 = scmp.eq.s32.totalorder %s18, 0
    %p39 = por %p37, %p38
    %p40 = scmp.ne.s32.totalorder %s26, %s27
    %p41 = scmp.eq.s32.totalorder %s19, 1
    %p42 = por %p40, %p41
    %p44 = scmp.ne.s32.totalorder %s27, %s43
    %p45 = scmp.eq.s32.totalorder %s19, 0
    %p46 = por %p44, %p45
    %s48 = sadd.s32 %s47, 1
    %p51 = scmp.eq.s32.totalorder %s13, 1
    %p52 = scmp.ne.s32.totalorder %s47, %s49
    %p53 = scmp.eq.s32.totalorder %s13, 0
    %p54 = por %p52, %p53
    %p55 = scmp.ne.s32.totalorder %s47, %s49
    %p56 = scmp.eq.s32.totalorder %s18, 1
    %p57 = por %p55, %p56
    %p58 = scmp.ne.s32.totalorder %s49, %s50
    %p59 = scmp.eq.s32.totalorder %s18, 0
    %p60 = por %p58, %p59
    %p61 = scmp.ne.s32.totalorder %s49, %s50
    %p62 = scmp.eq.s32.totalorder %s19, 1
    %p63 = por %p61, %p62
    %p65 = scmp.ne.s32.totalorder %s50, %s64
    %p66 = scmp.eq.s32.totalorder %s19, 0
    %p67 = por %p65, %p66
    %s69 = sadd.s32 %s68, 1
    %p72 = scmp.eq.s32.totalorder %s13, 1
    %p73 = scmp.ne.s32.totalorder %s68, %s70
    %p74 = scmp.eq.s32.totalorder %s13, 0
    %p75 = por %p73, %p74
    %p76 = scmp.ne.s32.totalorder %s68, %s70
    %p77 = scmp.eq.s32.totalorder %s18, 1
    %p78 = por %p76, %p77
    %p79 = scmp.ne.s32.totalorder %s70, %s71
    %p80 = scmp.eq.s32.totalorder %s18, 0
    %p81 = por %p79, %p80
    %p82 = scmp.ne.s32.totalorder %s70, %s71
    %p83 = scmp.eq.s32.totalorder %s19, 1
    %p84 = por %p82, %p83
    %p86 = scmp.ne.s32.totalorder %s71, %s85
    %p87 = scmp.eq.s32.totalorder %s19, 0
    %p88 = por %p86, %p87
    %s90 = sadd.s32 %s89, 1
    %p93 = scmp.eq.s32.totalorder %s13, 1
    %p94 = scmp.ne.s32.totalorder %s89, %s91
    %p95 = scmp.eq.s32.totalorder %s13, 0
    %p96 = por %p94, %p95
    %p97 = scmp.ne.s32.totalorder %s89, %s91
    %p98 = scmp.eq.s32.totalorder %s18, 1
    %p99 = por %p97, %p98
    %p100 = scmp.ne.s32.totalorder %s91, %s92
    %p101 = scmp.eq.s32.totalorder %s18, 0
    %p102 = por %p100, %p101
    %p103 = scmp.ne.s32.totalorder %s91, %s92
    %p104 = scmp.eq.s32.totalorder %s19, 1
    %p105 = por %p103, %p104
    %p107 = scmp.ne.s32.totalorder %s92, %s106
    %p108 = scmp.eq.s32.totalorder %s19, 0
    %p109 = por %p107, %p108
    %s111 = sadd.s32 %s110, 1
    %p114 = scmp.eq.s32.totalorder %s13, 1
    %p115 = scmp.ne.s32.totalorder %s110, %s112
    %p116 = scmp.eq.s32.totalorder %s13, 0
    %p117 = por %p115, %p116
    %p118 = scmp.ne.s32.totalorder %s110, %s112
    %p119 = scmp.eq.s32.totalorder %s18, 1
    %p120 = por %p118, %p119
    %p121 = scmp.ne.s32.totalorder %s112, %s113
    %p122 = scmp.eq.s32.totalorder %s18, 0
    %p123 = por %p121, %p122
    %p124 = scmp.ne.s32.totalorder %s112, %s113
    %p125 = scmp.eq.s32.totalorder %s19, 1
    %p126 = por %p124, %p125
    %p128 = scmp.ne.s32.totalorder %s113, %s127
    %p129 = scmp.eq.s32.totalorder %s19, 0
    %p130 = por %p128, %p129
    %s132 = sadd.s32 %s131, 1
    %p135 = scmp.eq.s32.totalorder %s13, 1
    %p136 = scmp.ne.s32.totalorder %s131, %s133
    %p137 = scmp.eq.s32.totalorder %s13, 0
    %p138 = por %p136, %p137
    %p139 = scmp.ne.s32.totalorder %s131, %s133
    %p140 = scmp.eq.s32.totalorder %s18, 1
    %p141 = por %p139, %p140
    %p142 = scmp.ne.s32.totalorder %s133, %s134
    %p143 = scmp.eq.s32.totalorder %s18, 0
    %p144 = por %p142, %p143
    %p145 = scmp.ne.s32.totalorder %s133, %s134
    %p146 = scmp.eq.s32.totalorder %s19, 1
    %p147 = por %p145, %p146
    %p149 = scmp.ne.s32.totalorder %s134, %s148
    %p150 = scmp.eq.s32.totalorder %s19, 0
    %p151 = por %p149, %p150
    %s153 = sadd.s32 %s152, 1
    %p156 = scmp.eq.s32.totalorder %s13, 1
    %p157 = scmp.ne.s32.totalorder %s152, %s154
    %p158 = scmp.eq.s32.totalorder %s13, 0
    %p159 = por %p157, %p158
    %p160 = scmp.ne.s32.totalorder %s152, %s154
    %p161 = scmp.eq.s32.totalorder %s18, 1
    %p162 = por %p160, %p161
    %p163 = scmp.ne.s32.totalorder %s154, %s155
    %p164 = scmp.eq.s32.totalorder %s18, 0
    %p165 = por %p163, %p164
    %p166 = scmp.ne.s32.totalorder %s154, %s155
    %p167 = scmp.eq.s32.totalorder %s19, 1
    %p168 = por %p166, %p167
    %p170 = scmp.ne.s32.totalorder %s155, %s169
    %p171 = scmp.eq.s32.totalorder %s19, 0
    %p172 = por %p170, %p171
    %s173 = ssub.s32 %s13, %s20
    %p174 = scmp.eq.s32.totalorder %s173, 0
    %s176 = sadd.s32 %s175, 1
    %s177 = scalar_select %p174, %s175, %s176
    %p180 = pneg %p174
    %p181 = scmp.eq.s32.totalorder %s13, 1
    %p182 = por %p180, %p181
    %p183 = scmp.ne.s32.totalorder %s175, %s178
    %p184 = scmp.eq.s32.totalorder %s13, 0
    %p185 = por %p183, %p184
    %p186 = scmp.ne.s32.totalorder %s175, %s178
    %p187 = scmp.eq.s32.totalorder %s18, 1
    %p188 = por %p186, %p187
    %p189 = scmp.ne.s32.totalorder %s178, %s179
    %p190 = scmp.eq.s32.totalorder %s18, 0
    %p191 = por %p189, %p190
    %p192 = scmp.ne.s32.totalorder %s178, %s179
    %p193 = scmp.eq.s32.totalorder %s19, 1
    %p194 = por %p192, %p193
    %p196 = scmp.ne.s32.totalorder %s179, %s195
    %p197 = scmp.eq.s32.totalorder %s19, 0
    %p198 = por %p196, %p197
    %p199 = scmp.le.s32.totalorder 1, %s13
    %p200 = scmp.lt.s32.totalorder %s13, 3
    %p201 = pnand %p199, %p200
    %p202 = pneg %p201
    // Predicated region
    $region9: #{a_call__.1} parent=5 // pred_check
      _
    $region10: #{a_call__.1} parent=5 // pred_check_branch
      %204 = sbr.rel (%p201) target = $region12
    $region11: #{a_call__.1} parent=5 // pred_region
      %s205 = ssub.s32 %s13, 1
      // Predicated region
      $region13: #{a_call__.1} parent=11 // pred_check
        %p206 = pneg %p60
      $region14: #{a_call__.1} parent=11 // pred_check_branch
        %208 = sbr.rel (%p206) target = $region16
      $region15: #{a_call__.1} parent=11 // pred_region
        _
      $region16: #{a_call__.1} parent=11 // pred_fallthru
        _
      // Predicated region
      $region17: #{a_call__.1} parent=11 // pred_check
        %p209 = pneg %p81
      $region18: #{a_call__.1} parent=11 // pred_check_branch
        %211 = sbr.rel (%p209) target = $region20
      $region19: #{a_call__.1} parent=11 // pred_region
        _
      $region20: #{a_call__.1} parent=11 // pred_fallthru
        _
      // Predicated region
      $region21: #{a_call__.1} parent=11 // pred_check
        %p212 = pneg %p102
      $region22: #{a_call__.1} parent=11 // pred_check_branch
        %214 = sbr.rel (%p212) target = $region24
      $region23: #{a_call__.1} parent=11 // pred_region
        _
      $region24: #{a_call__.1} parent=11 // pred_fallthru
        _
      // Predicated region
      $region25: #{a_call__.1} parent=11 // pred_check
        %p215 = pneg %p123
      $region26: #{a_call__.1} parent=11 // pred_check_branch
        %217 = sbr.rel (%p215) target = $region28
      $region27: #{a_call__.1} parent=11 // pred_region
        _
      $region28: #{a_call__.1} parent=11 // pred_fallthru
        _
      // Predicated region
      $region29: #{a_call__.1} parent=11 // pred_check
        %p218 = pneg %p144
      $region30: #{a_call__.1} parent=11 // pred_check_branch
        %220 = sbr.rel (%p218) target = $region32
      $region31: #{a_call__.1} parent=11 // pred_region
        _
      $region32: #{a_call__.1} parent=11 // pred_fallthru
        _
      // Predicated region
      $region33: #{a_call__.1} parent=11 // pred_check
        %p221 = pneg %p165
      $region34: #{a_call__.1} parent=11 // pred_check_branch
        %223 = sbr.rel (%p221) target = $region36
      $region35: #{a_call__.1} parent=11 // pred_region
        _
      $region36: #{a_call__.1} parent=11 // pred_fallthru
        _
    $region12: #{a_call__.1} parent=5 // pred_fallthru
      _
    %p224 = scmp.lt.s32.totalorder %s13, 2
    // Predicated region
    $region37: #{a_call__.1} parent=5 // pred_check
      %p225 = pneg %p224
    $region38: #{a_call__.1} parent=5 // pred_check_branch
      %227 = sbr.rel (%p225) target = $region40
    $region39: #{a_call__.1} parent=5 // pred_region
      // Predicated region
      $region41: #{a_call__.1} parent=39 // pred_check
        %p228 = pneg %p33
      $region42: #{a_call__.1} parent=39 // pred_check_branch
        %230 = sbr.rel (%p228) target = $region44
      $region43: #{a_call__.1} parent=39 // pred_region
        %p231 = scmp.lt.s32.totalorder %s13, 1
        %s232 = scalar_select %p231, %s13, 1
        %s233 = smul.addr %s232, 8
        %s234 = smul.addr %s233, 8
        %s235 = scalar_lea.vmem %s0, %s234
      $region44: #{a_call__.1} parent=39 // pred_fallthru
        _
    $region40: #{a_call__.1} parent=5 // pred_fallthru
      _
    %p236 = scmp.le.s32.totalorder 1, %s13
    %p237 = scmp.lt.s32.totalorder %s13, 3
    %p238 = pnand %p236, %p237
    %p239 = pneg %p238
    // Predicated region
    $region45: #{a_call__.1} parent=5 // pred_check
      _
    $region46: #{a_call__.1} parent=5 // pred_check_branch
      %241 = sbr.rel (%p238) target = $region48
    $region47: #{a_call__.1} parent=5 // pred_region
      %s242 = ssub.s32 %s13, 1
      %p243 = scmp.lt.s32.totalorder %s18, 1
      %s244 = scalar_select %p243, %s18, 1
      %s245 = smul.addr %s244, 8
      %s246 = smul.addr %s245, 8
      %s247 = scalar_lea.vmem %s0, %s246
      %p248 = pneg %p39
      %p249 = pneg %p36
      %p250 = pneg %p60
      %p251 = pneg %p57
      %p252 = pneg %p81
      %p253 = pneg %p78
      %p254 = pneg %p102
      %p255 = pneg %p99
      %p256 = pneg %p123
      %p257 = pneg %p120
      %p258 = pneg %p144
      %p259 = pneg %p141
      %p260 = pneg %p165
      %p261 = pneg %p162
      %p262 = pneg %p191
      %p263 = pneg %p188
      %p264 = scmp.lt.s32.totalorder %s18, 1
      %s265 = scalar_select %p264, %s18, 1
      %s266 = smul.addr %s265, 8
      %s267 = smul.addr %s266, 8
      %s268 = scalar_lea.vmem %s7, %s267
      %p269 = scmp.lt.s32.totalorder %s18, 1
      %s270 = scalar_select %p269, %s18, 1
      %s271 = smul.addr %s270, 8
      %s272 = smul.addr %s271, 8
      %s273 = scalar_lea.vmem %s0, %s272
      %p274 = scmp.lt.s32.totalorder %s18, 1
      %s275 = scalar_select %p274, %s18, 1
      %s276 = smul.addr %s275, 8
      %s277 = smul.addr %s276, 8
      %s278 = scalar_lea.vmem %s7, %s277
      %v279 = vld [vmem:[%s273] sm:$0xff]
      %v280 = vld [vmem:[%s273 + $0x8] sm:$0xff]
      %v281 = vld [vmem:[%s273 + $0x10] sm:$0xff]
      %v282 = vld [vmem:[%s273 + $0x18] sm:$0xff]
      %v283 = vld [vmem:[%s273 + $0x20] sm:$0xff]
      %v284 = vld [vmem:[%s273 + $0x28] sm:$0xff]
      %v285 = vld [vmem:[%s273 + $0x30] sm:$0xff]
      %v286 = vld [vmem:[%s273 + $0x38] sm:$0xff]
      %v287 = vld [vmem:[%s1] sm:$0xff]
      %v288 = vld [vmem:[%s1 + $0x8] sm:$0xff]
      %v289 = vld [vmem:[%s1 + $0x10] sm:$0xff]
      %v290 = vld [vmem:[%s1 + $0x18] sm:$0xff]
      %v291 = vld [vmem:[%s1 + $0x20] sm:$0xff]
      %v292 = vld [vmem:[%s1 + $0x28] sm:$0xff]
      %v293 = vld [vmem:[%s1 + $0x30] sm:$0xff]
      %v294 = vld [vmem:[%s1 + $0x38] sm:$0xff]
      %v295 = vld [vmem:[%s2] sm:$0xff]
      %v296 = vld [vmem:[%s2 + $0x8] sm:$0xff]
      %v297 = vld [vmem:[%s2 + $0x10] sm:$0xff]
      %v298 = vld [vmem:[%s2 + $0x18] sm:$0xff]
      %v299 = vld [vmem:[%s2 + $0x20] sm:$0xff]
      %v300 = vld [vmem:[%s2 + $0x28] sm:$0xff]
      %v301 = vld [vmem:[%s2 + $0x30] sm:$0xff]
      %v302 = vld [vmem:[%s2 + $0x38] sm:$0xff]
      %304 = vset.pattern.permute.xlu0 0
      %305 = vperm.xlu0 %304, %v295
      %v306 = vpop.permute.xlu0 %305
      %309 = vset.pattern.permute.xlu0 0
      %310 = vperm.xlu0 %309, %v296
      %v311 = vpop.permute.xlu0 %310
      %314 = vset.pattern.permute.xlu0 0
      %315 = vperm.xlu0 %314, %v297
      %v316 = vpop.permute.xlu0 %315
      %319 = vset.pattern.permute.xlu0 0
      %320 = vperm.xlu0 %319, %v298
      %v321 = vpop.permute.xlu0 %320
      %324 = vset.pattern.permute.xlu0 0
      %325 = vperm.xlu0 %324, %v299
      %v326 = vpop.permute.xlu0 %325
      %329 = vset.pattern.permute.xlu0 0
      %330 = vperm.xlu0 %329, %v300
      %v331 = vpop.permute.xlu0 %330
      %334 = vset.pattern.permute.xlu0 0
      %335 = vperm.xlu0 %334, %v301
      %v336 = vpop.permute.xlu0 %335
      %339 = vset.pattern.permute.xlu0 0
      %340 = vperm.xlu0 %339, %v302
      %v341 = vpop.permute.xlu0 %340
      %vm343 = vcmask 261120
      %v345 = vsel %vm343, %v287, 0
      %v348 = vsel %vm343, %v288, 0
      %v351 = vsel %vm343, %v289, 0
      %v354 = vsel %vm343, %v290, 0
      %v357 = vsel %vm343, %v291, 0
      %v360 = vsel %vm343, %v292, 0
      %v363 = vsel %vm343, %v293, 0
      %v366 = vsel %vm343, %v294, 0
      %368 = vmatprep.subr.mxu0 0.0
      %369 = vmatpush1.msra.mxu0 0.0
      %370 = vmatprep.subr.mxu0 0.0
      %371 = vmatpush1.msra.mxu0 0.0
      %372 = vmatprep.subr.mxu0 0.0
      %373 = vmatpush1.msra.mxu0 0.0
      %374 = vmatprep.subr.mxu0 0.0
      %375 = vmatpush1.msra.mxu0 0.0
      %376 = vmatprep.subr.mxu0 0.0
      %377 = vmatpush1.msra.mxu0 0.0
      %378 = vmatprep.subr.mxu0 0.0
      %379 = vmatpush1.msra.mxu0 0.0
      %380 = vmatprep.subr.mxu0 0.0
      %381 = vmatpush1.msra.mxu0 0.0
      %382 = vmatprep.subr.mxu0 0.0
      %383 = vmatpush1.msra.mxu0 0.0
      %384 = vmatprep.subr.mxu0 0.0
      %385 = vmatpush1.msra.mxu0 0.0
      %386 = vmatprep.subr.mxu0 0.0
      %387 = vmatpush1.msra.mxu0 0.0
      %388 = vmatprep.subr.mxu0 0.0
      %389 = vmatpush1.msra.mxu0 0.0
      %390 = vmatprep.subr.mxu0 0.0
      %391 = vmatpush1.msra.mxu0 0.0
      %392 = vmatprep.subr.mxu0 %v286
      %393 = vmatpush1.msra.mxu0 %v285
      %394 = vmatprep.subr.mxu0 %v284
      %395 = vmatpush1.msra.mxu0 %v283
      %396 = vmatprep.subr.mxu0 %v282
      %397 = vmatpush1.msra.mxu0 %v281
      %398 = vmatprep.subr.mxu0 %v280
      %399 = vmatpush1.msra.mxu0 %v279
      %400 = vmatprep.subr.mxu0 0.0
      %401 = vmatpush2.msra.mxu0 0.0
      %402 = vmatprep.subr.mxu0 0.0
      %403 = vmatpush2.msra.mxu0 0.0
      %404 = vmatprep.subr.mxu0 0.0
      %405 = vmatpush2.msra.mxu0 0.0
      %406 = vmatprep.subr.mxu0 0.0
      %407 = vmatpush2.msra.mxu0 0.0
      %408 = vmatprep.subr.mxu0 0.0
      %409 = vmatpush2.msra.mxu0 0.0
      %410 = vmatprep.subr.mxu0 0.0
      %411 = vmatpush2.msra.mxu0 0.0
      %412 = vmatprep.subr.mxu0 0.0
      %413 = vmatpush2.msra.mxu0 0.0
      %414 = vmatprep.subr.mxu0 0.0
      %415 = vmatpush2.msra.mxu0 0.0
      %416 = vmatprep.subr.mxu0 0.0
      %417 = vmatpush2.msra.mxu0 0.0
      %418 = vmatprep.subr.mxu0 0.0
      %419 = vmatpush2.msra.mxu0 0.0
      %420 = vmatprep.subr.mxu0 0.0
      %421 = vmatpush2.msra.mxu0 0.0
      %422 = vmatprep.subr.mxu0 0.0
      %423 = vmatpush2.msra.mxu0 0.0
      %424 = vmatprep.subr.mxu0 0.0
      %425 = vmatpush2.msra.mxu0 0.0
      %426 = vmatprep.subr.mxu0 0.0
      %427 = vmatpush2.msra.mxu0 0.0
      %428 = vmatprep.subr.mxu0 0.0
      %429 = vmatpush2.msra.mxu0 0.0
      %430 = vmatprep.subr.mxu0 0.0
      %431 = vmatpush2.msra.mxu0 0.0
      %432 = vmatprep.mubr.f32.mxu0 0.0
      %433 = vmatmul.mubr.f32.gmra.mxu0 %v345
      %v434 = vpop.f32.mrf.mxu0
      %v435 = vadd.f32 %v306, %v434
      %v436 = vpop.f32.mrf.mxu0
      %v437 = vadd.f32 %v306, %v436
      %438 = vmatprep.mubr.f32.mxu0 0.0
      %439 = vmatmul.mubr.f32.gmra.mxu0 %v348
      %v440 = vpop.f32.mrf.mxu0
      %v441 = vadd.f32 %v311, %v440
      %v442 = vpop.f32.mrf.mxu0
      %v443 = vadd.f32 %v311, %v442
      %444 = vmatprep.mubr.f32.mxu0 0.0
      %445 = vmatmul.mubr.f32.gmra.mxu0 %v351
      %v446 = vpop.f32.mrf.mxu0
      %v447 = vadd.f32 %v316, %v446
      %v448 = vpop.f32.mrf.mxu0
      %v449 = vadd.f32 %v316, %v448
      %450 = vmatprep.mubr.f32.mxu0 0.0
      %451 = vmatmul.mubr.f32.gmra.mxu0 %v354
      %v452 = vpop.f32.mrf.mxu0
      %v453 = vadd.f32 %v321, %v452
      %v454 = vpop.f32.mrf.mxu0
      %v455 = vadd.f32 %v321, %v454
      %456 = vmatprep.mubr.f32.mxu0 0.0
      %457 = vmatmul.mubr.f32.gmra.mxu0 %v357
      %v458 = vpop.f32.mrf.mxu0
      %v459 = vadd.f32 %v326, %v458
      %v460 = vpop.f32.mrf.mxu0
      %v461 = vadd.f32 %v326, %v460
      %462 = vmatprep.mubr.f32.mxu0 0.0
      %463 = vmatmul.mubr.f32.gmra.mxu0 %v360
      %v464 = vpop.f32.mrf.mxu0
      %v465 = vadd.f32 %v331, %v464
      %v466 = vpop.f32.mrf.mxu0
      %v467 = vadd.f32 %v331, %v466
      %468 = vmatprep.mubr.f32.mxu0 0.0
      %469 = vmatmul.mubr.f32.gmra.mxu0 %v363
      %v470 = vpop.f32.mrf.mxu0
      %v471 = vadd.f32 %v336, %v470
      %v472 = vpop.f32.mrf.mxu0
      %v473 = vadd.f32 %v336, %v472
      %474 = vmatprep.mubr.f32.mxu0 0.0
      %475 = vmatmul.mubr.f32.gmra.mxu0 %v366
      %v476 = vpop.f32.mrf.mxu0
      %v477 = vadd.f32 %v341, %v476
      %v478 = vpop.f32.mrf.mxu0
      %v479 = vadd.f32 %v341, %v478
      %480 = vdwg.mxu0
      %v481 = vlaneseq
      %v482 = vshrl.u32 %v481, 7
      %v483 = vsub.s32 0, %v482
      %v484 = vrot.slane %v435, %v483
      %486 = vbcast.lane.b32.xlu0 %v484, 256
      %v487 = vpop.permute.xlu0 %486
      %s489 = sor.u32 256, 8
      %490 = vbcast.lane.b32.xlu0 %v484, %s489
      %v491 = vpop.permute.xlu0 %490
      %s493 = sor.u32 256, 16
      %494 = vbcast.lane.b32.xlu0 %v484, %s493
      %v495 = vpop.permute.xlu0 %494
      %s497 = sor.u32 256, 24
      %498 = vbcast.lane.b32.xlu0 %v484, %s497
      %v499 = vpop.permute.xlu0 %498
      %s501 = sor.u32 256, 32
      %502 = vbcast.lane.b32.xlu0 %v484, %s501
      %v503 = vpop.permute.xlu0 %502
      %s505 = sor.u32 256, 40
      %506 = vbcast.lane.b32.xlu0 %v484, %s505
      %v507 = vpop.permute.xlu0 %506
      %s509 = sor.u32 256, 48
      %510 = vbcast.lane.b32.xlu0 %v484, %s509
      %v511 = vpop.permute.xlu0 %510
      %s513 = sor.u32 256, 56
      %514 = vbcast.lane.b32.xlu0 %v484, %s513
      %v515 = vpop.permute.xlu0 %514
      %s517 = sor.u32 256, 64
      %518 = vbcast.lane.b32.xlu0 %v484, %s517
      %v519 = vpop.permute.xlu0 %518
      %s521 = sor.u32 256, 72
      %522 = vbcast.lane.b32.xlu0 %v484, %s521
      %v523 = vpop.permute.xlu0 %522
      %s525 = sor.u32 256, 80
      %526 = vbcast.lane.b32.xlu0 %v484, %s525
      %v527 = vpop.permute.xlu0 %526
      %s529 = sor.u32 256, 88
      %530 = vbcast.lane.b32.xlu0 %v484, %s529
      %v531 = vpop.permute.xlu0 %530
      %s533 = sor.u32 256, 96
      %534 = vbcast.lane.b32.xlu0 %v484, %s533
      %v535 = vpop.permute.xlu0 %534
      %s537 = sor.u32 256, 104
      %538 = vbcast.lane.b32.xlu0 %v484, %s537
      %v539 = vpop.permute.xlu0 %538
      %s541 = sor.u32 256, 112
      %542 = vbcast.lane.b32.xlu0 %v484, %s541
      %v543 = vpop.permute.xlu0 %542
      %s545 = sor.u32 256, 120
      %546 = vbcast.lane.b32.xlu0 %v484, %s545
      %v547 = vpop.permute.xlu0 %546
      %v548 = vlaneseq
      %v549 = vshrl.u32 %v548, 7
      %v550 = vsub.s32 0, %v549
      %v551 = vrot.slane %v437, %v550
      %553 = vbcast.lane.b32.xlu0 %v551, 256
      %v554 = vpop.permute.xlu0 %553
      %s556 = sor.u32 256, 8
      %557 = vbcast.lane.b32.xlu0 %v551, %s556
      %v558 = vpop.permute.xlu0 %557
      %s560 = sor.u32 256, 16
      %561 = vbcast.lane.b32.xlu0 %v551, %s560
      %v562 = vpop.permute.xlu0 %561
      %s564 = sor.u32 256, 24
      %565 = vbcast.lane.b32.xlu0 %v551, %s564
      %v566 = vpop.permute.xlu0 %565
      %s568 = sor.u32 256, 32
      %569 = vbcast.lane.b32.xlu0 %v551, %s568
      %v570 = vpop.permute.xlu0 %569
      %s572 = sor.u32 256, 40
      %573 = vbcast.lane.b32.xlu0 %v551, %s572
      %v574 = vpop.permute.xlu0 %573
      %s576 = sor.u32 256, 48
      %577 = vbcast.lane.b32.xlu0 %v551, %s576
      %v578 = vpop.permute.xlu0 %577
      %s580 = sor.u32 256, 56
      %581 = vbcast.lane.b32.xlu0 %v551, %s580
      %v582 = vpop.permute.xlu0 %581
      %s584 = sor.u32 256, 64
      %585 = vbcast.lane.b32.xlu0 %v551, %s584
      %v586 = vpop.permute.xlu0 %585
      %s588 = sor.u32 256, 72
      %589 = vbcast.lane.b32.xlu0 %v551, %s588
      %v590 = vpop.permute.xlu0 %589
      %s592 = sor.u32 256, 80
      %593 = vbcast.lane.b32.xlu0 %v551, %s592
      %v594 = vpop.permute.xlu0 %593
      %s596 = sor.u32 256, 88
      %597 = vbcast.lane.b32.xlu0 %v551, %s596
      %v598 = vpop.permute.xlu0 %597
      %s600 = sor.u32 256, 96
      %601 = vbcast.lane.b32.xlu0 %v551, %s600
      %v602 = vpop.permute.xlu0 %601
      %s604 = sor.u32 256, 104
      %605 = vbcast.lane.b32.xlu0 %v551, %s604
      %v606 = vpop.permute.xlu0 %605
      %s608 = sor.u32 256, 112
      %609 = vbcast.lane.b32.xlu0 %v551, %s608
      %v610 = vpop.permute.xlu0 %609
      %s612 = sor.u32 256, 120
      %613 = vbcast.lane.b32.xlu0 %v551, %s612
      %v614 = vpop.permute.xlu0 %613
      %v615 = vlaneseq
      %v616 = vshrl.u32 %v615, 7
      %v617 = vsub.s32 1, %v616
      %v618 = vrot.slane %v435, %v617
      %620 = vbcast.lane.b32.xlu0 %v618, 256
      %v621 = vpop.permute.xlu0 %620
      %s623 = sor.u32 256, 8
      %624 = vbcast.lane.b32.xlu0 %v618, %s623
      %v625 = vpop.permute.xlu0 %624
      %s627 = sor.u32 256, 16
      %628 = vbcast.lane.b32.xlu0 %v618, %s627
      %v629 = vpop.permute.xlu0 %628
      %s631 = sor.u32 256, 24
      %632 = vbcast.lane.b32.xlu0 %v618, %s631
      %v633 = vpop.permute.xlu0 %632
      %s635 = sor.u32 256, 32
      %636 = vbcast.lane.b32.xlu0 %v618, %s635
      %v637 = vpop.permute.xlu0 %636
      %s639 = sor.u32 256, 40
      %640 = vbcast.lane.b32.xlu0 %v618, %s639
      %v641 = vpop.permute.xlu0 %640
      %s643 = sor.u32 256, 48
      %644 = vbcast.lane.b32.xlu0 %v618, %s643
      %v645 = vpop.permute.xlu0 %644
      %s647 = sor.u32 256, 56
      %648 = vbcast.lane.b32.xlu0 %v618, %s647
      %v649 = vpop.permute.xlu0 %648
      %s651 = sor.u32 256, 64
      %652 = vbcast.lane.b32.xlu0 %v618, %s651
      %v653 = vpop.permute.xlu0 %652
      %s655 = sor.u32 256, 72
      %656 = vbcast.lane.b32.xlu0 %v618, %s655
      %v657 = vpop.permute.xlu0 %656
      %s659 = sor.u32 256, 80
      %660 = vbcast.lane.b32.xlu0 %v618, %s659
      %v661 = vpop.permute.xlu0 %660
      %s663 = sor.u32 256, 88
      %664 = vbcast.lane.b32.xlu0 %v618, %s663
      %v665 = vpop.permute.xlu0 %664
      %s667 = sor.u32 256, 96
      %668 = vbcast.lane.b32.xlu0 %v618, %s667
      %v669 = vpop.permute.xlu0 %668
      %s671 = sor.u32 256, 104
      %672 = vbcast.lane.b32.xlu0 %v618, %s671
      %v673 = vpop.permute.xlu0 %672
      %s675 = sor.u32 256, 112
      %676 = vbcast.lane.b32.xlu0 %v618, %s675
      %v677 = vpop.permute.xlu0 %676
      %s679 = sor.u32 256, 120
      %680 = vbcast.lane.b32.xlu0 %v618, %s679
      %v681 = vpop.permute.xlu0 %680
      %v682 = vlaneseq
      %v683 = vshrl.u32 %v682, 7
      %v684 = vsub.s32 1, %v683
      %v685 = vrot.slane %v437, %v684
      %687 = vbcast.lane.b32.xlu0 %v685, 256
      %v688 = vpop.permute.xlu0 %687
      %s690 = sor.u32 256, 8
      %691 = vbcast.lane.b32.xlu0 %v685, %s690
      %v692 = vpop.permute.xlu0 %691
      %s694 = sor.u32 256, 16
      %695 = vbcast.lane.b32.xlu0 %v685, %s694
      %v696 = vpop.permute.xlu0 %695
      %s698 = sor.u32 256, 24
      %699 = vbcast.lane.b32.xlu0 %v685, %s698
      %v700 = vpop.permute.xlu0 %699
      %s702 = sor.u32 256, 32
      %703 = vbcast.lane.b32.xlu0 %v685, %s702
      %v704 = vpop.permute.xlu0 %703
      %s706 = sor.u32 256, 40
      %707 = vbcast.lane.b32.xlu0 %v685, %s706
      %v708 = vpop.permute.xlu0 %707
      %s710 = sor.u32 256, 48
      %711 = vbcast.lane.b32.xlu0 %v685, %s710
      %v712 = vpop.permute.xlu0 %711
      %s714 = sor.u32 256, 56
      %715 = vbcast.lane.b32.xlu0 %v685, %s714
      %v716 = vpop.permute.xlu0 %715
      %s718 = sor.u32 256, 64
      %719 = vbcast.lane.b32.xlu0 %v685, %s718
      %v720 = vpop.permute.xlu0 %719
      %s722 = sor.u32 256, 72
      %723 = vbcast.lane.b32.xlu0 %v685, %s722
      %v724 = vpop.permute.xlu0 %723
      %s726 = sor.u32 256, 80
      %727 = vbcast.lane.b32.xlu0 %v685, %s726
      %v728 = vpop.permute.xlu0 %727
      %s730 = sor.u32 256, 88
      %731 = vbcast.lane.b32.xlu0 %v685, %s730
      %v732 = vpop.permute.xlu0 %731
      %s734 = sor.u32 256, 96
      %735 = vbcast.lane.b32.xlu0 %v685, %s734
      %v736 = vpop.permute.xlu0 %735
      %s738 = sor.u32 256, 104
      %739 = vbcast.lane.b32.xlu0 %v685, %s738
      %v740 = vpop.permute.xlu0 %739
      %s742 = sor.u32 256, 112
      %743 = vbcast.lane.b32.xlu0 %v685, %s742
      %v744 = vpop.permute.xlu0 %743
      %s746 = sor.u32 256, 120
      %747 = vbcast.lane.b32.xlu0 %v685, %s746
      %v748 = vpop.permute.xlu0 %747
      %v749 = vlaneseq
      %v750 = vshrl.u32 %v749, 7
      %v751 = vsub.s32 2, %v750
      %v752 = vrot.slane %v435, %v751
      %754 = vbcast.lane.b32.xlu0 %v752, 256
      %v755 = vpop.permute.xlu0 %754
      %s757 = sor.u32 256, 8
      %758 = vbcast.lane.b32.xlu0 %v752, %s757
      %v759 = vpop.permute.xlu0 %758
      %s761 = sor.u32 256, 16
      %762 = vbcast.lane.b32.xlu0 %v752, %s761
      %v763 = vpop.permute.xlu0 %762
      %s765 = sor.u32 256, 24
      %766 = vbcast.lane.b32.xlu0 %v752, %s765
      %v767 = vpop.permute.xlu0 %766
      %s769 = sor.u32 256, 32
      %770 = vbcast.lane.b32.xlu0 %v752, %s769
      %v771 = vpop.permute.xlu0 %770
      %s773 = sor.u32 256, 40
      %774 = vbcast.lane.b32.xlu0 %v752, %s773
      %v775 = vpop.permute.xlu0 %774
      %s777 = sor.u32 256, 48
      %778 = vbcast.lane.b32.xlu0 %v752, %s777
      %v779 = vpop.permute.xlu0 %778
      %s781 = sor.u32 256, 56
      %782 = vbcast.lane.b32.xlu0 %v752, %s781
      %v783 = vpop.permute.xlu0 %782
      %s785 = sor.u32 256, 64
      %786 = vbcast.lane.b32.xlu0 %v752, %s785
      %v787 = vpop.permute.xlu0 %786
      %s789 = sor.u32 256, 72
      %790 = vbcast.lane.b32.xlu0 %v752, %s789
      %v791 = vpop.permute.xlu0 %790
      %s793 = sor.u32 256, 80
      %794 = vbcast.lane.b32.xlu0 %v752, %s793
      %v795 = vpop.permute.xlu0 %794
      %s797 = sor.u32 256, 88
      %798 = vbcast.lane.b32.xlu0 %v752, %s797
      %v799 = vpop.permute.xlu0 %798
      %s801 = sor.u32 256, 96
      %802 = vbcast.lane.b32.xlu0 %v752, %s801
      %v803 = vpop.permute.xlu0 %802
      %s805 = sor.u32 256, 104
      %806 = vbcast.lane.b32.xlu0 %v752, %s805
      %v807 = vpop.permute.xlu0 %806
      %s809 = sor.u32 256, 112
      %810 = vbcast.lane.b32.xlu0 %v752, %s809
      %v811 = vpop.permute.xlu0 %810
      %s813 = sor.u32 256, 120
      %814 = vbcast.lane.b32.xlu0 %v752, %s813
      %v815 = vpop.permute.xlu0 %814
      %v816 = vlaneseq
      %v817 = vshrl.u32 %v816, 7
      %v818 = vsub.s32 2, %v817
      %v819 = vrot.slane %v437, %v818
      %821 = vbcast.lane.b32.xlu0 %v819, 256
      %v822 = vpop.permute.xlu0 %821
      %s824 = sor.u32 256, 8
      %825 = vbcast.lane.b32.xlu0 %v819, %s824
      %v826 = vpop.permute.xlu0 %825
      %s828 = sor.u32 256, 16
      %829 = vbcast.lane.b32.xlu0 %v819, %s828
      %v830 = vpop.permute.xlu0 %829
      %s832 = sor.u32 256, 24
      %833 = vbcast.lane.b32.xlu0 %v819, %s832
      %v834 = vpop.permute.xlu0 %833
      %s836 = sor.u32 256, 32
      %837 = vbcast.lane.b32.xlu0 %v819, %s836
      %v838 = vpop.permute.xlu0 %837
      %s840 = sor.u32 256, 40
      %841 = vbcast.lane.b32.xlu0 %v819, %s840
      %v842 = vpop.permute.xlu0 %841
      %s844 = sor.u32 256, 48
      %845 = vbcast.lane.b32.xlu0 %v819, %s844
      %v846 = vpop.permute.xlu0 %845
      %s848 = sor.u32 256, 56
      %849 = vbcast.lane.b32.xlu0 %v819, %s848
      %v850 = vpop.permute.xlu0 %849
      %s852 = sor.u32 256, 64
      %853 = vbcast.lane.b32.xlu0 %v819, %s852
      %v854 = vpop.permute.xlu0 %853
      %s856 = sor.u32 256, 72
      %857 = vbcast.lane.b32.xlu0 %v819, %s856
      %v858 = vpop.permute.xlu0 %857
      %s860 = sor.u32 256, 80
      %861 = vbcast.lane.b32.xlu0 %v819, %s860
      %v862 = vpop.permute.xlu0 %861
      %s864 = sor.u32 256, 88
      %865 = vbcast.lane.b32.xlu0 %v819, %s864
      %v866 = vpop.permute.xlu0 %865
      %s868 = sor.u32 256, 96
      %869 = vbcast.lane.b32.xlu0 %v819, %s868
      %v870 = vpop.permute.xlu0 %869
      %s872 = sor.u32 256, 104
      %873 = vbcast.lane.b32.xlu0 %v819, %s872
      %v874 = vpop.permute.xlu0 %873
      %s876 = sor.u32 256, 112
      %877 = vbcast.lane.b32.xlu0 %v819, %s876
      %v878 = vpop.permute.xlu0 %877
      %s880 = sor.u32 256, 120
      %881 = vbcast.lane.b32.xlu0 %v819, %s880
      %v882 = vpop.permute.xlu0 %881
      %v883 = vlaneseq
      %v884 = vshrl.u32 %v883, 7
      %v885 = vsub.s32 3, %v884
      %v886 = vrot.slane %v435, %v885
      %888 = vbcast.lane.b32.xlu0 %v886, 256
      %v889 = vpop.permute.xlu0 %888
      %s891 = sor.u32 256, 8
      %892 = vbcast.lane.b32.xlu0 %v886, %s891
      %v893 = vpop.permute.xlu0 %892
      %s895 = sor.u32 256, 16
      %896 = vbcast.lane.b32.xlu0 %v886, %s895
      %v897 = vpop.permute.xlu0 %896
      %s899 = sor.u32 256, 24
      %900 = vbcast.lane.b32.xlu0 %v886, %s899
      %v901 = vpop.permute.xlu0 %900
      %s903 = sor.u32 256, 32
      %904 = vbcast.lane.b32.xlu0 %v886, %s903
      %v905 = vpop.permute.xlu0 %904
      %s907 = sor.u32 256, 40
      %908 = vbcast.lane.b32.xlu0 %v886, %s907
      %v909 = vpop.permute.xlu0 %908
      %s911 = sor.u32 256, 48
      %912 = vbcast.lane.b32.xlu0 %v886, %s911
      %v913 = vpop.permute.xlu0 %912
      %s915 = sor.u32 256, 56
      %916 = vbcast.lane.b32.xlu0 %v886, %s915
      %v917 = vpop.permute.xlu0 %916
      %s919 = sor.u32 256, 64
      %920 = vbcast.lane.b32.xlu0 %v886, %s919
      %v921 = vpop.permute.xlu0 %920
      %s923 = sor.u32 256, 72
      %924 = vbcast.lane.b32.xlu0 %v886, %s923
      %v925 = vpop.permute.xlu0 %924
      %s927 = sor.u32 256, 80
      %928 = vbcast.lane.b32.xlu0 %v886, %s927
      %v929 = vpop.permute.xlu0 %928
      %s931 = sor.u32 256, 88
      %932 = vbcast.lane.b32.xlu0 %v886, %s931
      %v933 = vpop.permute.xlu0 %932
      %s935 = sor.u32 256, 96
      %936 = vbcast.lane.b32.xlu0 %v886, %s935
      %v937 = vpop.permute.xlu0 %936
      %s939 = sor.u32 256, 104
      %940 = vbcast.lane.b32.xlu0 %v886, %s939
      %v941 = vpop.permute.xlu0 %940
      %s943 = sor.u32 256, 112
      %944 = vbcast.lane.b32.xlu0 %v886, %s943
      %v945 = vpop.permute.xlu0 %944
      %s947 = sor.u32 256, 120
      %948 = vbcast.lane.b32.xlu0 %v886, %s947
      %v949 = vpop.permute.xlu0 %948
      %v950 = vlaneseq
      %v951 = vshrl.u32 %v950, 7
      %v952 = vsub.s32 3, %v951
      %v953 = vrot.slane %v437, %v952
      %955 = vbcast.lane.b32.xlu0 %v953, 256
      %v956 = vpop.permute.xlu0 %955
      %s958 = sor.u32 256, 8
      %959 = vbcast.lane.b32.xlu0 %v953, %s958
      %v960 = vpop.permute.xlu0 %959
      %s962 = sor.u32 256, 16
      %963 = vbcast.lane.b32.xlu0 %v953, %s962
      %v964 = vpop.permute.xlu0 %963
      %s966 = sor.u32 256, 24
      %967 = vbcast.lane.b32.xlu0 %v953, %s966
      %v968 = vpop.permute.xlu0 %967
      %s970 = sor.u32 256, 32
      %971 = vbcast.lane.b32.xlu0 %v953, %s970
      %v972 = vpop.permute.xlu0 %971
      %s974 = sor.u32 256, 40
      %975 = vbcast.lane.b32.xlu0 %v953, %s974
      %v976 = vpop.permute.xlu0 %975
      %s978 = sor.u32 256, 48
      %979 = vbcast.lane.b32.xlu0 %v953, %s978
      %v980 = vpop.permute.xlu0 %979
      %s982 = sor.u32 256, 56
      %983 = vbcast.lane.b32.xlu0 %v953, %s982
      %v984 = vpop.permute.xlu0 %983
      %s986 = sor.u32 256, 64
      %987 = vbcast.lane.b32.xlu0 %v953, %s986
      %v988 = vpop.permute.xlu0 %987
      %s990 = sor.u32 256, 72
      %991 = vbcast.lane.b32.xlu0 %v953, %s990
      %v992 = vpop.permute.xlu0 %991
      %s994 = sor.u32 256, 80
      %995 = vbcast.lane.b32.xlu0 %v953, %s994
      %v996 = vpop.permute.xlu0 %995
      %s998 = sor.u32 256, 88
      %999 = vbcast.lane.b32.xlu0 %v953, %s998
      %v1000 = vpop.permute.xlu0 %999
      %s1002 = sor.u32 256, 96
      %1003 = vbcast.lane.b32.xlu0 %v953, %s1002
      %v1004 = vpop.permute.xlu0 %1003
      %s1006 = sor.u32 256, 104
      %1007 = vbcast.lane.b32.xlu0 %v953, %s1006
      %v1008 = vpop.permute.xlu0 %1007
      %s1010 = sor.u32 256, 112
      %1011 = vbcast.lane.b32.xlu0 %v953, %s1010
      %v1012 = vpop.permute.xlu0 %1011
      %s1014 = sor.u32 256, 120
      %1015 = vbcast.lane.b32.xlu0 %v953, %s1014
      %v1016 = vpop.permute.xlu0 %1015
      %v1017 = vlaneseq
      %v1018 = vshrl.u32 %v1017, 7
      %v1019 = vsub.s32 4, %v1018
      %v1020 = vrot.slane %v435, %v1019
      %1022 = vbcast.lane.b32.xlu0 %v1020, 256
      %v1023 = vpop.permute.xlu0 %1022
      %s1025 = sor.u32 256, 8
      %1026 = vbcast.lane.b32.xlu0 %v1020, %s1025
      %v1027 = vpop.permute.xlu0 %1026
      %s1029 = sor.u32 256, 16
      %1030 = vbcast.lane.b32.xlu0 %v1020, %s1029
      %v1031 = vpop.permute.xlu0 %1030
      %s1033 = sor.u32 256, 24
      %1034 = vbcast.lane.b32.xlu0 %v1020, %s1033
      %v1035 = vpop.permute.xlu0 %1034
      %s1037 = sor.u32 256, 32
      %1038 = vbcast.lane.b32.xlu0 %v1020, %s1037
      %v1039 = vpop.permute.xlu0 %1038
      %s1041 = sor.u32 256, 40
      %1042 = vbcast.lane.b32.xlu0 %v1020, %s1041
      %v1043 = vpop.permute.xlu0 %1042
      %s1045 = sor.u32 256, 48
      %1046 = vbcast.lane.b32.xlu0 %v1020, %s1045
      %v1047 = vpop.permute.xlu0 %1046
      %s1049 = sor.u32 256, 56
      %1050 = vbcast.lane.b32.xlu0 %v1020, %s1049
      %v1051 = vpop.permute.xlu0 %1050
      %s1053 = sor.u32 256, 64
      %1054 = vbcast.lane.b32.xlu0 %v1020, %s1053
      %v1055 = vpop.permute.xlu0 %1054
      %s1057 = sor.u32 256, 72
      %1058 = vbcast.lane.b32.xlu0 %v1020, %s1057
      %v1059 = vpop.permute.xlu0 %1058
      %s1061 = sor.u32 256, 80
      %1062 = vbcast.lane.b32.xlu0 %v1020, %s1061
      %v1063 = vpop.permute.xlu0 %1062
      %s1065 = sor.u32 256, 88
      %1066 = vbcast.lane.b32.xlu0 %v1020, %s1065
      %v1067 = vpop.permute.xlu0 %1066
      %s1069 = sor.u32 256, 96
      %1070 = vbcast.lane.b32.xlu0 %v1020, %s1069
      %v1071 = vpop.permute.xlu0 %1070
      %s1073 = sor.u32 256, 104
      %1074 = vbcast.lane.b32.xlu0 %v1020, %s1073
      %v1075 = vpop.permute.xlu0 %1074
      %s1077 = sor.u32 256, 112
      %1078 = vbcast.lane.b32.xlu0 %v1020, %s1077
      %v1079 = vpop.permute.xlu0 %1078
      %s1081 = sor.u32 256, 120
      %1082 = vbcast.lane.b32.xlu0 %v1020, %s1081
      %v1083 = vpop.permute.xlu0 %1082
      %v1084 = vlaneseq
      %v1085 = vshrl.u32 %v1084, 7
      %v1086 = vsub.s32 4, %v1085
      %v1087 = vrot.slane %v437, %v1086
      %1089 = vbcast.lane.b32.xlu0 %v1087, 256
      %v1090 = vpop.permute.xlu0 %1089
      %s1092 = sor.u32 256, 8
      %1093 = vbcast.lane.b32.xlu0 %v1087, %s1092
      %v1094 = vpop.permute.xlu0 %1093
      %s1096 = sor.u32 256, 16
      %1097 = vbcast.lane.b32.xlu0 %v1087, %s1096
      %v1098 = vpop.permute.xlu0 %1097
      %s1100 = sor.u32 256, 24
      %1101 = vbcast.lane.b32.xlu0 %v1087, %s1100
      %v1102 = vpop.permute.xlu0 %1101
      %s1104 = sor.u32 256, 32
      %1105 = vbcast.lane.b32.xlu0 %v1087, %s1104
      %v1106 = vpop.permute.xlu0 %1105
      %s1108 = sor.u32 256, 40
      %1109 = vbcast.lane.b32.xlu0 %v1087, %s1108
      %v1110 = vpop.permute.xlu0 %1109
      %s1112 = sor.u32 256, 48
      %1113 = vbcast.lane.b32.xlu0 %v1087, %s1112
      %v1114 = vpop.permute.xlu0 %1113
      %s1116 = sor.u32 256, 56
      %1117 = vbcast.lane.b32.xlu0 %v1087, %s1116
      %v1118 = vpop.permute.xlu0 %1117
      %s1120 = sor.u32 256, 64
      %1121 = vbcast.lane.b32.xlu0 %v1087, %s1120
      %v1122 = vpop.permute.xlu0 %1121
      %s1124 = sor.u32 256, 72
      %1125 = vbcast.lane.b32.xlu0 %v1087, %s1124
      %v1126 = vpop.permute.xlu0 %1125
      %s1128 = sor.u32 256, 80
      %1129 = vbcast.lane.b32.xlu0 %v1087, %s1128
      %v1130 = vpop.permute.xlu0 %1129
      %s1132 = sor.u32 256, 88
      %1133 = vbcast.lane.b32.xlu0 %v1087, %s1132
      %v1134 = vpop.permute.xlu0 %1133
      %s1136 = sor.u32 256, 96
      %1137 = vbcast.lane.b32.xlu0 %v1087, %s1136
      %v1138 = vpop.permute.xlu0 %1137
      %s1140 = sor.u32 256, 104
      %1141 = vbcast.lane.b32.xlu0 %v1087, %s1140
      %v1142 = vpop.permute.xlu0 %1141
      %s1144 = sor.u32 256, 112
      %1145 = vbcast.lane.b32.xlu0 %v1087, %s1144
      %v1146 = vpop.permute.xlu0 %1145
      %s1148 = sor.u32 256, 120
      %1149 = vbcast.lane.b32.xlu0 %v1087, %s1148
      %v1150 = vpop.permute.xlu0 %1149
      %v1151 = vlaneseq
      %v1152 = vshrl.u32 %v1151, 7
      %v1153 = vsub.s32 5, %v1152
      %v1154 = vrot.slane %v435, %v1153
      %1156 = vbcast.lane.b32.xlu0 %v1154, 256
      %v1157 = vpop.permute.xlu0 %1156
      %s1159 = sor.u32 256, 8
      %1160 = vbcast.lane.b32.xlu0 %v1154, %s1159
      %v1161 = vpop.permute.xlu0 %1160
      %s1163 = sor.u32 256, 16
      %1164 = vbcast.lane.b32.xlu0 %v1154, %s1163
      %v1165 = vpop.permute.xlu0 %1164
      %s1167 = sor.u32 256, 24
      %1168 = vbcast.lane.b32.xlu0 %v1154, %s1167
      %v1169 = vpop.permute.xlu0 %1168
      %s1171 = sor.u32 256, 32
      %1172 = vbcast.lane.b32.xlu0 %v1154, %s1171
      %v1173 = vpop.permute.xlu0 %1172
      %s1175 = sor.u32 256, 40
      %1176 = vbcast.lane.b32.xlu0 %v1154, %s1175
      %v1177 = vpop.permute.xlu0 %1176
      %s1179 = sor.u32 256, 48
      %1180 = vbcast.lane.b32.xlu0 %v1154, %s1179
      %v1181 = vpop.permute.xlu0 %1180
      %s1183 = sor.u32 256, 56
      %1184 = vbcast.lane.b32.xlu0 %v1154, %s1183
      %v1185 = vpop.permute.xlu0 %1184
      %s1187 = sor.u32 256, 64
      %1188 = vbcast.lane.b32.xlu0 %v1154, %s1187
      %v1189 = vpop.permute.xlu0 %1188
      %s1191 = sor.u32 256, 72
      %1192 = vbcast.lane.b32.xlu0 %v1154, %s1191
      %v1193 = vpop.permute.xlu0 %1192
      %s1195 = sor.u32 256, 80
      %1196 = vbcast.lane.b32.xlu0 %v1154, %s1195
      %v1197 = vpop.permute.xlu0 %1196
      %s1199 = sor.u32 256, 88
      %1200 = vbcast.lane.b32.xlu0 %v1154, %s1199
      %v1201 = vpop.permute.xlu0 %1200
      %s1203 = sor.u32 256, 96
      %1204 = vbcast.lane.b32.xlu0 %v1154, %s1203
      %v1205 = vpop.permute.xlu0 %1204
      %s1207 = sor.u32 256, 104
      %1208 = vbcast.lane.b32.xlu0 %v1154, %s1207
      %v1209 = vpop.permute.xlu0 %1208
      %s1211 = sor.u32 256, 112
      %1212 = vbcast.lane.b32.xlu0 %v1154, %s1211
      %v1213 = vpop.permute.xlu0 %1212
      %s1215 = sor.u32 256, 120
      %1216 = vbcast.lane.b32.xlu0 %v1154, %s1215
      %v1217 = vpop.permute.xlu0 %1216
      %v1218 = vlaneseq
      %v1219 = vshrl.u32 %v1218, 7
      %v1220 = vsub.s32 5, %v1219
      %v1221 = vrot.slane %v437, %v1220
      %1223 = vbcast.lane.b32.xlu0 %v1221, 256
      %v1224 = vpop.permute.xlu0 %1223
      %s1226 = sor.u32 256, 8
      %1227 = vbcast.lane.b32.xlu0 %v1221, %s1226
      %v1228 = vpop.permute.xlu0 %1227
      %s1230 = sor.u32 256, 16
      %1231 = vbcast.lane.b32.xlu0 %v1221, %s1230
      %v1232 = vpop.permute.xlu0 %1231
      %s1234 = sor.u32 256, 24
      %1235 = vbcast.lane.b32.xlu0 %v1221, %s1234
      %v1236 = vpop.permute.xlu0 %1235
      %s1238 = sor.u32 256, 32
      %1239 = vbcast.lane.b32.xlu0 %v1221, %s1238
      %v1240 = vpop.permute.xlu0 %1239
      %s1242 = sor.u32 256, 40
      %1243 = vbcast.lane.b32.xlu0 %v1221, %s1242
      %v1244 = vpop.permute.xlu0 %1243
      %s1246 = sor.u32 256, 48
      %1247 = vbcast.lane.b32.xlu0 %v1221, %s1246
      %v1248 = vpop.permute.xlu0 %1247
      %s1250 = sor.u32 256, 56
      %1251 = vbcast.lane.b32.xlu0 %v1221, %s1250
      %v1252 = vpop.permute.xlu0 %1251
      %s1254 = sor.u32 256, 64
      %1255 = vbcast.lane.b32.xlu0 %v1221, %s1254
      %v1256 = vpop.permute.xlu0 %1255
      %s1258 = sor.u32 256, 72
      %1259 = vbcast.lane.b32.xlu0 %v1221, %s1258
      %v1260 = vpop.permute.xlu0 %1259
      %s1262 = sor.u32 256, 80
      %1263 = vbcast.lane.b32.xlu0 %v1221, %s1262
      %v1264 = vpop.permute.xlu0 %1263
      %s1266 = sor.u32 256, 88
      %1267 = vbcast.lane.b32.xlu0 %v1221, %s1266
      %v1268 = vpop.permute.xlu0 %1267
      %s1270 = sor.u32 256, 96
      %1271 = vbcast.lane.b32.xlu0 %v1221, %s1270
      %v1272 = vpop.permute.xlu0 %1271
      %s1274 = sor.u32 256, 104
      %1275 = vbcast.lane.b32.xlu0 %v1221, %s1274
      %v1276 = vpop.permute.xlu0 %1275
      %s1278 = sor.u32 256, 112
      %1279 = vbcast.lane.b32.xlu0 %v1221, %s1278
      %v1280 = vpop.permute.xlu0 %1279
      %s1282 = sor.u32 256, 120
      %1283 = vbcast.lane.b32.xlu0 %v1221, %s1282
      %v1284 = vpop.permute.xlu0 %1283
      %v1285 = vlaneseq
      %v1286 = vshrl.u32 %v1285, 7
      %v1287 = vsub.s32 6, %v1286
      %v1288 = vrot.slane %v435, %v1287
      %1290 = vbcast.lane.b32.xlu0 %v1288, 256
      %v1291 = vpop.permute.xlu0 %1290
      %s1293 = sor.u32 256, 8
      %1294 = vbcast.lane.b32.xlu0 %v1288, %s1293
      %v1295 = vpop.permute.xlu0 %1294
      %s1297 = sor.u32 256, 16
      %1298 = vbcast.lane.b32.xlu0 %v1288, %s1297
      %v1299 = vpop.permute.xlu0 %1298
      %s1301 = sor.u32 256, 24
      %1302 = vbcast.lane.b32.xlu0 %v1288, %s1301
      %v1303 = vpop.permute.xlu0 %1302
      %s1305 = sor.u32 256, 32
      %1306 = vbcast.lane.b32.xlu0 %v1288, %s1305
      %v1307 = vpop.permute.xlu0 %1306
      %s1309 = sor.u32 256, 40
      %1310 = vbcast.lane.b32.xlu0 %v1288, %s1309
      %v1311 = vpop.permute.xlu0 %1310
      %s1313 = sor.u32 256, 48
      %1314 = vbcast.lane.b32.xlu0 %v1288, %s1313
      %v1315 = vpop.permute.xlu0 %1314
      %s1317 = sor.u32 256, 56
      %1318 = vbcast.lane.b32.xlu0 %v1288, %s1317
      %v1319 = vpop.permute.xlu0 %1318
      %s1321 = sor.u32 256, 64
      %1322 = vbcast.lane.b32.xlu0 %v1288, %s1321
      %v1323 = vpop.permute.xlu0 %1322
      %s1325 = sor.u32 256, 72
      %1326 = vbcast.lane.b32.xlu0 %v1288, %s1325
      %v1327 = vpop.permute.xlu0 %1326
      %s1329 = sor.u32 256, 80
      %1330 = vbcast.lane.b32.xlu0 %v1288, %s1329
      %v1331 = vpop.permute.xlu0 %1330
      %s1333 = sor.u32 256, 88
      %1334 = vbcast.lane.b32.xlu0 %v1288, %s1333
      %v1335 = vpop.permute.xlu0 %1334
      %s1337 = sor.u32 256, 96
      %1338 = vbcast.lane.b32.xlu0 %v1288, %s1337
      %v1339 = vpop.permute.xlu0 %1338
      %s1341 = sor.u32 256, 104
      %1342 = vbcast.lane.b32.xlu0 %v1288, %s1341
      %v1343 = vpop.permute.xlu0 %1342
      %s1345 = sor.u32 256, 112
      %1346 = vbcast.lane.b32.xlu0 %v1288, %s1345
      %v1347 = vpop.permute.xlu0 %1346
      %s1349 = sor.u32 256, 120
      %1350 = vbcast.lane.b32.xlu0 %v1288, %s1349
      %v1351 = vpop.permute.xlu0 %1350
      %v1352 = vlaneseq
      %v1353 = vshrl.u32 %v1352, 7
      %v1354 = vsub.s32 6, %v1353
      %v1355 = vrot.slane %v437, %v1354
      %1357 = vbcast.lane.b32.xlu0 %v1355, 256
      %v1358 = vpop.permute.xlu0 %1357
      %s1360 = sor.u32 256, 8
      %1361 = vbcast.lane.b32.xlu0 %v1355, %s1360
      %v1362 = vpop.permute.xlu0 %1361
      %s1364 = sor.u32 256, 16
      %1365 = vbcast.lane.b32.xlu0 %v1355, %s1364
      %v1366 = vpop.permute.xlu0 %1365
      %s1368 = sor.u32 256, 24
      %1369 = vbcast.lane.b32.xlu0 %v1355, %s1368
      %v1370 = vpop.permute.xlu0 %1369
      %s1372 = sor.u32 256, 32
      %1373 = vbcast.lane.b32.xlu0 %v1355, %s1372
      %v1374 = vpop.permute.xlu0 %1373
      %s1376 = sor.u32 256, 40
      %1377 = vbcast.lane.b32.xlu0 %v1355, %s1376
      %v1378 = vpop.permute.xlu0 %1377
      %s1380 = sor.u32 256, 48
      %1381 = vbcast.lane.b32.xlu0 %v1355, %s1380
      %v1382 = vpop.permute.xlu0 %1381
      %s1384 = sor.u32 256, 56
      %1385 = vbcast.lane.b32.xlu0 %v1355, %s1384
      %v1386 = vpop.permute.xlu0 %1385
      %s1388 = sor.u32 256, 64
      %1389 = vbcast.lane.b32.xlu0 %v1355, %s1388
      %v1390 = vpop.permute.xlu0 %1389
      %s1392 = sor.u32 256, 72
      %1393 = vbcast.lane.b32.xlu0 %v1355, %s1392
      %v1394 = vpop.permute.xlu0 %1393
      %s1396 = sor.u32 256, 80
      %1397 = vbcast.lane.b32.xlu0 %v1355, %s1396
      %v1398 = vpop.permute.xlu0 %1397
      %s1400 = sor.u32 256, 88
      %1401 = vbcast.lane.b32.xlu0 %v1355, %s1400
      %v1402 = vpop.permute.xlu0 %1401
      %s1404 = sor.u32 256, 96
      %1405 = vbcast.lane.b32.xlu0 %v1355, %s1404
      %v1406 = vpop.permute.xlu0 %1405
      %s1408 = sor.u32 256, 104
      %1409 = vbcast.lane.b32.xlu0 %v1355, %s1408
      %v1410 = vpop.permute.xlu0 %1409
      %s1412 = sor.u32 256, 112
      %1413 = vbcast.lane.b32.xlu0 %v1355, %s1412
      %v1414 = vpop.permute.xlu0 %1413
      %s1416 = sor.u32 256, 120
      %1417 = vbcast.lane.b32.xlu0 %v1355, %s1416
      %v1418 = vpop.permute.xlu0 %1417
      %v1419 = vlaneseq
      %v1420 = vshrl.u32 %v1419, 7
      %v1421 = vsub.s32 7, %v1420
      %v1422 = vrot.slane %v435, %v1421
      %1424 = vbcast.lane.b32.xlu0 %v1422, 256
      %v1425 = vpop.permute.xlu0 %1424
      %s1427 = sor.u32 256, 8
      %1428 = vbcast.lane.b32.xlu0 %v1422, %s1427
      %v1429 = vpop.permute.xlu0 %1428
      %s1431 = sor.u32 256, 16
      %1432 = vbcast.lane.b32.xlu0 %v1422, %s1431
      %v1433 = vpop.permute.xlu0 %1432
      %s1435 = sor.u32 256, 24
      %1436 = vbcast.lane.b32.xlu0 %v1422, %s1435
      %v1437 = vpop.permute.xlu0 %1436
      %s1439 = sor.u32 256, 32
      %1440 = vbcast.lane.b32.xlu0 %v1422, %s1439
      %v1441 = vpop.permute.xlu0 %1440
      %s1443 = sor.u32 256, 40
      %1444 = vbcast.lane.b32.xlu0 %v1422, %s1443
      %v1445 = vpop.permute.xlu0 %1444
      %s1447 = sor.u32 256, 48
      %1448 = vbcast.lane.b32.xlu0 %v1422, %s1447
      %v1449 = vpop.permute.xlu0 %1448
      %s1451 = sor.u32 256, 56
      %1452 = vbcast.lane.b32.xlu0 %v1422, %s1451
      %v1453 = vpop.permute.xlu0 %1452
      %s1455 = sor.u32 256, 64
      %1456 = vbcast.lane.b32.xlu0 %v1422, %s1455
      %v1457 = vpop.permute.xlu0 %1456
      %s1459 = sor.u32 256, 72
      %1460 = vbcast.lane.b32.xlu0 %v1422, %s1459
      %v1461 = vpop.permute.xlu0 %1460
      %s1463 = sor.u32 256, 80
      %1464 = vbcast.lane.b32.xlu0 %v1422, %s1463
      %v1465 = vpop.permute.xlu0 %1464
      %s1467 = sor.u32 256, 88
      %1468 = vbcast.lane.b32.xlu0 %v1422, %s1467
      %v1469 = vpop.permute.xlu0 %1468
      %s1471 = sor.u32 256, 96
      %1472 = vbcast.lane.b32.xlu0 %v1422, %s1471
      %v1473 = vpop.permute.xlu0 %1472
      %s1475 = sor.u32 256, 104
      %1476 = vbcast.lane.b32.xlu0 %v1422, %s1475
      %v1477 = vpop.permute.xlu0 %1476
      %s1479 = sor.u32 256, 112
      %1480 = vbcast.lane.b32.xlu0 %v1422, %s1479
      %v1481 = vpop.permute.xlu0 %1480
      %s1483 = sor.u32 256, 120
      %1484 = vbcast.lane.b32.xlu0 %v1422, %s1483
      %v1485 = vpop.permute.xlu0 %1484
      %v1486 = vlaneseq
      %v1487 = vshrl.u32 %v1486, 7
      %v1488 = vsub.s32 7, %v1487
      %v1489 = vrot.slane %v437, %v1488
      %1491 = vbcast.lane.b32.xlu0 %v1489, 256
      %v1492 = vpop.permute.xlu0 %1491
      %s1494 = sor.u32 256, 8
      %1495 = vbcast.lane.b32.xlu0 %v1489, %s1494
      %v1496 = vpop.permute.xlu0 %1495
      %s1498 = sor.u32 256, 16
      %1499 = vbcast.lane.b32.xlu0 %v1489, %s1498
      %v1500 = vpop.permute.xlu0 %1499
      %s1502 = sor.u32 256, 24
      %1503 = vbcast.lane.b32.xlu0 %v1489, %s1502
      %v1504 = vpop.permute.xlu0 %1503
      %s1506 = sor.u32 256, 32
      %1507 = vbcast.lane.b32.xlu0 %v1489, %s1506
      %v1508 = vpop.permute.xlu0 %1507
      %s1510 = sor.u32 256, 40
      %1511 = vbcast.lane.b32.xlu0 %v1489, %s1510
      %v1512 = vpop.permute.xlu0 %1511
      %s1514 = sor.u32 256, 48
      %1515 = vbcast.lane.b32.xlu0 %v1489, %s1514
      %v1516 = vpop.permute.xlu0 %1515
      %s1518 = sor.u32 256, 56
      %1519 = vbcast.lane.b32.xlu0 %v1489, %s1518
      %v1520 = vpop.permute.xlu0 %1519
      %s1522 = sor.u32 256, 64
      %1523 = vbcast.lane.b32.xlu0 %v1489, %s1522
      %v1524 = vpop.permute.xlu0 %1523
      %s1526 = sor.u32 256, 72
      %1527 = vbcast.lane.b32.xlu0 %v1489, %s1526
      %v1528 = vpop.permute.xlu0 %1527
      %s1530 = sor.u32 256, 80
      %1531 = vbcast.lane.b32.xlu0 %v1489, %s1530
      %v1532 = vpop.permute.xlu0 %1531
      %s1534 = sor.u32 256, 88
      %1535 = vbcast.lane.b32.xlu0 %v1489, %s1534
      %v1536 = vpop.permute.xlu0 %1535
      %s1538 = sor.u32 256, 96
      %1539 = vbcast.lane.b32.xlu0 %v1489, %s1538
      %v1540 = vpop.permute.xlu0 %1539
      %s1542 = sor.u32 256, 104
      %1543 = vbcast.lane.b32.xlu0 %v1489, %s1542
      %v1544 = vpop.permute.xlu0 %1543
      %s1546 = sor.u32 256, 112
      %1547 = vbcast.lane.b32.xlu0 %v1489, %s1546
      %v1548 = vpop.permute.xlu0 %1547
      %s1550 = sor.u32 256, 120
      %1551 = vbcast.lane.b32.xlu0 %v1489, %s1550
      %v1552 = vpop.permute.xlu0 %1551
      %v1555 = vcombine.low %v447, %v449
      %v1556 = vcombine.high %v447, %v449
      %v1558 = vunpack.c.l.s4 1966171168
      %v1559 = vunpack.c.0.s8 %v1558
      %v1560 = vlaneseq
      %v1561 = vshrl.u32 %v1560, 7
      %v1562 = vsub.s32 %v1559, %v1561
      %v1563 = vrot.slane %v1555, %v1562
      %v1565 = vunpack.c.l.s4 1966171168
      %v1566 = vunpack.c.0.s8 %v1565
      %v1567 = vlaneseq
      %v1568 = vshrl.u32 %v1567, 7
      %v1569 = vsub.s32 %v1566, %v1568
      %v1570 = vrot.slane %v1556, %v1569
      %v1571 = vcombine.high %v1563, %v1563
      %v1572 = vcombine.high %v1570, %v1570
      %v1574 = vunpack.c.l.s4 1966171168
      %v1575 = vunpack.c.0.s8 %v1574
      %v1576 = vlaneseq
      %v1577 = vshrl.u32 %v1576, 7
      %v1578 = vsub.s32 %v1575, %v1577
      %v1579 = vrot.slane %v1563, %v1578
      %v1581 = vunpack.c.l.s4 1966171168
      %v1582 = vunpack.c.0.s8 %v1581
      %v1583 = vlaneseq
      %v1584 = vshrl.u32 %v1583, 7
      %v1585 = vsub.s32 %v1582, %v1584
      %v1586 = vrot.slane %v1570, %v1585
      %v1588 = vunpack.c.l.s4 1966171168
      %v1589 = vunpack.c.0.s8 %v1588
      %v1590 = vlaneseq
      %v1591 = vshrl.u32 %v1590, 7
      %v1592 = vsub.s32 %v1589, %v1591
      %v1593 = vrot.slane %v1571, %v1592
      %v1595 = vunpack.c.l.s4 1966171168
      %v1596 = vunpack.c.0.s8 %v1595
      %v1597 = vlaneseq
      %v1598 = vshrl.u32 %v1597, 7
      %v1599 = vsub.s32 %v1596, %v1598
      %v1600 = vrot.slane %v1572, %v1599
      %v1601 = vcombine.high %v1579, %v1579
      %v1602 = vcombine.high %v1586, %v1586
      %v1603 = vcombine.high %v1593, %v1593
      %v1604 = vcombine.high %v1600, %v1600
      %v1605 = vlaneseq
      %v1606 = vshrl.u32 %v1605, 7
      %v1607 = vsub.s32 0, %v1606
      %v1608 = vrot.slane %v1579, %v1607
      %v1609 = vlaneseq
      %v1610 = vshrl.u32 %v1609, 7
      %v1611 = vsub.s32 1, %v1610
      %v1612 = vrot.slane %v1579, %v1611
      %v1613 = vlaneseq
      %v1614 = vshrl.u32 %v1613, 7
      %v1615 = vsub.s32 0, %v1614
      %v1616 = vrot.slane %v1593, %v1615
      %v1617 = vlaneseq
      %v1618 = vshrl.u32 %v1617, 7
      %v1619 = vsub.s32 1, %v1618
      %v1620 = vrot.slane %v1593, %v1619
      %v1621 = vlaneseq
      %v1622 = vshrl.u32 %v1621, 7
      %v1623 = vsub.s32 0, %v1622
      %v1624 = vrot.slane %v1601, %v1623
      %v1625 = vlaneseq
      %v1626 = vshrl.u32 %v1625, 7
      %v1627 = vsub.s32 1, %v1626
      %v1628 = vrot.slane %v1601, %v1627
      %v1629 = vlaneseq
      %v1630 = vshrl.u32 %v1629, 7
      %v1631 = vsub.s32 0, %v1630
      %v1632 = vrot.slane %v1603, %v1631
      %v1633 = vlaneseq
      %v1634 = vshrl.u32 %v1633, 7
      %v1635 = vsub.s32 1, %v1634
      %v1636 = vrot.slane %v1603, %v1635
      %v1637 = vlaneseq
      %v1638 = vshrl.u32 %v1637, 7
      %v1639 = vsub.s32 0, %v1638
      %v1640 = vrot.slane %v1586, %v1639
      %v1641 = vlaneseq
      %v1642 = vshrl.u32 %v1641, 7
      %v1643 = vsub.s32 1, %v1642
      %v1644 = vrot.slane %v1586, %v1643
      %v1645 = vlaneseq
      %v1646 = vshrl.u32 %v1645, 7
      %v1647 = vsub.s32 0, %v1646
      %v1648 = vrot.slane %v1600, %v1647
      %v1649 = vlaneseq
      %v1650 = vshrl.u32 %v1649, 7
      %v1651 = vsub.s32 1, %v1650
      %v1652 = vrot.slane %v1600, %v1651
      %v1653 = vlaneseq
      %v1654 = vshrl.u32 %v1653, 7
      %v1655 = vsub.s32 0, %v1654
      %v1656 = vrot.slane %v1602, %v1655
      %v1657 = vlaneseq
      %v1658 = vshrl.u32 %v1657, 7
      %v1659 = vsub.s32 1, %v1658
      %v1660 = vrot.slane %v1602, %v1659
      %v1661 = vlaneseq
      %v1662 = vshrl.u32 %v1661, 7
      %v1663 = vsub.s32 0, %v1662
      %v1664 = vrot.slane %v1604, %v1663
      %v1665 = vlaneseq
      %v1666 = vshrl.u32 %v1665, 7
      %v1667 = vsub.s32 1, %v1666
      %v1668 = vrot.slane %v1604, %v1667
      %v1685 = vmul.f32 %v487, %v1608
      %v1686 = vmul.f32 %v487, %v1612
      %v1687 = vmul.f32 %v491, %v1608
      %v1688 = vmul.f32 %v491, %v1612
      %v1689 = vmul.f32 %v495, %v1608
      %v1690 = vmul.f32 %v495, %v1612
      %v1691 = vmul.f32 %v499, %v1608
      %v1692 = vmul.f32 %v499, %v1612
      %v1693 = vmul.f32 %v503, %v1608
      %v1694 = vmul.f32 %v503, %v1612
      %v1695 = vmul.f32 %v507, %v1608
      %v1696 = vmul.f32 %v507, %v1612
      %v1697 = vmul.f32 %v511, %v1608
      %v1698 = vmul.f32 %v511, %v1612
      %v1699 = vmul.f32 %v515, %v1608
      %v1700 = vmul.f32 %v515, %v1612
      %v1701 = vmul.f32 %v519, %v1608
      %v1702 = vmul.f32 %v519, %v1612
      %v1703 = vmul.f32 %v523, %v1608
      %v1704 = vmul.f32 %v523, %v1612
      %v1705 = vmul.f32 %v527, %v1608
      %v1706 = vmul.f32 %v527, %v1612
      %v1707 = vmul.f32 %v531, %v1608
      %v1708 = vmul.f32 %v531, %v1612
      %v1709 = vmul.f32 %v535, %v1608
      %v1710 = vmul.f32 %v535, %v1612
      %v1711 = vmul.f32 %v539, %v1608
      %v1712 = vmul.f32 %v539, %v1612
      %v1713 = vmul.f32 %v543, %v1608
      %v1714 = vmul.f32 %v543, %v1612
      %v1715 = vmul.f32 %v547, %v1608
      %v1716 = vmul.f32 %v547, %v1612
      %v1717 = vmul.f32 %v554, %v1608
      %v1718 = vmul.f32 %v554, %v1612
      %v1719 = vmul.f32 %v558, %v1608
      %v1720 = vmul.f32 %v558, %v1612
      %v1721 = vmul.f32 %v562, %v1608
      %v1722 = vmul.f32 %v562, %v1612
      %v1723 = vmul.f32 %v566, %v1608
      %v1724 = vmul.f32 %v566, %v1612
      %v1725 = vmul.f32 %v570, %v1608
      %v1726 = vmul.f32 %v570, %v1612
      %v1727 = vmul.f32 %v574, %v1608
      %v1728 = vmul.f32 %v574, %v1612
      %v1729 = vmul.f32 %v578, %v1608
      %v1730 = vmul.f32 %v578, %v1612
      %v1731 = vmul.f32 %v582, %v1608
      %v1732 = vmul.f32 %v582, %v1612
      %v1733 = vmul.f32 %v586, %v1608
      %v1734 = vmul.f32 %v586, %v1612
      %v1735 = vmul.f32 %v590, %v1608
      %v1736 = vmul.f32 %v590, %v1612
      %v1737 = vmul.f32 %v594, %v1608
      %v1738 = vmul.f32 %v594, %v1612
      %v1739 = vmul.f32 %v598, %v1608
      %v1740 = vmul.f32 %v598, %v1612
      %v1741 = vmul.f32 %v602, %v1608
      %v1742 = vmul.f32 %v602, %v1612
      %v1743 = vmul.f32 %v606, %v1608
      %v1744 = vmul.f32 %v606, %v1612
      %v1745 = vmul.f32 %v610, %v1608
      %v1746 = vmul.f32 %v610, %v1612
      %v1747 = vmul.f32 %v614, %v1608
      %v1748 = vmul.f32 %v614, %v1612
      %v1749 = vmul.f32 %v621, %v1616
      %v1750 = vmul.f32 %v621, %v1620
      %v1751 = vmul.f32 %v625, %v1616
      %v1752 = vmul.f32 %v625, %v1620
      %v1753 = vmul.f32 %v629, %v1616
      %v1754 = vmul.f32 %v629, %v1620
      %v1755 = vmul.f32 %v633, %v1616
      %v1756 = vmul.f32 %v633, %v1620
      %v1757 = vmul.f32 %v637, %v1616
      %v1758 = vmul.f32 %v637, %v1620
      %v1759 = vmul.f32 %v641, %v1616
      %v1760 = vmul.f32 %v641, %v1620
      %v1761 = vmul.f32 %v645, %v1616
      %v1762 = vmul.f32 %v645, %v1620
      %v1763 = vmul.f32 %v649, %v1616
      %v1764 = vmul.f32 %v649, %v1620
      %v1765 = vmul.f32 %v653, %v1616
      %v1766 = vmul.f32 %v653, %v1620
      %v1767 = vmul.f32 %v657, %v1616
      %v1768 = vmul.f32 %v657, %v1620
      %v1769 = vmul.f32 %v661, %v1616
      %v1770 = vmul.f32 %v661, %v1620
      %v1771 = vmul.f32 %v665, %v1616
      %v1772 = vmul.f32 %v665, %v1620
      %v1773 = vmul.f32 %v669, %v1616
      %v1774 = vmul.f32 %v669, %v1620
      %v1775 = vmul.f32 %v673, %v1616
      %v1776 = vmul.f32 %v673, %v1620
      %v1777 = vmul.f32 %v677, %v1616
      %v1778 = vmul.f32 %v677, %v1620
      %v1779 = vmul.f32 %v681, %v1616
      %v1780 = vmul.f32 %v681, %v1620
      %v1781 = vmul.f32 %v688, %v1616
      %v1782 = vmul.f32 %v688, %v1620
      %v1783 = vmul.f32 %v692, %v1616
      %v1784 = vmul.f32 %v692, %v1620
      %v1785 = vmul.f32 %v696, %v1616
      %v1786 = vmul.f32 %v696, %v1620
      %v1787 = vmul.f32 %v700, %v1616
      %v1788 = vmul.f32 %v700, %v1620
      %v1789 = vmul.f32 %v704, %v1616
      %v1790 = vmul.f32 %v704, %v1620
      %v1791 = vmul.f32 %v708, %v1616
      %v1792 = vmul.f32 %v708, %v1620
      %v1793 = vmul.f32 %v712, %v1616
      %v1794 = vmul.f32 %v712, %v1620
      %v1795 = vmul.f32 %v716, %v1616
      %v1796 = vmul.f32 %v716, %v1620
      %v1797 = vmul.f32 %v720, %v1616
      %v1798 = vmul.f32 %v720, %v1620
      %v1799 = vmul.f32 %v724, %v1616
      %v1800 = vmul.f32 %v724, %v1620
      %v1801 = vmul.f32 %v728, %v1616
      %v1802 = vmul.f32 %v728, %v1620
      %v1803 = vmul.f32 %v732, %v1616
      %v1804 = vmul.f32 %v732, %v1620
      %v1805 = vmul.f32 %v736, %v1616
      %v1806 = vmul.f32 %v736, %v1620
      %v1807 = vmul.f32 %v740, %v1616
      %v1808 = vmul.f32 %v740, %v1620
      %v1809 = vmul.f32 %v744, %v1616
      %v1810 = vmul.f32 %v744, %v1620
      %v1811 = vmul.f32 %v748, %v1616
      %v1812 = vmul.f32 %v748, %v1620
      %v1813 = vmul.f32 %v755, %v1624
      %v1814 = vmul.f32 %v755, %v1628
      %v1815 = vmul.f32 %v759, %v1624
      %v1816 = vmul.f32 %v759, %v1628
      %v1817 = vmul.f32 %v763, %v1624
      %v1818 = vmul.f32 %v763, %v1628
      %v1819 = vmul.f32 %v767, %v1624
      %v1820 = vmul.f32 %v767, %v1628
      %v1821 = vmul.f32 %v771, %v1624
      %v1822 = vmul.f32 %v771, %v1628
      %v1823 = vmul.f32 %v775, %v1624
      %v1824 = vmul.f32 %v775, %v1628
      %v1825 = vmul.f32 %v779, %v1624
      %v1826 = vmul.f32 %v779, %v1628
      %v1827 = vmul.f32 %v783, %v1624
      %v1828 = vmul.f32 %v783, %v1628
      %v1829 = vmul.f32 %v787, %v1624
      %v1830 = vmul.f32 %v787, %v1628
      %v1831 = vmul.f32 %v791, %v1624
      %v1832 = vmul.f32 %v791, %v1628
      %v1833 = vmul.f32 %v795, %v1624
      %v1834 = vmul.f32 %v795, %v1628
      %v1835 = vmul.f32 %v799, %v1624
      %v1836 = vmul.f32 %v799, %v1628
      %v1837 = vmul.f32 %v803, %v1624
      %v1838 = vmul.f32 %v803, %v1628
      %v1839 = vmul.f32 %v807, %v1624
      %v1840 = vmul.f32 %v807, %v1628
      %v1841 = vmul.f32 %v811, %v1624
      %v1842 = vmul.f32 %v811, %v1628
      %v1843 = vmul.f32 %v815, %v1624
      %v1844 = vmul.f32 %v815, %v1628
      %v1845 = vmul.f32 %v822, %v1624
      %v1846 = vmul.f32 %v822, %v1628
      %v1847 = vmul.f32 %v826, %v1624
      %v1848 = vmul.f32 %v826, %v1628
      %v1849 = vmul.f32 %v830, %v1624
      %v1850 = vmul.f32 %v830, %v1628
      %v1851 = vmul.f32 %v834, %v1624
      %v1852 = vmul.f32 %v834, %v1628
      %v1853 = vmul.f32 %v838, %v1624
      %v1854 = vmul.f32 %v838, %v1628
      %v1855 = vmul.f32 %v842, %v1624
      %v1856 = vmul.f32 %v842, %v1628
      %v1857 = vmul.f32 %v846, %v1624
      %v1858 = vmul.f32 %v846, %v1628
      %v1859 = vmul.f32 %v850, %v1624
      %v1860 = vmul.f32 %v850, %v1628
      %v1861 = vmul.f32 %v854, %v1624
      %v1862 = vmul.f32 %v854, %v1628
      %v1863 = vmul.f32 %v858, %v1624
      %v1864 = vmul.f32 %v858, %v1628
      %v1865 = vmul.f32 %v862, %v1624
      %v1866 = vmul.f32 %v862, %v1628
      %v1867 = vmul.f32 %v866, %v1624
      %v1868 = vmul.f32 %v866, %v1628
      %v1869 = vmul.f32 %v870, %v1624
      %v1870 = vmul.f32 %v870, %v1628
      %v1871 = vmul.f32 %v874, %v1624
      %v1872 = vmul.f32 %v874, %v1628
      %v1873 = vmul.f32 %v878, %v1624
      %v1874 = vmul.f32 %v878, %v1628
      %v1875 = vmul.f32 %v882, %v1624
      %v1876 = vmul.f32 %v882, %v1628
      %v1877 = vmul.f32 %v889, %v1632
      %v1878 = vmul.f32 %v889, %v1636
      %v1879 = vmul.f32 %v893, %v1632
      %v1880 = vmul.f32 %v893, %v1636
      %v1881 = vmul.f32 %v897, %v1632
      %v1882 = vmul.f32 %v897, %v1636
      %v1883 = vmul.f32 %v901, %v1632
      %v1884 = vmul.f32 %v901, %v1636
      %v1885 = vmul.f32 %v905, %v1632
      %v1886 = vmul.f32 %v905, %v1636
      %v1887 = vmul.f32 %v909, %v1632
      %v1888 = vmul.f32 %v909, %v1636
      %v1889 = vmul.f32 %v913, %v1632
      %v1890 = vmul.f32 %v913, %v1636
      %v1891 = vmul.f32 %v917, %v1632
      %v1892 = vmul.f32 %v917, %v1636
      %v1893 = vmul.f32 %v921, %v1632
      %v1894 = vmul.f32 %v921, %v1636
      %v1895 = vmul.f32 %v925, %v1632
      %v1896 = vmul.f32 %v925, %v1636
      %v1897 = vmul.f32 %v929, %v1632
      %v1898 = vmul.f32 %v929, %v1636
      %v1899 = vmul.f32 %v933, %v1632
      %v1900 = vmul.f32 %v933, %v1636
      %v1901 = vmul.f32 %v937, %v1632
      %v1902 = vmul.f32 %v937, %v1636
      %v1903 = vmul.f32 %v941, %v1632
      %v1904 = vmul.f32 %v941, %v1636
      %v1905 = vmul.f32 %v945, %v1632
      %v1906 = vmul.f32 %v945, %v1636
      %v1907 = vmul.f32 %v949, %v1632
      %v1908 = vmul.f32 %v949, %v1636
      %v1909 = vmul.f32 %v956, %v1632
      %v1910 = vmul.f32 %v956, %v1636
      %v1911 = vmul.f32 %v960, %v1632
      %v1912 = vmul.f32 %v960, %v1636
      %v1913 = vmul.f32 %v964, %v1632
      %v1914 = vmul.f32 %v964, %v1636
      %v1915 = vmul.f32 %v968, %v1632
      %v1916 = vmul.f32 %v968, %v1636
      %v1917 = vmul.f32 %v972, %v1632
      %v1918 = vmul.f32 %v972, %v1636
      %v1919 = vmul.f32 %v976, %v1632
      %v1920 = vmul.f32 %v976, %v1636
      %v1921 = vmul.f32 %v980, %v1632
      %v1922 = vmul.f32 %v980, %v1636
      %v1923 = vmul.f32 %v984, %v1632
      %v1924 = vmul.f32 %v984, %v1636
      %v1925 = vmul.f32 %v988, %v1632
      %v1926 = vmul.f32 %v988, %v1636
      %v1927 = vmul.f32 %v992, %v1632
      %v1928 = vmul.f32 %v992, %v1636
      %v1929 = vmul.f32 %v996, %v1632
      %v1930 = vmul.f32 %v996, %v1636
      %v1931 = vmul.f32 %v1000, %v1632
      %v1932 = vmul.f32 %v1000, %v1636
      %v1933 = vmul.f32 %v1004, %v1632
      %v1934 = vmul.f32 %v1004, %v1636
      %v1935 = vmul.f32 %v1008, %v1632
      %v1936 = vmul.f32 %v1008, %v1636
      %v1937 = vmul.f32 %v1012, %v1632
      %v1938 = vmul.f32 %v1012, %v1636
      %v1939 = vmul.f32 %v1016, %v1632
      %v1940 = vmul.f32 %v1016, %v1636
      %v1941 = vmul.f32 %v1023, %v1640
      %v1942 = vmul.f32 %v1023, %v1644
      %v1943 = vmul.f32 %v1027, %v1640
      %v1944 = vmul.f32 %v1027, %v1644
      %v1945 = vmul.f32 %v1031, %v1640
      %v1946 = vmul.f32 %v1031, %v1644
      %v1947 = vmul.f32 %v1035, %v1640
      %v1948 = vmul.f32 %v1035, %v1644
      %v1949 = vmul.f32 %v1039, %v1640
      %v1950 = vmul.f32 %v1039, %v1644
      %v1951 = vmul.f32 %v1043, %v1640
      %v1952 = vmul.f32 %v1043, %v1644
      %v1953 = vmul.f32 %v1047, %v1640
      %v1954 = vmul.f32 %v1047, %v1644
      %v1955 = vmul.f32 %v1051, %v1640
      %v1956 = vmul.f32 %v1051, %v1644
      %v1957 = vmul.f32 %v1055, %v1640
      %v1958 = vmul.f32 %v1055, %v1644
      %v1959 = vmul.f32 %v1059, %v1640
      %v1960 = vmul.f32 %v1059, %v1644
      %v1961 = vmul.f32 %v1063, %v1640
      %v1962 = vmul.f32 %v1063, %v1644
      %v1963 = vmul.f32 %v1067, %v1640
      %v1964 = vmul.f32 %v1067, %v1644
      %v1965 = vmul.f32 %v1071, %v1640
      %v1966 = vmul.f32 %v1071, %v1644
      %v1967 = vmul.f32 %v1075, %v1640
      %v1968 = vmul.f32 %v1075, %v1644
      %v1969 = vmul.f32 %v1079, %v1640
      %v1970 = vmul.f32 %v1079, %v1644
      %v1971 = vmul.f32 %v1083, %v1640
      %v1972 = vmul.f32 %v1083, %v1644
      %v1973 = vmul.f32 %v1090, %v1640
      %v1974 = vmul.f32 %v1090, %v1644
      %v1975 = vmul.f32 %v1094, %v1640
      %v1976 = vmul.f32 %v1094, %v1644
      %v1977 = vmul.f32 %v1098, %v1640
      %v1978 = vmul.f32 %v1098, %v1644
      %v1979 = vmul.f32 %v1102, %v1640
      %v1980 = vmul.f32 %v1102, %v1644
      %v1981 = vmul.f32 %v1106, %v1640
      %v1982 = vmul.f32 %v1106, %v1644
      %v1983 = vmul.f32 %v1110, %v1640
      %v1984 = vmul.f32 %v1110, %v1644
      %v1985 = vmul.f32 %v1114, %v1640
      %v1986 = vmul.f32 %v1114, %v1644
      %v1987 = vmul.f32 %v1118, %v1640
      %v1988 = vmul.f32 %v1118, %v1644
      %v1989 = vmul.f32 %v1122, %v1640
      %v1990 = vmul.f32 %v1122, %v1644
      %v1991 = vmul.f32 %v1126, %v1640
      %v1992 = vmul.f32 %v1126, %v1644
      %v1993 = vmul.f32 %v1130, %v1640
      %v1994 = vmul.f32 %v1130, %v1644
      %v1995 = vmul.f32 %v1134, %v1640
      %v1996 = vmul.f32 %v1134, %v1644
      %v1997 = vmul.f32 %v1138, %v1640
      %v1998 = vmul.f32 %v1138, %v1644
      %v1999 = vmul.f32 %v1142, %v1640
      %v2000 = vmul.f32 %v1142, %v1644
      %v2001 = vmul.f32 %v1146, %v1640
      %v2002 = vmul.f32 %v1146, %v1644
      %v2003 = vmul.f32 %v1150, %v1640
      %v2004 = vmul.f32 %v1150, %v1644
      %v2005 = vmul.f32 %v1157, %v1648
      %v2006 = vmul.f32 %v1157, %v1652
      %v2007 = vmul.f32 %v1161, %v1648
      %v2008 = vmul.f32 %v1161, %v1652
      %v2009 = vmul.f32 %v1165, %v1648
      %v2010 = vmul.f32 %v1165, %v1652
      %v2011 = vmul.f32 %v1169, %v1648
      %v2012 = vmul.f32 %v1169, %v1652
      %v2013 = vmul.f32 %v1173, %v1648
      %v2014 = vmul.f32 %v1173, %v1652
      %v2015 = vmul.f32 %v1177, %v1648
      %v2016 = vmul.f32 %v1177, %v1652
      %v2017 = vmul.f32 %v1181, %v1648
      %v2018 = vmul.f32 %v1181, %v1652
      %v2019 = vmul.f32 %v1185, %v1648
      %v2020 = vmul.f32 %v1185, %v1652
      %v2021 = vmul.f32 %v1189, %v1648
      %v2022 = vmul.f32 %v1189, %v1652
      %v2023 = vmul.f32 %v1193, %v1648
      %v2024 = vmul.f32 %v1193, %v1652
      %v2025 = vmul.f32 %v1197, %v1648
      %v2026 = vmul.f32 %v1197, %v1652
      %v2027 = vmul.f32 %v1201, %v1648
      %v2028 = vmul.f32 %v1201, %v1652
      %v2029 = vmul.f32 %v1205, %v1648
      %v2030 = vmul.f32 %v1205, %v1652
      %v2031 = vmul.f32 %v1209, %v1648
      %v2032 = vmul.f32 %v1209, %v1652
      %v2033 = vmul.f32 %v1213, %v1648
      %v2034 = vmul.f32 %v1213, %v1652
      %v2035 = vmul.f32 %v1217, %v1648
      %v2036 = vmul.f32 %v1217, %v1652
      %v2037 = vmul.f32 %v1224, %v1648
      %v2038 = vmul.f32 %v1224, %v1652
      %v2039 = vmul.f32 %v1228, %v1648
      %v2040 = vmul.f32 %v1228, %v1652
      %v2041 = vmul.f32 %v1232, %v1648
      %v2042 = vmul.f32 %v1232, %v1652
      %v2043 = vmul.f32 %v1236, %v1648
      %v2044 = vmul.f32 %v1236, %v1652
      %v2045 = vmul.f32 %v1240, %v1648
      %v2046 = vmul.f32 %v1240, %v1652
      %v2047 = vmul.f32 %v1244, %v1648
      %v2048 = vmul.f32 %v1244, %v1652
      %v2049 = vmul.f32 %v1248, %v1648
      %v2050 = vmul.f32 %v1248, %v1652
      %v2051 = vmul.f32 %v1252, %v1648
      %v2052 = vmul.f32 %v1252, %v1652
      %v2053 = vmul.f32 %v1256, %v1648
      %v2054 = vmul.f32 %v1256, %v1652
      %v2055 = vmul.f32 %v1260, %v1648
      %v2056 = vmul.f32 %v1260, %v1652
      %v2057 = vmul.f32 %v1264, %v1648
      %v2058 = vmul.f32 %v1264, %v1652
      %v2059 = vmul.f32 %v1268, %v1648
      %v2060 = vmul.f32 %v1268, %v1652
      %v2061 = vmul.f32 %v1272, %v1648
      %v2062 = vmul.f32 %v1272, %v1652
      %v2063 = vmul.f32 %v1276, %v1648
      %v2064 = vmul.f32 %v1276, %v1652
      %v2065 = vmul.f32 %v1280, %v1648
      %v2066 = vmul.f32 %v1280, %v1652
      %v2067 = vmul.f32 %v1284, %v1648
      %v2068 = vmul.f32 %v1284, %v1652
      %v2069 = vmul.f32 %v1291, %v1656
      %v2070 = vmul.f32 %v1291, %v1660
      %v2071 = vmul.f32 %v1295, %v1656
      %v2072 = vmul.f32 %v1295, %v1660
      %v2073 = vmul.f32 %v1299, %v1656
      %v2074 = vmul.f32 %v1299, %v1660
      %v2075 = vmul.f32 %v1303, %v1656
      %v2076 = vmul.f32 %v1303, %v1660
      %v2077 = vmul.f32 %v1307, %v1656
      %v2078 = vmul.f32 %v1307, %v1660
      %v2079 = vmul.f32 %v1311, %v1656
      %v2080 = vmul.f32 %v1311, %v1660
      %v2081 = vmul.f32 %v1315, %v1656
      %v2082 = vmul.f32 %v1315, %v1660
      %v2083 = vmul.f32 %v1319, %v1656
      %v2084 = vmul.f32 %v1319, %v1660
      %v2085 = vmul.f32 %v1323, %v1656
      %v2086 = vmul.f32 %v1323, %v1660
      %v2087 = vmul.f32 %v1327, %v1656
      %v2088 = vmul.f32 %v1327, %v1660
      %v2089 = vmul.f32 %v1331, %v1656
      %v2090 = vmul.f32 %v1331, %v1660
      %v2091 = vmul.f32 %v1335, %v1656
      %v2092 = vmul.f32 %v1335, %v1660
      %v2093 = vmul.f32 %v1339, %v1656
      %v2094 = vmul.f32 %v1339, %v1660
      %v2095 = vmul.f32 %v1343, %v1656
      %v2096 = vmul.f32 %v1343, %v1660
      %v2097 = vmul.f32 %v1347, %v1656
      %v2098 = vmul.f32 %v1347, %v1660
      %v2099 = vmul.f32 %v1351, %v1656
      %v2100 = vmul.f32 %v1351, %v1660
      %v2101 = vmul.f32 %v1358, %v1656
      %v2102 = vmul.f32 %v1358, %v1660
      %v2103 = vmul.f32 %v1362, %v1656
      %v2104 = vmul.f32 %v1362, %v1660
      %v2105 = vmul.f32 %v1366, %v1656
      %v2106 = vmul.f32 %v1366, %v1660
      %v2107 = vmul.f32 %v1370, %v1656
      %v2108 = vmul.f32 %v1370, %v1660
      %v2109 = vmul.f32 %v1374, %v1656
      %v2110 = vmul.f32 %v1374, %v1660
      %v2111 = vmul.f32 %v1378, %v1656
      %v2112 = vmul.f32 %v1378, %v1660
      %v2113 = vmul.f32 %v1382, %v1656
      %v2114 = vmul.f32 %v1382, %v1660
      %v2115 = vmul.f32 %v1386, %v1656
      %v2116 = vmul.f32 %v1386, %v1660
      %v2117 = vmul.f32 %v1390, %v1656
      %v2118 = vmul.f32 %v1390, %v1660
      %v2119 = vmul.f32 %v1394, %v1656
      %v2120 = vmul.f32 %v1394, %v1660
      %v2121 = vmul.f32 %v1398, %v1656
      %v2122 = vmul.f32 %v1398, %v1660
      %v2123 = vmul.f32 %v1402, %v1656
      %v2124 = vmul.f32 %v1402, %v1660
      %v2125 = vmul.f32 %v1406, %v1656
      %v2126 = vmul.f32 %v1406, %v1660
      %v2127 = vmul.f32 %v1410, %v1656
      %v2128 = vmul.f32 %v1410, %v1660
      %v2129 = vmul.f32 %v1414, %v1656
      %v2130 = vmul.f32 %v1414, %v1660
      %v2131 = vmul.f32 %v1418, %v1656
      %v2132 = vmul.f32 %v1418, %v1660
      %v2133 = vmul.f32 %v1425, %v1664
      %v2134 = vmul.f32 %v1425, %v1668
      %v2135 = vmul.f32 %v1429, %v1664
      %v2136 = vmul.f32 %v1429, %v1668
      %v2137 = vmul.f32 %v1433, %v1664
      %v2138 = vmul.f32 %v1433, %v1668
      %v2139 = vmul.f32 %v1437, %v1664
      %v2140 = vmul.f32 %v1437, %v1668
      %v2141 = vmul.f32 %v1441, %v1664
      %v2142 = vmul.f32 %v1441, %v1668
      %v2143 = vmul.f32 %v1445, %v1664
      %v2144 = vmul.f32 %v1445, %v1668
      %v2145 = vmul.f32 %v1449, %v1664
      %v2146 = vmul.f32 %v1449, %v1668
      %v2147 = vmul.f32 %v1453, %v1664
      %v2148 = vmul.f32 %v1453, %v1668
      %v2149 = vmul.f32 %v1457, %v1664
      %v2150 = vmul.f32 %v1457, %v1668
      %v2151 = vmul.f32 %v1461, %v1664
      %v2152 = vmul.f32 %v1461, %v1668
      %v2153 = vmul.f32 %v1465, %v1664
      %v2154 = vmul.f32 %v1465, %v1668
      %v2155 = vmul.f32 %v1469, %v1664
      %v2156 = vmul.f32 %v1469, %v1668
      %v2157 = vmul.f32 %v1473, %v1664
      %v2158 = vmul.f32 %v1473, %v1668
      %v2159 = vmul.f32 %v1477, %v1664
      %v2160 = vmul.f32 %v1477, %v1668
      %v2161 = vmul.f32 %v1481, %v1664
      %v2162 = vmul.f32 %v1481, %v1668
      %v2163 = vmul.f32 %v1485, %v1664
      %v2164 = vmul.f32 %v1485, %v1668
      %v2165 = vmul.f32 %v1492, %v1664
      %v2166 = vmul.f32 %v1492, %v1668
      %v2167 = vmul.f32 %v1496, %v1664
      %v2168 = vmul.f32 %v1496, %v1668
      %v2169 = vmul.f32 %v1500, %v1664
      %v2170 = vmul.f32 %v1500, %v1668
      %v2171 = vmul.f32 %v1504, %v1664
      %v2172 = vmul.f32 %v1504, %v1668
      %v2173 = vmul.f32 %v1508, %v1664
      %v2174 = vmul.f32 %v1508, %v1668
      %v2175 = vmul.f32 %v1512, %v1664
      %v2176 = vmul.f32 %v1512, %v1668
      %v2177 = vmul.f32 %v1516, %v1664
      %v2178 = vmul.f32 %v1516, %v1668
      %v2179 = vmul.f32 %v1520, %v1664
      %v2180 = vmul.f32 %v1520, %v1668
      %v2181 = vmul.f32 %v1524, %v1664
      %v2182 = vmul.f32 %v1524, %v1668
      %v2183 = vmul.f32 %v1528, %v1664
      %v2184 = vmul.f32 %v1528, %v1668
      %v2185 = vmul.f32 %v1532, %v1664
      %v2186 = vmul.f32 %v1532, %v1668
      %v2187 = vmul.f32 %v1536, %v1664
      %v2188 = vmul.f32 %v1536, %v1668
      %v2189 = vmul.f32 %v1540, %v1664
      %v2190 = vmul.f32 %v1540, %v1668
      %v2191 = vmul.f32 %v1544, %v1664
      %v2192 = vmul.f32 %v1544, %v1668
      %v2193 = vmul.f32 %v1548, %v1664
      %v2194 = vmul.f32 %v1548, %v1668
      %v2195 = vmul.f32 %v1552, %v1664
      %v2196 = vmul.f32 %v1552, %v1668
      %v2197 = vlaneseq
      %v2198 = vshrl.u32 %v2197, 7
      %v2199 = vsub.s32 0, %v2198
      %v2200 = vrot.slane %v441, %v2199
      %2202 = vbcast.lane.b32.xlu0 %v2200, 256
      %v2203 = vpop.permute.xlu0 %2202
      %s2205 = sor.u32 256, 8
      %2206 = vbcast.lane.b32.xlu0 %v2200, %s2205
      %v2207 = vpop.permute.xlu0 %2206
      %s2209 = sor.u32 256, 16
      %2210 = vbcast.lane.b32.xlu0 %v2200, %s2209
      %v2211 = vpop.permute.xlu0 %2210
      %s2213 = sor.u32 256, 24
      %2214 = vbcast.lane.b32.xlu0 %v2200, %s2213
      %v2215 = vpop.permute.xlu0 %2214
      %s2217 = sor.u32 256, 32
      %2218 = vbcast.lane.b32.xlu0 %v2200, %s2217
      %v2219 = vpop.permute.xlu0 %2218
      %s2221 = sor.u32 256, 40
      %2222 = vbcast.lane.b32.xlu0 %v2200, %s2221
      %v2223 = vpop.permute.xlu0 %2222
      %s2225 = sor.u32 256, 48
      %2226 = vbcast.lane.b32.xlu0 %v2200, %s2225
      %v2227 = vpop.permute.xlu0 %2226
      %s2229 = sor.u32 256, 56
      %2230 = vbcast.lane.b32.xlu0 %v2200, %s2229
      %v2231 = vpop.permute.xlu0 %2230
      %s2233 = sor.u32 256, 64
      %2234 = vbcast.lane.b32.xlu0 %v2200, %s2233
      %v2235 = vpop.permute.xlu0 %2234
      %s2237 = sor.u32 256, 72
      %2238 = vbcast.lane.b32.xlu0 %v2200, %s2237
      %v2239 = vpop.permute.xlu0 %2238
      %s2241 = sor.u32 256, 80
      %2242 = vbcast.lane.b32.xlu0 %v2200, %s2241
      %v2243 = vpop.permute.xlu0 %2242
      %s2245 = sor.u32 256, 88
      %2246 = vbcast.lane.b32.xlu0 %v2200, %s2245
      %v2247 = vpop.permute.xlu0 %2246
      %s2249 = sor.u32 256, 96
      %2250 = vbcast.lane.b32.xlu0 %v2200, %s2249
      %v2251 = vpop.permute.xlu0 %2250
      %s2253 = sor.u32 256, 104
      %2254 = vbcast.lane.b32.xlu0 %v2200, %s2253
      %v2255 = vpop.permute.xlu0 %2254
      %s2257 = sor.u32 256, 112
      %2258 = vbcast.lane.b32.xlu0 %v2200, %s2257
      %v2259 = vpop.permute.xlu0 %2258
      %s2261 = sor.u32 256, 120
      %2262 = vbcast.lane.b32.xlu0 %v2200, %s2261
      %v2263 = vpop.permute.xlu0 %2262
      %v2264 = vlaneseq
      %v2265 = vshrl.u32 %v2264, 7
      %v2266 = vsub.s32 0, %v2265
      %v2267 = vrot.slane %v443, %v2266
      %2269 = vbcast.lane.b32.xlu0 %v2267, 256
      %v2270 = vpop.permute.xlu0 %2269
      %s2272 = sor.u32 256, 8
      %2273 = vbcast.lane.b32.xlu0 %v2267, %s2272
      %v2274 = vpop.permute.xlu0 %2273
      %s2276 = sor.u32 256, 16
      %2277 = vbcast.lane.b32.xlu0 %v2267, %s2276
      %v2278 = vpop.permute.xlu0 %2277
      %s2280 = sor.u32 256, 24
      %2281 = vbcast.lane.b32.xlu0 %v2267, %s2280
      %v2282 = vpop.permute.xlu0 %2281
      %s2284 = sor.u32 256, 32
      %2285 = vbcast.lane.b32.xlu0 %v2267, %s2284
      %v2286 = vpop.permute.xlu0 %2285
      %s2288 = sor.u32 256, 40
      %2289 = vbcast.lane.b32.xlu0 %v2267, %s2288
      %v2290 = vpop.permute.xlu0 %2289
      %s2292 = sor.u32 256, 48
      %2293 = vbcast.lane.b32.xlu0 %v2267, %s2292
      %v2294 = vpop.permute.xlu0 %2293
      %s2296 = sor.u32 256, 56
      %2297 = vbcast.lane.b32.xlu0 %v2267, %s2296
      %v2298 = vpop.permute.xlu0 %2297
      %s2300 = sor.u32 256, 64
      %2301 = vbcast.lane.b32.xlu0 %v2267, %s2300
      %v2302 = vpop.permute.xlu0 %2301
      %s2304 = sor.u32 256, 72
      %2305 = vbcast.lane.b32.xlu0 %v2267, %s2304
      %v2306 = vpop.permute.xlu0 %2305
      %s2308 = sor.u32 256, 80
      %2309 = vbcast.lane.b32.xlu0 %v2267, %s2308
      %v2310 = vpop.permute.xlu0 %2309
      %s2312 = sor.u32 256, 88
      %2313 = vbcast.lane.b32.xlu0 %v2267, %s2312
      %v2314 = vpop.permute.xlu0 %2313
      %s2316 = sor.u32 256, 96
      %2317 = vbcast.lane.b32.xlu0 %v2267, %s2316
      %v2318 = vpop.permute.xlu0 %2317
      %s2320 = sor.u32 256, 104
      %2321 = vbcast.lane.b32.xlu0 %v2267, %s2320
      %v2322 = vpop.permute.xlu0 %2321
      %s2324 = sor.u32 256, 112
      %2325 = vbcast.lane.b32.xlu0 %v2267, %s2324
      %v2326 = vpop.permute.xlu0 %2325
      %s2328 = sor.u32 256, 120
      %2329 = vbcast.lane.b32.xlu0 %v2267, %s2328
      %v2330 = vpop.permute.xlu0 %2329
      %v2331 = vlaneseq
      %v2332 = vshrl.u32 %v2331, 7
      %v2333 = vsub.s32 1, %v2332
      %v2334 = vrot.slane %v441, %v2333
      %2336 = vbcast.lane.b32.xlu0 %v2334, 256
      %v2337 = vpop.permute.xlu0 %2336
      %s2339 = sor.u32 256, 8
      %2340 = vbcast.lane.b32.xlu0 %v2334, %s2339
      %v2341 = vpop.permute.xlu0 %2340
      %s2343 = sor.u32 256, 16
      %2344 = vbcast.lane.b32.xlu0 %v2334, %s2343
      %v2345 = vpop.permute.xlu0 %2344
      %s2347 = sor.u32 256, 24
      %2348 = vbcast.lane.b32.xlu0 %v2334, %s2347
      %v2349 = vpop.permute.xlu0 %2348
      %s2351 = sor.u32 256, 32
      %2352 = vbcast.lane.b32.xlu0 %v2334, %s2351
      %v2353 = vpop.permute.xlu0 %2352
      %s2355 = sor.u32 256, 40
      %2356 = vbcast.lane.b32.xlu0 %v2334, %s2355
      %v2357 = vpop.permute.xlu0 %2356
      %s2359 = sor.u32 256, 48
      %2360 = vbcast.lane.b32.xlu0 %v2334, %s2359
      %v2361 = vpop.permute.xlu0 %2360
      %s2363 = sor.u32 256, 56
      %2364 = vbcast.lane.b32.xlu0 %v2334, %s2363
      %v2365 = vpop.permute.xlu0 %2364
      %s2367 = sor.u32 256, 64
      %2368 = vbcast.lane.b32.xlu0 %v2334, %s2367
      %v2369 = vpop.permute.xlu0 %2368
      %s2371 = sor.u32 256, 72
      %2372 = vbcast.lane.b32.xlu0 %v2334, %s2371
      %v2373 = vpop.permute.xlu0 %2372
      %s2375 = sor.u32 256, 80
      %2376 = vbcast.lane.b32.xlu0 %v2334, %s2375
      %v2377 = vpop.permute.xlu0 %2376
      %s2379 = sor.u32 256, 88
      %2380 = vbcast.lane.b32.xlu0 %v2334, %s2379
      %v2381 = vpop.permute.xlu0 %2380
      %s2383 = sor.u32 256, 96
      %2384 = vbcast.lane.b32.xlu0 %v2334, %s2383
      %v2385 = vpop.permute.xlu0 %2384
      %s2387 = sor.u32 256, 104
      %2388 = vbcast.lane.b32.xlu0 %v2334, %s2387
      %v2389 = vpop.permute.xlu0 %2388
      %s2391 = sor.u32 256, 112
      %2392 = vbcast.lane.b32.xlu0 %v2334, %s2391
      %v2393 = vpop.permute.xlu0 %2392
      %s2395 = sor.u32 256, 120
      %2396 = vbcast.lane.b32.xlu0 %v2334, %s2395
      %v2397 = vpop.permute.xlu0 %2396
      %v2398 = vlaneseq
      %v2399 = vshrl.u32 %v2398, 7
      %v2400 = vsub.s32 1, %v2399
      %v2401 = vrot.slane %v443, %v2400
      %2403 = vbcast.lane.b32.xlu0 %v2401, 256
      %v2404 = vpop.permute.xlu0 %2403
      %s2406 = sor.u32 256, 8
      %2407 = vbcast.lane.b32.xlu0 %v2401, %s2406
      %v2408 = vpop.permute.xlu0 %2407
      %s2410 = sor.u32 256, 16
      %2411 = vbcast.lane.b32.xlu0 %v2401, %s2410
      %v2412 = vpop.permute.xlu0 %2411
      %s2414 = sor.u32 256, 24
      %2415 = vbcast.lane.b32.xlu0 %v2401, %s2414
      %v2416 = vpop.permute.xlu0 %2415
      %s2418 = sor.u32 256, 32
      %2419 = vbcast.lane.b32.xlu0 %v2401, %s2418
      %v2420 = vpop.permute.xlu0 %2419
      %s2422 = sor.u32 256, 40
      %2423 = vbcast.lane.b32.xlu0 %v2401, %s2422
      %v2424 = vpop.permute.xlu0 %2423
      %s2426 = sor.u32 256, 48
      %2427 = vbcast.lane.b32.xlu0 %v2401, %s2426
      %v2428 = vpop.permute.xlu0 %2427
      %s2430 = sor.u32 256, 56
      %2431 = vbcast.lane.b32.xlu0 %v2401, %s2430
      %v2432 = vpop.permute.xlu0 %2431
      %s2434 = sor.u32 256, 64
      %2435 = vbcast.lane.b32.xlu0 %v2401, %s2434
      %v2436 = vpop.permute.xlu0 %2435
      %s2438 = sor.u32 256, 72
      %2439 = vbcast.lane.b32.xlu0 %v2401, %s2438
      %v2440 = vpop.permute.xlu0 %2439
      %s2442 = sor.u32 256, 80
      %2443 = vbcast.lane.b32.xlu0 %v2401, %s2442
      %v2444 = vpop.permute.xlu0 %2443
      %s2446 = sor.u32 256, 88
      %2447 = vbcast.lane.b32.xlu0 %v2401, %s2446
      %v2448 = vpop.permute.xlu0 %2447
      %s2450 = sor.u32 256, 96
      %2451 = vbcast.lane.b32.xlu0 %v2401, %s2450
      %v2452 = vpop.permute.xlu0 %2451
      %s2454 = sor.u32 256, 104
      %2455 = vbcast.lane.b32.xlu0 %v2401, %s2454
      %v2456 = vpop.permute.xlu0 %2455
      %s2458 = sor.u32 256, 112
      %2459 = vbcast.lane.b32.xlu0 %v2401, %s2458
      %v2460 = vpop.permute.xlu0 %2459
      %s2462 = sor.u32 256, 120
      %2463 = vbcast.lane.b32.xlu0 %v2401, %s2462
      %v2464 = vpop.permute.xlu0 %2463
      %v2465 = vlaneseq
      %v2466 = vshrl.u32 %v2465, 7
      %v2467 = vsub.s32 2, %v2466
      %v2468 = vrot.slane %v441, %v2467
      %2470 = vbcast.lane.b32.xlu0 %v2468, 256
      %v2471 = vpop.permute.xlu0 %2470
      %s2473 = sor.u32 256, 8
      %2474 = vbcast.lane.b32.xlu0 %v2468, %s2473
      %v2475 = vpop.permute.xlu0 %2474
      %s2477 = sor.u32 256, 16
      %2478 = vbcast.lane.b32.xlu0 %v2468, %s2477
      %v2479 = vpop.permute.xlu0 %2478
      %s2481 = sor.u32 256, 24
      %2482 = vbcast.lane.b32.xlu0 %v2468, %s2481
      %v2483 = vpop.permute.xlu0 %2482
      %s2485 = sor.u32 256, 32
      %2486 = vbcast.lane.b32.xlu0 %v2468, %s2485
      %v2487 = vpop.permute.xlu0 %2486
      %s2489 = sor.u32 256, 40
      %2490 = vbcast.lane.b32.xlu0 %v2468, %s2489
      %v2491 = vpop.permute.xlu0 %2490
      %s2493 = sor.u32 256, 48
      %2494 = vbcast.lane.b32.xlu0 %v2468, %s2493
      %v2495 = vpop.permute.xlu0 %2494
      %s2497 = sor.u32 256, 56
      %2498 = vbcast.lane.b32.xlu0 %v2468, %s2497
      %v2499 = vpop.permute.xlu0 %2498
      %s2501 = sor.u32 256, 64
      %2502 = vbcast.lane.b32.xlu0 %v2468, %s2501
      %v2503 = vpop.permute.xlu0 %2502
      %s2505 = sor.u32 256, 72
      %2506 = vbcast.lane.b32.xlu0 %v2468, %s2505
      %v2507 = vpop.permute.xlu0 %2506
      %s2509 = sor.u32 256, 80
      %2510 = vbcast.lane.b32.xlu0 %v2468, %s2509
      %v2511 = vpop.permute.xlu0 %2510
      %s2513 = sor.u32 256, 88
      %2514 = vbcast.lane.b32.xlu0 %v2468, %s2513
      %v2515 = vpop.permute.xlu0 %2514
      %s2517 = sor.u32 256, 96
      %2518 = vbcast.lane.b32.xlu0 %v2468, %s2517
      %v2519 = vpop.permute.xlu0 %2518
      %s2521 = sor.u32 256, 104
      %2522 = vbcast.lane.b32.xlu0 %v2468, %s2521
      %v2523 = vpop.permute.xlu0 %2522
      %s2525 = sor.u32 256, 112
      %2526 = vbcast.lane.b32.xlu0 %v2468, %s2525
      %v2527 = vpop.permute.xlu0 %2526
      %s2529 = sor.u32 256, 120
      %2530 = vbcast.lane.b32.xlu0 %v2468, %s2529
      %v2531 = vpop.permute.xlu0 %2530
      %v2532 = vlaneseq
      %v2533 = vshrl.u32 %v2532, 7
      %v2534 = vsub.s32 2, %v2533
      %v2535 = vrot.slane %v443, %v2534
      %2537 = vbcast.lane.b32.xlu0 %v2535, 256
      %v2538 = vpop.permute.xlu0 %2537
      %s2540 = sor.u32 256, 8
      %2541 = vbcast.lane.b32.xlu0 %v2535, %s2540
      %v2542 = vpop.permute.xlu0 %2541
      %s2544 = sor.u32 256, 16
      %2545 = vbcast.lane.b32.xlu0 %v2535, %s2544
      %v2546 = vpop.permute.xlu0 %2545
      %s2548 = sor.u32 256, 24
      %2549 = vbcast.lane.b32.xlu0 %v2535, %s2548
      %v2550 = vpop.permute.xlu0 %2549
      %s2552 = sor.u32 256, 32
      %2553 = vbcast.lane.b32.xlu0 %v2535, %s2552
      %v2554 = vpop.permute.xlu0 %2553
      %s2556 = sor.u32 256, 40
      %2557 = vbcast.lane.b32.xlu0 %v2535, %s2556
      %v2558 = vpop.permute.xlu0 %2557
      %s2560 = sor.u32 256, 48
      %2561 = vbcast.lane.b32.xlu0 %v2535, %s2560
      %v2562 = vpop.permute.xlu0 %2561
      %s2564 = sor.u32 256, 56
      %2565 = vbcast.lane.b32.xlu0 %v2535, %s2564
      %v2566 = vpop.permute.xlu0 %2565
      %s2568 = sor.u32 256, 64
      %2569 = vbcast.lane.b32.xlu0 %v2535, %s2568
      %v2570 = vpop.permute.xlu0 %2569
      %s2572 = sor.u32 256, 72
      %2573 = vbcast.lane.b32.xlu0 %v2535, %s2572
      %v2574 = vpop.permute.xlu0 %2573
      %s2576 = sor.u32 256, 80
      %2577 = vbcast.lane.b32.xlu0 %v2535, %s2576
      %v2578 = vpop.permute.xlu0 %2577
      %s2580 = sor.u32 256, 88
      %2581 = vbcast.lane.b32.xlu0 %v2535, %s2580
      %v2582 = vpop.permute.xlu0 %2581
      %s2584 = sor.u32 256, 96
      %2585 = vbcast.lane.b32.xlu0 %v2535, %s2584
      %v2586 = vpop.permute.xlu0 %2585
      %s2588 = sor.u32 256, 104
      %2589 = vbcast.lane.b32.xlu0 %v2535, %s2588
      %v2590 = vpop.permute.xlu0 %2589
      %s2592 = sor.u32 256, 112
      %2593 = vbcast.lane.b32.xlu0 %v2535, %s2592
      %v2594 = vpop.permute.xlu0 %2593
      %s2596 = sor.u32 256, 120
      %2597 = vbcast.lane.b32.xlu0 %v2535, %s2596
      %v2598 = vpop.permute.xlu0 %2597
      %v2599 = vlaneseq
      %v2600 = vshrl.u32 %v2599, 7
      %v2601 = vsub.s32 3, %v2600
      %v2602 = vrot.slane %v441, %v2601
      %2604 = vbcast.lane.b32.xlu0 %v2602, 256
      %v2605 = vpop.permute.xlu0 %2604
      %s2607 = sor.u32 256, 8
      %2608 = vbcast.lane.b32.xlu0 %v2602, %s2607
      %v2609 = vpop.permute.xlu0 %2608
      %s2611 = sor.u32 256, 16
      %2612 = vbcast.lane.b32.xlu0 %v2602, %s2611
      %v2613 = vpop.permute.xlu0 %2612
      %s2615 = sor.u32 256, 24
      %2616 = vbcast.lane.b32.xlu0 %v2602, %s2615
      %v2617 = vpop.permute.xlu0 %2616
      %s2619 = sor.u32 256, 32
      %2620 = vbcast.lane.b32.xlu0 %v2602, %s2619
      %v2621 = vpop.permute.xlu0 %2620
      %s2623 = sor.u32 256, 40
      %2624 = vbcast.lane.b32.xlu0 %v2602, %s2623
      %v2625 = vpop.permute.xlu0 %2624
      %s2627 = sor.u32 256, 48
      %2628 = vbcast.lane.b32.xlu0 %v2602, %s2627
      %v2629 = vpop.permute.xlu0 %2628
      %s2631 = sor.u32 256, 56
      %2632 = vbcast.lane.b32.xlu0 %v2602, %s2631
      %v2633 = vpop.permute.xlu0 %2632
      %s2635 = sor.u32 256, 64
      %2636 = vbcast.lane.b32.xlu0 %v2602, %s2635
      %v2637 = vpop.permute.xlu0 %2636
      %s2639 = sor.u32 256, 72
      %2640 = vbcast.lane.b32.xlu0 %v2602, %s2639
      %v2641 = vpop.permute.xlu0 %2640
      %s2643 = sor.u32 256, 80
      %2644 = vbcast.lane.b32.xlu0 %v2602, %s2643
      %v2645 = vpop.permute.xlu0 %2644
      %s2647 = sor.u32 256, 88
      %2648 = vbcast.lane.b32.xlu0 %v2602, %s2647
      %v2649 = vpop.permute.xlu0 %2648
      %s2651 = sor.u32 256, 96
      %2652 = vbcast.lane.b32.xlu0 %v2602, %s2651
      %v2653 = vpop.permute.xlu0 %2652
      %s2655 = sor.u32 256, 104
      %2656 = vbcast.lane.b32.xlu0 %v2602, %s2655
      %v2657 = vpop.permute.xlu0 %2656
      %s2659 = sor.u32 256, 112
      %2660 = vbcast.lane.b32.xlu0 %v2602, %s2659
      %v2661 = vpop.permute.xlu0 %2660
      %s2663 = sor.u32 256, 120
      %2664 = vbcast.lane.b32.xlu0 %v2602, %s2663
      %v2665 = vpop.permute.xlu0 %2664
      %v2666 = vlaneseq
      %v2667 = vshrl.u32 %v2666, 7
      %v2668 = vsub.s32 3, %v2667
      %v2669 = vrot.slane %v443, %v2668
      %2671 = vbcast.lane.b32.xlu0 %v2669, 256
      %v2672 = vpop.permute.xlu0 %2671
      %s2674 = sor.u32 256, 8
      %2675 = vbcast.lane.b32.xlu0 %v2669, %s2674
      %v2676 = vpop.permute.xlu0 %2675
      %s2678 = sor.u32 256, 16
      %2679 = vbcast.lane.b32.xlu0 %v2669, %s2678
      %v2680 = vpop.permute.xlu0 %2679
      %s2682 = sor.u32 256, 24
      %2683 = vbcast.lane.b32.xlu0 %v2669, %s2682
      %v2684 = vpop.permute.xlu0 %2683
      %s2686 = sor.u32 256, 32
      %2687 = vbcast.lane.b32.xlu0 %v2669, %s2686
      %v2688 = vpop.permute.xlu0 %2687
      %s2690 = sor.u32 256, 40
      %2691 = vbcast.lane.b32.xlu0 %v2669, %s2690
      %v2692 = vpop.permute.xlu0 %2691
      %s2694 = sor.u32 256, 48
      %2695 = vbcast.lane.b32.xlu0 %v2669, %s2694
      %v2696 = vpop.permute.xlu0 %2695
      %s2698 = sor.u32 256, 56
      %2699 = vbcast.lane.b32.xlu0 %v2669, %s2698
      %v2700 = vpop.permute.xlu0 %2699
      %s2702 = sor.u32 256, 64
      %2703 = vbcast.lane.b32.xlu0 %v2669, %s2702
      %v2704 = vpop.permute.xlu0 %2703
      %s2706 = sor.u32 256, 72
      %2707 = vbcast.lane.b32.xlu0 %v2669, %s2706
      %v2708 = vpop.permute.xlu0 %2707
      %s2710 = sor.u32 256, 80
      %2711 = vbcast.lane.b32.xlu0 %v2669, %s2710
      %v2712 = vpop.permute.xlu0 %2711
      %s2714 = sor.u32 256, 88
      %2715 = vbcast.lane.b32.xlu0 %v2669, %s2714
      %v2716 = vpop.permute.xlu0 %2715
      %s2718 = sor.u32 256, 96
      %2719 = vbcast.lane.b32.xlu0 %v2669, %s2718
      %v2720 = vpop.permute.xlu0 %2719
      %s2722 = sor.u32 256, 104
      %2723 = vbcast.lane.b32.xlu0 %v2669, %s2722
      %v2724 = vpop.permute.xlu0 %2723
      %s2726 = sor.u32 256, 112
      %2727 = vbcast.lane.b32.xlu0 %v2669, %s2726
      %v2728 = vpop.permute.xlu0 %2727
      %s2730 = sor.u32 256, 120
      %2731 = vbcast.lane.b32.xlu0 %v2669, %s2730
      %v2732 = vpop.permute.xlu0 %2731
      %v2733 = vlaneseq
      %v2734 = vshrl.u32 %v2733, 7
      %v2735 = vsub.s32 4, %v2734
      %v2736 = vrot.slane %v441, %v2735
      %2738 = vbcast.lane.b32.xlu0 %v2736, 256
      %v2739 = vpop.permute.xlu0 %2738
      %s2741 = sor.u32 256, 8
      %2742 = vbcast.lane.b32.xlu0 %v2736, %s2741
      %v2743 = vpop.permute.xlu0 %2742
      %s2745 = sor.u32 256, 16
      %2746 = vbcast.lane.b32.xlu0 %v2736, %s2745
      %v2747 = vpop.permute.xlu0 %2746
      %s2749 = sor.u32 256, 24
      %2750 = vbcast.lane.b32.xlu0 %v2736, %s2749
      %v2751 = vpop.permute.xlu0 %2750
      %s2753 = sor.u32 256, 32
      %2754 = vbcast.lane.b32.xlu0 %v2736, %s2753
      %v2755 = vpop.permute.xlu0 %2754
      %s2757 = sor.u32 256, 40
      %2758 = vbcast.lane.b32.xlu0 %v2736, %s2757
      %v2759 = vpop.permute.xlu0 %2758
      %s2761 = sor.u32 256, 48
      %2762 = vbcast.lane.b32.xlu0 %v2736, %s2761
      %v2763 = vpop.permute.xlu0 %2762
      %s2765 = sor.u32 256, 56
      %2766 = vbcast.lane.b32.xlu0 %v2736, %s2765
      %v2767 = vpop.permute.xlu0 %2766
      %s2769 = sor.u32 256, 64
      %2770 = vbcast.lane.b32.xlu0 %v2736, %s2769
      %v2771 = vpop.permute.xlu0 %2770
      %s2773 = sor.u32 256, 72
      %2774 = vbcast.lane.b32.xlu0 %v2736, %s2773
      %v2775 = vpop.permute.xlu0 %2774
      %s2777 = sor.u32 256, 80
      %2778 = vbcast.lane.b32.xlu0 %v2736, %s2777
      %v2779 = vpop.permute.xlu0 %2778
      %s2781 = sor.u32 256, 88
      %2782 = vbcast.lane.b32.xlu0 %v2736, %s2781
      %v2783 = vpop.permute.xlu0 %2782
      %s2785 = sor.u32 256, 96
      %2786 = vbcast.lane.b32.xlu0 %v2736, %s2785
      %v2787 = vpop.permute.xlu0 %2786
      %s2789 = sor.u32 256, 104
      %2790 = vbcast.lane.b32.xlu0 %v2736, %s2789
      %v2791 = vpop.permute.xlu0 %2790
      %s2793 = sor.u32 256, 112
      %2794 = vbcast.lane.b32.xlu0 %v2736, %s2793
      %v2795 = vpop.permute.xlu0 %2794
      %s2797 = sor.u32 256, 120
      %2798 = vbcast.lane.b32.xlu0 %v2736, %s2797
      %v2799 = vpop.permute.xlu0 %2798
      %v2800 = vlaneseq
      %v2801 = vshrl.u32 %v2800, 7
      %v2802 = vsub.s32 4, %v2801
      %v2803 = vrot.slane %v443, %v2802
      %2805 = vbcast.lane.b32.xlu0 %v2803, 256
      %v2806 = vpop.permute.xlu0 %2805
      %s2808 = sor.u32 256, 8
      %2809 = vbcast.lane.b32.xlu0 %v2803, %s2808
      %v2810 = vpop.permute.xlu0 %2809
      %s2812 = sor.u32 256, 16
      %2813 = vbcast.lane.b32.xlu0 %v2803, %s2812
      %v2814 = vpop.permute.xlu0 %2813
      %s2816 = sor.u32 256, 24
      %2817 = vbcast.lane.b32.xlu0 %v2803, %s2816
      %v2818 = vpop.permute.xlu0 %2817
      %s2820 = sor.u32 256, 32
      %2821 = vbcast.lane.b32.xlu0 %v2803, %s2820
      %v2822 = vpop.permute.xlu0 %2821
      %s2824 = sor.u32 256, 40
      %2825 = vbcast.lane.b32.xlu0 %v2803, %s2824
      %v2826 = vpop.permute.xlu0 %2825
      %s2828 = sor.u32 256, 48
      %2829 = vbcast.lane.b32.xlu0 %v2803, %s2828
      %v2830 = vpop.permute.xlu0 %2829
      %s2832 = sor.u32 256, 56
      %2833 = vbcast.lane.b32.xlu0 %v2803, %s2832
      %v2834 = vpop.permute.xlu0 %2833
      %s2836 = sor.u32 256, 64
      %2837 = vbcast.lane.b32.xlu0 %v2803, %s2836
      %v2838 = vpop.permute.xlu0 %2837
      %s2840 = sor.u32 256, 72
      %2841 = vbcast.lane.b32.xlu0 %v2803, %s2840
      %v2842 = vpop.permute.xlu0 %2841
      %s2844 = sor.u32 256, 80
      %2845 = vbcast.lane.b32.xlu0 %v2803, %s2844
      %v2846 = vpop.permute.xlu0 %2845
      %s2848 = sor.u32 256, 88
      %2849 = vbcast.lane.b32.xlu0 %v2803, %s2848
      %v2850 = vpop.permute.xlu0 %2849
      %s2852 = sor.u32 256, 96
      %2853 = vbcast.lane.b32.xlu0 %v2803, %s2852
      %v2854 = vpop.permute.xlu0 %2853
      %s2856 = sor.u32 256, 104
      %2857 = vbcast.lane.b32.xlu0 %v2803, %s2856
      %v2858 = vpop.permute.xlu0 %2857
      %s2860 = sor.u32 256, 112
      %2861 = vbcast.lane.b32.xlu0 %v2803, %s2860
      %v2862 = vpop.permute.xlu0 %2861
      %s2864 = sor.u32 256, 120
      %2865 = vbcast.lane.b32.xlu0 %v2803, %s2864
      %v2866 = vpop.permute.xlu0 %2865
      %v2867 = vlaneseq
      %v2868 = vshrl.u32 %v2867, 7
      %v2869 = vsub.s32 5, %v2868
      %v2870 = vrot.slane %v441, %v2869
      %2872 = vbcast.lane.b32.xlu0 %v2870, 256
      %v2873 = vpop.permute.xlu0 %2872
      %s2875 = sor.u32 256, 8
      %2876 = vbcast.lane.b32.xlu0 %v2870, %s2875
      %v2877 = vpop.permute.xlu0 %2876
      %s2879 = sor.u32 256, 16
      %2880 = vbcast.lane.b32.xlu0 %v2870, %s2879
      %v2881 = vpop.permute.xlu0 %2880
      %s2883 = sor.u32 256, 24
      %2884 = vbcast.lane.b32.xlu0 %v2870, %s2883
      %v2885 = vpop.permute.xlu0 %2884
      %s2887 = sor.u32 256, 32
      %2888 = vbcast.lane.b32.xlu0 %v2870, %s2887
      %v2889 = vpop.permute.xlu0 %2888
      %s2891 = sor.u32 256, 40
      %2892 = vbcast.lane.b32.xlu0 %v2870, %s2891
      %v2893 = vpop.permute.xlu0 %2892
      %s2895 = sor.u32 256, 48
      %2896 = vbcast.lane.b32.xlu0 %v2870, %s2895
      %v2897 = vpop.permute.xlu0 %2896
      %s2899 = sor.u32 256, 56
      %2900 = vbcast.lane.b32.xlu0 %v2870, %s2899
      %v2901 = vpop.permute.xlu0 %2900
      %s2903 = sor.u32 256, 64
      %2904 = vbcast.lane.b32.xlu0 %v2870, %s2903
      %v2905 = vpop.permute.xlu0 %2904
      %s2907 = sor.u32 256, 72
      %2908 = vbcast.lane.b32.xlu0 %v2870, %s2907
      %v2909 = vpop.permute.xlu0 %2908
      %s2911 = sor.u32 256, 80
      %2912 = vbcast.lane.b32.xlu0 %v2870, %s2911
      %v2913 = vpop.permute.xlu0 %2912
      %s2915 = sor.u32 256, 88
      %2916 = vbcast.lane.b32.xlu0 %v2870, %s2915
      %v2917 = vpop.permute.xlu0 %2916
      %s2919 = sor.u32 256, 96
      %2920 = vbcast.lane.b32.xlu0 %v2870, %s2919
      %v2921 = vpop.permute.xlu0 %2920
      %s2923 = sor.u32 256, 104
      %2924 = vbcast.lane.b32.xlu0 %v2870, %s2923
      %v2925 = vpop.permute.xlu0 %2924
      %s2927 = sor.u32 256, 112
      %2928 = vbcast.lane.b32.xlu0 %v2870, %s2927
      %v2929 = vpop.permute.xlu0 %2928
      %s2931 = sor.u32 256, 120
      %2932 = vbcast.lane.b32.xlu0 %v2870, %s2931
      %v2933 = vpop.permute.xlu0 %2932
      %v2934 = vlaneseq
      %v2935 = vshrl.u32 %v2934, 7
      %v2936 = vsub.s32 5, %v2935
      %v2937 = vrot.slane %v443, %v2936
      %2939 = vbcast.lane.b32.xlu0 %v2937, 256
      %v2940 = vpop.permute.xlu0 %2939
      %s2942 = sor.u32 256, 8
      %2943 = vbcast.lane.b32.xlu0 %v2937, %s2942
      %v2944 = vpop.permute.xlu0 %2943
      %s2946 = sor.u32 256, 16
      %2947 = vbcast.lane.b32.xlu0 %v2937, %s2946
      %v2948 = vpop.permute.xlu0 %2947
      %s2950 = sor.u32 256, 24
      %2951 = vbcast.lane.b32.xlu0 %v2937, %s2950
      %v2952 = vpop.permute.xlu0 %2951
      %s2954 = sor.u32 256, 32
      %2955 = vbcast.lane.b32.xlu0 %v2937, %s2954
      %v2956 = vpop.permute.xlu0 %2955
      %s2958 = sor.u32 256, 40
      %2959 = vbcast.lane.b32.xlu0 %v2937, %s2958
      %v2960 = vpop.permute.xlu0 %2959
      %s2962 = sor.u32 256, 48
      %2963 = vbcast.lane.b32.xlu0 %v2937, %s2962
      %v2964 = vpop.permute.xlu0 %2963
      %s2966 = sor.u32 256, 56
      %2967 = vbcast.lane.b32.xlu0 %v2937, %s2966
      %v2968 = vpop.permute.xlu0 %2967
      %s2970 = sor.u32 256, 64
      %2971 = vbcast.lane.b32.xlu0 %v2937, %s2970
      %v2972 = vpop.permute.xlu0 %2971
      %s2974 = sor.u32 256, 72
      %2975 = vbcast.lane.b32.xlu0 %v2937, %s2974
      %v2976 = vpop.permute.xlu0 %2975
      %s2978 = sor.u32 256, 80
      %2979 = vbcast.lane.b32.xlu0 %v2937, %s2978
      %v2980 = vpop.permute.xlu0 %2979
      %s2982 = sor.u32 256, 88
      %2983 = vbcast.lane.b32.xlu0 %v2937, %s2982
      %v2984 = vpop.permute.xlu0 %2983
      %s2986 = sor.u32 256, 96
      %2987 = vbcast.lane.b32.xlu0 %v2937, %s2986
      %v2988 = vpop.permute.xlu0 %2987
      %s2990 = sor.u32 256, 104
      %2991 = vbcast.lane.b32.xlu0 %v2937, %s2990
      %v2992 = vpop.permute.xlu0 %2991
      %s2994 = sor.u32 256, 112
      %2995 = vbcast.lane.b32.xlu0 %v2937, %s2994
      %v2996 = vpop.permute.xlu0 %2995
      %s2998 = sor.u32 256, 120
      %2999 = vbcast.lane.b32.xlu0 %v2937, %s2998
      %v3000 = vpop.permute.xlu0 %2999
      %v3001 = vlaneseq
      %v3002 = vshrl.u32 %v3001, 7
      %v3003 = vsub.s32 6, %v3002
      %v3004 = vrot.slane %v441, %v3003
      %3006 = vbcast.lane.b32.xlu0 %v3004, 256
      %v3007 = vpop.permute.xlu0 %3006
      %s3009 = sor.u32 256, 8
      %3010 = vbcast.lane.b32.xlu0 %v3004, %s3009
      %v3011 = vpop.permute.xlu0 %3010
      %s3013 = sor.u32 256, 16
      %3014 = vbcast.lane.b32.xlu0 %v3004, %s3013
      %v3015 = vpop.permute.xlu0 %3014
      %s3017 = sor.u32 256, 24
      %3018 = vbcast.lane.b32.xlu0 %v3004, %s3017
      %v3019 = vpop.permute.xlu0 %3018
      %s3021 = sor.u32 256, 32
      %3022 = vbcast.lane.b32.xlu0 %v3004, %s3021
      %v3023 = vpop.permute.xlu0 %3022
      %s3025 = sor.u32 256, 40
      %3026 = vbcast.lane.b32.xlu0 %v3004, %s3025
      %v3027 = vpop.permute.xlu0 %3026
      %s3029 = sor.u32 256, 48
      %3030 = vbcast.lane.b32.xlu0 %v3004, %s3029
      %v3031 = vpop.permute.xlu0 %3030
      %s3033 = sor.u32 256, 56
      %3034 = vbcast.lane.b32.xlu0 %v3004, %s3033
      %v3035 = vpop.permute.xlu0 %3034
      %s3037 = sor.u32 256, 64
      %3038 = vbcast.lane.b32.xlu0 %v3004, %s3037
      %v3039 = vpop.permute.xlu0 %3038
      %s3041 = sor.u32 256, 72
      %3042 = vbcast.lane.b32.xlu0 %v3004, %s3041
      %v3043 = vpop.permute.xlu0 %3042
      %s3045 = sor.u32 256, 80
      %3046 = vbcast.lane.b32.xlu0 %v3004, %s3045
      %v3047 = vpop.permute.xlu0 %3046
      %s3049 = sor.u32 256, 88
      %3050 = vbcast.lane.b32.xlu0 %v3004, %s3049
      %v3051 = vpop.permute.xlu0 %3050
      %s3053 = sor.u32 256, 96
      %3054 = vbcast.lane.b32.xlu0 %v3004, %s3053
      %v3055 = vpop.permute.xlu0 %3054
      %s3057 = sor.u32 256, 104
      %3058 = vbcast.lane.b32.xlu0 %v3004, %s3057
      %v3059 = vpop.permute.xlu0 %3058
      %s3061 = sor.u32 256, 112
      %3062 = vbcast.lane.b32.xlu0 %v3004, %s3061
      %v3063 = vpop.permute.xlu0 %3062
      %s3065 = sor.u32 256, 120
      %3066 = vbcast.lane.b32.xlu0 %v3004, %s3065
      %v3067 = vpop.permute.xlu0 %3066
      %v3068 = vlaneseq
      %v3069 = vshrl.u32 %v3068, 7
      %v3070 = vsub.s32 6, %v3069
      %v3071 = vrot.slane %v443, %v3070
      %3073 = vbcast.lane.b32.xlu0 %v3071, 256
      %v3074 = vpop.permute.xlu0 %3073
      %s3076 = sor.u32 256, 8
      %3077 = vbcast.lane.b32.xlu0 %v3071, %s3076
      %v3078 = vpop.permute.xlu0 %3077
      %s3080 = sor.u32 256, 16
      %3081 = vbcast.lane.b32.xlu0 %v3071, %s3080
      %v3082 = vpop.permute.xlu0 %3081
      %s3084 = sor.u32 256, 24
      %3085 = vbcast.lane.b32.xlu0 %v3071, %s3084
      %v3086 = vpop.permute.xlu0 %3085
      %s3088 = sor.u32 256, 32
      %3089 = vbcast.lane.b32.xlu0 %v3071, %s3088
      %v3090 = vpop.permute.xlu0 %3089
      %s3092 = sor.u32 256, 40
      %3093 = vbcast.lane.b32.xlu0 %v3071, %s3092
      %v3094 = vpop.permute.xlu0 %3093
      %s3096 = sor.u32 256, 48
      %3097 = vbcast.lane.b32.xlu0 %v3071, %s3096
      %v3098 = vpop.permute.xlu0 %3097
      %s3100 = sor.u32 256, 56
      %3101 = vbcast.lane.b32.xlu0 %v3071, %s3100
      %v3102 = vpop.permute.xlu0 %3101
      %s3104 = sor.u32 256, 64
      %3105 = vbcast.lane.b32.xlu0 %v3071, %s3104
      %v3106 = vpop.permute.xlu0 %3105
      %s3108 = sor.u32 256, 72
      %3109 = vbcast.lane.b32.xlu0 %v3071, %s3108
      %v3110 = vpop.permute.xlu0 %3109
      %s3112 = sor.u32 256, 80
      %3113 = vbcast.lane.b32.xlu0 %v3071, %s3112
      %v3114 = vpop.permute.xlu0 %3113
      %s3116 = sor.u32 256, 88
      %3117 = vbcast.lane.b32.xlu0 %v3071, %s3116
      %v3118 = vpop.permute.xlu0 %3117
      %s3120 = sor.u32 256, 96
      %3121 = vbcast.lane.b32.xlu0 %v3071, %s3120
      %v3122 = vpop.permute.xlu0 %3121
      %s3124 = sor.u32 256, 104
      %3125 = vbcast.lane.b32.xlu0 %v3071, %s3124
      %v3126 = vpop.permute.xlu0 %3125
      %s3128 = sor.u32 256, 112
      %3129 = vbcast.lane.b32.xlu0 %v3071, %s3128
      %v3130 = vpop.permute.xlu0 %3129
      %s3132 = sor.u32 256, 120
      %3133 = vbcast.lane.b32.xlu0 %v3071, %s3132
      %v3134 = vpop.permute.xlu0 %3133
      %v3135 = vlaneseq
      %v3136 = vshrl.u32 %v3135, 7
      %v3137 = vsub.s32 7, %v3136
      %v3138 = vrot.slane %v441, %v3137
      %3140 = vbcast.lane.b32.xlu0 %v3138, 256
      %v3141 = vpop.permute.xlu0 %3140
      %s3143 = sor.u32 256, 8
      %3144 = vbcast.lane.b32.xlu0 %v3138, %s3143
      %v3145 = vpop.permute.xlu0 %3144
      %s3147 = sor.u32 256, 16
      %3148 = vbcast.lane.b32.xlu0 %v3138, %s3147
      %v3149 = vpop.permute.xlu0 %3148
      %s3151 = sor.u32 256, 24
      %3152 = vbcast.lane.b32.xlu0 %v3138, %s3151
      %v3153 = vpop.permute.xlu0 %3152
      %s3155 = sor.u32 256, 32
      %3156 = vbcast.lane.b32.xlu0 %v3138, %s3155
      %v3157 = vpop.permute.xlu0 %3156
      %s3159 = sor.u32 256, 40
      %3160 = vbcast.lane.b32.xlu0 %v3138, %s3159
      %v3161 = vpop.permute.xlu0 %3160
      %s3163 = sor.u32 256, 48
      %3164 = vbcast.lane.b32.xlu0 %v3138, %s3163
      %v3165 = vpop.permute.xlu0 %3164
      %s3167 = sor.u32 256, 56
      %3168 = vbcast.lane.b32.xlu0 %v3138, %s3167
      %v3169 = vpop.permute.xlu0 %3168
      %s3171 = sor.u32 256, 64
      %3172 = vbcast.lane.b32.xlu0 %v3138, %s3171
      %v3173 = vpop.permute.xlu0 %3172
      %s3175 = sor.u32 256, 72
      %3176 = vbcast.lane.b32.xlu0 %v3138, %s3175
      %v3177 = vpop.permute.xlu0 %3176
      %s3179 = sor.u32 256, 80
      %3180 = vbcast.lane.b32.xlu0 %v3138, %s3179
      %v3181 = vpop.permute.xlu0 %3180
      %s3183 = sor.u32 256, 88
      %3184 = vbcast.lane.b32.xlu0 %v3138, %s3183
      %v3185 = vpop.permute.xlu0 %3184
      %s3187 = sor.u32 256, 96
      %3188 = vbcast.lane.b32.xlu0 %v3138, %s3187
      %v3189 = vpop.permute.xlu0 %3188
      %s3191 = sor.u32 256, 104
      %3192 = vbcast.lane.b32.xlu0 %v3138, %s3191
      %v3193 = vpop.permute.xlu0 %3192
      %s3195 = sor.u32 256, 112
      %3196 = vbcast.lane.b32.xlu0 %v3138, %s3195
      %v3197 = vpop.permute.xlu0 %3196
      %s3199 = sor.u32 256, 120
      %3200 = vbcast.lane.b32.xlu0 %v3138, %s3199
      %v3201 = vpop.permute.xlu0 %3200
      %v3202 = vlaneseq
      %v3203 = vshrl.u32 %v3202, 7
      %v3204 = vsub.s32 7, %v3203
      %v3205 = vrot.slane %v443, %v3204
      %3207 = vbcast.lane.b32.xlu0 %v3205, 256
      %v3208 = vpop.permute.xlu0 %3207
      %s3210 = sor.u32 256, 8
      %3211 = vbcast.lane.b32.xlu0 %v3205, %s3210
      %v3212 = vpop.permute.xlu0 %3211
      %s3214 = sor.u32 256, 16
      %3215 = vbcast.lane.b32.xlu0 %v3205, %s3214
      %v3216 = vpop.permute.xlu0 %3215
      %s3218 = sor.u32 256, 24
      %3219 = vbcast.lane.b32.xlu0 %v3205, %s3218
      %v3220 = vpop.permute.xlu0 %3219
      %s3222 = sor.u32 256, 32
      %3223 = vbcast.lane.b32.xlu0 %v3205, %s3222
      %v3224 = vpop.permute.xlu0 %3223
      %s3226 = sor.u32 256, 40
      %3227 = vbcast.lane.b32.xlu0 %v3205, %s3226
      %v3228 = vpop.permute.xlu0 %3227
      %s3230 = sor.u32 256, 48
      %3231 = vbcast.lane.b32.xlu0 %v3205, %s3230
      %v3232 = vpop.permute.xlu0 %3231
      %s3234 = sor.u32 256, 56
      %3235 = vbcast.lane.b32.xlu0 %v3205, %s3234
      %v3236 = vpop.permute.xlu0 %3235
      %s3238 = sor.u32 256, 64
      %3239 = vbcast.lane.b32.xlu0 %v3205, %s3238
      %v3240 = vpop.permute.xlu0 %3239
      %s3242 = sor.u32 256, 72
      %3243 = vbcast.lane.b32.xlu0 %v3205, %s3242
      %v3244 = vpop.permute.xlu0 %3243
      %s3246 = sor.u32 256, 80
      %3247 = vbcast.lane.b32.xlu0 %v3205, %s3246
      %v3248 = vpop.permute.xlu0 %3247
      %s3250 = sor.u32 256, 88
      %3251 = vbcast.lane.b32.xlu0 %v3205, %s3250
      %v3252 = vpop.permute.xlu0 %3251
      %s3254 = sor.u32 256, 96
      %3255 = vbcast.lane.b32.xlu0 %v3205, %s3254
      %v3256 = vpop.permute.xlu0 %3255
      %s3258 = sor.u32 256, 104
      %3259 = vbcast.lane.b32.xlu0 %v3205, %s3258
      %v3260 = vpop.permute.xlu0 %3259
      %s3262 = sor.u32 256, 112
      %3263 = vbcast.lane.b32.xlu0 %v3205, %s3262
      %v3264 = vpop.permute.xlu0 %3263
      %s3266 = sor.u32 256, 120
      %3267 = vbcast.lane.b32.xlu0 %v3205, %s3266
      %v3268 = vpop.permute.xlu0 %3267
      %v3271 = vcombine.low %v453, %v455
      %v3272 = vcombine.high %v453, %v455
      %v3274 = vunpack.c.l.s4 1966171168
      %v3275 = vunpack.c.0.s8 %v3274
      %v3276 = vlaneseq
      %v3277 = vshrl.u32 %v3276, 7
      %v3278 = vsub.s32 %v3275, %v3277
      %v3279 = vrot.slane %v3271, %v3278
      %v3281 = vunpack.c.l.s4 1966171168
      %v3282 = vunpack.c.0.s8 %v3281
      %v3283 = vlaneseq
      %v3284 = vshrl.u32 %v3283, 7
      %v3285 = vsub.s32 %v3282, %v3284
      %v3286 = vrot.slane %v3272, %v3285
      %v3287 = vcombine.high %v3279, %v3279
      %v3288 = vcombine.high %v3286, %v3286
      %v3290 = vunpack.c.l.s4 1966171168
      %v3291 = vunpack.c.0.s8 %v3290
      %v3292 = vlaneseq
      %v3293 = vshrl.u32 %v3292, 7
      %v3294 = vsub.s32 %v3291, %v3293
      %v3295 = vrot.slane %v3279, %v3294
      %v3297 = vunpack.c.l.s4 1966171168
      %v3298 = vunpack.c.0.s8 %v3297
      %v3299 = vlaneseq
      %v3300 = vshrl.u32 %v3299, 7
      %v3301 = vsub.s32 %v3298, %v3300
      %v3302 = vrot.slane %v3286, %v3301
      %v3304 = vunpack.c.l.s4 1966171168
      %v3305 = vunpack.c.0.s8 %v3304
      %v3306 = vlaneseq
      %v3307 = vshrl.u32 %v3306, 7
      %v3308 = vsub.s32 %v3305, %v3307
      %v3309 = vrot.slane %v3287, %v3308
      %v3311 = vunpack.c.l.s4 1966171168
      %v3312 = vunpack.c.0.s8 %v3311
      %v3313 = vlaneseq
      %v3314 = vshrl.u32 %v3313, 7
      %v3315 = vsub.s32 %v3312, %v3314
      %v3316 = vrot.slane %v3288, %v3315
      %v3317 = vcombine.high %v3295, %v3295
      %v3318 = vcombine.high %v3302, %v3302
      %v3319 = vcombine.high %v3309, %v3309
      %v3320 = vcombine.high %v3316, %v3316
      %v3321 = vlaneseq
      %v3322 = vshrl.u32 %v3321, 7
      %v3323 = vsub.s32 0, %v3322
      %v3324 = vrot.slane %v3295, %v3323
      %v3325 = vlaneseq
      %v3326 = vshrl.u32 %v3325, 7
      %v3327 = vsub.s32 1, %v3326
      %v3328 = vrot.slane %v3295, %v3327
      %v3329 = vlaneseq
      %v3330 = vshrl.u32 %v3329, 7
      %v3331 = vsub.s32 0, %v3330
      %v3332 = vrot.slane %v3309, %v3331
      %v3333 = vlaneseq
      %v3334 = vshrl.u32 %v3333, 7
      %v3335 = vsub.s32 1, %v3334
      %v3336 = vrot.slane %v3309, %v3335
      %v3337 = vlaneseq
      %v3338 = vshrl.u32 %v3337, 7
      %v3339 = vsub.s32 0, %v3338
      %v3340 = vrot.slane %v3317, %v3339
      %v3341 = vlaneseq
      %v3342 = vshrl.u32 %v3341, 7
      %v3343 = vsub.s32 1, %v3342
      %v3344 = vrot.slane %v3317, %v3343
      %v3345 = vlaneseq
      %v3346 = vshrl.u32 %v3345, 7
      %v3347 = vsub.s32 0, %v3346
      %v3348 = vrot.slane %v3319, %v3347
      %v3349 = vlaneseq
      %v3350 = vshrl.u32 %v3349, 7
      %v3351 = vsub.s32 1, %v3350
      %v3352 = vrot.slane %v3319, %v3351
      %v3353 = vlaneseq
      %v3354 = vshrl.u32 %v3353, 7
      %v3355 = vsub.s32 0, %v3354
      %v3356 = vrot.slane %v3302, %v3355
      %v3357 = vlaneseq
      %v3358 = vshrl.u32 %v3357, 7
      %v3359 = vsub.s32 1, %v3358
      %v3360 = vrot.slane %v3302, %v3359
      %v3361 = vlaneseq
      %v3362 = vshrl.u32 %v3361, 7
      %v3363 = vsub.s32 0, %v3362
      %v3364 = vrot.slane %v3316, %v3363
      %v3365 = vlaneseq
      %v3366 = vshrl.u32 %v3365, 7
      %v3367 = vsub.s32 1, %v3366
      %v3368 = vrot.slane %v3316, %v3367
      %v3369 = vlaneseq
      %v3370 = vshrl.u32 %v3369, 7
      %v3371 = vsub.s32 0, %v3370
      %v3372 = vrot.slane %v3318, %v3371
      %v3373 = vlaneseq
      %v3374 = vshrl.u32 %v3373, 7
      %v3375 = vsub.s32 1, %v3374
      %v3376 = vrot.slane %v3318, %v3375
      %v3377 = vlaneseq
      %v3378 = vshrl.u32 %v3377, 7
      %v3379 = vsub.s32 0, %v3378
      %v3380 = vrot.slane %v3320, %v3379
      %v3381 = vlaneseq
      %v3382 = vshrl.u32 %v3381, 7
      %v3383 = vsub.s32 1, %v3382
      %v3384 = vrot.slane %v3320, %v3383
      %v3401 = vmul.f32 %v2203, %v3324
      %v3402 = vmul.f32 %v2203, %v3328
      %v3403 = vmul.f32 %v2207, %v3324
      %v3404 = vmul.f32 %v2207, %v3328
      %v3405 = vmul.f32 %v2211, %v3324
      %v3406 = vmul.f32 %v2211, %v3328
      %v3407 = vmul.f32 %v2215, %v3324
      %v3408 = vmul.f32 %v2215, %v3328
      %v3409 = vmul.f32 %v2219, %v3324
      %v3410 = vmul.f32 %v2219, %v3328
      %v3411 = vmul.f32 %v2223, %v3324
      %v3412 = vmul.f32 %v2223, %v3328
      %v3413 = vmul.f32 %v2227, %v3324
      %v3414 = vmul.f32 %v2227, %v3328
      %v3415 = vmul.f32 %v2231, %v3324
      %v3416 = vmul.f32 %v2231, %v3328
      %v3417 = vmul.f32 %v2235, %v3324
      %v3418 = vmul.f32 %v2235, %v3328
      %v3419 = vmul.f32 %v2239, %v3324
      %v3420 = vmul.f32 %v2239, %v3328
      %v3421 = vmul.f32 %v2243, %v3324
      %v3422 = vmul.f32 %v2243, %v3328
      %v3423 = vmul.f32 %v2247, %v3324
      %v3424 = vmul.f32 %v2247, %v3328
      %v3425 = vmul.f32 %v2251, %v3324
      %v3426 = vmul.f32 %v2251, %v3328
      %v3427 = vmul.f32 %v2255, %v3324
      %v3428 = vmul.f32 %v2255, %v3328
      %v3429 = vmul.f32 %v2259, %v3324
      %v3430 = vmul.f32 %v2259, %v3328
      %v3431 = vmul.f32 %v2263, %v3324
      %v3432 = vmul.f32 %v2263, %v3328
      %v3433 = vmul.f32 %v2270, %v3324
      %v3434 = vmul.f32 %v2270, %v3328
      %v3435 = vmul.f32 %v2274, %v3324
      %v3436 = vmul.f32 %v2274, %v3328
      %v3437 = vmul.f32 %v2278, %v3324
      %v3438 = vmul.f32 %v2278, %v3328
      %v3439 = vmul.f32 %v2282, %v3324
      %v3440 = vmul.f32 %v2282, %v3328
      %v3441 = vmul.f32 %v2286, %v3324
      %v3442 = vmul.f32 %v2286, %v3328
      %v3443 = vmul.f32 %v2290, %v3324
      %v3444 = vmul.f32 %v2290, %v3328
      %v3445 = vmul.f32 %v2294, %v3324
      %v3446 = vmul.f32 %v2294, %v3328
      %v3447 = vmul.f32 %v2298, %v3324
      %v3448 = vmul.f32 %v2298, %v3328
      %v3449 = vmul.f32 %v2302, %v3324
      %v3450 = vmul.f32 %v2302, %v3328
      %v3451 = vmul.f32 %v2306, %v3324
      %v3452 = vmul.f32 %v2306, %v3328
      %v3453 = vmul.f32 %v2310, %v3324
      %v3454 = vmul.f32 %v2310, %v3328
      %v3455 = vmul.f32 %v2314, %v3324
      %v3456 = vmul.f32 %v2314, %v3328
      %v3457 = vmul.f32 %v2318, %v3324
      %v3458 = vmul.f32 %v2318, %v3328
      %v3459 = vmul.f32 %v2322, %v3324
      %v3460 = vmul.f32 %v2322, %v3328
      %v3461 = vmul.f32 %v2326, %v3324
      %v3462 = vmul.f32 %v2326, %v3328
      %v3463 = vmul.f32 %v2330, %v3324
      %v3464 = vmul.f32 %v2330, %v3328
      %v3465 = vmul.f32 %v2337, %v3332
      %v3466 = vmul.f32 %v2337, %v3336
      %v3467 = vmul.f32 %v2341, %v3332
      %v3468 = vmul.f32 %v2341, %v3336
      %v3469 = vmul.f32 %v2345, %v3332
      %v3470 = vmul.f32 %v2345, %v3336
      %v3471 = vmul.f32 %v2349, %v3332
      %v3472 = vmul.f32 %v2349, %v3336
      %v3473 = vmul.f32 %v2353, %v3332
      %v3474 = vmul.f32 %v2353, %v3336
      %v3475 = vmul.f32 %v2357, %v3332
      %v3476 = vmul.f32 %v2357, %v3336
      %v3477 = vmul.f32 %v2361, %v3332
      %v3478 = vmul.f32 %v2361, %v3336
      %v3479 = vmul.f32 %v2365, %v3332
      %v3480 = vmul.f32 %v2365, %v3336
      %v3481 = vmul.f32 %v2369, %v3332
      %v3482 = vmul.f32 %v2369, %v3336
      %v3483 = vmul.f32 %v2373, %v3332
      %v3484 = vmul.f32 %v2373, %v3336
      %v3485 = vmul.f32 %v2377, %v3332
      %v3486 = vmul.f32 %v2377, %v3336
      %v3487 = vmul.f32 %v2381, %v3332
      %v3488 = vmul.f32 %v2381, %v3336
      %v3489 = vmul.f32 %v2385, %v3332
      %v3490 = vmul.f32 %v2385, %v3336
      %v3491 = vmul.f32 %v2389, %v3332
      %v3492 = vmul.f32 %v2389, %v3336
      %v3493 = vmul.f32 %v2393, %v3332
      %v3494 = vmul.f32 %v2393, %v3336
      %v3495 = vmul.f32 %v2397, %v3332
      %v3496 = vmul.f32 %v2397, %v3336
      %v3497 = vmul.f32 %v2404, %v3332
      %v3498 = vmul.f32 %v2404, %v3336
      %v3499 = vmul.f32 %v2408, %v3332
      %v3500 = vmul.f32 %v2408, %v3336
      %v3501 = vmul.f32 %v2412, %v3332
      %v3502 = vmul.f32 %v2412, %v3336
      %v3503 = vmul.f32 %v2416, %v3332
      %v3504 = vmul.f32 %v2416, %v3336
      %v3505 = vmul.f32 %v2420, %v3332
      %v3506 = vmul.f32 %v2420, %v3336
      %v3507 = vmul.f32 %v2424, %v3332
      %v3508 = vmul.f32 %v2424, %v3336
      %v3509 = vmul.f32 %v2428, %v3332
      %v3510 = vmul.f32 %v2428, %v3336
      %v3511 = vmul.f32 %v2432, %v3332
      %v3512 = vmul.f32 %v2432, %v3336
      %v3513 = vmul.f32 %v2436, %v3332
      %v3514 = vmul.f32 %v2436, %v3336
      %v3515 = vmul.f32 %v2440, %v3332
      %v3516 = vmul.f32 %v2440, %v3336
      %v3517 = vmul.f32 %v2444, %v3332
      %v3518 = vmul.f32 %v2444, %v3336
      %v3519 = vmul.f32 %v2448, %v3332
      %v3520 = vmul.f32 %v2448, %v3336
      %v3521 = vmul.f32 %v2452, %v3332
      %v3522 = vmul.f32 %v2452, %v3336
      %v3523 = vmul.f32 %v2456, %v3332
      %v3524 = vmul.f32 %v2456, %v3336
      %v3525 = vmul.f32 %v2460, %v3332
      %v3526 = vmul.f32 %v2460, %v3336
      %v3527 = vmul.f32 %v2464, %v3332
      %v3528 = vmul.f32 %v2464, %v3336
      %v3529 = vmul.f32 %v2471, %v3340
      %v3530 = vmul.f32 %v2471, %v3344
      %v3531 = vmul.f32 %v2475, %v3340
      %v3532 = vmul.f32 %v2475, %v3344
      %v3533 = vmul.f32 %v2479, %v3340
      %v3534 = vmul.f32 %v2479, %v3344
      %v3535 = vmul.f32 %v2483, %v3340
      %v3536 = vmul.f32 %v2483, %v3344
      %v3537 = vmul.f32 %v2487, %v3340
      %v3538 = vmul.f32 %v2487, %v3344
      %v3539 = vmul.f32 %v2491, %v3340
      %v3540 = vmul.f32 %v2491, %v3344
      %v3541 = vmul.f32 %v2495, %v3340
      %v3542 = vmul.f32 %v2495, %v3344
      %v3543 = vmul.f32 %v2499, %v3340
      %v3544 = vmul.f32 %v2499, %v3344
      %v3545 = vmul.f32 %v2503, %v3340
      %v3546 = vmul.f32 %v2503, %v3344
      %v3547 = vmul.f32 %v2507, %v3340
      %v3548 = vmul.f32 %v2507, %v3344
      %v3549 = vmul.f32 %v2511, %v3340
      %v3550 = vmul.f32 %v2511, %v3344
      %v3551 = vmul.f32 %v2515, %v3340
      %v3552 = vmul.f32 %v2515, %v3344
      %v3553 = vmul.f32 %v2519, %v3340
      %v3554 = vmul.f32 %v2519, %v3344
      %v3555 = vmul.f32 %v2523, %v3340
      %v3556 = vmul.f32 %v2523, %v3344
      %v3557 = vmul.f32 %v2527, %v3340
      %v3558 = vmul.f32 %v2527, %v3344
      %v3559 = vmul.f32 %v2531, %v3340
      %v3560 = vmul.f32 %v2531, %v3344
      %v3561 = vmul.f32 %v2538, %v3340
      %v3562 = vmul.f32 %v2538, %v3344
      %v3563 = vmul.f32 %v2542, %v3340
      %v3564 = vmul.f32 %v2542, %v3344
      %v3565 = vmul.f32 %v2546, %v3340
      %v3566 = vmul.f32 %v2546, %v3344
      %v3567 = vmul.f32 %v2550, %v3340
      %v3568 = vmul.f32 %v2550, %v3344
      %v3569 = vmul.f32 %v2554, %v3340
      %v3570 = vmul.f32 %v2554, %v3344
      %v3571 = vmul.f32 %v2558, %v3340
      %v3572 = vmul.f32 %v2558, %v3344
      %v3573 = vmul.f32 %v2562, %v3340
      %v3574 = vmul.f32 %v2562, %v3344
      %v3575 = vmul.f32 %v2566, %v3340
      %v3576 = vmul.f32 %v2566, %v3344
      %v3577 = vmul.f32 %v2570, %v3340
      %v3578 = vmul.f32 %v2570, %v3344
      %v3579 = vmul.f32 %v2574, %v3340
      %v3580 = vmul.f32 %v2574, %v3344
      %v3581 = vmul.f32 %v2578, %v3340
      %v3582 = vmul.f32 %v2578, %v3344
      %v3583 = vmul.f32 %v2582, %v3340
      %v3584 = vmul.f32 %v2582, %v3344
      %v3585 = vmul.f32 %v2586, %v3340
      %v3586 = vmul.f32 %v2586, %v3344
      %v3587 = vmul.f32 %v2590, %v3340
      %v3588 = vmul.f32 %v2590, %v3344
      %v3589 = vmul.f32 %v2594, %v3340
      %v3590 = vmul.f32 %v2594, %v3344
      %v3591 = vmul.f32 %v2598, %v3340
      %v3592 = vmul.f32 %v2598, %v3344
      %v3593 = vmul.f32 %v2605, %v3348
      %v3594 = vmul.f32 %v2605, %v3352
      %v3595 = vmul.f32 %v2609, %v3348
      %v3596 = vmul.f32 %v2609, %v3352
      %v3597 = vmul.f32 %v2613, %v3348
      %v3598 = vmul.f32 %v2613, %v3352
      %v3599 = vmul.f32 %v2617, %v3348
      %v3600 = vmul.f32 %v2617, %v3352
      %v3601 = vmul.f32 %v2621, %v3348
      %v3602 = vmul.f32 %v2621, %v3352
      %v3603 = vmul.f32 %v2625, %v3348
      %v3604 = vmul.f32 %v2625, %v3352
      %v3605 = vmul.f32 %v2629, %v3348
      %v3606 = vmul.f32 %v2629, %v3352
      %v3607 = vmul.f32 %v2633, %v3348
      %v3608 = vmul.f32 %v2633, %v3352
      %v3609 = vmul.f32 %v2637, %v3348
      %v3610 = vmul.f32 %v2637, %v3352
      %v3611 = vmul.f32 %v2641, %v3348
      %v3612 = vmul.f32 %v2641, %v3352
      %v3613 = vmul.f32 %v2645, %v3348
      %v3614 = vmul.f32 %v2645, %v3352
      %v3615 = vmul.f32 %v2649, %v3348
      %v3616 = vmul.f32 %v2649, %v3352
      %v3617 = vmul.f32 %v2653, %v3348
      %v3618 = vmul.f32 %v2653, %v3352
      %v3619 = vmul.f32 %v2657, %v3348
      %v3620 = vmul.f32 %v2657, %v3352
      %v3621 = vmul.f32 %v2661, %v3348
      %v3622 = vmul.f32 %v2661, %v3352
      %v3623 = vmul.f32 %v2665, %v3348
      %v3624 = vmul.f32 %v2665, %v3352
      %v3625 = vmul.f32 %v2672, %v3348
      %v3626 = vmul.f32 %v2672, %v3352
      %v3627 = vmul.f32 %v2676, %v3348
      %v3628 = vmul.f32 %v2676, %v3352
      %v3629 = vmul.f32 %v2680, %v3348
      %v3630 = vmul.f32 %v2680, %v3352
      %v3631 = vmul.f32 %v2684, %v3348
      %v3632 = vmul.f32 %v2684, %v3352
      %v3633 = vmul.f32 %v2688, %v3348
      %v3634 = vmul.f32 %v2688, %v3352
      %v3635 = vmul.f32 %v2692, %v3348
      %v3636 = vmul.f32 %v2692, %v3352
      %v3637 = vmul.f32 %v2696, %v3348
      %v3638 = vmul.f32 %v2696, %v3352
      %v3639 = vmul.f32 %v2700, %v3348
      %v3640 = vmul.f32 %v2700, %v3352
      %v3641 = vmul.f32 %v2704, %v3348
      %v3642 = vmul.f32 %v2704, %v3352
      %v3643 = vmul.f32 %v2708, %v3348
      %v3644 = vmul.f32 %v2708, %v3352
      %v3645 = vmul.f32 %v2712, %v3348
      %v3646 = vmul.f32 %v2712, %v3352
      %v3647 = vmul.f32 %v2716, %v3348
      %v3648 = vmul.f32 %v2716, %v3352
      %v3649 = vmul.f32 %v2720, %v3348
      %v3650 = vmul.f32 %v2720, %v3352
      %v3651 = vmul.f32 %v2724, %v3348
      %v3652 = vmul.f32 %v2724, %v3352
      %v3653 = vmul.f32 %v2728, %v3348
      %v3654 = vmul.f32 %v2728, %v3352
      %v3655 = vmul.f32 %v2732, %v3348
      %v3656 = vmul.f32 %v2732, %v3352
      %v3657 = vmul.f32 %v2739, %v3356
      %v3658 = vmul.f32 %v2739, %v3360
      %v3659 = vmul.f32 %v2743, %v3356
      %v3660 = vmul.f32 %v2743, %v3360
      %v3661 = vmul.f32 %v2747, %v3356
      %v3662 = vmul.f32 %v2747, %v3360
      %v3663 = vmul.f32 %v2751, %v3356
      %v3664 = vmul.f32 %v2751, %v3360
      %v3665 = vmul.f32 %v2755, %v3356
      %v3666 = vmul.f32 %v2755, %v3360
      %v3667 = vmul.f32 %v2759, %v3356
      %v3668 = vmul.f32 %v2759, %v3360
      %v3669 = vmul.f32 %v2763, %v3356
      %v3670 = vmul.f32 %v2763, %v3360
      %v3671 = vmul.f32 %v2767, %v3356
      %v3672 = vmul.f32 %v2767, %v3360
      %v3673 = vmul.f32 %v2771, %v3356
      %v3674 = vmul.f32 %v2771, %v3360
      %v3675 = vmul.f32 %v2775, %v3356
      %v3676 = vmul.f32 %v2775, %v3360
      %v3677 = vmul.f32 %v2779, %v3356
      %v3678 = vmul.f32 %v2779, %v3360
      %v3679 = vmul.f32 %v2783, %v3356
      %v3680 = vmul.f32 %v2783, %v3360
      %v3681 = vmul.f32 %v2787, %v3356
      %v3682 = vmul.f32 %v2787, %v3360
      %v3683 = vmul.f32 %v2791, %v3356
      %v3684 = vmul.f32 %v2791, %v3360
      %v3685 = vmul.f32 %v2795, %v3356
      %v3686 = vmul.f32 %v2795, %v3360
      %v3687 = vmul.f32 %v2799, %v3356
      %v3688 = vmul.f32 %v2799, %v3360
      %v3689 = vmul.f32 %v2806, %v3356
      %v3690 = vmul.f32 %v2806, %v3360
      %v3691 = vmul.f32 %v2810, %v3356
      %v3692 = vmul.f32 %v2810, %v3360
      %v3693 = vmul.f32 %v2814, %v3356
      %v3694 = vmul.f32 %v2814, %v3360
      %v3695 = vmul.f32 %v2818, %v3356
      %v3696 = vmul.f32 %v2818, %v3360
      %v3697 = vmul.f32 %v2822, %v3356
      %v3698 = vmul.f32 %v2822, %v3360
      %v3699 = vmul.f32 %v2826, %v3356
      %v3700 = vmul.f32 %v2826, %v3360
      %v3701 = vmul.f32 %v2830, %v3356
      %v3702 = vmul.f32 %v2830, %v3360
      %v3703 = vmul.f32 %v2834, %v3356
      %v3704 = vmul.f32 %v2834, %v3360
      %v3705 = vmul.f32 %v2838, %v3356
      %v3706 = vmul.f32 %v2838, %v3360
      %v3707 = vmul.f32 %v2842, %v3356
      %v3708 = vmul.f32 %v2842, %v3360
      %v3709 = vmul.f32 %v2846, %v3356
      %v3710 = vmul.f32 %v2846, %v3360
      %v3711 = vmul.f32 %v2850, %v3356
      %v3712 = vmul.f32 %v2850, %v3360
      %v3713 = vmul.f32 %v2854, %v3356
      %v3714 = vmul.f32 %v2854, %v3360
      %v3715 = vmul.f32 %v2858, %v3356
      %v3716 = vmul.f32 %v2858, %v3360
      %v3717 = vmul.f32 %v2862, %v3356
      %v3718 = vmul.f32 %v2862, %v3360
      %v3719 = vmul.f32 %v2866, %v3356
      %v3720 = vmul.f32 %v2866, %v3360
      %v3721 = vmul.f32 %v2873, %v3364
      %v3722 = vmul.f32 %v2873, %v3368
      %v3723 = vmul.f32 %v2877, %v3364
      %v3724 = vmul.f32 %v2877, %v3368
      %v3725 = vmul.f32 %v2881, %v3364
      %v3726 = vmul.f32 %v2881, %v3368
      %v3727 = vmul.f32 %v2885, %v3364
      %v3728 = vmul.f32 %v2885, %v3368
      %v3729 = vmul.f32 %v2889, %v3364
      %v3730 = vmul.f32 %v2889, %v3368
      %v3731 = vmul.f32 %v2893, %v3364
      %v3732 = vmul.f32 %v2893, %v3368
      %v3733 = vmul.f32 %v2897, %v3364
      %v3734 = vmul.f32 %v2897, %v3368
      %v3735 = vmul.f32 %v2901, %v3364
      %v3736 = vmul.f32 %v2901, %v3368
      %v3737 = vmul.f32 %v2905, %v3364
      %v3738 = vmul.f32 %v2905, %v3368
      %v3739 = vmul.f32 %v2909, %v3364
      %v3740 = vmul.f32 %v2909, %v3368
      %v3741 = vmul.f32 %v2913, %v3364
      %v3742 = vmul.f32 %v2913, %v3368
      %v3743 = vmul.f32 %v2917, %v3364
      %v3744 = vmul.f32 %v2917, %v3368
      %v3745 = vmul.f32 %v2921, %v3364
      %v3746 = vmul.f32 %v2921, %v3368
      %v3747 = vmul.f32 %v2925, %v3364
      %v3748 = vmul.f32 %v2925, %v3368
      %v3749 = vmul.f32 %v2929, %v3364
      %v3750 = vmul.f32 %v2929, %v3368
      %v3751 = vmul.f32 %v2933, %v3364
      %v3752 = vmul.f32 %v2933, %v3368
      %v3753 = vmul.f32 %v2940, %v3364
      %v3754 = vmul.f32 %v2940, %v3368
      %v3755 = vmul.f32 %v2944, %v3364
      %v3756 = vmul.f32 %v2944, %v3368
      %v3757 = vmul.f32 %v2948, %v3364
      %v3758 = vmul.f32 %v2948, %v3368
      %v3759 = vmul.f32 %v2952, %v3364
      %v3760 = vmul.f32 %v2952, %v3368
      %v3761 = vmul.f32 %v2956, %v3364
      %v3762 = vmul.f32 %v2956, %v3368
      %v3763 = vmul.f32 %v2960, %v3364
      %v3764 = vmul.f32 %v2960, %v3368
      %v3765 = vmul.f32 %v2964, %v3364
      %v3766 = vmul.f32 %v2964, %v3368
      %v3767 = vmul.f32 %v2968, %v3364
      %v3768 = vmul.f32 %v2968, %v3368
      %v3769 = vmul.f32 %v2972, %v3364
      %v3770 = vmul.f32 %v2972, %v3368
      %v3771 = vmul.f32 %v2976, %v3364
      %v3772 = vmul.f32 %v2976, %v3368
      %v3773 = vmul.f32 %v2980, %v3364
      %v3774 = vmul.f32 %v2980, %v3368
      %v3775 = vmul.f32 %v2984, %v3364
      %v3776 = vmul.f32 %v2984, %v3368
      %v3777 = vmul.f32 %v2988, %v3364
      %v3778 = vmul.f32 %v2988, %v3368
      %v3779 = vmul.f32 %v2992, %v3364
      %v3780 = vmul.f32 %v2992, %v3368
      %v3781 = vmul.f32 %v2996, %v3364
      %v3782 = vmul.f32 %v2996, %v3368
      %v3783 = vmul.f32 %v3000, %v3364
      %v3784 = vmul.f32 %v3000, %v3368
      %v3785 = vmul.f32 %v3007, %v3372
      %v3786 = vmul.f32 %v3007, %v3376
      %v3787 = vmul.f32 %v3011, %v3372
      %v3788 = vmul.f32 %v3011, %v3376
      %v3789 = vmul.f32 %v3015, %v3372
      %v3790 = vmul.f32 %v3015, %v3376
      %v3791 = vmul.f32 %v3019, %v3372
      %v3792 = vmul.f32 %v3019, %v3376
      %v3793 = vmul.f32 %v3023, %v3372
      %v3794 = vmul.f32 %v3023, %v3376
      %v3795 = vmul.f32 %v3027, %v3372
      %v3796 = vmul.f32 %v3027, %v3376
      %v3797 = vmul.f32 %v3031, %v3372
      %v3798 = vmul.f32 %v3031, %v3376
      %v3799 = vmul.f32 %v3035, %v3372
      %v3800 = vmul.f32 %v3035, %v3376
      %v3801 = vmul.f32 %v3039, %v3372
      %v3802 = vmul.f32 %v3039, %v3376
      %v3803 = vmul.f32 %v3043, %v3372
      %v3804 = vmul.f32 %v3043, %v3376
      %v3805 = vmul.f32 %v3047, %v3372
      %v3806 = vmul.f32 %v3047, %v3376
      %v3807 = vmul.f32 %v3051, %v3372
      %v3808 = vmul.f32 %v3051, %v3376
      %v3809 = vmul.f32 %v3055, %v3372
      %v3810 = vmul.f32 %v3055, %v3376
      %v3811 = vmul.f32 %v3059, %v3372
      %v3812 = vmul.f32 %v3059, %v3376
      %v3813 = vmul.f32 %v3063, %v3372
      %v3814 = vmul.f32 %v3063, %v3376
      %v3815 = vmul.f32 %v3067, %v3372
      %v3816 = vmul.f32 %v3067, %v3376
      %v3817 = vmul.f32 %v3074, %v3372
      %v3818 = vmul.f32 %v3074, %v3376
      %v3819 = vmul.f32 %v3078, %v3372
      %v3820 = vmul.f32 %v3078, %v3376
      %v3821 = vmul.f32 %v3082, %v3372
      %v3822 = vmul.f32 %v3082, %v3376
      %v3823 = vmul.f32 %v3086, %v3372
      %v3824 = vmul.f32 %v3086, %v3376
      %v3825 = vmul.f32 %v3090, %v3372
      %v3826 = vmul.f32 %v3090, %v3376
      %v3827 = vmul.f32 %v3094, %v3372
      %v3828 = vmul.f32 %v3094, %v3376
      %v3829 = vmul.f32 %v3098, %v3372
      %v3830 = vmul.f32 %v3098, %v3376
      %v3831 = vmul.f32 %v3102, %v3372
      %v3832 = vmul.f32 %v3102, %v3376
      %v3833 = vmul.f32 %v3106, %v3372
      %v3834 = vmul.f32 %v3106, %v3376
      %v3835 = vmul.f32 %v3110, %v3372
      %v3836 = vmul.f32 %v3110, %v3376
      %v3837 = vmul.f32 %v3114, %v3372
      %v3838 = vmul.f32 %v3114, %v3376
      %v3839 = vmul.f32 %v3118, %v3372
      %v3840 = vmul.f32 %v3118, %v3376
      %v3841 = vmul.f32 %v3122, %v3372
      %v3842 = vmul.f32 %v3122, %v3376
      %v3843 = vmul.f32 %v3126, %v3372
      %v3844 = vmul.f32 %v3126, %v3376
      %v3845 = vmul.f32 %v3130, %v3372
      %v3846 = vmul.f32 %v3130, %v3376
      %v3847 = vmul.f32 %v3134, %v3372
      %v3848 = vmul.f32 %v3134, %v3376
      %v3849 = vmul.f32 %v3141, %v3380
      %v3850 = vmul.f32 %v3141, %v3384
      %v3851 = vmul.f32 %v3145, %v3380
      %v3852 = vmul.f32 %v3145, %v3384
      %v3853 = vmul.f32 %v3149, %v3380
      %v3854 = vmul.f32 %v3149, %v3384
      %v3855 = vmul.f32 %v3153, %v3380
      %v3856 = vmul.f32 %v3153, %v3384
      %v3857 = vmul.f32 %v3157, %v3380
      %v3858 = vmul.f32 %v3157, %v3384
      %v3859 = vmul.f32 %v3161, %v3380
      %v3860 = vmul.f32 %v3161, %v3384
      %v3861 = vmul.f32 %v3165, %v3380
      %v3862 = vmul.f32 %v3165, %v3384
      %v3863 = vmul.f32 %v3169, %v3380
      %v3864 = vmul.f32 %v3169, %v3384
      %v3865 = vmul.f32 %v3173, %v3380
      %v3866 = vmul.f32 %v3173, %v3384
      %v3867 = vmul.f32 %v3177, %v3380
      %v3868 = vmul.f32 %v3177, %v3384
      %v3869 = vmul.f32 %v3181, %v3380
      %v3870 = vmul.f32 %v3181, %v3384
      %v3871 = vmul.f32 %v3185, %v3380
      %v3872 = vmul.f32 %v3185, %v3384
      %v3873 = vmul.f32 %v3189, %v3380
      %v3874 = vmul.f32 %v3189, %v3384
      %v3875 = vmul.f32 %v3193, %v3380
      %v3876 = vmul.f32 %v3193, %v3384
      %v3877 = vmul.f32 %v3197, %v3380
      %v3878 = vmul.f32 %v3197, %v3384
      %v3879 = vmul.f32 %v3201, %v3380
      %v3880 = vmul.f32 %v3201, %v3384
      %v3881 = vmul.f32 %v3208, %v3380
      %v3882 = vmul.f32 %v3208, %v3384
      %v3883 = vmul.f32 %v3212, %v3380
      %v3884 = vmul.f32 %v3212, %v3384
      %v3885 = vmul.f32 %v3216, %v3380
      %v3886 = vmul.f32 %v3216, %v3384
      %v3887 = vmul.f32 %v3220, %v3380
      %v3888 = vmul.f32 %v3220, %v3384
      %v3889 = vmul.f32 %v3224, %v3380
      %v3890 = vmul.f32 %v3224, %v3384
      %v3891 = vmul.f32 %v3228, %v3380
      %v3892 = vmul.f32 %v3228, %v3384
      %v3893 = vmul.f32 %v3232, %v3380
      %v3894 = vmul.f32 %v3232, %v3384
      %v3895 = vmul.f32 %v3236, %v3380
      %v3896 = vmul.f32 %v3236, %v3384
      %v3897 = vmul.f32 %v3240, %v3380
      %v3898 = vmul.f32 %v3240, %v3384
      %v3899 = vmul.f32 %v3244, %v3380
      %v3900 = vmul.f32 %v3244, %v3384
      %v3901 = vmul.f32 %v3248, %v3380
      %v3902 = vmul.f32 %v3248, %v3384
      %v3903 = vmul.f32 %v3252, %v3380
      %v3904 = vmul.f32 %v3252, %v3384
      %v3905 = vmul.f32 %v3256, %v3380
      %v3906 = vmul.f32 %v3256, %v3384
      %v3907 = vmul.f32 %v3260, %v3380
      %v3908 = vmul.f32 %v3260, %v3384
      %v3909 = vmul.f32 %v3264, %v3380
      %v3910 = vmul.f32 %v3264, %v3384
      %v3911 = vmul.f32 %v3268, %v3380
      %v3912 = vmul.f32 %v3268, %v3384
      %v3913 = vadd.f32 %v1685, %v3401
      %v3914 = vadd.f32 %v1686, %v3402
      %v3915 = vadd.f32 %v1687, %v3403
      %v3916 = vadd.f32 %v1688, %v3404
      %v3917 = vadd.f32 %v1689, %v3405
      %v3918 = vadd.f32 %v1690, %v3406
      %v3919 = vadd.f32 %v1691, %v3407
      %v3920 = vadd.f32 %v1692, %v3408
      %v3921 = vadd.f32 %v1693, %v3409
      %v3922 = vadd.f32 %v1694, %v3410
      %v3923 = vadd.f32 %v1695, %v3411
      %v3924 = vadd.f32 %v1696, %v3412
      %v3925 = vadd.f32 %v1697, %v3413
      %v3926 = vadd.f32 %v1698, %v3414
      %v3927 = vadd.f32 %v1699, %v3415
      %v3928 = vadd.f32 %v1700, %v3416
      %v3929 = vadd.f32 %v1701, %v3417
      %v3930 = vadd.f32 %v1702, %v3418
      %v3931 = vadd.f32 %v1703, %v3419
      %v3932 = vadd.f32 %v1704, %v3420
      %v3933 = vadd.f32 %v1705, %v3421
      %v3934 = vadd.f32 %v1706, %v3422
      %v3935 = vadd.f32 %v1707, %v3423
      %v3936 = vadd.f32 %v1708, %v3424
      %v3937 = vadd.f32 %v1709, %v3425
      %v3938 = vadd.f32 %v1710, %v3426
      %v3939 = vadd.f32 %v1711, %v3427
      %v3940 = vadd.f32 %v1712, %v3428
      %v3941 = vadd.f32 %v1713, %v3429
      %v3942 = vadd.f32 %v1714, %v3430
      %v3943 = vadd.f32 %v1715, %v3431
      %v3944 = vadd.f32 %v1716, %v3432
      %v3945 = vadd.f32 %v1717, %v3433
      %v3946 = vadd.f32 %v1718, %v3434
      %v3947 = vadd.f32 %v1719, %v3435
      %v3948 = vadd.f32 %v1720, %v3436
      %v3949 = vadd.f32 %v1721, %v3437
      %v3950 = vadd.f32 %v1722, %v3438
      %v3951 = vadd.f32 %v1723, %v3439
      %v3952 = vadd.f32 %v1724, %v3440
      %v3953 = vadd.f32 %v1725, %v3441
      %v3954 = vadd.f32 %v1726, %v3442
      %v3955 = vadd.f32 %v1727, %v3443
      %v3956 = vadd.f32 %v1728, %v3444
      %v3957 = vadd.f32 %v1729, %v3445
      %v3958 = vadd.f32 %v1730, %v3446
      %v3959 = vadd.f32 %v1731, %v3447
      %v3960 = vadd.f32 %v1732, %v3448
      %v3961 = vadd.f32 %v1733, %v3449
      %v3962 = vadd.f32 %v1734, %v3450
      %v3963 = vadd.f32 %v1735, %v3451
      %v3964 = vadd.f32 %v1736, %v3452
      %v3965 = vadd.f32 %v1737, %v3453
      %v3966 = vadd.f32 %v1738, %v3454
      %v3967 = vadd.f32 %v1739, %v3455
      %v3968 = vadd.f32 %v1740, %v3456
      %v3969 = vadd.f32 %v1741, %v3457
      %v3970 = vadd.f32 %v1742, %v3458
      %v3971 = vadd.f32 %v1743, %v3459
      %v3972 = vadd.f32 %v1744, %v3460
      %v3973 = vadd.f32 %v1745, %v3461
      %v3974 = vadd.f32 %v1746, %v3462
      %v3975 = vadd.f32 %v1747, %v3463
      %v3976 = vadd.f32 %v1748, %v3464
      %v3977 = vadd.f32 %v1749, %v3465
      %v3978 = vadd.f32 %v1750, %v3466
      %v3979 = vadd.f32 %v1751, %v3467
      %v3980 = vadd.f32 %v1752, %v3468
      %v3981 = vadd.f32 %v1753, %v3469
      %v3982 = vadd.f32 %v1754, %v3470
      %v3983 = vadd.f32 %v1755, %v3471
      %v3984 = vadd.f32 %v1756, %v3472
      %v3985 = vadd.f32 %v1757, %v3473
      %v3986 = vadd.f32 %v1758, %v3474
      %v3987 = vadd.f32 %v1759, %v3475
      %v3988 = vadd.f32 %v1760, %v3476
      %v3989 = vadd.f32 %v1761, %v3477
      %v3990 = vadd.f32 %v1762, %v3478
      %v3991 = vadd.f32 %v1763, %v3479
      %v3992 = vadd.f32 %v1764, %v3480
      %v3993 = vadd.f32 %v1765, %v3481
      %v3994 = vadd.f32 %v1766, %v3482
      %v3995 = vadd.f32 %v1767, %v3483
      %v3996 = vadd.f32 %v1768, %v3484
      %v3997 = vadd.f32 %v1769, %v3485
      %v3998 = vadd.f32 %v1770, %v3486
      %v3999 = vadd.f32 %v1771, %v3487
      %v4000 = vadd.f32 %v1772, %v3488
      %v4001 = vadd.f32 %v1773, %v3489
      %v4002 = vadd.f32 %v1774, %v3490
      %v4003 = vadd.f32 %v1775, %v3491
      %v4004 = vadd.f32 %v1776, %v3492
      %v4005 = vadd.f32 %v1777, %v3493
      %v4006 = vadd.f32 %v1778, %v3494
      %v4007 = vadd.f32 %v1779, %v3495
      %v4008 = vadd.f32 %v1780, %v3496
      %v4009 = vadd.f32 %v1781, %v3497
      %v4010 = vadd.f32 %v1782, %v3498
      %v4011 = vadd.f32 %v1783, %v3499
      %v4012 = vadd.f32 %v1784, %v3500
      %v4013 = vadd.f32 %v1785, %v3501
      %v4014 = vadd.f32 %v1786, %v3502
      %v4015 = vadd.f32 %v1787, %v3503
      %v4016 = vadd.f32 %v1788, %v3504
      %v4017 = vadd.f32 %v1789, %v3505
      %v4018 = vadd.f32 %v1790, %v3506
      %v4019 = vadd.f32 %v1791, %v3507
      %v4020 = vadd.f32 %v1792, %v3508
      %v4021 = vadd.f32 %v1793, %v3509
      %v4022 = vadd.f32 %v1794, %v3510
      %v4023 = vadd.f32 %v1795, %v3511
      %v4024 = vadd.f32 %v1796, %v3512
      %v4025 = vadd.f32 %v1797, %v3513
      %v4026 = vadd.f32 %v1798, %v3514
      %v4027 = vadd.f32 %v1799, %v3515
      %v4028 = vadd.f32 %v1800, %v3516
      %v4029 = vadd.f32 %v1801, %v3517
      %v4030 = vadd.f32 %v1802, %v3518
      %v4031 = vadd.f32 %v1803, %v3519
      %v4032 = vadd.f32 %v1804, %v3520
      %v4033 = vadd.f32 %v1805, %v3521
      %v4034 = vadd.f32 %v1806, %v3522
      %v4035 = vadd.f32 %v1807, %v3523
      %v4036 = vadd.f32 %v1808, %v3524
      %v4037 = vadd.f32 %v1809, %v3525
      %v4038 = vadd.f32 %v1810, %v3526
      %v4039 = vadd.f32 %v1811, %v3527
      %v4040 = vadd.f32 %v1812, %v3528
      %v4041 = vadd.f32 %v1813, %v3529
      %v4042 = vadd.f32 %v1814, %v3530
      %v4043 = vadd.f32 %v1815, %v3531
      %v4044 = vadd.f32 %v1816, %v3532
      %v4045 = vadd.f32 %v1817, %v3533
      %v4046 = vadd.f32 %v1818, %v3534
      %v4047 = vadd.f32 %v1819, %v3535
      %v4048 = vadd.f32 %v1820, %v3536
      %v4049 = vadd.f32 %v1821, %v3537
      %v4050 = vadd.f32 %v1822, %v3538
      %v4051 = vadd.f32 %v1823, %v3539
      %v4052 = vadd.f32 %v1824, %v3540
      %v4053 = vadd.f32 %v1825, %v3541
      %v4054 = vadd.f32 %v1826, %v3542
      %v4055 = vadd.f32 %v1827, %v3543
      %v4056 = vadd.f32 %v1828, %v3544
      %v4057 = vadd.f32 %v1829, %v3545
      %v4058 = vadd.f32 %v1830, %v3546
      %v4059 = vadd.f32 %v1831, %v3547
      %v4060 = vadd.f32 %v1832, %v3548
      %v4061 = vadd.f32 %v1833, %v3549
      %v4062 = vadd.f32 %v1834, %v3550
      %v4063 = vadd.f32 %v1835, %v3551
      %v4064 = vadd.f32 %v1836, %v3552
      %v4065 = vadd.f32 %v1837, %v3553
      %v4066 = vadd.f32 %v1838, %v3554
      %v4067 = vadd.f32 %v1839, %v3555
      %v4068 = vadd.f32 %v1840, %v3556
      %v4069 = vadd.f32 %v1841, %v3557
      %v4070 = vadd.f32 %v1842, %v3558
      %v4071 = vadd.f32 %v1843, %v3559
      %v4072 = vadd.f32 %v1844, %v3560
      %v4073 = vadd.f32 %v1845, %v3561
      %v4074 = vadd.f32 %v1846, %v3562
      %v4075 = vadd.f32 %v1847, %v3563
      %v4076 = vadd.f32 %v1848, %v3564
      %v4077 = vadd.f32 %v1849, %v3565
      %v4078 = vadd.f32 %v1850, %v3566
      %v4079 = vadd.f32 %v1851, %v3567
      %v4080 = vadd.f32 %v1852, %v3568
      %v4081 = vadd.f32 %v1853, %v3569
      %v4082 = vadd.f32 %v1854, %v3570
      %v4083 = vadd.f32 %v1855, %v3571
      %v4084 = vadd.f32 %v1856, %v3572
      %v4085 = vadd.f32 %v1857, %v3573
      %v4086 = vadd.f32 %v1858, %v3574
      %v4087 = vadd.f32 %v1859, %v3575
      %v4088 = vadd.f32 %v1860, %v3576
      %v4089 = vadd.f32 %v1861, %v3577
      %v4090 = vadd.f32 %v1862, %v3578
      %v4091 = vadd.f32 %v1863, %v3579
      %v4092 = vadd.f32 %v1864, %v3580
      %v4093 = vadd.f32 %v1865, %v3581
      %v4094 = vadd.f32 %v1866, %v3582
      %v4095 = vadd.f32 %v1867, %v3583
      %v4096 = vadd.f32 %v1868, %v3584
      %v4097 = vadd.f32 %v1869, %v3585
      %v4098 = vadd.f32 %v1870, %v3586
      %v4099 = vadd.f32 %v1871, %v3587
      %v4100 = vadd.f32 %v1872, %v3588
      %v4101 = vadd.f32 %v1873, %v3589
      %v4102 = vadd.f32 %v1874, %v3590
      %v4103 = vadd.f32 %v1875, %v3591
      %v4104 = vadd.f32 %v1876, %v3592
      %v4105 = vadd.f32 %v1877, %v3593
      %v4106 = vadd.f32 %v1878, %v3594
      %v4107 = vadd.f32 %v1879, %v3595
      %v4108 = vadd.f32 %v1880, %v3596
      %v4109 = vadd.f32 %v1881, %v3597
      %v4110 = vadd.f32 %v1882, %v3598
      %v4111 = vadd.f32 %v1883, %v3599
      %v4112 = vadd.f32 %v1884, %v3600
      %v4113 = vadd.f32 %v1885, %v3601
      %v4114 = vadd.f32 %v1886, %v3602
      %v4115 = vadd.f32 %v1887, %v3603
      %v4116 = vadd.f32 %v1888, %v3604
      %v4117 = vadd.f32 %v1889, %v3605
      %v4118 = vadd.f32 %v1890, %v3606
      %v4119 = vadd.f32 %v1891, %v3607
      %v4120 = vadd.f32 %v1892, %v3608
      %v4121 = vadd.f32 %v1893, %v3609
      %v4122 = vadd.f32 %v1894, %v3610
      %v4123 = vadd.f32 %v1895, %v3611
      %v4124 = vadd.f32 %v1896, %v3612
      %v4125 = vadd.f32 %v1897, %v3613
      %v4126 = vadd.f32 %v1898, %v3614
      %v4127 = vadd.f32 %v1899, %v3615
      %v4128 = vadd.f32 %v1900, %v3616
      %v4129 = vadd.f32 %v1901, %v3617
      %v4130 = vadd.f32 %v1902, %v3618
      %v4131 = vadd.f32 %v1903, %v3619
      %v4132 = vadd.f32 %v1904, %v3620
      %v4133 = vadd.f32 %v1905, %v3621
      %v4134 = vadd.f32 %v1906, %v3622
      %v4135 = vadd.f32 %v1907, %v3623
      %v4136 = vadd.f32 %v1908, %v3624
      %v4137 = vadd.f32 %v1909, %v3625
      %v4138 = vadd.f32 %v1910, %v3626
      %v4139 = vadd.f32 %v1911, %v3627
      %v4140 = vadd.f32 %v1912, %v3628
      %v4141 = vadd.f32 %v1913, %v3629
      %v4142 = vadd.f32 %v1914, %v3630
      %v4143 = vadd.f32 %v1915, %v3631
      %v4144 = vadd.f32 %v1916, %v3632
      %v4145 = vadd.f32 %v1917, %v3633
      %v4146 = vadd.f32 %v1918, %v3634
      %v4147 = vadd.f32 %v1919, %v3635
      %v4148 = vadd.f32 %v1920, %v3636
      %v4149 = vadd.f32 %v1921, %v3637
      %v4150 = vadd.f32 %v1922, %v3638
      %v4151 = vadd.f32 %v1923, %v3639
      %v4152 = vadd.f32 %v1924, %v3640
      %v4153 = vadd.f32 %v1925, %v3641
      %v4154 = vadd.f32 %v1926, %v3642
      %v4155 = vadd.f32 %v1927, %v3643
      %v4156 = vadd.f32 %v1928, %v3644
      %v4157 = vadd.f32 %v1929, %v3645
      %v4158 = vadd.f32 %v1930, %v3646
      %v4159 = vadd.f32 %v1931, %v3647
      %v4160 = vadd.f32 %v1932, %v3648
      %v4161 = vadd.f32 %v1933, %v3649
      %v4162 = vadd.f32 %v1934, %v3650
      %v4163 = vadd.f32 %v1935, %v3651
      %v4164 = vadd.f32 %v1936, %v3652
      %v4165 = vadd.f32 %v1937, %v3653
      %v4166 = vadd.f32 %v1938, %v3654
      %v4167 = vadd.f32 %v1939, %v3655
      %v4168 = vadd.f32 %v1940, %v3656
      %v4169 = vadd.f32 %v1941, %v3657
      %v4170 = vadd.f32 %v1942, %v3658
      %v4171 = vadd.f32 %v1943, %v3659
      %v4172 = vadd.f32 %v1944, %v3660
      %v4173 = vadd.f32 %v1945, %v3661
      %v4174 = vadd.f32 %v1946, %v3662
      %v4175 = vadd.f32 %v1947, %v3663
      %v4176 = vadd.f32 %v1948, %v3664
      %v4177 = vadd.f32 %v1949, %v3665
      %v4178 = vadd.f32 %v1950, %v3666
      %v4179 = vadd.f32 %v1951, %v3667
      %v4180 = vadd.f32 %v1952, %v3668
      %v4181 = vadd.f32 %v1953, %v3669
      %v4182 = vadd.f32 %v1954, %v3670
      %v4183 = vadd.f32 %v1955, %v3671
      %v4184 = vadd.f32 %v1956, %v3672
      %v4185 = vadd.f32 %v1957, %v3673
      %v4186 = vadd.f32 %v1958, %v3674
      %v4187 = vadd.f32 %v1959, %v3675
      %v4188 = vadd.f32 %v1960, %v3676
      %v4189 = vadd.f32 %v1961, %v3677
      %v4190 = vadd.f32 %v1962, %v3678
      %v4191 = vadd.f32 %v1963, %v3679
      %v4192 = vadd.f32 %v1964, %v3680
      %v4193 = vadd.f32 %v1965, %v3681
      %v4194 = vadd.f32 %v1966, %v3682
      %v4195 = vadd.f32 %v1967, %v3683
      %v4196 = vadd.f32 %v1968, %v3684
      %v4197 = vadd.f32 %v1969, %v3685
      %v4198 = vadd.f32 %v1970, %v3686
      %v4199 = vadd.f32 %v1971, %v3687
      %v4200 = vadd.f32 %v1972, %v3688
      %v4201 = vadd.f32 %v1973, %v3689
      %v4202 = vadd.f32 %v1974, %v3690
      %v4203 = vadd.f32 %v1975, %v3691
      %v4204 = vadd.f32 %v1976, %v3692
      %v4205 = vadd.f32 %v1977, %v3693
      %v4206 = vadd.f32 %v1978, %v3694
      %v4207 = vadd.f32 %v1979, %v3695
      %v4208 = vadd.f32 %v1980, %v3696
      %v4209 = vadd.f32 %v1981, %v3697
      %v4210 = vadd.f32 %v1982, %v3698
      %v4211 = vadd.f32 %v1983, %v3699
      %v4212 = vadd.f32 %v1984, %v3700
      %v4213 = vadd.f32 %v1985, %v3701
      %v4214 = vadd.f32 %v1986, %v3702
      %v4215 = vadd.f32 %v1987, %v3703
      %v4216 = vadd.f32 %v1988, %v3704
      %v4217 = vadd.f32 %v1989, %v3705
      %v4218 = vadd.f32 %v1990, %v3706
      %v4219 = vadd.f32 %v1991, %v3707
      %v4220 = vadd.f32 %v1992, %v3708
      %v4221 = vadd.f32 %v1993, %v3709
      %v4222 = vadd.f32 %v1994, %v3710
      %v4223 = vadd.f32 %v1995, %v3711
      %v4224 = vadd.f32 %v1996, %v3712
      %v4225 = vadd.f32 %v1997, %v3713
      %v4226 = vadd.f32 %v1998, %v3714
      %v4227 = vadd.f32 %v1999, %v3715
      %v4228 = vadd.f32 %v2000, %v3716
      %v4229 = vadd.f32 %v2001, %v3717
      %v4230 = vadd.f32 %v2002, %v3718
      %v4231 = vadd.f32 %v2003, %v3719
      %v4232 = vadd.f32 %v2004, %v3720
      %v4233 = vadd.f32 %v2005, %v3721
      %v4234 = vadd.f32 %v2006, %v3722
      %v4235 = vadd.f32 %v2007, %v3723
      %v4236 = vadd.f32 %v2008, %v3724
      %v4237 = vadd.f32 %v2009, %v3725
      %v4238 = vadd.f32 %v2010, %v3726
      %v4239 = vadd.f32 %v2011, %v3727
      %v4240 = vadd.f32 %v2012, %v3728
      %v4241 = vadd.f32 %v2013, %v3729
      %v4242 = vadd.f32 %v2014, %v3730
      %v4243 = vadd.f32 %v2015, %v3731
      %v4244 = vadd.f32 %v2016, %v3732
      %v4245 = vadd.f32 %v2017, %v3733
      %v4246 = vadd.f32 %v2018, %v3734
      %v4247 = vadd.f32 %v2019, %v3735
      %v4248 = vadd.f32 %v2020, %v3736
      %v4249 = vadd.f32 %v2021, %v3737
      %v4250 = vadd.f32 %v2022, %v3738
      %v4251 = vadd.f32 %v2023, %v3739
      %v4252 = vadd.f32 %v2024, %v3740
      %v4253 = vadd.f32 %v2025, %v3741
      %v4254 = vadd.f32 %v2026, %v3742
      %v4255 = vadd.f32 %v2027, %v3743
      %v4256 = vadd.f32 %v2028, %v3744
      %v4257 = vadd.f32 %v2029, %v3745
      %v4258 = vadd.f32 %v2030, %v3746
      %v4259 = vadd.f32 %v2031, %v3747
      %v4260 = vadd.f32 %v2032, %v3748
      %v4261 = vadd.f32 %v2033, %v3749
      %v4262 = vadd.f32 %v2034, %v3750
      %v4263 = vadd.f32 %v2035, %v3751
      %v4264 = vadd.f32 %v2036, %v3752
      %v4265 = vadd.f32 %v2037, %v3753
      %v4266 = vadd.f32 %v2038, %v3754
      %v4267 = vadd.f32 %v2039, %v3755
      %v4268 = vadd.f32 %v2040, %v3756
      %v4269 = vadd.f32 %v2041, %v3757
      %v4270 = vadd.f32 %v2042, %v3758
      %v4271 = vadd.f32 %v2043, %v3759
      %v4272 = vadd.f32 %v2044, %v3760
      %v4273 = vadd.f32 %v2045, %v3761
      %v4274 = vadd.f32 %v2046, %v3762
      %v4275 = vadd.f32 %v2047, %v3763
      %v4276 = vadd.f32 %v2048, %v3764
      %v4277 = vadd.f32 %v2049, %v3765
      %v4278 = vadd.f32 %v2050, %v3766
      %v4279 = vadd.f32 %v2051, %v3767
      %v4280 = vadd.f32 %v2052, %v3768
      %v4281 = vadd.f32 %v2053, %v3769
      %v4282 = vadd.f32 %v2054, %v3770
      %v4283 = vadd.f32 %v2055, %v3771
      %v4284 = vadd.f32 %v2056, %v3772
      %v4285 = vadd.f32 %v2057, %v3773
      %v4286 = vadd.f32 %v2058, %v3774
      %v4287 = vadd.f32 %v2059, %v3775
      %v4288 = vadd.f32 %v2060, %v3776
      %v4289 = vadd.f32 %v2061, %v3777
      %v4290 = vadd.f32 %v2062, %v3778
      %v4291 = vadd.f32 %v2063, %v3779
      %v4292 = vadd.f32 %v2064, %v3780
      %v4293 = vadd.f32 %v2065, %v3781
      %v4294 = vadd.f32 %v2066, %v3782
      %v4295 = vadd.f32 %v2067, %v3783
      %v4296 = vadd.f32 %v2068, %v3784
      %v4297 = vadd.f32 %v2069, %v3785
      %v4298 = vadd.f32 %v2070, %v3786
      %v4299 = vadd.f32 %v2071, %v3787
      %v4300 = vadd.f32 %v2072, %v3788
      %v4301 = vadd.f32 %v2073, %v3789
      %v4302 = vadd.f32 %v2074, %v3790
      %v4303 = vadd.f32 %v2075, %v3791
      %v4304 = vadd.f32 %v2076, %v3792
      %v4305 = vadd.f32 %v2077, %v3793
      %v4306 = vadd.f32 %v2078, %v3794
      %v4307 = vadd.f32 %v2079, %v3795
      %v4308 = vadd.f32 %v2080, %v3796
      %v4309 = vadd.f32 %v2081, %v3797
      %v4310 = vadd.f32 %v2082, %v3798
      %v4311 = vadd.f32 %v2083, %v3799
      %v4312 = vadd.f32 %v2084, %v3800
      %v4313 = vadd.f32 %v2085, %v3801
      %v4314 = vadd.f32 %v2086, %v3802
      %v4315 = vadd.f32 %v2087, %v3803
      %v4316 = vadd.f32 %v2088, %v3804
      %v4317 = vadd.f32 %v2089, %v3805
      %v4318 = vadd.f32 %v2090, %v3806
      %v4319 = vadd.f32 %v2091, %v3807
      %v4320 = vadd.f32 %v2092, %v3808
      %v4321 = vadd.f32 %v2093, %v3809
      %v4322 = vadd.f32 %v2094, %v3810
      %v4323 = vadd.f32 %v2095, %v3811
      %v4324 = vadd.f32 %v2096, %v3812
      %v4325 = vadd.f32 %v2097, %v3813
      %v4326 = vadd.f32 %v2098, %v3814
      %v4327 = vadd.f32 %v2099, %v3815
      %v4328 = vadd.f32 %v2100, %v3816
      %v4329 = vadd.f32 %v2101, %v3817
      %v4330 = vadd.f32 %v2102, %v3818
      %v4331 = vadd.f32 %v2103, %v3819
      %v4332 = vadd.f32 %v2104, %v3820
      %v4333 = vadd.f32 %v2105, %v3821
      %v4334 = vadd.f32 %v2106, %v3822
      %v4335 = vadd.f32 %v2107, %v3823
      %v4336 = vadd.f32 %v2108, %v3824
      %v4337 = vadd.f32 %v2109, %v3825
      %v4338 = vadd.f32 %v2110, %v3826
      %v4339 = vadd.f32 %v2111, %v3827
      %v4340 = vadd.f32 %v2112, %v3828
      %v4341 = vadd.f32 %v2113, %v3829
      %v4342 = vadd.f32 %v2114, %v3830
      %v4343 = vadd.f32 %v2115, %v3831
      %v4344 = vadd.f32 %v2116, %v3832
      %v4345 = vadd.f32 %v2117, %v3833
      %v4346 = vadd.f32 %v2118, %v3834
      %v4347 = vadd.f32 %v2119, %v3835
      %v4348 = vadd.f32 %v2120, %v3836
      %v4349 = vadd.f32 %v2121, %v3837
      %v4350 = vadd.f32 %v2122, %v3838
      %v4351 = vadd.f32 %v2123, %v3839
      %v4352 = vadd.f32 %v2124, %v3840
      %v4353 = vadd.f32 %v2125, %v3841
      %v4354 = vadd.f32 %v2126, %v3842
      %v4355 = vadd.f32 %v2127, %v3843
      %v4356 = vadd.f32 %v2128, %v3844
      %v4357 = vadd.f32 %v2129, %v3845
      %v4358 = vadd.f32 %v2130, %v3846
      %v4359 = vadd.f32 %v2131, %v3847
      %v4360 = vadd.f32 %v2132, %v3848
      %v4361 = vadd.f32 %v2133, %v3849
      %v4362 = vadd.f32 %v2134, %v3850
      %v4363 = vadd.f32 %v2135, %v3851
      %v4364 = vadd.f32 %v2136, %v3852
      %v4365 = vadd.f32 %v2137, %v3853
      %v4366 = vadd.f32 %v2138, %v3854
      %v4367 = vadd.f32 %v2139, %v3855
      %v4368 = vadd.f32 %v2140, %v3856
      %v4369 = vadd.f32 %v2141, %v3857
      %v4370 = vadd.f32 %v2142, %v3858
      %v4371 = vadd.f32 %v2143, %v3859
      %v4372 = vadd.f32 %v2144, %v3860
      %v4373 = vadd.f32 %v2145, %v3861
      %v4374 = vadd.f32 %v2146, %v3862
      %v4375 = vadd.f32 %v2147, %v3863
      %v4376 = vadd.f32 %v2148, %v3864
      %v4377 = vadd.f32 %v2149, %v3865
      %v4378 = vadd.f32 %v2150, %v3866
      %v4379 = vadd.f32 %v2151, %v3867
      %v4380 = vadd.f32 %v2152, %v3868
      %v4381 = vadd.f32 %v2153, %v3869
      %v4382 = vadd.f32 %v2154, %v3870
      %v4383 = vadd.f32 %v2155, %v3871
      %v4384 = vadd.f32 %v2156, %v3872
      %v4385 = vadd.f32 %v2157, %v3873
      %v4386 = vadd.f32 %v2158, %v3874
      %v4387 = vadd.f32 %v2159, %v3875
      %v4388 = vadd.f32 %v2160, %v3876
      %v4389 = vadd.f32 %v2161, %v3877
      %v4390 = vadd.f32 %v2162, %v3878
      %v4391 = vadd.f32 %v2163, %v3879
      %v4392 = vadd.f32 %v2164, %v3880
      %v4393 = vadd.f32 %v2165, %v3881
      %v4394 = vadd.f32 %v2166, %v3882
      %v4395 = vadd.f32 %v2167, %v3883
      %v4396 = vadd.f32 %v2168, %v3884
      %v4397 = vadd.f32 %v2169, %v3885
      %v4398 = vadd.f32 %v2170, %v3886
      %v4399 = vadd.f32 %v2171, %v3887
      %v4400 = vadd.f32 %v2172, %v3888
      %v4401 = vadd.f32 %v2173, %v3889
      %v4402 = vadd.f32 %v2174, %v3890
      %v4403 = vadd.f32 %v2175, %v3891
      %v4404 = vadd.f32 %v2176, %v3892
      %v4405 = vadd.f32 %v2177, %v3893
      %v4406 = vadd.f32 %v2178, %v3894
      %v4407 = vadd.f32 %v2179, %v3895
      %v4408 = vadd.f32 %v2180, %v3896
      %v4409 = vadd.f32 %v2181, %v3897
      %v4410 = vadd.f32 %v2182, %v3898
      %v4411 = vadd.f32 %v2183, %v3899
      %v4412 = vadd.f32 %v2184, %v3900
      %v4413 = vadd.f32 %v2185, %v3901
      %v4414 = vadd.f32 %v2186, %v3902
      %v4415 = vadd.f32 %v2187, %v3903
      %v4416 = vadd.f32 %v2188, %v3904
      %v4417 = vadd.f32 %v2189, %v3905
      %v4418 = vadd.f32 %v2190, %v3906
      %v4419 = vadd.f32 %v2191, %v3907
      %v4420 = vadd.f32 %v2192, %v3908
      %v4421 = vadd.f32 %v2193, %v3909
      %v4422 = vadd.f32 %v2194, %v3910
      %v4423 = vadd.f32 %v2195, %v3911
      %v4424 = vadd.f32 %v2196, %v3912
      %v4425 = vmul.f32 %v3913, 0.70710677
      %v4426 = vmul.f32 %v3914, 0.70710677
      %v4427 = vmul.f32 %v3915, 0.70710677
      %v4428 = vmul.f32 %v3916, 0.70710677
      %v4429 = vmul.f32 %v3917, 0.70710677
      %v4430 = vmul.f32 %v3918, 0.70710677
      %v4431 = vmul.f32 %v3919, 0.70710677
      %v4432 = vmul.f32 %v3920, 0.70710677
      %v4433 = vmul.f32 %v3921, 0.70710677
      %v4434 = vmul.f32 %v3922, 0.70710677
      %v4435 = vmul.f32 %v3923, 0.70710677
      %v4436 = vmul.f32 %v3924, 0.70710677
      %v4437 = vmul.f32 %v3925, 0.70710677
      %v4438 = vmul.f32 %v3926, 0.70710677
      %v4439 = vmul.f32 %v3927, 0.70710677
      %v4440 = vmul.f32 %v3928, 0.70710677
      %v4441 = vmul.f32 %v3929, 0.70710677
      %v4442 = vmul.f32 %v3930, 0.70710677
      %v4443 = vmul.f32 %v3931, 0.70710677
      %v4444 = vmul.f32 %v3932, 0.70710677
      %v4445 = vmul.f32 %v3933, 0.70710677
      %v4446 = vmul.f32 %v3934, 0.70710677
      %v4447 = vmul.f32 %v3935, 0.70710677
      %v4448 = vmul.f32 %v3936, 0.70710677
      %v4449 = vmul.f32 %v3937, 0.70710677
      %v4450 = vmul.f32 %v3938, 0.70710677
      %v4451 = vmul.f32 %v3939, 0.70710677
      %v4452 = vmul.f32 %v3940, 0.70710677
      %v4453 = vmul.f32 %v3941, 0.70710677
      %v4454 = vmul.f32 %v3942, 0.70710677
      %v4455 = vmul.f32 %v3943, 0.70710677
      %v4456 = vmul.f32 %v3944, 0.70710677
      %v4457 = vmul.f32 %v3945, 0.70710677
      %v4458 = vmul.f32 %v3946, 0.70710677
      %v4459 = vmul.f32 %v3947, 0.70710677
      %v4460 = vmul.f32 %v3948, 0.70710677
      %v4461 = vmul.f32 %v3949, 0.70710677
      %v4462 = vmul.f32 %v3950, 0.70710677
      %v4463 = vmul.f32 %v3951, 0.70710677
      %v4464 = vmul.f32 %v3952, 0.70710677
      %v4465 = vmul.f32 %v3953, 0.70710677
      %v4466 = vmul.f32 %v3954, 0.70710677
      %v4467 = vmul.f32 %v3955, 0.70710677
      %v4468 = vmul.f32 %v3956, 0.70710677
      %v4469 = vmul.f32 %v3957, 0.70710677
      %v4470 = vmul.f32 %v3958, 0.70710677
      %v4471 = vmul.f32 %v3959, 0.70710677
      %v4472 = vmul.f32 %v3960, 0.70710677
      %v4473 = vmul.f32 %v3961, 0.70710677
      %v4474 = vmul.f32 %v3962, 0.70710677
      %v4475 = vmul.f32 %v3963, 0.70710677
      %v4476 = vmul.f32 %v3964, 0.70710677
      %v4477 = vmul.f32 %v3965, 0.70710677
      %v4478 = vmul.f32 %v3966, 0.70710677
      %v4479 = vmul.f32 %v3967, 0.70710677
      %v4480 = vmul.f32 %v3968, 0.70710677
      %v4481 = vmul.f32 %v3969, 0.70710677
      %v4482 = vmul.f32 %v3970, 0.70710677
      %v4483 = vmul.f32 %v3971, 0.70710677
      %v4484 = vmul.f32 %v3972, 0.70710677
      %v4485 = vmul.f32 %v3973, 0.70710677
      %v4486 = vmul.f32 %v3974, 0.70710677
      %v4487 = vmul.f32 %v3975, 0.70710677
      %v4488 = vmul.f32 %v3976, 0.70710677
      %v4489 = vmul.f32 %v3977, 0.70710677
      %v4490 = vmul.f32 %v3978, 0.70710677
      %v4491 = vmul.f32 %v3979, 0.70710677
      %v4492 = vmul.f32 %v3980, 0.70710677
      %v4493 = vmul.f32 %v3981, 0.70710677
      %v4494 = vmul.f32 %v3982, 0.70710677
      %v4495 = vmul.f32 %v3983, 0.70710677
      %v4496 = vmul.f32 %v3984, 0.70710677
      %v4497 = vmul.f32 %v3985, 0.70710677
      %v4498 = vmul.f32 %v3986, 0.70710677
      %v4499 = vmul.f32 %v3987, 0.70710677
      %v4500 = vmul.f32 %v3988, 0.70710677
      %v4501 = vmul.f32 %v3989, 0.70710677
      %v4502 = vmul.f32 %v3990, 0.70710677
      %v4503 = vmul.f32 %v3991, 0.70710677
      %v4504 = vmul.f32 %v3992, 0.70710677
      %v4505 = vmul.f32 %v3993, 0.70710677
      %v4506 = vmul.f32 %v3994, 0.70710677
      %v4507 = vmul.f32 %v3995, 0.70710677
      %v4508 = vmul.f32 %v3996, 0.70710677
      %v4509 = vmul.f32 %v3997, 0.70710677
      %v4510 = vmul.f32 %v3998, 0.70710677
      %v4511 = vmul.f32 %v3999, 0.70710677
      %v4512 = vmul.f32 %v4000, 0.70710677
      %v4513 = vmul.f32 %v4001, 0.70710677
      %v4514 = vmul.f32 %v4002, 0.70710677
      %v4515 = vmul.f32 %v4003, 0.70710677
      %v4516 = vmul.f32 %v4004, 0.70710677
      %v4517 = vmul.f32 %v4005, 0.70710677
      %v4518 = vmul.f32 %v4006, 0.70710677
      %v4519 = vmul.f32 %v4007, 0.70710677
      %v4520 = vmul.f32 %v4008, 0.70710677
      %v4521 = vmul.f32 %v4009, 0.70710677
      %v4522 = vmul.f32 %v4010, 0.70710677
      %v4523 = vmul.f32 %v4011, 0.70710677
      %v4524 = vmul.f32 %v4012, 0.70710677
      %v4525 = vmul.f32 %v4013, 0.70710677
      %v4526 = vmul.f32 %v4014, 0.70710677
      %v4527 = vmul.f32 %v4015, 0.70710677
      %v4528 = vmul.f32 %v4016, 0.70710677
      %v4529 = vmul.f32 %v4017, 0.70710677
      %v4530 = vmul.f32 %v4018, 0.70710677
      %v4531 = vmul.f32 %v4019, 0.70710677
      %v4532 = vmul.f32 %v4020, 0.70710677
      %v4533 = vmul.f32 %v4021, 0.70710677
      %v4534 = vmul.f32 %v4022, 0.70710677
      %v4535 = vmul.f32 %v4023, 0.70710677
      %v4536 = vmul.f32 %v4024, 0.70710677
      %v4537 = vmul.f32 %v4025, 0.70710677
      %v4538 = vmul.f32 %v4026, 0.70710677
      %v4539 = vmul.f32 %v4027, 0.70710677
      %v4540 = vmul.f32 %v4028, 0.70710677
      %v4541 = vmul.f32 %v4029, 0.70710677
      %v4542 = vmul.f32 %v4030, 0.70710677
      %v4543 = vmul.f32 %v4031, 0.70710677
      %v4544 = vmul.f32 %v4032, 0.70710677
      %v4545 = vmul.f32 %v4033, 0.70710677
      %v4546 = vmul.f32 %v4034, 0.70710677
      %v4547 = vmul.f32 %v4035, 0.70710677
      %v4548 = vmul.f32 %v4036, 0.70710677
      %v4549 = vmul.f32 %v4037, 0.70710677
      %v4550 = vmul.f32 %v4038, 0.70710677
      %v4551 = vmul.f32 %v4039, 0.70710677
      %v4552 = vmul.f32 %v4040, 0.70710677
      %v4553 = vmul.f32 %v4041, 0.70710677
      %v4554 = vmul.f32 %v4042, 0.70710677
      %v4555 = vmul.f32 %v4043, 0.70710677
      %v4556 = vmul.f32 %v4044, 0.70710677
      %v4557 = vmul.f32 %v4045, 0.70710677
      %v4558 = vmul.f32 %v4046, 0.70710677
      %v4559 = vmul.f32 %v4047, 0.70710677
      %v4560 = vmul.f32 %v4048, 0.70710677
      %v4561 = vmul.f32 %v4049, 0.70710677
      %v4562 = vmul.f32 %v4050, 0.70710677
      %v4563 = vmul.f32 %v4051, 0.70710677
      %v4564 = vmul.f32 %v4052, 0.70710677
      %v4565 = vmul.f32 %v4053, 0.70710677
      %v4566 = vmul.f32 %v4054, 0.70710677
      %v4567 = vmul.f32 %v4055, 0.70710677
      %v4568 = vmul.f32 %v4056, 0.70710677
      %v4569 = vmul.f32 %v4057, 0.70710677
      %v4570 = vmul.f32 %v4058, 0.70710677
      %v4571 = vmul.f32 %v4059, 0.70710677
      %v4572 = vmul.f32 %v4060, 0.70710677
      %v4573 = vmul.f32 %v4061, 0.70710677
      %v4574 = vmul.f32 %v4062, 0.70710677
      %v4575 = vmul.f32 %v4063, 0.70710677
      %v4576 = vmul.f32 %v4064, 0.70710677
      %v4577 = vmul.f32 %v4065, 0.70710677
      %v4578 = vmul.f32 %v4066, 0.70710677
      %v4579 = vmul.f32 %v4067, 0.70710677
      %v4580 = vmul.f32 %v4068, 0.70710677
      %v4581 = vmul.f32 %v4069, 0.70710677
      %v4582 = vmul.f32 %v4070, 0.70710677
      %v4583 = vmul.f32 %v4071, 0.70710677
      %v4584 = vmul.f32 %v4072, 0.70710677
      %v4585 = vmul.f32 %v4073, 0.70710677
      %v4586 = vmul.f32 %v4074, 0.70710677
      %v4587 = vmul.f32 %v4075, 0.70710677
      %v4588 = vmul.f32 %v4076, 0.70710677
      %v4589 = vmul.f32 %v4077, 0.70710677
      %v4590 = vmul.f32 %v4078, 0.70710677
      %v4591 = vmul.f32 %v4079, 0.70710677
      %v4592 = vmul.f32 %v4080, 0.70710677
      %v4593 = vmul.f32 %v4081, 0.70710677
      %v4594 = vmul.f32 %v4082, 0.70710677
      %v4595 = vmul.f32 %v4083, 0.70710677
      %v4596 = vmul.f32 %v4084, 0.70710677
      %v4597 = vmul.f32 %v4085, 0.70710677
      %v4598 = vmul.f32 %v4086, 0.70710677
      %v4599 = vmul.f32 %v4087, 0.70710677
      %v4600 = vmul.f32 %v4088, 0.70710677
      %v4601 = vmul.f32 %v4089, 0.70710677
      %v4602 = vmul.f32 %v4090, 0.70710677
      %v4603 = vmul.f32 %v4091, 0.70710677
      %v4604 = vmul.f32 %v4092, 0.70710677
      %v4605 = vmul.f32 %v4093, 0.70710677
      %v4606 = vmul.f32 %v4094, 0.70710677
      %v4607 = vmul.f32 %v4095, 0.70710677
      %v4608 = vmul.f32 %v4096, 0.70710677
      %v4609 = vmul.f32 %v4097, 0.70710677
      %v4610 = vmul.f32 %v4098, 0.70710677
      %v4611 = vmul.f32 %v4099, 0.70710677
      %v4612 = vmul.f32 %v4100, 0.70710677
      %v4613 = vmul.f32 %v4101, 0.70710677
      %v4614 = vmul.f32 %v4102, 0.70710677
      %v4615 = vmul.f32 %v4103, 0.70710677
      %v4616 = vmul.f32 %v4104, 0.70710677
      %v4617 = vmul.f32 %v4105, 0.70710677
      %v4618 = vmul.f32 %v4106, 0.70710677
      %v4619 = vmul.f32 %v4107, 0.70710677
      %v4620 = vmul.f32 %v4108, 0.70710677
      %v4621 = vmul.f32 %v4109, 0.70710677
      %v4622 = vmul.f32 %v4110, 0.70710677
      %v4623 = vmul.f32 %v4111, 0.70710677
      %v4624 = vmul.f32 %v4112, 0.70710677
      %v4625 = vmul.f32 %v4113, 0.70710677
      %v4626 = vmul.f32 %v4114, 0.70710677
      %v4627 = vmul.f32 %v4115, 0.70710677
      %v4628 = vmul.f32 %v4116, 0.70710677
      %v4629 = vmul.f32 %v4117, 0.70710677
      %v4630 = vmul.f32 %v4118, 0.70710677
      %v4631 = vmul.f32 %v4119, 0.70710677
      %v4632 = vmul.f32 %v4120, 0.70710677
      %v4633 = vmul.f32 %v4121, 0.70710677
      %v4634 = vmul.f32 %v4122, 0.70710677
      %v4635 = vmul.f32 %v4123, 0.70710677
      %v4636 = vmul.f32 %v4124, 0.70710677
      %v4637 = vmul.f32 %v4125, 0.70710677
      %v4638 = vmul.f32 %v4126, 0.70710677
      %v4639 = vmul.f32 %v4127, 0.70710677
      %v4640 = vmul.f32 %v4128, 0.70710677
      %v4641 = vmul.f32 %v4129, 0.70710677
      %v4642 = vmul.f32 %v4130, 0.70710677
      %v4643 = vmul.f32 %v4131, 0.70710677
      %v4644 = vmul.f32 %v4132, 0.70710677
      %v4645 = vmul.f32 %v4133, 0.70710677
      %v4646 = vmul.f32 %v4134, 0.70710677
      %v4647 = vmul.f32 %v4135, 0.70710677
      %v4648 = vmul.f32 %v4136, 0.70710677
      %v4649 = vmul.f32 %v4137, 0.70710677
      %v4650 = vmul.f32 %v4138, 0.70710677
      %v4651 = vmul.f32 %v4139, 0.70710677
      %v4652 = vmul.f32 %v4140, 0.70710677
      %v4653 = vmul.f32 %v4141, 0.70710677
      %v4654 = vmul.f32 %v4142, 0.70710677
      %v4655 = vmul.f32 %v4143, 0.70710677
      %v4656 = vmul.f32 %v4144, 0.70710677
      %v4657 = vmul.f32 %v4145, 0.70710677
      %v4658 = vmul.f32 %v4146, 0.70710677
      %v4659 = vmul.f32 %v4147, 0.70710677
      %v4660 = vmul.f32 %v4148, 0.70710677
      %v4661 = vmul.f32 %v4149, 0.70710677
      %v4662 = vmul.f32 %v4150, 0.70710677
      %v4663 = vmul.f32 %v4151, 0.70710677
      %v4664 = vmul.f32 %v4152, 0.70710677
      %v4665 = vmul.f32 %v4153, 0.70710677
      %v4666 = vmul.f32 %v4154, 0.70710677
      %v4667 = vmul.f32 %v4155, 0.70710677
      %v4668 = vmul.f32 %v4156, 0.70710677
      %v4669 = vmul.f32 %v4157, 0.70710677
      %v4670 = vmul.f32 %v4158, 0.70710677
      %v4671 = vmul.f32 %v4159, 0.70710677
      %v4672 = vmul.f32 %v4160, 0.70710677
      %v4673 = vmul.f32 %v4161, 0.70710677
      %v4674 = vmul.f32 %v4162, 0.70710677
      %v4675 = vmul.f32 %v4163, 0.70710677
      %v4676 = vmul.f32 %v4164, 0.70710677
      %v4677 = vmul.f32 %v4165, 0.70710677
      %v4678 = vmul.f32 %v4166, 0.70710677
      %v4679 = vmul.f32 %v4167, 0.70710677
      %v4680 = vmul.f32 %v4168, 0.70710677
      %v4681 = vmul.f32 %v4169, 0.70710677
      %v4682 = vmul.f32 %v4170, 0.70710677
      %v4683 = vmul.f32 %v4171, 0.70710677
      %v4684 = vmul.f32 %v4172, 0.70710677
      %v4685 = vmul.f32 %v4173, 0.70710677
      %v4686 = vmul.f32 %v4174, 0.70710677
      %v4687 = vmul.f32 %v4175, 0.70710677
      %v4688 = vmul.f32 %v4176, 0.70710677
      %v4689 = vmul.f32 %v4177, 0.70710677
      %v4690 = vmul.f32 %v4178, 0.70710677
      %v4691 = vmul.f32 %v4179, 0.70710677
      %v4692 = vmul.f32 %v4180, 0.70710677
      %v4693 = vmul.f32 %v4181, 0.70710677
      %v4694 = vmul.f32 %v4182, 0.70710677
      %v4695 = vmul.f32 %v4183, 0.70710677
      %v4696 = vmul.f32 %v4184, 0.70710677
      %v4697 = vmul.f32 %v4185, 0.70710677
      %v4698 = vmul.f32 %v4186, 0.70710677
      %v4699 = vmul.f32 %v4187, 0.70710677
      %v4700 = vmul.f32 %v4188, 0.70710677
      %v4701 = vmul.f32 %v4189, 0.70710677
      %v4702 = vmul.f32 %v4190, 0.70710677
      %v4703 = vmul.f32 %v4191, 0.70710677
      %v4704 = vmul.f32 %v4192, 0.70710677
      %v4705 = vmul.f32 %v4193, 0.70710677
      %v4706 = vmul.f32 %v4194, 0.70710677
      %v4707 = vmul.f32 %v4195, 0.70710677
      %v4708 = vmul.f32 %v4196, 0.70710677
      %v4709 = vmul.f32 %v4197, 0.70710677
      %v4710 = vmul.f32 %v4198, 0.70710677
      %v4711 = vmul.f32 %v4199, 0.70710677
      %v4712 = vmul.f32 %v4200, 0.70710677
      %v4713 = vmul.f32 %v4201, 0.70710677
      %v4714 = vmul.f32 %v4202, 0.70710677
      %v4715 = vmul.f32 %v4203, 0.70710677
      %v4716 = vmul.f32 %v4204, 0.70710677
      %v4717 = vmul.f32 %v4205, 0.70710677
      %v4718 = vmul.f32 %v4206, 0.70710677
      %v4719 = vmul.f32 %v4207, 0.70710677
      %v4720 = vmul.f32 %v4208, 0.70710677
      %v4721 = vmul.f32 %v4209, 0.70710677
      %v4722 = vmul.f32 %v4210, 0.70710677
      %v4723 = vmul.f32 %v4211, 0.70710677
      %v4724 = vmul.f32 %v4212, 0.70710677
      %v4725 = vmul.f32 %v4213, 0.70710677
      %v4726 = vmul.f32 %v4214, 0.70710677
      %v4727 = vmul.f32 %v4215, 0.70710677
      %v4728 = vmul.f32 %v4216, 0.70710677
      %v4729 = vmul.f32 %v4217, 0.70710677
      %v4730 = vmul.f32 %v4218, 0.70710677
      %v4731 = vmul.f32 %v4219, 0.70710677
      %v4732 = vmul.f32 %v4220, 0.70710677
      %v4733 = vmul.f32 %v4221, 0.70710677
      %v4734 = vmul.f32 %v4222, 0.70710677
      %v4735 = vmul.f32 %v4223, 0.70710677
      %v4736 = vmul.f32 %v4224, 0.70710677
      %v4737 = vmul.f32 %v4225, 0.70710677
      %v4738 = vmul.f32 %v4226, 0.70710677
      %v4739 = vmul.f32 %v4227, 0.70710677
      %v4740 = vmul.f32 %v4228, 0.70710677
      %v4741 = vmul.f32 %v4229, 0.70710677
      %v4742 = vmul.f32 %v4230, 0.70710677
      %v4743 = vmul.f32 %v4231, 0.70710677
      %v4744 = vmul.f32 %v4232, 0.70710677
      %v4745 = vmul.f32 %v4233, 0.70710677
      %v4746 = vmul.f32 %v4234, 0.70710677
      %v4747 = vmul.f32 %v4235, 0.70710677
      %v4748 = vmul.f32 %v4236, 0.70710677
      %v4749 = vmul.f32 %v4237, 0.70710677
      %v4750 = vmul.f32 %v4238, 0.70710677
      %v4751 = vmul.f32 %v4239, 0.70710677
      %v4752 = vmul.f32 %v4240, 0.70710677
      %v4753 = vmul.f32 %v4241, 0.70710677
      %v4754 = vmul.f32 %v4242, 0.70710677
      %v4755 = vmul.f32 %v4243, 0.70710677
      %v4756 = vmul.f32 %v4244, 0.70710677
      %v4757 = vmul.f32 %v4245, 0.70710677
      %v4758 = vmul.f32 %v4246, 0.70710677
      %v4759 = vmul.f32 %v4247, 0.70710677
      %v4760 = vmul.f32 %v4248, 0.70710677
      %v4761 = vmul.f32 %v4249, 0.70710677
      %v4762 = vmul.f32 %v4250, 0.70710677
      %v4763 = vmul.f32 %v4251, 0.70710677
      %v4764 = vmul.f32 %v4252, 0.70710677
      %v4765 = vmul.f32 %v4253, 0.70710677
      %v4766 = vmul.f32 %v4254, 0.70710677
      %v4767 = vmul.f32 %v4255, 0.70710677
      %v4768 = vmul.f32 %v4256, 0.70710677
      %v4769 = vmul.f32 %v4257, 0.70710677
      %v4770 = vmul.f32 %v4258, 0.70710677
      %v4771 = vmul.f32 %v4259, 0.70710677
      %v4772 = vmul.f32 %v4260, 0.70710677
      %v4773 = vmul.f32 %v4261, 0.70710677
      %v4774 = vmul.f32 %v4262, 0.70710677
      %v4775 = vmul.f32 %v4263, 0.70710677
      %v4776 = vmul.f32 %v4264, 0.70710677
      %v4777 = vmul.f32 %v4265, 0.70710677
      %v4778 = vmul.f32 %v4266, 0.70710677
      %v4779 = vmul.f32 %v4267, 0.70710677
      %v4780 = vmul.f32 %v4268, 0.70710677
      %v4781 = vmul.f32 %v4269, 0.70710677
      %v4782 = vmul.f32 %v4270, 0.70710677
      %v4783 = vmul.f32 %v4271, 0.70710677
      %v4784 = vmul.f32 %v4272, 0.70710677
      %v4785 = vmul.f32 %v4273, 0.70710677
      %v4786 = vmul.f32 %v4274, 0.70710677
      %v4787 = vmul.f32 %v4275, 0.70710677
      %v4788 = vmul.f32 %v4276, 0.70710677
      %v4789 = vmul.f32 %v4277, 0.70710677
      %v4790 = vmul.f32 %v4278, 0.70710677
      %v4791 = vmul.f32 %v4279, 0.70710677
      %v4792 = vmul.f32 %v4280, 0.70710677
      %v4793 = vmul.f32 %v4281, 0.70710677
      %v4794 = vmul.f32 %v4282, 0.70710677
      %v4795 = vmul.f32 %v4283, 0.70710677
      %v4796 = vmul.f32 %v4284, 0.70710677
      %v4797 = vmul.f32 %v4285, 0.70710677
      %v4798 = vmul.f32 %v4286, 0.70710677
      %v4799 = vmul.f32 %v4287, 0.70710677
      %v4800 = vmul.f32 %v4288, 0.70710677
      %v4801 = vmul.f32 %v4289, 0.70710677
      %v4802 = vmul.f32 %v4290, 0.70710677
      %v4803 = vmul.f32 %v4291, 0.70710677
      %v4804 = vmul.f32 %v4292, 0.70710677
      %v4805 = vmul.f32 %v4293, 0.70710677
      %v4806 = vmul.f32 %v4294, 0.70710677
      %v4807 = vmul.f32 %v4295, 0.70710677
      %v4808 = vmul.f32 %v4296, 0.70710677
      %v4809 = vmul.f32 %v4297, 0.70710677
      %v4810 = vmul.f32 %v4298, 0.70710677
      %v4811 = vmul.f32 %v4299, 0.70710677
      %v4812 = vmul.f32 %v4300, 0.70710677
      %v4813 = vmul.f32 %v4301, 0.70710677
      %v4814 = vmul.f32 %v4302, 0.70710677
      %v4815 = vmul.f32 %v4303, 0.70710677
      %v4816 = vmul.f32 %v4304, 0.70710677
      %v4817 = vmul.f32 %v4305, 0.70710677
      %v4818 = vmul.f32 %v4306, 0.70710677
      %v4819 = vmul.f32 %v4307, 0.70710677
      %v4820 = vmul.f32 %v4308, 0.70710677
      %v4821 = vmul.f32 %v4309, 0.70710677
      %v4822 = vmul.f32 %v4310, 0.70710677
      %v4823 = vmul.f32 %v4311, 0.70710677
      %v4824 = vmul.f32 %v4312, 0.70710677
      %v4825 = vmul.f32 %v4313, 0.70710677
      %v4826 = vmul.f32 %v4314, 0.70710677
      %v4827 = vmul.f32 %v4315, 0.70710677
      %v4828 = vmul.f32 %v4316, 0.70710677
      %v4829 = vmul.f32 %v4317, 0.70710677
      %v4830 = vmul.f32 %v4318, 0.70710677
      %v4831 = vmul.f32 %v4319, 0.70710677
      %v4832 = vmul.f32 %v4320, 0.70710677
      %v4833 = vmul.f32 %v4321, 0.70710677
      %v4834 = vmul.f32 %v4322, 0.70710677
      %v4835 = vmul.f32 %v4323, 0.70710677
      %v4836 = vmul.f32 %v4324, 0.70710677
      %v4837 = vmul.f32 %v4325, 0.70710677
      %v4838 = vmul.f32 %v4326, 0.70710677
      %v4839 = vmul.f32 %v4327, 0.70710677
      %v4840 = vmul.f32 %v4328, 0.70710677
      %v4841 = vmul.f32 %v4329, 0.70710677
      %v4842 = vmul.f32 %v4330, 0.70710677
      %v4843 = vmul.f32 %v4331, 0.70710677
      %v4844 = vmul.f32 %v4332, 0.70710677
      %v4845 = vmul.f32 %v4333, 0.70710677
      %v4846 = vmul.f32 %v4334, 0.70710677
      %v4847 = vmul.f32 %v4335, 0.70710677
      %v4848 = vmul.f32 %v4336, 0.70710677
      %v4849 = vmul.f32 %v4337, 0.70710677
      %v4850 = vmul.f32 %v4338, 0.70710677
      %v4851 = vmul.f32 %v4339, 0.70710677
      %v4852 = vmul.f32 %v4340, 0.70710677
      %v4853 = vmul.f32 %v4341, 0.70710677
      %v4854 = vmul.f32 %v4342, 0.70710677
      %v4855 = vmul.f32 %v4343, 0.70710677
      %v4856 = vmul.f32 %v4344, 0.70710677
      %v4857 = vmul.f32 %v4345, 0.70710677
      %v4858 = vmul.f32 %v4346, 0.70710677
      %v4859 = vmul.f32 %v4347, 0.70710677
      %v4860 = vmul.f32 %v4348, 0.70710677
      %v4861 = vmul.f32 %v4349, 0.70710677
      %v4862 = vmul.f32 %v4350, 0.70710677
      %v4863 = vmul.f32 %v4351, 0.70710677
      %v4864 = vmul.f32 %v4352, 0.70710677
      %v4865 = vmul.f32 %v4353, 0.70710677
      %v4866 = vmul.f32 %v4354, 0.70710677
      %v4867 = vmul.f32 %v4355, 0.70710677
      %v4868 = vmul.f32 %v4356, 0.70710677
      %v4869 = vmul.f32 %v4357, 0.70710677
      %v4870 = vmul.f32 %v4358, 0.70710677
      %v4871 = vmul.f32 %v4359, 0.70710677
      %v4872 = vmul.f32 %v4360, 0.70710677
      %v4873 = vmul.f32 %v4361, 0.70710677
      %v4874 = vmul.f32 %v4362, 0.70710677
      %v4875 = vmul.f32 %v4363, 0.70710677
      %v4876 = vmul.f32 %v4364, 0.70710677
      %v4877 = vmul.f32 %v4365, 0.70710677
      %v4878 = vmul.f32 %v4366, 0.70710677
      %v4879 = vmul.f32 %v4367, 0.70710677
      %v4880 = vmul.f32 %v4368, 0.70710677
      %v4881 = vmul.f32 %v4369, 0.70710677
      %v4882 = vmul.f32 %v4370, 0.70710677
      %v4883 = vmul.f32 %v4371, 0.70710677
      %v4884 = vmul.f32 %v4372, 0.70710677
      %v4885 = vmul.f32 %v4373, 0.70710677
      %v4886 = vmul.f32 %v4374, 0.70710677
      %v4887 = vmul.f32 %v4375, 0.70710677
      %v4888 = vmul.f32 %v4376, 0.70710677
      %v4889 = vmul.f32 %v4377, 0.70710677
      %v4890 = vmul.f32 %v4378, 0.70710677
      %v4891 = vmul.f32 %v4379, 0.70710677
      %v4892 = vmul.f32 %v4380, 0.70710677
      %v4893 = vmul.f32 %v4381, 0.70710677
      %v4894 = vmul.f32 %v4382, 0.70710677
      %v4895 = vmul.f32 %v4383, 0.70710677
      %v4896 = vmul.f32 %v4384, 0.70710677
      %v4897 = vmul.f32 %v4385, 0.70710677
      %v4898 = vmul.f32 %v4386, 0.70710677
      %v4899 = vmul.f32 %v4387, 0.70710677
      %v4900 = vmul.f32 %v4388, 0.70710677
      %v4901 = vmul.f32 %v4389, 0.70710677
      %v4902 = vmul.f32 %v4390, 0.70710677
      %v4903 = vmul.f32 %v4391, 0.70710677
      %v4904 = vmul.f32 %v4392, 0.70710677
      %v4905 = vmul.f32 %v4393, 0.70710677
      %v4906 = vmul.f32 %v4394, 0.70710677
      %v4907 = vmul.f32 %v4395, 0.70710677
      %v4908 = vmul.f32 %v4396, 0.70710677
      %v4909 = vmul.f32 %v4397, 0.70710677
      %v4910 = vmul.f32 %v4398, 0.70710677
      %v4911 = vmul.f32 %v4399, 0.70710677
      %v4912 = vmul.f32 %v4400, 0.70710677
      %v4913 = vmul.f32 %v4401, 0.70710677
      %v4914 = vmul.f32 %v4402, 0.70710677
      %v4915 = vmul.f32 %v4403, 0.70710677
      %v4916 = vmul.f32 %v4404, 0.70710677
      %v4917 = vmul.f32 %v4405, 0.70710677
      %v4918 = vmul.f32 %v4406, 0.70710677
      %v4919 = vmul.f32 %v4407, 0.70710677
      %v4920 = vmul.f32 %v4408, 0.70710677
      %v4921 = vmul.f32 %v4409, 0.70710677
      %v4922 = vmul.f32 %v4410, 0.70710677
      %v4923 = vmul.f32 %v4411, 0.70710677
      %v4924 = vmul.f32 %v4412, 0.70710677
      %v4925 = vmul.f32 %v4413, 0.70710677
      %v4926 = vmul.f32 %v4414, 0.70710677
      %v4927 = vmul.f32 %v4415, 0.70710677
      %v4928 = vmul.f32 %v4416, 0.70710677
      %v4929 = vmul.f32 %v4417, 0.70710677
      %v4930 = vmul.f32 %v4418, 0.70710677
      %v4931 = vmul.f32 %v4419, 0.70710677
      %v4932 = vmul.f32 %v4420, 0.70710677
      %v4933 = vmul.f32 %v4421, 0.70710677
      %v4934 = vmul.f32 %v4422, 0.70710677
      %v4935 = vmul.f32 %v4423, 0.70710677
      %v4936 = vmul.f32 %v4424, 0.70710677
      %v4937 = vmax.f32 %v4425, %v4426
      %4938 = vmax.xlane.f32.xlu0 %v4937
      %v4939 = vpop.xlane.xlu0 %4938
      %v4940 = vmax.f32 %v4427, %v4428
      %4941 = vmax.xlane.f32.xlu0 %v4940
      %v4942 = vpop.xlane.xlu0 %4941
      %v4943 = vmax.f32 %v4429, %v4430
      %4944 = vmax.xlane.f32.xlu0 %v4943
      %v4945 = vpop.xlane.xlu0 %4944
      %v4946 = vmax.f32 %v4431, %v4432
      %4947 = vmax.xlane.f32.xlu0 %v4946
      %v4948 = vpop.xlane.xlu0 %4947
      %v4949 = vmax.f32 %v4433, %v4434
      %4950 = vmax.xlane.f32.xlu0 %v4949
      %v4951 = vpop.xlane.xlu0 %4950
      %v4952 = vmax.f32 %v4435, %v4436
      %4953 = vmax.xlane.f32.xlu0 %v4952
      %v4954 = vpop.xlane.xlu0 %4953
      %v4955 = vmax.f32 %v4437, %v4438
      %4956 = vmax.xlane.f32.xlu0 %v4955
      %v4957 = vpop.xlane.xlu0 %4956
      %v4958 = vmax.f32 %v4439, %v4440
      %4959 = vmax.xlane.f32.xlu0 %v4958
      %v4960 = vpop.xlane.xlu0 %4959
      %v4961 = vmax.f32 %v4441, %v4442
      %4962 = vmax.xlane.f32.xlu0 %v4961
      %v4963 = vpop.xlane.xlu0 %4962
      %v4964 = vmax.f32 %v4443, %v4444
      %4965 = vmax.xlane.f32.xlu0 %v4964
      %v4966 = vpop.xlane.xlu0 %4965
      %v4967 = vmax.f32 %v4445, %v4446
      %4968 = vmax.xlane.f32.xlu0 %v4967
      %v4969 = vpop.xlane.xlu0 %4968
      %v4970 = vmax.f32 %v4447, %v4448
      %4971 = vmax.xlane.f32.xlu0 %v4970
      %v4972 = vpop.xlane.xlu0 %4971
      %v4973 = vmax.f32 %v4449, %v4450
      %4974 = vmax.xlane.f32.xlu0 %v4973
      %v4975 = vpop.xlane.xlu0 %4974
      %v4976 = vmax.f32 %v4451, %v4452
      %4977 = vmax.xlane.f32.xlu0 %v4976
      %v4978 = vpop.xlane.xlu0 %4977
      %v4979 = vmax.f32 %v4453, %v4454
      %4980 = vmax.xlane.f32.xlu0 %v4979
      %v4981 = vpop.xlane.xlu0 %4980
      %v4982 = vmax.f32 %v4455, %v4456
      %4983 = vmax.xlane.f32.xlu0 %v4982
      %v4984 = vpop.xlane.xlu0 %4983
      %v4985 = vmax.f32 %v4457, %v4458
      %4986 = vmax.xlane.f32.xlu0 %v4985
      %v4987 = vpop.xlane.xlu0 %4986
      %v4988 = vmax.f32 %v4459, %v4460
      %4989 = vmax.xlane.f32.xlu0 %v4988
      %v4990 = vpop.xlane.xlu0 %4989
      %v4991 = vmax.f32 %v4461, %v4462
      %4992 = vmax.xlane.f32.xlu0 %v4991
      %v4993 = vpop.xlane.xlu0 %4992
      %v4994 = vmax.f32 %v4463, %v4464
      %4995 = vmax.xlane.f32.xlu0 %v4994
      %v4996 = vpop.xlane.xlu0 %4995
      %v4997 = vmax.f32 %v4465, %v4466
      %4998 = vmax.xlane.f32.xlu0 %v4997
      %v4999 = vpop.xlane.xlu0 %4998
      %v5000 = vmax.f32 %v4467, %v4468
      %5001 = vmax.xlane.f32.xlu0 %v5000
      %v5002 = vpop.xlane.xlu0 %5001
      %v5003 = vmax.f32 %v4469, %v4470
      %5004 = vmax.xlane.f32.xlu0 %v5003
      %v5005 = vpop.xlane.xlu0 %5004
      %v5006 = vmax.f32 %v4471, %v4472
      %5007 = vmax.xlane.f32.xlu0 %v5006
      %v5008 = vpop.xlane.xlu0 %5007
      %v5009 = vmax.f32 %v4473, %v4474
      %5010 = vmax.xlane.f32.xlu0 %v5009
      %v5011 = vpop.xlane.xlu0 %5010
      %v5012 = vmax.f32 %v4475, %v4476
      %5013 = vmax.xlane.f32.xlu0 %v5012
      %v5014 = vpop.xlane.xlu0 %5013
      %v5015 = vmax.f32 %v4477, %v4478
      %5016 = vmax.xlane.f32.xlu0 %v5015
      %v5017 = vpop.xlane.xlu0 %5016
      %v5018 = vmax.f32 %v4479, %v4480
      %5019 = vmax.xlane.f32.xlu0 %v5018
      %v5020 = vpop.xlane.xlu0 %5019
      %v5021 = vmax.f32 %v4481, %v4482
      %5022 = vmax.xlane.f32.xlu0 %v5021
      %v5023 = vpop.xlane.xlu0 %5022
      %v5024 = vmax.f32 %v4483, %v4484
      %5025 = vmax.xlane.f32.xlu0 %v5024
      %v5026 = vpop.xlane.xlu0 %5025
      %v5027 = vmax.f32 %v4485, %v4486
      %5028 = vmax.xlane.f32.xlu0 %v5027
      %v5029 = vpop.xlane.xlu0 %5028
      %v5030 = vmax.f32 %v4487, %v4488
      %5031 = vmax.xlane.f32.xlu0 %v5030
      %v5032 = vpop.xlane.xlu0 %5031
      %v5033 = vmax.f32 %v4489, %v4490
      %5034 = vmax.xlane.f32.xlu0 %v5033
      %v5035 = vpop.xlane.xlu0 %5034
      %v5036 = vmax.f32 %v4491, %v4492
      %5037 = vmax.xlane.f32.xlu0 %v5036
      %v5038 = vpop.xlane.xlu0 %5037
      %v5039 = vmax.f32 %v4493, %v4494
      %5040 = vmax.xlane.f32.xlu0 %v5039
      %v5041 = vpop.xlane.xlu0 %5040
      %v5042 = vmax.f32 %v4495, %v4496
      %5043 = vmax.xlane.f32.xlu0 %v5042
      %v5044 = vpop.xlane.xlu0 %5043
      %v5045 = vmax.f32 %v4497, %v4498
      %5046 = vmax.xlane.f32.xlu0 %v5045
      %v5047 = vpop.xlane.xlu0 %5046
      %v5048 = vmax.f32 %v4499, %v4500
      %5049 = vmax.xlane.f32.xlu0 %v5048
      %v5050 = vpop.xlane.xlu0 %5049
      %v5051 = vmax.f32 %v4501, %v4502
      %5052 = vmax.xlane.f32.xlu0 %v5051
      %v5053 = vpop.xlane.xlu0 %5052
      %v5054 = vmax.f32 %v4503, %v4504
      %5055 = vmax.xlane.f32.xlu0 %v5054
      %v5056 = vpop.xlane.xlu0 %5055
      %v5057 = vmax.f32 %v4505, %v4506
      %5058 = vmax.xlane.f32.xlu0 %v5057
      %v5059 = vpop.xlane.xlu0 %5058
      %v5060 = vmax.f32 %v4507, %v4508
      %5061 = vmax.xlane.f32.xlu0 %v5060
      %v5062 = vpop.xlane.xlu0 %5061
      %v5063 = vmax.f32 %v4509, %v4510
      %5064 = vmax.xlane.f32.xlu0 %v5063
      %v5065 = vpop.xlane.xlu0 %5064
      %v5066 = vmax.f32 %v4511, %v4512
      %5067 = vmax.xlane.f32.xlu0 %v5066
      %v5068 = vpop.xlane.xlu0 %5067
      %v5069 = vmax.f32 %v4513, %v4514
      %5070 = vmax.xlane.f32.xlu0 %v5069
      %v5071 = vpop.xlane.xlu0 %5070
      %v5072 = vmax.f32 %v4515, %v4516
      %5073 = vmax.xlane.f32.xlu0 %v5072
      %v5074 = vpop.xlane.xlu0 %5073
      %v5075 = vmax.f32 %v4517, %v4518
      %5076 = vmax.xlane.f32.xlu0 %v5075
      %v5077 = vpop.xlane.xlu0 %5076
      %v5078 = vmax.f32 %v4519, %v4520
      %5079 = vmax.xlane.f32.xlu0 %v5078
      %v5080 = vpop.xlane.xlu0 %5079
      %v5081 = vmax.f32 %v4521, %v4522
      %5082 = vmax.xlane.f32.xlu0 %v5081
      %v5083 = vpop.xlane.xlu0 %5082
      %v5084 = vmax.f32 %v4523, %v4524
      %5085 = vmax.xlane.f32.xlu0 %v5084
      %v5086 = vpop.xlane.xlu0 %5085
      %v5087 = vmax.f32 %v4525, %v4526
      %5088 = vmax.xlane.f32.xlu0 %v5087
      %v5089 = vpop.xlane.xlu0 %5088
      %v5090 = vmax.f32 %v4527, %v4528
      %5091 = vmax.xlane.f32.xlu0 %v5090
      %v5092 = vpop.xlane.xlu0 %5091
      %v5093 = vmax.f32 %v4529, %v4530
      %5094 = vmax.xlane.f32.xlu0 %v5093
      %v5095 = vpop.xlane.xlu0 %5094
      %v5096 = vmax.f32 %v4531, %v4532
      %5097 = vmax.xlane.f32.xlu0 %v5096
      %v5098 = vpop.xlane.xlu0 %5097
      %v5099 = vmax.f32 %v4533, %v4534
      %5100 = vmax.xlane.f32.xlu0 %v5099
      %v5101 = vpop.xlane.xlu0 %5100
      %v5102 = vmax.f32 %v4535, %v4536
      %5103 = vmax.xlane.f32.xlu0 %v5102
      %v5104 = vpop.xlane.xlu0 %5103
      %v5105 = vmax.f32 %v4537, %v4538
      %5106 = vmax.xlane.f32.xlu0 %v5105
      %v5107 = vpop.xlane.xlu0 %5106
      %v5108 = vmax.f32 %v4539, %v4540
      %5109 = vmax.xlane.f32.xlu0 %v5108
      %v5110 = vpop.xlane.xlu0 %5109
      %v5111 = vmax.f32 %v4541, %v4542
      %5112 = vmax.xlane.f32.xlu0 %v5111
      %v5113 = vpop.xlane.xlu0 %5112
      %v5114 = vmax.f32 %v4543, %v4544
      %5115 = vmax.xlane.f32.xlu0 %v5114
      %v5116 = vpop.xlane.xlu0 %5115
      %v5117 = vmax.f32 %v4545, %v4546
      %5118 = vmax.xlane.f32.xlu0 %v5117
      %v5119 = vpop.xlane.xlu0 %5118
      %v5120 = vmax.f32 %v4547, %v4548
      %5121 = vmax.xlane.f32.xlu0 %v5120
      %v5122 = vpop.xlane.xlu0 %5121
      %v5123 = vmax.f32 %v4549, %v4550
      %5124 = vmax.xlane.f32.xlu0 %v5123
      %v5125 = vpop.xlane.xlu0 %5124
      %v5126 = vmax.f32 %v4551, %v4552
      %5127 = vmax.xlane.f32.xlu0 %v5126
      %v5128 = vpop.xlane.xlu0 %5127
      %v5129 = vmax.f32 %v4553, %v4554
      %5130 = vmax.xlane.f32.xlu0 %v5129
      %v5131 = vpop.xlane.xlu0 %5130
      %v5132 = vmax.f32 %v4555, %v4556
      %5133 = vmax.xlane.f32.xlu0 %v5132
      %v5134 = vpop.xlane.xlu0 %5133
      %v5135 = vmax.f32 %v4557, %v4558
      %5136 = vmax.xlane.f32.xlu0 %v5135
      %v5137 = vpop.xlane.xlu0 %5136
      %v5138 = vmax.f32 %v4559, %v4560
      %5139 = vmax.xlane.f32.xlu0 %v5138
      %v5140 = vpop.xlane.xlu0 %5139
      %v5141 = vmax.f32 %v4561, %v4562
      %5142 = vmax.xlane.f32.xlu0 %v5141
      %v5143 = vpop.xlane.xlu0 %5142
      %v5144 = vmax.f32 %v4563, %v4564
      %5145 = vmax.xlane.f32.xlu0 %v5144
      %v5146 = vpop.xlane.xlu0 %5145
      %v5147 = vmax.f32 %v4565, %v4566
      %5148 = vmax.xlane.f32.xlu0 %v5147
      %v5149 = vpop.xlane.xlu0 %5148
      %v5150 = vmax.f32 %v4567, %v4568
      %5151 = vmax.xlane.f32.xlu0 %v5150
      %v5152 = vpop.xlane.xlu0 %5151
      %v5153 = vmax.f32 %v4569, %v4570
      %5154 = vmax.xlane.f32.xlu0 %v5153
      %v5155 = vpop.xlane.xlu0 %5154
      %v5156 = vmax.f32 %v4571, %v4572
      %5157 = vmax.xlane.f32.xlu0 %v5156
      %v5158 = vpop.xlane.xlu0 %5157
      %v5159 = vmax.f32 %v4573, %v4574
      %5160 = vmax.xlane.f32.xlu0 %v5159
      %v5161 = vpop.xlane.xlu0 %5160
      %v5162 = vmax.f32 %v4575, %v4576
      %5163 = vmax.xlane.f32.xlu0 %v5162
      %v5164 = vpop.xlane.xlu0 %5163
      %v5165 = vmax.f32 %v4577, %v4578
      %5166 = vmax.xlane.f32.xlu0 %v5165
      %v5167 = vpop.xlane.xlu0 %5166
      %v5168 = vmax.f32 %v4579, %v4580
      %5169 = vmax.xlane.f32.xlu0 %v5168
      %v5170 = vpop.xlane.xlu0 %5169
      %v5171 = vmax.f32 %v4581, %v4582
      %5172 = vmax.xlane.f32.xlu0 %v5171
      %v5173 = vpop.xlane.xlu0 %5172
      %v5174 = vmax.f32 %v4583, %v4584
      %5175 = vmax.xlane.f32.xlu0 %v5174
      %v5176 = vpop.xlane.xlu0 %5175
      %v5177 = vmax.f32 %v4585, %v4586
      %5178 = vmax.xlane.f32.xlu0 %v5177
      %v5179 = vpop.xlane.xlu0 %5178
      %v5180 = vmax.f32 %v4587, %v4588
      %5181 = vmax.xlane.f32.xlu0 %v5180
      %v5182 = vpop.xlane.xlu0 %5181
      %v5183 = vmax.f32 %v4589, %v4590
      %5184 = vmax.xlane.f32.xlu0 %v5183
      %v5185 = vpop.xlane.xlu0 %5184
      %v5186 = vmax.f32 %v4591, %v4592
      %5187 = vmax.xlane.f32.xlu0 %v5186
      %v5188 = vpop.xlane.xlu0 %5187
      %v5189 = vmax.f32 %v4593, %v4594
      %5190 = vmax.xlane.f32.xlu0 %v5189
      %v5191 = vpop.xlane.xlu0 %5190
      %v5192 = vmax.f32 %v4595, %v4596
      %5193 = vmax.xlane.f32.xlu0 %v5192
      %v5194 = vpop.xlane.xlu0 %5193
      %v5195 = vmax.f32 %v4597, %v4598
      %5196 = vmax.xlane.f32.xlu0 %v5195
      %v5197 = vpop.xlane.xlu0 %5196
      %v5198 = vmax.f32 %v4599, %v4600
      %5199 = vmax.xlane.f32.xlu0 %v5198
      %v5200 = vpop.xlane.xlu0 %5199
      %v5201 = vmax.f32 %v4601, %v4602
      %5202 = vmax.xlane.f32.xlu0 %v5201
      %v5203 = vpop.xlane.xlu0 %5202
      %v5204 = vmax.f32 %v4603, %v4604
      %5205 = vmax.xlane.f32.xlu0 %v5204
      %v5206 = vpop.xlane.xlu0 %5205
      %v5207 = vmax.f32 %v4605, %v4606
      %5208 = vmax.xlane.f32.xlu0 %v5207
      %v5209 = vpop.xlane.xlu0 %5208
      %v5210 = vmax.f32 %v4607, %v4608
      %5211 = vmax.xlane.f32.xlu0 %v5210
      %v5212 = vpop.xlane.xlu0 %5211
      %v5213 = vmax.f32 %v4609, %v4610
      %5214 = vmax.xlane.f32.xlu0 %v5213
      %v5215 = vpop.xlane.xlu0 %5214
      %v5216 = vmax.f32 %v4611, %v4612
      %5217 = vmax.xlane.f32.xlu0 %v5216
      %v5218 = vpop.xlane.xlu0 %5217
      %v5219 = vmax.f32 %v4613, %v4614
      %5220 = vmax.xlane.f32.xlu0 %v5219
      %v5221 = vpop.xlane.xlu0 %5220
      %v5222 = vmax.f32 %v4615, %v4616
      %5223 = vmax.xlane.f32.xlu0 %v5222
      %v5224 = vpop.xlane.xlu0 %5223
      %v5225 = vmax.f32 %v4617, %v4618
      %5226 = vmax.xlane.f32.xlu0 %v5225
      %v5227 = vpop.xlane.xlu0 %5226
      %v5228 = vmax.f32 %v4619, %v4620
      %5229 = vmax.xlane.f32.xlu0 %v5228
      %v5230 = vpop.xlane.xlu0 %5229
      %v5231 = vmax.f32 %v4621, %v4622
      %5232 = vmax.xlane.f32.xlu0 %v5231
      %v5233 = vpop.xlane.xlu0 %5232
      %v5234 = vmax.f32 %v4623, %v4624
      %5235 = vmax.xlane.f32.xlu0 %v5234
      %v5236 = vpop.xlane.xlu0 %5235
      %v5237 = vmax.f32 %v4625, %v4626
      %5238 = vmax.xlane.f32.xlu0 %v5237
      %v5239 = vpop.xlane.xlu0 %5238
      %v5240 = vmax.f32 %v4627, %v4628
      %5241 = vmax.xlane.f32.xlu0 %v5240
      %v5242 = vpop.xlane.xlu0 %5241
      %v5243 = vmax.f32 %v4629, %v4630
      %5244 = vmax.xlane.f32.xlu0 %v5243
      %v5245 = vpop.xlane.xlu0 %5244
      %v5246 = vmax.f32 %v4631, %v4632
      %5247 = vmax.xlane.f32.xlu0 %v5246
      %v5248 = vpop.xlane.xlu0 %5247
      %v5249 = vmax.f32 %v4633, %v4634
      %5250 = vmax.xlane.f32.xlu0 %v5249
      %v5251 = vpop.xlane.xlu0 %5250
      %v5252 = vmax.f32 %v4635, %v4636
      %5253 = vmax.xlane.f32.xlu0 %v5252
      %v5254 = vpop.xlane.xlu0 %5253
      %v5255 = vmax.f32 %v4637, %v4638
      %5256 = vmax.xlane.f32.xlu0 %v5255
      %v5257 = vpop.xlane.xlu0 %5256
      %v5258 = vmax.f32 %v4639, %v4640
      %5259 = vmax.xlane.f32.xlu0 %v5258
      %v5260 = vpop.xlane.xlu0 %5259
      %v5261 = vmax.f32 %v4641, %v4642
      %5262 = vmax.xlane.f32.xlu0 %v5261
      %v5263 = vpop.xlane.xlu0 %5262
      %v5264 = vmax.f32 %v4643, %v4644
      %5265 = vmax.xlane.f32.xlu0 %v5264
      %v5266 = vpop.xlane.xlu0 %5265
      %v5267 = vmax.f32 %v4645, %v4646
      %5268 = vmax.xlane.f32.xlu0 %v5267
      %v5269 = vpop.xlane.xlu0 %5268
      %v5270 = vmax.f32 %v4647, %v4648
      %5271 = vmax.xlane.f32.xlu0 %v5270
      %v5272 = vpop.xlane.xlu0 %5271
      %v5273 = vmax.f32 %v4649, %v4650
      %5274 = vmax.xlane.f32.xlu0 %v5273
      %v5275 = vpop.xlane.xlu0 %5274
      %v5276 = vmax.f32 %v4651, %v4652
      %5277 = vmax.xlane.f32.xlu0 %v5276
      %v5278 = vpop.xlane.xlu0 %5277
      %v5279 = vmax.f32 %v4653, %v4654
      %5280 = vmax.xlane.f32.xlu0 %v5279
      %v5281 = vpop.xlane.xlu0 %5280
      %v5282 = vmax.f32 %v4655, %v4656
      %5283 = vmax.xlane.f32.xlu0 %v5282
      %v5284 = vpop.xlane.xlu0 %5283
      %v5285 = vmax.f32 %v4657, %v4658
      %5286 = vmax.xlane.f32.xlu0 %v5285
      %v5287 = vpop.xlane.xlu0 %5286
      %v5288 = vmax.f32 %v4659, %v4660
      %5289 = vmax.xlane.f32.xlu0 %v5288
      %v5290 = vpop.xlane.xlu0 %5289
      %v5291 = vmax.f32 %v4661, %v4662
      %5292 = vmax.xlane.f32.xlu0 %v5291
      %v5293 = vpop.xlane.xlu0 %5292
      %v5294 = vmax.f32 %v4663, %v4664
      %5295 = vmax.xlane.f32.xlu0 %v5294
      %v5296 = vpop.xlane.xlu0 %5295
      %v5297 = vmax.f32 %v4665, %v4666
      %5298 = vmax.xlane.f32.xlu0 %v5297
      %v5299 = vpop.xlane.xlu0 %5298
      %v5300 = vmax.f32 %v4667, %v4668
      %5301 = vmax.xlane.f32.xlu0 %v5300
      %v5302 = vpop.xlane.xlu0 %5301
      %v5303 = vmax.f32 %v4669, %v4670
      %5304 = vmax.xlane.f32.xlu0 %v5303
      %v5305 = vpop.xlane.xlu0 %5304
      %v5306 = vmax.f32 %v4671, %v4672
      %5307 = vmax.xlane.f32.xlu0 %v5306
      %v5308 = vpop.xlane.xlu0 %5307
      %v5309 = vmax.f32 %v4673, %v4674
      %5310 = vmax.xlane.f32.xlu0 %v5309
      %v5311 = vpop.xlane.xlu0 %5310
      %v5312 = vmax.f32 %v4675, %v4676
      %5313 = vmax.xlane.f32.xlu0 %v5312
      %v5314 = vpop.xlane.xlu0 %5313
      %v5315 = vmax.f32 %v4677, %v4678
      %5316 = vmax.xlane.f32.xlu0 %v5315
      %v5317 = vpop.xlane.xlu0 %5316
      %v5318 = vmax.f32 %v4679, %v4680
      %5319 = vmax.xlane.f32.xlu0 %v5318
      %v5320 = vpop.xlane.xlu0 %5319
      %v5321 = vmax.f32 %v4681, %v4682
      %5322 = vmax.xlane.f32.xlu0 %v5321
      %v5323 = vpop.xlane.xlu0 %5322
      %v5324 = vmax.f32 %v4683, %v4684
      %5325 = vmax.xlane.f32.xlu0 %v5324
      %v5326 = vpop.xlane.xlu0 %5325
      %v5327 = vmax.f32 %v4685, %v4686
      %5328 = vmax.xlane.f32.xlu0 %v5327
      %v5329 = vpop.xlane.xlu0 %5328
      %v5330 = vmax.f32 %v4687, %v4688
      %5331 = vmax.xlane.f32.xlu0 %v5330
      %v5332 = vpop.xlane.xlu0 %5331
      %v5333 = vmax.f32 %v4689, %v4690
      %5334 = vmax.xlane.f32.xlu0 %v5333
      %v5335 = vpop.xlane.xlu0 %5334
      %v5336 = vmax.f32 %v4691, %v4692
      %5337 = vmax.xlane.f32.xlu0 %v5336
      %v5338 = vpop.xlane.xlu0 %5337
      %v5339 = vmax.f32 %v4693, %v4694
      %5340 = vmax.xlane.f32.xlu0 %v5339
      %v5341 = vpop.xlane.xlu0 %5340
      %v5342 = vmax.f32 %v4695, %v4696
      %5343 = vmax.xlane.f32.xlu0 %v5342
      %v5344 = vpop.xlane.xlu0 %5343
      %v5345 = vmax.f32 %v4697, %v4698
      %5346 = vmax.xlane.f32.xlu0 %v5345
      %v5347 = vpop.xlane.xlu0 %5346
      %v5348 = vmax.f32 %v4699, %v4700
      %5349 = vmax.xlane.f32.xlu0 %v5348
      %v5350 = vpop.xlane.xlu0 %5349
      %v5351 = vmax.f32 %v4701, %v4702
      %5352 = vmax.xlane.f32.xlu0 %v5351
      %v5353 = vpop.xlane.xlu0 %5352
      %v5354 = vmax.f32 %v4703, %v4704
      %5355 = vmax.xlane.f32.xlu0 %v5354
      %v5356 = vpop.xlane.xlu0 %5355
      %v5357 = vmax.f32 %v4705, %v4706
      %5358 = vmax.xlane.f32.xlu0 %v5357
      %v5359 = vpop.xlane.xlu0 %5358
      %v5360 = vmax.f32 %v4707, %v4708
      %5361 = vmax.xlane.f32.xlu0 %v5360
      %v5362 = vpop.xlane.xlu0 %5361
      %v5363 = vmax.f32 %v4709, %v4710
      %5364 = vmax.xlane.f32.xlu0 %v5363
      %v5365 = vpop.xlane.xlu0 %5364
      %v5366 = vmax.f32 %v4711, %v4712
      %5367 = vmax.xlane.f32.xlu0 %v5366
      %v5368 = vpop.xlane.xlu0 %5367
      %v5369 = vmax.f32 %v4713, %v4714
      %5370 = vmax.xlane.f32.xlu0 %v5369
      %v5371 = vpop.xlane.xlu0 %5370
      %v5372 = vmax.f32 %v4715, %v4716
      %5373 = vmax.xlane.f32.xlu0 %v5372
      %v5374 = vpop.xlane.xlu0 %5373
      %v5375 = vmax.f32 %v4717, %v4718
      %5376 = vmax.xlane.f32.xlu0 %v5375
      %v5377 = vpop.xlane.xlu0 %5376
      %v5378 = vmax.f32 %v4719, %v4720
      %5379 = vmax.xlane.f32.xlu0 %v5378
      %v5380 = vpop.xlane.xlu0 %5379
      %v5381 = vmax.f32 %v4721, %v4722
      %5382 = vmax.xlane.f32.xlu0 %v5381
      %v5383 = vpop.xlane.xlu0 %5382
      %v5384 = vmax.f32 %v4723, %v4724
      %5385 = vmax.xlane.f32.xlu0 %v5384
      %v5386 = vpop.xlane.xlu0 %5385
      %v5387 = vmax.f32 %v4725, %v4726
      %5388 = vmax.xlane.f32.xlu0 %v5387
      %v5389 = vpop.xlane.xlu0 %5388
      %v5390 = vmax.f32 %v4727, %v4728
      %5391 = vmax.xlane.f32.xlu0 %v5390
      %v5392 = vpop.xlane.xlu0 %5391
      %v5393 = vmax.f32 %v4729, %v4730
      %5394 = vmax.xlane.f32.xlu0 %v5393
      %v5395 = vpop.xlane.xlu0 %5394
      %v5396 = vmax.f32 %v4731, %v4732
      %5397 = vmax.xlane.f32.xlu0 %v5396
      %v5398 = vpop.xlane.xlu0 %5397
      %v5399 = vmax.f32 %v4733, %v4734
      %5400 = vmax.xlane.f32.xlu0 %v5399
      %v5401 = vpop.xlane.xlu0 %5400
      %v5402 = vmax.f32 %v4735, %v4736
      %5403 = vmax.xlane.f32.xlu0 %v5402
      %v5404 = vpop.xlane.xlu0 %5403
      %v5405 = vmax.f32 %v4737, %v4738
      %5406 = vmax.xlane.f32.xlu0 %v5405
      %v5407 = vpop.xlane.xlu0 %5406
      %v5408 = vmax.f32 %v4739, %v4740
      %5409 = vmax.xlane.f32.xlu0 %v5408
      %v5410 = vpop.xlane.xlu0 %5409
      %v5411 = vmax.f32 %v4741, %v4742
      %5412 = vmax.xlane.f32.xlu0 %v5411
      %v5413 = vpop.xlane.xlu0 %5412
      %v5414 = vmax.f32 %v4743, %v4744
      %5415 = vmax.xlane.f32.xlu0 %v5414
      %v5416 = vpop.xlane.xlu0 %5415
      %v5417 = vmax.f32 %v4745, %v4746
      %5418 = vmax.xlane.f32.xlu0 %v5417
      %v5419 = vpop.xlane.xlu0 %5418
      %v5420 = vmax.f32 %v4747, %v4748
      %5421 = vmax.xlane.f32.xlu0 %v5420
      %v5422 = vpop.xlane.xlu0 %5421
      %v5423 = vmax.f32 %v4749, %v4750
      %5424 = vmax.xlane.f32.xlu0 %v5423
      %v5425 = vpop.xlane.xlu0 %5424
      %v5426 = vmax.f32 %v4751, %v4752
      %5427 = vmax.xlane.f32.xlu0 %v5426
      %v5428 = vpop.xlane.xlu0 %5427
      %v5429 = vmax.f32 %v4753, %v4754
      %5430 = vmax.xlane.f32.xlu0 %v5429
      %v5431 = vpop.xlane.xlu0 %5430
      %v5432 = vmax.f32 %v4755, %v4756
      %5433 = vmax.xlane.f32.xlu0 %v5432
      %v5434 = vpop.xlane.xlu0 %5433
      %v5435 = vmax.f32 %v4757, %v4758
      %5436 = vmax.xlane.f32.xlu0 %v5435
      %v5437 = vpop.xlane.xlu0 %5436
      %v5438 = vmax.f32 %v4759, %v4760
      %5439 = vmax.xlane.f32.xlu0 %v5438
      %v5440 = vpop.xlane.xlu0 %5439
      %v5441 = vmax.f32 %v4761, %v4762
      %5442 = vmax.xlane.f32.xlu0 %v5441
      %v5443 = vpop.xlane.xlu0 %5442
      %v5444 = vmax.f32 %v4763, %v4764
      %5445 = vmax.xlane.f32.xlu0 %v5444
      %v5446 = vpop.xlane.xlu0 %5445
      %v5447 = vmax.f32 %v4765, %v4766
      %5448 = vmax.xlane.f32.xlu0 %v5447
      %v5449 = vpop.xlane.xlu0 %5448
      %v5450 = vmax.f32 %v4767, %v4768
      %5451 = vmax.xlane.f32.xlu0 %v5450
      %v5452 = vpop.xlane.xlu0 %5451
      %v5453 = vmax.f32 %v4769, %v4770
      %5454 = vmax.xlane.f32.xlu0 %v5453
      %v5455 = vpop.xlane.xlu0 %5454
      %v5456 = vmax.f32 %v4771, %v4772
      %5457 = vmax.xlane.f32.xlu0 %v5456
      %v5458 = vpop.xlane.xlu0 %5457
      %v5459 = vmax.f32 %v4773, %v4774
      %5460 = vmax.xlane.f32.xlu0 %v5459
      %v5461 = vpop.xlane.xlu0 %5460
      %v5462 = vmax.f32 %v4775, %v4776
      %5463 = vmax.xlane.f32.xlu0 %v5462
      %v5464 = vpop.xlane.xlu0 %5463
      %v5465 = vmax.f32 %v4777, %v4778
      %5466 = vmax.xlane.f32.xlu0 %v5465
      %v5467 = vpop.xlane.xlu0 %5466
      %v5468 = vmax.f32 %v4779, %v4780
      %5469 = vmax.xlane.f32.xlu0 %v5468
      %v5470 = vpop.xlane.xlu0 %5469
      %v5471 = vmax.f32 %v4781, %v4782
      %5472 = vmax.xlane.f32.xlu0 %v5471
      %v5473 = vpop.xlane.xlu0 %5472
      %v5474 = vmax.f32 %v4783, %v4784
      %5475 = vmax.xlane.f32.xlu0 %v5474
      %v5476 = vpop.xlane.xlu0 %5475
      %v5477 = vmax.f32 %v4785, %v4786
      %5478 = vmax.xlane.f32.xlu0 %v5477
      %v5479 = vpop.xlane.xlu0 %5478
      %v5480 = vmax.f32 %v4787, %v4788
      %5481 = vmax.xlane.f32.xlu0 %v5480
      %v5482 = vpop.xlane.xlu0 %5481
      %v5483 = vmax.f32 %v4789, %v4790
      %5484 = vmax.xlane.f32.xlu0 %v5483
      %v5485 = vpop.xlane.xlu0 %5484
      %v5486 = vmax.f32 %v4791, %v4792
      %5487 = vmax.xlane.f32.xlu0 %v5486
      %v5488 = vpop.xlane.xlu0 %5487
      %v5489 = vmax.f32 %v4793, %v4794
      %5490 = vmax.xlane.f32.xlu0 %v5489
      %v5491 = vpop.xlane.xlu0 %5490
      %v5492 = vmax.f32 %v4795, %v4796
      %5493 = vmax.xlane.f32.xlu0 %v5492
      %v5494 = vpop.xlane.xlu0 %5493
      %v5495 = vmax.f32 %v4797, %v4798
      %5496 = vmax.xlane.f32.xlu0 %v5495
      %v5497 = vpop.xlane.xlu0 %5496
      %v5498 = vmax.f32 %v4799, %v4800
      %5499 = vmax.xlane.f32.xlu0 %v5498
      %v5500 = vpop.xlane.xlu0 %5499
      %v5501 = vmax.f32 %v4801, %v4802
      %5502 = vmax.xlane.f32.xlu0 %v5501
      %v5503 = vpop.xlane.xlu0 %5502
      %v5504 = vmax.f32 %v4803, %v4804
      %5505 = vmax.xlane.f32.xlu0 %v5504
      %v5506 = vpop.xlane.xlu0 %5505
      %v5507 = vmax.f32 %v4805, %v4806
      %5508 = vmax.xlane.f32.xlu0 %v5507
      %v5509 = vpop.xlane.xlu0 %5508
      %v5510 = vmax.f32 %v4807, %v4808
      %5511 = vmax.xlane.f32.xlu0 %v5510
      %v5512 = vpop.xlane.xlu0 %5511
      %v5513 = vmax.f32 %v4809, %v4810
      %5514 = vmax.xlane.f32.xlu0 %v5513
      %v5515 = vpop.xlane.xlu0 %5514
      %v5516 = vmax.f32 %v4811, %v4812
      %5517 = vmax.xlane.f32.xlu0 %v5516
      %v5518 = vpop.xlane.xlu0 %5517
      %v5519 = vmax.f32 %v4813, %v4814
      %5520 = vmax.xlane.f32.xlu0 %v5519
      %v5521 = vpop.xlane.xlu0 %5520
      %v5522 = vmax.f32 %v4815, %v4816
      %5523 = vmax.xlane.f32.xlu0 %v5522
      %v5524 = vpop.xlane.xlu0 %5523
      %v5525 = vmax.f32 %v4817, %v4818
      %5526 = vmax.xlane.f32.xlu0 %v5525
      %v5527 = vpop.xlane.xlu0 %5526
      %v5528 = vmax.f32 %v4819, %v4820
      %5529 = vmax.xlane.f32.xlu0 %v5528
      %v5530 = vpop.xlane.xlu0 %5529
      %v5531 = vmax.f32 %v4821, %v4822
      %5532 = vmax.xlane.f32.xlu0 %v5531
      %v5533 = vpop.xlane.xlu0 %5532
      %v5534 = vmax.f32 %v4823, %v4824
      %5535 = vmax.xlane.f32.xlu0 %v5534
      %v5536 = vpop.xlane.xlu0 %5535
      %v5537 = vmax.f32 %v4825, %v4826
      %5538 = vmax.xlane.f32.xlu0 %v5537
      %v5539 = vpop.xlane.xlu0 %5538
      %v5540 = vmax.f32 %v4827, %v4828
      %5541 = vmax.xlane.f32.xlu0 %v5540
      %v5542 = vpop.xlane.xlu0 %5541
      %v5543 = vmax.f32 %v4829, %v4830
      %5544 = vmax.xlane.f32.xlu0 %v5543
      %v5545 = vpop.xlane.xlu0 %5544
      %v5546 = vmax.f32 %v4831, %v4832
      %5547 = vmax.xlane.f32.xlu0 %v5546
      %v5548 = vpop.xlane.xlu0 %5547
      %v5549 = vmax.f32 %v4833, %v4834
      %5550 = vmax.xlane.f32.xlu0 %v5549
      %v5551 = vpop.xlane.xlu0 %5550
      %v5552 = vmax.f32 %v4835, %v4836
      %5553 = vmax.xlane.f32.xlu0 %v5552
      %v5554 = vpop.xlane.xlu0 %5553
      %v5555 = vmax.f32 %v4837, %v4838
      %5556 = vmax.xlane.f32.xlu0 %v5555
      %v5557 = vpop.xlane.xlu0 %5556
      %v5558 = vmax.f32 %v4839, %v4840
      %5559 = vmax.xlane.f32.xlu0 %v5558
      %v5560 = vpop.xlane.xlu0 %5559
      %v5561 = vmax.f32 %v4841, %v4842
      %5562 = vmax.xlane.f32.xlu0 %v5561
      %v5563 = vpop.xlane.xlu0 %5562
      %v5564 = vmax.f32 %v4843, %v4844
      %5565 = vmax.xlane.f32.xlu0 %v5564
      %v5566 = vpop.xlane.xlu0 %5565
      %v5567 = vmax.f32 %v4845, %v4846
      %5568 = vmax.xlane.f32.xlu0 %v5567
      %v5569 = vpop.xlane.xlu0 %5568
      %v5570 = vmax.f32 %v4847, %v4848
      %5571 = vmax.xlane.f32.xlu0 %v5570
      %v5572 = vpop.xlane.xlu0 %5571
      %v5573 = vmax.f32 %v4849, %v4850
      %5574 = vmax.xlane.f32.xlu0 %v5573
      %v5575 = vpop.xlane.xlu0 %5574
      %v5576 = vmax.f32 %v4851, %v4852
      %5577 = vmax.xlane.f32.xlu0 %v5576
      %v5578 = vpop.xlane.xlu0 %5577
      %v5579 = vmax.f32 %v4853, %v4854
      %5580 = vmax.xlane.f32.xlu0 %v5579
      %v5581 = vpop.xlane.xlu0 %5580
      %v5582 = vmax.f32 %v4855, %v4856
      %5583 = vmax.xlane.f32.xlu0 %v5582
      %v5584 = vpop.xlane.xlu0 %5583
      %v5585 = vmax.f32 %v4857, %v4858
      %5586 = vmax.xlane.f32.xlu0 %v5585
      %v5587 = vpop.xlane.xlu0 %5586
      %v5588 = vmax.f32 %v4859, %v4860
      %5589 = vmax.xlane.f32.xlu0 %v5588
      %v5590 = vpop.xlane.xlu0 %5589
      %v5591 = vmax.f32 %v4861, %v4862
      %5592 = vmax.xlane.f32.xlu0 %v5591
      %v5593 = vpop.xlane.xlu0 %5592
      %v5594 = vmax.f32 %v4863, %v4864
      %5595 = vmax.xlane.f32.xlu0 %v5594
      %v5596 = vpop.xlane.xlu0 %5595
      %v5597 = vmax.f32 %v4865, %v4866
      %5598 = vmax.xlane.f32.xlu0 %v5597
      %v5599 = vpop.xlane.xlu0 %5598
      %v5600 = vmax.f32 %v4867, %v4868
      %5601 = vmax.xlane.f32.xlu0 %v5600
      %v5602 = vpop.xlane.xlu0 %5601
      %v5603 = vmax.f32 %v4869, %v4870
      %5604 = vmax.xlane.f32.xlu0 %v5603
      %v5605 = vpop.xlane.xlu0 %5604
      %v5606 = vmax.f32 %v4871, %v4872
      %5607 = vmax.xlane.f32.xlu0 %v5606
      %v5608 = vpop.xlane.xlu0 %5607
      %v5609 = vmax.f32 %v4873, %v4874
      %5610 = vmax.xlane.f32.xlu0 %v5609
      %v5611 = vpop.xlane.xlu0 %5610
      %v5612 = vmax.f32 %v4875, %v4876
      %5613 = vmax.xlane.f32.xlu0 %v5612
      %v5614 = vpop.xlane.xlu0 %5613
      %v5615 = vmax.f32 %v4877, %v4878
      %5616 = vmax.xlane.f32.xlu0 %v5615
      %v5617 = vpop.xlane.xlu0 %5616
      %v5618 = vmax.f32 %v4879, %v4880
      %5619 = vmax.xlane.f32.xlu0 %v5618
      %v5620 = vpop.xlane.xlu0 %5619
      %v5621 = vmax.f32 %v4881, %v4882
      %5622 = vmax.xlane.f32.xlu0 %v5621
      %v5623 = vpop.xlane.xlu0 %5622
      %v5624 = vmax.f32 %v4883, %v4884
      %5625 = vmax.xlane.f32.xlu0 %v5624
      %v5626 = vpop.xlane.xlu0 %5625
      %v5627 = vmax.f32 %v4885, %v4886
      %5628 = vmax.xlane.f32.xlu0 %v5627
      %v5629 = vpop.xlane.xlu0 %5628
      %v5630 = vmax.f32 %v4887, %v4888
      %5631 = vmax.xlane.f32.xlu0 %v5630
      %v5632 = vpop.xlane.xlu0 %5631
      %v5633 = vmax.f32 %v4889, %v4890
      %5634 = vmax.xlane.f32.xlu0 %v5633
      %v5635 = vpop.xlane.xlu0 %5634
      %v5636 = vmax.f32 %v4891, %v4892
      %5637 = vmax.xlane.f32.xlu0 %v5636
      %v5638 = vpop.xlane.xlu0 %5637
      %v5639 = vmax.f32 %v4893, %v4894
      %5640 = vmax.xlane.f32.xlu0 %v5639
      %v5641 = vpop.xlane.xlu0 %5640
      %v5642 = vmax.f32 %v4895, %v4896
      %5643 = vmax.xlane.f32.xlu0 %v5642
      %v5644 = vpop.xlane.xlu0 %5643
      %v5645 = vmax.f32 %v4897, %v4898
      %5646 = vmax.xlane.f32.xlu0 %v5645
      %v5647 = vpop.xlane.xlu0 %5646
      %v5648 = vmax.f32 %v4899, %v4900
      %5649 = vmax.xlane.f32.xlu0 %v5648
      %v5650 = vpop.xlane.xlu0 %5649
      %v5651 = vmax.f32 %v4901, %v4902
      %5652 = vmax.xlane.f32.xlu0 %v5651
      %v5653 = vpop.xlane.xlu0 %5652
      %v5654 = vmax.f32 %v4903, %v4904
      %5655 = vmax.xlane.f32.xlu0 %v5654
      %v5656 = vpop.xlane.xlu0 %5655
      %v5657 = vmax.f32 %v4905, %v4906
      %5658 = vmax.xlane.f32.xlu0 %v5657
      %v5659 = vpop.xlane.xlu0 %5658
      %v5660 = vmax.f32 %v4907, %v4908
      %5661 = vmax.xlane.f32.xlu0 %v5660
      %v5662 = vpop.xlane.xlu0 %5661
      %v5663 = vmax.f32 %v4909, %v4910
      %5664 = vmax.xlane.f32.xlu0 %v5663
      %v5665 = vpop.xlane.xlu0 %5664
      %v5666 = vmax.f32 %v4911, %v4912
      %5667 = vmax.xlane.f32.xlu0 %v5666
      %v5668 = vpop.xlane.xlu0 %5667
      %v5669 = vmax.f32 %v4913, %v4914
      %5670 = vmax.xlane.f32.xlu0 %v5669
      %v5671 = vpop.xlane.xlu0 %5670
      %v5672 = vmax.f32 %v4915, %v4916
      %5673 = vmax.xlane.f32.xlu0 %v5672
      %v5674 = vpop.xlane.xlu0 %5673
      %v5675 = vmax.f32 %v4917, %v4918
      %5676 = vmax.xlane.f32.xlu0 %v5675
      %v5677 = vpop.xlane.xlu0 %5676
      %v5678 = vmax.f32 %v4919, %v4920
      %5679 = vmax.xlane.f32.xlu0 %v5678
      %v5680 = vpop.xlane.xlu0 %5679
      %v5681 = vmax.f32 %v4921, %v4922
      %5682 = vmax.xlane.f32.xlu0 %v5681
      %v5683 = vpop.xlane.xlu0 %5682
      %v5684 = vmax.f32 %v4923, %v4924
      %5685 = vmax.xlane.f32.xlu0 %v5684
      %v5686 = vpop.xlane.xlu0 %5685
      %v5687 = vmax.f32 %v4925, %v4926
      %5688 = vmax.xlane.f32.xlu0 %v5687
      %v5689 = vpop.xlane.xlu0 %5688
      %v5690 = vmax.f32 %v4927, %v4928
      %5691 = vmax.xlane.f32.xlu0 %v5690
      %v5692 = vpop.xlane.xlu0 %5691
      %v5693 = vmax.f32 %v4929, %v4930
      %5694 = vmax.xlane.f32.xlu0 %v5693
      %v5695 = vpop.xlane.xlu0 %5694
      %v5696 = vmax.f32 %v4931, %v4932
      %5697 = vmax.xlane.f32.xlu0 %v5696
      %v5698 = vpop.xlane.xlu0 %5697
      %v5699 = vmax.f32 %v4933, %v4934
      %5700 = vmax.xlane.f32.xlu0 %v5699
      %v5701 = vpop.xlane.xlu0 %5700
      %v5702 = vmax.f32 %v4935, %v4936
      %5703 = vmax.xlane.f32.xlu0 %v5702
      %v5704 = vpop.xlane.xlu0 %5703
      %v5705 = vsub.f32 %v4425, %v4939
      %v5706 = vsub.f32 %v4426, %v4939
      %v5707 = vsub.f32 %v4427, %v4942
      %v5708 = vsub.f32 %v4428, %v4942
      %v5709 = vsub.f32 %v4429, %v4945
      %v5710 = vsub.f32 %v4430, %v4945
      %v5711 = vsub.f32 %v4431, %v4948
      %v5712 = vsub.f32 %v4432, %v4948
      %v5713 = vsub.f32 %v4433, %v4951
      %v5714 = vsub.f32 %v4434, %v4951
      %v5715 = vsub.f32 %v4435, %v4954
      %v5716 = vsub.f32 %v4436, %v4954
      %v5717 = vsub.f32 %v4437, %v4957
      %v5718 = vsub.f32 %v4438, %v4957
      %v5719 = vsub.f32 %v4439, %v4960
      %v5720 = vsub.f32 %v4440, %v4960
      %v5721 = vsub.f32 %v4441, %v4963
      %v5722 = vsub.f32 %v4442, %v4963
      %v5723 = vsub.f32 %v4443, %v4966
      %v5724 = vsub.f32 %v4444, %v4966
      %v5725 = vsub.f32 %v4445, %v4969
      %v5726 = vsub.f32 %v4446, %v4969
      %v5727 = vsub.f32 %v4447, %v4972
      %v5728 = vsub.f32 %v4448, %v4972
      %v5729 = vsub.f32 %v4449, %v4975
      %v5730 = vsub.f32 %v4450, %v4975
      %v5731 = vsub.f32 %v4451, %v4978
      %v5732 = vsub.f32 %v4452, %v4978
      %v5733 = vsub.f32 %v4453, %v4981
      %v5734 = vsub.f32 %v4454, %v4981
      %v5735 = vsub.f32 %v4455, %v4984
      %v5736 = vsub.f32 %v4456, %v4984
      %v5737 = vsub.f32 %v4457, %v4987
      %v5738 = vsub.f32 %v4458, %v4987
      %v5739 = vsub.f32 %v4459, %v4990
      %v5740 = vsub.f32 %v4460, %v4990
      %v5741 = vsub.f32 %v4461, %v4993
      %v5742 = vsub.f32 %v4462, %v4993
      %v5743 = vsub.f32 %v4463, %v4996
      %v5744 = vsub.f32 %v4464, %v4996
      %v5745 = vsub.f32 %v4465, %v4999
      %v5746 = vsub.f32 %v4466, %v4999
      %v5747 = vsub.f32 %v4467, %v5002
      %v5748 = vsub.f32 %v4468, %v5002
      %v5749 = vsub.f32 %v4469, %v5005
      %v5750 = vsub.f32 %v4470, %v5005
      %v5751 = vsub.f32 %v4471, %v5008
      %v5752 = vsub.f32 %v4472, %v5008
      %v5753 = vsub.f32 %v4473, %v5011
      %v5754 = vsub.f32 %v4474, %v5011
      %v5755 = vsub.f32 %v4475, %v5014
      %v5756 = vsub.f32 %v4476, %v5014
      %v5757 = vsub.f32 %v4477, %v5017
      %v5758 = vsub.f32 %v4478, %v5017
      %v5759 = vsub.f32 %v4479, %v5020
      %v5760 = vsub.f32 %v4480, %v5020
      %v5761 = vsub.f32 %v4481, %v5023
      %v5762 = vsub.f32 %v4482, %v5023
      %v5763 = vsub.f32 %v4483, %v5026
      %v5764 = vsub.f32 %v4484, %v5026
      %v5765 = vsub.f32 %v4485, %v5029
      %v5766 = vsub.f32 %v4486, %v5029
      %v5767 = vsub.f32 %v4487, %v5032
      %v5768 = vsub.f32 %v4488, %v5032
      %v5769 = vsub.f32 %v4489, %v5035
      %v5770 = vsub.f32 %v4490, %v5035
      %v5771 = vsub.f32 %v4491, %v5038
      %v5772 = vsub.f32 %v4492, %v5038
      %v5773 = vsub.f32 %v4493, %v5041
      %v5774 = vsub.f32 %v4494, %v5041
      %v5775 = vsub.f32 %v4495, %v5044
      %v5776 = vsub.f32 %v4496, %v5044
      %v5777 = vsub.f32 %v4497, %v5047
      %v5778 = vsub.f32 %v4498, %v5047
      %v5779 = vsub.f32 %v4499, %v5050
      %v5780 = vsub.f32 %v4500, %v5050
      %v5781 = vsub.f32 %v4501, %v5053
      %v5782 = vsub.f32 %v4502, %v5053
      %v5783 = vsub.f32 %v4503, %v5056
      %v5784 = vsub.f32 %v4504, %v5056
      %v5785 = vsub.f32 %v4505, %v5059
      %v5786 = vsub.f32 %v4506, %v5059
      %v5787 = vsub.f32 %v4507, %v5062
      %v5788 = vsub.f32 %v4508, %v5062
      %v5789 = vsub.f32 %v4509, %v5065
      %v5790 = vsub.f32 %v4510, %v5065
      %v5791 = vsub.f32 %v4511, %v5068
      %v5792 = vsub.f32 %v4512, %v5068
      %v5793 = vsub.f32 %v4513, %v5071
      %v5794 = vsub.f32 %v4514, %v5071
      %v5795 = vsub.f32 %v4515, %v5074
      %v5796 = vsub.f32 %v4516, %v5074
      %v5797 = vsub.f32 %v4517, %v5077
      %v5798 = vsub.f32 %v4518, %v5077
      %v5799 = vsub.f32 %v4519, %v5080
      %v5800 = vsub.f32 %v4520, %v5080
      %v5801 = vsub.f32 %v4521, %v5083
      %v5802 = vsub.f32 %v4522, %v5083
      %v5803 = vsub.f32 %v4523, %v5086
      %v5804 = vsub.f32 %v4524, %v5086
      %v5805 = vsub.f32 %v4525, %v5089
      %v5806 = vsub.f32 %v4526, %v5089
      %v5807 = vsub.f32 %v4527, %v5092
      %v5808 = vsub.f32 %v4528, %v5092
      %v5809 = vsub.f32 %v4529, %v5095
      %v5810 = vsub.f32 %v4530, %v5095
      %v5811 = vsub.f32 %v4531, %v5098
      %v5812 = vsub.f32 %v4532, %v5098
      %v5813 = vsub.f32 %v4533, %v5101
      %v5814 = vsub.f32 %v4534, %v5101
      %v5815 = vsub.f32 %v4535, %v5104
      %v5816 = vsub.f32 %v4536, %v5104
      %v5817 = vsub.f32 %v4537, %v5107
      %v5818 = vsub.f32 %v4538, %v5107
      %v5819 = vsub.f32 %v4539, %v5110
      %v5820 = vsub.f32 %v4540, %v5110
      %v5821 = vsub.f32 %v4541, %v5113
      %v5822 = vsub.f32 %v4542, %v5113
      %v5823 = vsub.f32 %v4543, %v5116
      %v5824 = vsub.f32 %v4544, %v5116
      %v5825 = vsub.f32 %v4545, %v5119
      %v5826 = vsub.f32 %v4546, %v5119
      %v5827 = vsub.f32 %v4547, %v5122
      %v5828 = vsub.f32 %v4548, %v5122
      %v5829 = vsub.f32 %v4549, %v5125
      %v5830 = vsub.f32 %v4550, %v5125
      %v5831 = vsub.f32 %v4551, %v5128
      %v5832 = vsub.f32 %v4552, %v5128
      %v5833 = vsub.f32 %v4553, %v5131
      %v5834 = vsub.f32 %v4554, %v5131
      %v5835 = vsub.f32 %v4555, %v5134
      %v5836 = vsub.f32 %v4556, %v5134
      %v5837 = vsub.f32 %v4557, %v5137
      %v5838 = vsub.f32 %v4558, %v5137
      %v5839 = vsub.f32 %v4559, %v5140
      %v5840 = vsub.f32 %v4560, %v5140
      %v5841 = vsub.f32 %v4561, %v5143
      %v5842 = vsub.f32 %v4562, %v5143
      %v5843 = vsub.f32 %v4563, %v5146
      %v5844 = vsub.f32 %v4564, %v5146
      %v5845 = vsub.f32 %v4565, %v5149
      %v5846 = vsub.f32 %v4566, %v5149
      %v5847 = vsub.f32 %v4567, %v5152
      %v5848 = vsub.f32 %v4568, %v5152
      %v5849 = vsub.f32 %v4569, %v5155
      %v5850 = vsub.f32 %v4570, %v5155
      %v5851 = vsub.f32 %v4571, %v5158
      %v5852 = vsub.f32 %v4572, %v5158
      %v5853 = vsub.f32 %v4573, %v5161
      %v5854 = vsub.f32 %v4574, %v5161
      %v5855 = vsub.f32 %v4575, %v5164
      %v5856 = vsub.f32 %v4576, %v5164
      %v5857 = vsub.f32 %v4577, %v5167
      %v5858 = vsub.f32 %v4578, %v5167
      %v5859 = vsub.f32 %v4579, %v5170
      %v5860 = vsub.f32 %v4580, %v5170
      %v5861 = vsub.f32 %v4581, %v5173
      %v5862 = vsub.f32 %v4582, %v5173
      %v5863 = vsub.f32 %v4583, %v5176
      %v5864 = vsub.f32 %v4584, %v5176
      %v5865 = vsub.f32 %v4585, %v5179
      %v5866 = vsub.f32 %v4586, %v5179
      %v5867 = vsub.f32 %v4587, %v5182
      %v5868 = vsub.f32 %v4588, %v5182
      %v5869 = vsub.f32 %v4589, %v5185
      %v5870 = vsub.f32 %v4590, %v5185
      %v5871 = vsub.f32 %v4591, %v5188
      %v5872 = vsub.f32 %v4592, %v5188
      %v5873 = vsub.f32 %v4593, %v5191
      %v5874 = vsub.f32 %v4594, %v5191
      %v5875 = vsub.f32 %v4595, %v5194
      %v5876 = vsub.f32 %v4596, %v5194
      %v5877 = vsub.f32 %v4597, %v5197
      %v5878 = vsub.f32 %v4598, %v5197
      %v5879 = vsub.f32 %v4599, %v5200
      %v5880 = vsub.f32 %v4600, %v5200
      %v5881 = vsub.f32 %v4601, %v5203
      %v5882 = vsub.f32 %v4602, %v5203
      %v5883 = vsub.f32 %v4603, %v5206
      %v5884 = vsub.f32 %v4604, %v5206
      %v5885 = vsub.f32 %v4605, %v5209
      %v5886 = vsub.f32 %v4606, %v5209
      %v5887 = vsub.f32 %v4607, %v5212
      %v5888 = vsub.f32 %v4608, %v5212
      %v5889 = vsub.f32 %v4609, %v5215
      %v5890 = vsub.f32 %v4610, %v5215
      %v5891 = vsub.f32 %v4611, %v5218
      %v5892 = vsub.f32 %v4612, %v5218
      %v5893 = vsub.f32 %v4613, %v5221
      %v5894 = vsub.f32 %v4614, %v5221
      %v5895 = vsub.f32 %v4615, %v5224
      %v5896 = vsub.f32 %v4616, %v5224
      %v5897 = vsub.f32 %v4617, %v5227
      %v5898 = vsub.f32 %v4618, %v5227
      %v5899 = vsub.f32 %v4619, %v5230
      %v5900 = vsub.f32 %v4620, %v5230
      %v5901 = vsub.f32 %v4621, %v5233
      %v5902 = vsub.f32 %v4622, %v5233
      %v5903 = vsub.f32 %v4623, %v5236
      %v5904 = vsub.f32 %v4624, %v5236
      %v5905 = vsub.f32 %v4625, %v5239
      %v5906 = vsub.f32 %v4626, %v5239
      %v5907 = vsub.f32 %v4627, %v5242
      %v5908 = vsub.f32 %v4628, %v5242
      %v5909 = vsub.f32 %v4629, %v5245
      %v5910 = vsub.f32 %v4630, %v5245
      %v5911 = vsub.f32 %v4631, %v5248
      %v5912 = vsub.f32 %v4632, %v5248
      %v5913 = vsub.f32 %v4633, %v5251
      %v5914 = vsub.f32 %v4634, %v5251
      %v5915 = vsub.f32 %v4635, %v5254
      %v5916 = vsub.f32 %v4636, %v5254
      %v5917 = vsub.f32 %v4637, %v5257
      %v5918 = vsub.f32 %v4638, %v5257
      %v5919 = vsub.f32 %v4639, %v5260
      %v5920 = vsub.f32 %v4640, %v5260
      %v5921 = vsub.f32 %v4641, %v5263
      %v5922 = vsub.f32 %v4642, %v5263
      %v5923 = vsub.f32 %v4643, %v5266
      %v5924 = vsub.f32 %v4644, %v5266
      %v5925 = vsub.f32 %v4645, %v5269
      %v5926 = vsub.f32 %v4646, %v5269
      %v5927 = vsub.f32 %v4647, %v5272
      %v5928 = vsub.f32 %v4648, %v5272
      %v5929 = vsub.f32 %v4649, %v5275
      %v5930 = vsub.f32 %v4650, %v5275
      %v5931 = vsub.f32 %v4651, %v5278
      %v5932 = vsub.f32 %v4652, %v5278
      %v5933 = vsub.f32 %v4653, %v5281
      %v5934 = vsub.f32 %v4654, %v5281
      %v5935 = vsub.f32 %v4655, %v5284
      %v5936 = vsub.f32 %v4656, %v5284
      %v5937 = vsub.f32 %v4657, %v5287
      %v5938 = vsub.f32 %v4658, %v5287
      %v5939 = vsub.f32 %v4659, %v5290
      %v5940 = vsub.f32 %v4660, %v5290
      %v5941 = vsub.f32 %v4661, %v5293
      %v5942 = vsub.f32 %v4662, %v5293
      %v5943 = vsub.f32 %v4663, %v5296
      %v5944 = vsub.f32 %v4664, %v5296
      %v5945 = vsub.f32 %v4665, %v5299
      %v5946 = vsub.f32 %v4666, %v5299
      %v5947 = vsub.f32 %v4667, %v5302
      %v5948 = vsub.f32 %v4668, %v5302
      %v5949 = vsub.f32 %v4669, %v5305
      %v5950 = vsub.f32 %v4670, %v5305
      %v5951 = vsub.f32 %v4671, %v5308
      %v5952 = vsub.f32 %v4672, %v5308
      %v5953 = vsub.f32 %v4673, %v5311
      %v5954 = vsub.f32 %v4674, %v5311
      %v5955 = vsub.f32 %v4675, %v5314
      %v5956 = vsub.f32 %v4676, %v5314
      %v5957 = vsub.f32 %v4677, %v5317
      %v5958 = vsub.f32 %v4678, %v5317
      %v5959 = vsub.f32 %v4679, %v5320
      %v5960 = vsub.f32 %v4680, %v5320
      %v5961 = vsub.f32 %v4681, %v5323
      %v5962 = vsub.f32 %v4682, %v5323
      %v5963 = vsub.f32 %v4683, %v5326
      %v5964 = vsub.f32 %v4684, %v5326
      %v5965 = vsub.f32 %v4685, %v5329
      %v5966 = vsub.f32 %v4686, %v5329
      %v5967 = vsub.f32 %v4687, %v5332
      %v5968 = vsub.f32 %v4688, %v5332
      %v5969 = vsub.f32 %v4689, %v5335
      %v5970 = vsub.f32 %v4690, %v5335
      %v5971 = vsub.f32 %v4691, %v5338
      %v5972 = vsub.f32 %v4692, %v5338
      %v5973 = vsub.f32 %v4693, %v5341
      %v5974 = vsub.f32 %v4694, %v5341
      %v5975 = vsub.f32 %v4695, %v5344
      %v5976 = vsub.f32 %v4696, %v5344
      %v5977 = vsub.f32 %v4697, %v5347
      %v5978 = vsub.f32 %v4698, %v5347
      %v5979 = vsub.f32 %v4699, %v5350
      %v5980 = vsub.f32 %v4700, %v5350
      %v5981 = vsub.f32 %v4701, %v5353
      %v5982 = vsub.f32 %v4702, %v5353
      %v5983 = vsub.f32 %v4703, %v5356
      %v5984 = vsub.f32 %v4704, %v5356
      %v5985 = vsub.f32 %v4705, %v5359
      %v5986 = vsub.f32 %v4706, %v5359
      %v5987 = vsub.f32 %v4707, %v5362
      %v5988 = vsub.f32 %v4708, %v5362
      %v5989 = vsub.f32 %v4709, %v5365
      %v5990 = vsub.f32 %v4710, %v5365
      %v5991 = vsub.f32 %v4711, %v5368
      %v5992 = vsub.f32 %v4712, %v5368
      %v5993 = vsub.f32 %v4713, %v5371
      %v5994 = vsub.f32 %v4714, %v5371
      %v5995 = vsub.f32 %v4715, %v5374
      %v5996 = vsub.f32 %v4716, %v5374
      %v5997 = vsub.f32 %v4717, %v5377
      %v5998 = vsub.f32 %v4718, %v5377
      %v5999 = vsub.f32 %v4719, %v5380
      %v6000 = vsub.f32 %v4720, %v5380
      %v6001 = vsub.f32 %v4721, %v5383
      %v6002 = vsub.f32 %v4722, %v5383
      %v6003 = vsub.f32 %v4723, %v5386
      %v6004 = vsub.f32 %v4724, %v5386
      %v6005 = vsub.f32 %v4725, %v5389
      %v6006 = vsub.f32 %v4726, %v5389
      %v6007 = vsub.f32 %v4727, %v5392
      %v6008 = vsub.f32 %v4728, %v5392
      %v6009 = vsub.f32 %v4729, %v5395
      %v6010 = vsub.f32 %v4730, %v5395
      %v6011 = vsub.f32 %v4731, %v5398
      %v6012 = vsub.f32 %v4732, %v5398
      %v6013 = vsub.f32 %v4733, %v5401
      %v6014 = vsub.f32 %v4734, %v5401
      %v6015 = vsub.f32 %v4735, %v5404
      %v6016 = vsub.f32 %v4736, %v5404
      %v6017 = vsub.f32 %v4737, %v5407
      %v6018 = vsub.f32 %v4738, %v5407
      %v6019 = vsub.f32 %v4739, %v5410
      %v6020 = vsub.f32 %v4740, %v5410
      %v6021 = vsub.f32 %v4741, %v5413
      %v6022 = vsub.f32 %v4742, %v5413
      %v6023 = vsub.f32 %v4743, %v5416
      %v6024 = vsub.f32 %v4744, %v5416
      %v6025 = vsub.f32 %v4745, %v5419
      %v6026 = vsub.f32 %v4746, %v5419
      %v6027 = vsub.f32 %v4747, %v5422
      %v6028 = vsub.f32 %v4748, %v5422
      %v6029 = vsub.f32 %v4749, %v5425
      %v6030 = vsub.f32 %v4750, %v5425
      %v6031 = vsub.f32 %v4751, %v5428
      %v6032 = vsub.f32 %v4752, %v5428
      %v6033 = vsub.f32 %v4753, %v5431
      %v6034 = vsub.f32 %v4754, %v5431
      %v6035 = vsub.f32 %v4755, %v5434
      %v6036 = vsub.f32 %v4756, %v5434
      %v6037 = vsub.f32 %v4757, %v5437
      %v6038 = vsub.f32 %v4758, %v5437
      %v6039 = vsub.f32 %v4759, %v5440
      %v6040 = vsub.f32 %v4760, %v5440
      %v6041 = vsub.f32 %v4761, %v5443
      %v6042 = vsub.f32 %v4762, %v5443
      %v6043 = vsub.f32 %v4763, %v5446
      %v6044 = vsub.f32 %v4764, %v5446
      %v6045 = vsub.f32 %v4765, %v5449
      %v6046 = vsub.f32 %v4766, %v5449
      %v6047 = vsub.f32 %v4767, %v5452
      %v6048 = vsub.f32 %v4768, %v5452
      %v6049 = vsub.f32 %v4769, %v5455
      %v6050 = vsub.f32 %v4770, %v5455
      %v6051 = vsub.f32 %v4771, %v5458
      %v6052 = vsub.f32 %v4772, %v5458
      %v6053 = vsub.f32 %v4773, %v5461
      %v6054 = vsub.f32 %v4774, %v5461
      %v6055 = vsub.f32 %v4775, %v5464
      %v6056 = vsub.f32 %v4776, %v5464
      %v6057 = vsub.f32 %v4777, %v5467
      %v6058 = vsub.f32 %v4778, %v5467
      %v6059 = vsub.f32 %v4779, %v5470
      %v6060 = vsub.f32 %v4780, %v5470
      %v6061 = vsub.f32 %v4781, %v5473
      %v6062 = vsub.f32 %v4782, %v5473
      %v6063 = vsub.f32 %v4783, %v5476
      %v6064 = vsub.f32 %v4784, %v5476
      %v6065 = vsub.f32 %v4785, %v5479
      %v6066 = vsub.f32 %v4786, %v5479
      %v6067 = vsub.f32 %v4787, %v5482
      %v6068 = vsub.f32 %v4788, %v5482
      %v6069 = vsub.f32 %v4789, %v5485
      %v6070 = vsub.f32 %v4790, %v5485
      %v6071 = vsub.f32 %v4791, %v5488
      %v6072 = vsub.f32 %v4792, %v5488
      %v6073 = vsub.f32 %v4793, %v5491
      %v6074 = vsub.f32 %v4794, %v5491
      %v6075 = vsub.f32 %v4795, %v5494
      %v6076 = vsub.f32 %v4796, %v5494
      %v6077 = vsub.f32 %v4797, %v5497
      %v6078 = vsub.f32 %v4798, %v5497
      %v6079 = vsub.f32 %v4799, %v5500
      %v6080 = vsub.f32 %v4800, %v5500
      %v6081 = vsub.f32 %v4801, %v5503
      %v6082 = vsub.f32 %v4802, %v5503
      %v6083 = vsub.f32 %v4803, %v5506
      %v6084 = vsub.f32 %v4804, %v5506
      %v6085 = vsub.f32 %v4805, %v5509
      %v6086 = vsub.f32 %v4806, %v5509
      %v6087 = vsub.f32 %v4807, %v5512
      %v6088 = vsub.f32 %v4808, %v5512
      %v6089 = vsub.f32 %v4809, %v5515
      %v6090 = vsub.f32 %v4810, %v5515
      %v6091 = vsub.f32 %v4811, %v5518
      %v6092 = vsub.f32 %v4812, %v5518
      %v6093 = vsub.f32 %v4813, %v5521
      %v6094 = vsub.f32 %v4814, %v5521
      %v6095 = vsub.f32 %v4815, %v5524
      %v6096 = vsub.f32 %v4816, %v5524
      %v6097 = vsub.f32 %v4817, %v5527
      %v6098 = vsub.f32 %v4818, %v5527
      %v6099 = vsub.f32 %v4819, %v5530
      %v6100 = vsub.f32 %v4820, %v5530
      %v6101 = vsub.f32 %v4821, %v5533
      %v6102 = vsub.f32 %v4822, %v5533
      %v6103 = vsub.f32 %v4823, %v5536
      %v6104 = vsub.f32 %v4824, %v5536
      %v6105 = vsub.f32 %v4825, %v5539
      %v6106 = vsub.f32 %v4826, %v5539
      %v6107 = vsub.f32 %v4827, %v5542
      %v6108 = vsub.f32 %v4828, %v5542
      %v6109 = vsub.f32 %v4829, %v5545
      %v6110 = vsub.f32 %v4830, %v5545
      %v6111 = vsub.f32 %v4831, %v5548
      %v6112 = vsub.f32 %v4832, %v5548
      %v6113 = vsub.f32 %v4833, %v5551
      %v6114 = vsub.f32 %v4834, %v5551
      %v6115 = vsub.f32 %v4835, %v5554
      %v6116 = vsub.f32 %v4836, %v5554
      %v6117 = vsub.f32 %v4837, %v5557
      %v6118 = vsub.f32 %v4838, %v5557
      %v6119 = vsub.f32 %v4839, %v5560
      %v6120 = vsub.f32 %v4840, %v5560
      %v6121 = vsub.f32 %v4841, %v5563
      %v6122 = vsub.f32 %v4842, %v5563
      %v6123 = vsub.f32 %v4843, %v5566
      %v6124 = vsub.f32 %v4844, %v5566
      %v6125 = vsub.f32 %v4845, %v5569
      %v6126 = vsub.f32 %v4846, %v5569
      %v6127 = vsub.f32 %v4847, %v5572
      %v6128 = vsub.f32 %v4848, %v5572
      %v6129 = vsub.f32 %v4849, %v5575
      %v6130 = vsub.f32 %v4850, %v5575
      %v6131 = vsub.f32 %v4851, %v5578
      %v6132 = vsub.f32 %v4852, %v5578
      %v6133 = vsub.f32 %v4853, %v5581
      %v6134 = vsub.f32 %v4854, %v5581
      %v6135 = vsub.f32 %v4855, %v5584
      %v6136 = vsub.f32 %v4856, %v5584
      %v6137 = vsub.f32 %v4857, %v5587
      %v6138 = vsub.f32 %v4858, %v5587
      %v6139 = vsub.f32 %v4859, %v5590
      %v6140 = vsub.f32 %v4860, %v5590
      %v6141 = vsub.f32 %v4861, %v5593
      %v6142 = vsub.f32 %v4862, %v5593
      %v6143 = vsub.f32 %v4863, %v5596
      %v6144 = vsub.f32 %v4864, %v5596
      %v6145 = vsub.f32 %v4865, %v5599
      %v6146 = vsub.f32 %v4866, %v5599
      %v6147 = vsub.f32 %v4867, %v5602
      %v6148 = vsub.f32 %v4868, %v5602
      %v6149 = vsub.f32 %v4869, %v5605
      %v6150 = vsub.f32 %v4870, %v5605
      %v6151 = vsub.f32 %v4871, %v5608
      %v6152 = vsub.f32 %v4872, %v5608
      %v6153 = vsub.f32 %v4873, %v5611
      %v6154 = vsub.f32 %v4874, %v5611
      %v6155 = vsub.f32 %v4875, %v5614
      %v6156 = vsub.f32 %v4876, %v5614
      %v6157 = vsub.f32 %v4877, %v5617
      %v6158 = vsub.f32 %v4878, %v5617
      %v6159 = vsub.f32 %v4879, %v5620
      %v6160 = vsub.f32 %v4880, %v5620
      %v6161 = vsub.f32 %v4881, %v5623
      %v6162 = vsub.f32 %v4882, %v5623
      %v6163 = vsub.f32 %v4883, %v5626
      %v6164 = vsub.f32 %v4884, %v5626
      %v6165 = vsub.f32 %v4885, %v5629
      %v6166 = vsub.f32 %v4886, %v5629
      %v6167 = vsub.f32 %v4887, %v5632
      %v6168 = vsub.f32 %v4888, %v5632
      %v6169 = vsub.f32 %v4889, %v5635
      %v6170 = vsub.f32 %v4890, %v5635
      %v6171 = vsub.f32 %v4891, %v5638
      %v6172 = vsub.f32 %v4892, %v5638
      %v6173 = vsub.f32 %v4893, %v5641
      %v6174 = vsub.f32 %v4894, %v5641
      %v6175 = vsub.f32 %v4895, %v5644
      %v6176 = vsub.f32 %v4896, %v5644
      %v6177 = vsub.f32 %v4897, %v5647
      %v6178 = vsub.f32 %v4898, %v5647
      %v6179 = vsub.f32 %v4899, %v5650
      %v6180 = vsub.f32 %v4900, %v5650
      %v6181 = vsub.f32 %v4901, %v5653
      %v6182 = vsub.f32 %v4902, %v5653
      %v6183 = vsub.f32 %v4903, %v5656
      %v6184 = vsub.f32 %v4904, %v5656
      %v6185 = vsub.f32 %v4905, %v5659
      %v6186 = vsub.f32 %v4906, %v5659
      %v6187 = vsub.f32 %v4907, %v5662
      %v6188 = vsub.f32 %v4908, %v5662
      %v6189 = vsub.f32 %v4909, %v5665
      %v6190 = vsub.f32 %v4910, %v5665
      %v6191 = vsub.f32 %v4911, %v5668
      %v6192 = vsub.f32 %v4912, %v5668
      %v6193 = vsub.f32 %v4913, %v5671
      %v6194 = vsub.f32 %v4914, %v5671
      %v6195 = vsub.f32 %v4915, %v5674
      %v6196 = vsub.f32 %v4916, %v5674
      %v6197 = vsub.f32 %v4917, %v5677
      %v6198 = vsub.f32 %v4918, %v5677
      %v6199 = vsub.f32 %v4919, %v5680
      %v6200 = vsub.f32 %v4920, %v5680
      %v6201 = vsub.f32 %v4921, %v5683
      %v6202 = vsub.f32 %v4922, %v5683
      %v6203 = vsub.f32 %v4923, %v5686
      %v6204 = vsub.f32 %v4924, %v5686
      %v6205 = vsub.f32 %v4925, %v5689
      %v6206 = vsub.f32 %v4926, %v5689
      %v6207 = vsub.f32 %v4927, %v5692
      %v6208 = vsub.f32 %v4928, %v5692
      %v6209 = vsub.f32 %v4929, %v5695
      %v6210 = vsub.f32 %v4930, %v5695
      %v6211 = vsub.f32 %v4931, %v5698
      %v6212 = vsub.f32 %v4932, %v5698
      %v6213 = vsub.f32 %v4933, %v5701
      %v6214 = vsub.f32 %v4934, %v5701
      %v6215 = vsub.f32 %v4935, %v5704
      %v6216 = vsub.f32 %v4936, %v5704
      %v6217 = vmul.f32 %v5705, 1.442695
      %v6218 = vpow.pop %v6217
      %v6219 = vmul.f32 %v5706, 1.442695
      %v6220 = vpow.pop %v6219
      %v6221 = vmul.f32 %v5707, 1.442695
      %v6222 = vpow.pop %v6221
      %v6223 = vmul.f32 %v5708, 1.442695
      %v6224 = vpow.pop %v6223
      %v6225 = vmul.f32 %v5709, 1.442695
      %v6226 = vpow.pop %v6225
      %v6227 = vmul.f32 %v5710, 1.442695
      %v6228 = vpow.pop %v6227
      %v6229 = vmul.f32 %v5711, 1.442695
      %v6230 = vpow.pop %v6229
      %v6231 = vmul.f32 %v5712, 1.442695
      %v6232 = vpow.pop %v6231
      %v6233 = vmul.f32 %v5713, 1.442695
      %v6234 = vpow.pop %v6233
      %v6235 = vmul.f32 %v5714, 1.442695
      %v6236 = vpow.pop %v6235
      %v6237 = vmul.f32 %v5715, 1.442695
      %v6238 = vpow.pop %v6237
      %v6239 = vmul.f32 %v5716, 1.442695
      %v6240 = vpow.pop %v6239
      %v6241 = vmul.f32 %v5717, 1.442695
      %v6242 = vpow.pop %v6241
      %v6243 = vmul.f32 %v5718, 1.442695
      %v6244 = vpow.pop %v6243
      %v6245 = vmul.f32 %v5719, 1.442695
      %v6246 = vpow.pop %v6245
      %v6247 = vmul.f32 %v5720, 1.442695
      %v6248 = vpow.pop %v6247
      %v6249 = vmul.f32 %v5721, 1.442695
      %v6250 = vpow.pop %v6249
      %v6251 = vmul.f32 %v5722, 1.442695
      %v6252 = vpow.pop %v6251
      %v6253 = vmul.f32 %v5723, 1.442695
      %v6254 = vpow.pop %v6253
      %v6255 = vmul.f32 %v5724, 1.442695
      %v6256 = vpow.pop %v6255
      %v6257 = vmul.f32 %v5725, 1.442695
      %v6258 = vpow.pop %v6257
      %v6259 = vmul.f32 %v5726, 1.442695
      %v6260 = vpow.pop %v6259
      %v6261 = vmul.f32 %v5727, 1.442695
      %v6262 = vpow.pop %v6261
      %v6263 = vmul.f32 %v5728, 1.442695
      %v6264 = vpow.pop %v6263
      %v6265 = vmul.f32 %v5729, 1.442695
      %v6266 = vpow.pop %v6265
      %v6267 = vmul.f32 %v5730, 1.442695
      %v6268 = vpow.pop %v6267
      %v6269 = vmul.f32 %v5731, 1.442695
      %v6270 = vpow.pop %v6269
      %v6271 = vmul.f32 %v5732, 1.442695
      %v6272 = vpow.pop %v6271
      %v6273 = vmul.f32 %v5733, 1.442695
      %v6274 = vpow.pop %v6273
      %v6275 = vmul.f32 %v5734, 1.442695
      %v6276 = vpow.pop %v6275
      %v6277 = vmul.f32 %v5735, 1.442695
      %v6278 = vpow.pop %v6277
      %v6279 = vmul.f32 %v5736, 1.442695
      %v6280 = vpow.pop %v6279
      %v6281 = vmul.f32 %v5737, 1.442695
      %v6282 = vpow.pop %v6281
      %v6283 = vmul.f32 %v5738, 1.442695
      %v6284 = vpow.pop %v6283
      %v6285 = vmul.f32 %v5739, 1.442695
      %v6286 = vpow.pop %v6285
      %v6287 = vmul.f32 %v5740, 1.442695
      %v6288 = vpow.pop %v6287
      %v6289 = vmul.f32 %v5741, 1.442695
      %v6290 = vpow.pop %v6289
      %v6291 = vmul.f32 %v5742, 1.442695
      %v6292 = vpow.pop %v6291
      %v6293 = vmul.f32 %v5743, 1.442695
      %v6294 = vpow.pop %v6293
      %v6295 = vmul.f32 %v5744, 1.442695
      %v6296 = vpow.pop %v6295
      %v6297 = vmul.f32 %v5745, 1.442695
      %v6298 = vpow.pop %v6297
      %v6299 = vmul.f32 %v5746, 1.442695
      %v6300 = vpow.pop %v6299
      %v6301 = vmul.f32 %v5747, 1.442695
      %v6302 = vpow.pop %v6301
      %v6303 = vmul.f32 %v5748, 1.442695
      %v6304 = vpow.pop %v6303
      %v6305 = vmul.f32 %v5749, 1.442695
      %v6306 = vpow.pop %v6305
      %v6307 = vmul.f32 %v5750, 1.442695
      %v6308 = vpow.pop %v6307
      %v6309 = vmul.f32 %v5751, 1.442695
      %v6310 = vpow.pop %v6309
      %v6311 = vmul.f32 %v5752, 1.442695
      %v6312 = vpow.pop %v6311
      %v6313 = vmul.f32 %v5753, 1.442695
      %v6314 = vpow.pop %v6313
      %v6315 = vmul.f32 %v5754, 1.442695
      %v6316 = vpow.pop %v6315
      %v6317 = vmul.f32 %v5755, 1.442695
      %v6318 = vpow.pop %v6317
      %v6319 = vmul.f32 %v5756, 1.442695
      %v6320 = vpow.pop %v6319
      %v6321 = vmul.f32 %v5757, 1.442695
      %v6322 = vpow.pop %v6321
      %v6323 = vmul.f32 %v5758, 1.442695
      %v6324 = vpow.pop %v6323
      %v6325 = vmul.f32 %v5759, 1.442695
      %v6326 = vpow.pop %v6325
      %v6327 = vmul.f32 %v5760, 1.442695
      %v6328 = vpow.pop %v6327
      %v6329 = vmul.f32 %v5761, 1.442695
      %v6330 = vpow.pop %v6329
      %v6331 = vmul.f32 %v5762, 1.442695
      %v6332 = vpow.pop %v6331
      %v6333 = vmul.f32 %v5763, 1.442695
      %v6334 = vpow.pop %v6333
      %v6335 = vmul.f32 %v5764, 1.442695
      %v6336 = vpow.pop %v6335
      %v6337 = vmul.f32 %v5765, 1.442695
      %v6338 = vpow.pop %v6337
      %v6339 = vmul.f32 %v5766, 1.442695
      %v6340 = vpow.pop %v6339
      %v6341 = vmul.f32 %v5767, 1.442695
      %v6342 = vpow.pop %v6341
      %v6343 = vmul.f32 %v5768, 1.442695
      %v6344 = vpow.pop %v6343
      %v6345 = vmul.f32 %v5769, 1.442695
      %v6346 = vpow.pop %v6345
      %v6347 = vmul.f32 %v5770, 1.442695
      %v6348 = vpow.pop %v6347
      %v6349 = vmul.f32 %v5771, 1.442695
      %v6350 = vpow.pop %v6349
      %v6351 = vmul.f32 %v5772, 1.442695
      %v6352 = vpow.pop %v6351
      %v6353 = vmul.f32 %v5773, 1.442695
      %v6354 = vpow.pop %v6353
      %v6355 = vmul.f32 %v5774, 1.442695
      %v6356 = vpow.pop %v6355
      %v6357 = vmul.f32 %v5775, 1.442695
      %v6358 = vpow.pop %v6357
      %v6359 = vmul.f32 %v5776, 1.442695
      %v6360 = vpow.pop %v6359
      %v6361 = vmul.f32 %v5777, 1.442695
      %v6362 = vpow.pop %v6361
      %v6363 = vmul.f32 %v5778, 1.442695
      %v6364 = vpow.pop %v6363
      %v6365 = vmul.f32 %v5779, 1.442695
      %v6366 = vpow.pop %v6365
      %v6367 = vmul.f32 %v5780, 1.442695
      %v6368 = vpow.pop %v6367
      %v6369 = vmul.f32 %v5781, 1.442695
      %v6370 = vpow.pop %v6369
      %v6371 = vmul.f32 %v5782, 1.442695
      %v6372 = vpow.pop %v6371
      %v6373 = vmul.f32 %v5783, 1.442695
      %v6374 = vpow.pop %v6373
      %v6375 = vmul.f32 %v5784, 1.442695
      %v6376 = vpow.pop %v6375
      %v6377 = vmul.f32 %v5785, 1.442695
      %v6378 = vpow.pop %v6377
      %v6379 = vmul.f32 %v5786, 1.442695
      %v6380 = vpow.pop %v6379
      %v6381 = vmul.f32 %v5787, 1.442695
      %v6382 = vpow.pop %v6381
      %v6383 = vmul.f32 %v5788, 1.442695
      %v6384 = vpow.pop %v6383
      %v6385 = vmul.f32 %v5789, 1.442695
      %v6386 = vpow.pop %v6385
      %v6387 = vmul.f32 %v5790, 1.442695
      %v6388 = vpow.pop %v6387
      %v6389 = vmul.f32 %v5791, 1.442695
      %v6390 = vpow.pop %v6389
      %v6391 = vmul.f32 %v5792, 1.442695
      %v6392 = vpow.pop %v6391
      %v6393 = vmul.f32 %v5793, 1.442695
      %v6394 = vpow.pop %v6393
      %v6395 = vmul.f32 %v5794, 1.442695
      %v6396 = vpow.pop %v6395
      %v6397 = vmul.f32 %v5795, 1.442695
      %v6398 = vpow.pop %v6397
      %v6399 = vmul.f32 %v5796, 1.442695
      %v6400 = vpow.pop %v6399
      %v6401 = vmul.f32 %v5797, 1.442695
      %v6402 = vpow.pop %v6401
      %v6403 = vmul.f32 %v5798, 1.442695
      %v6404 = vpow.pop %v6403
      %v6405 = vmul.f32 %v5799, 1.442695
      %v6406 = vpow.pop %v6405
      %v6407 = vmul.f32 %v5800, 1.442695
      %v6408 = vpow.pop %v6407
      %v6409 = vmul.f32 %v5801, 1.442695
      %v6410 = vpow.pop %v6409
      %v6411 = vmul.f32 %v5802, 1.442695
      %v6412 = vpow.pop %v6411
      %v6413 = vmul.f32 %v5803, 1.442695
      %v6414 = vpow.pop %v6413
      %v6415 = vmul.f32 %v5804, 1.442695
      %v6416 = vpow.pop %v6415
      %v6417 = vmul.f32 %v5805, 1.442695
      %v6418 = vpow.pop %v6417
      %v6419 = vmul.f32 %v5806, 1.442695
      %v6420 = vpow.pop %v6419
      %v6421 = vmul.f32 %v5807, 1.442695
      %v6422 = vpow.pop %v6421
      %v6423 = vmul.f32 %v5808, 1.442695
      %v6424 = vpow.pop %v6423
      %v6425 = vmul.f32 %v5809, 1.442695
      %v6426 = vpow.pop %v6425
      %v6427 = vmul.f32 %v5810, 1.442695
      %v6428 = vpow.pop %v6427
      %v6429 = vmul.f32 %v5811, 1.442695
      %v6430 = vpow.pop %v6429
      %v6431 = vmul.f32 %v5812, 1.442695
      %v6432 = vpow.pop %v6431
      %v6433 = vmul.f32 %v5813, 1.442695
      %v6434 = vpow.pop %v6433
      %v6435 = vmul.f32 %v5814, 1.442695
      %v6436 = vpow.pop %v6435
      %v6437 = vmul.f32 %v5815, 1.442695
      %v6438 = vpow.pop %v6437
      %v6439 = vmul.f32 %v5816, 1.442695
      %v6440 = vpow.pop %v6439
      %v6441 = vmul.f32 %v5817, 1.442695
      %v6442 = vpow.pop %v6441
      %v6443 = vmul.f32 %v5818, 1.442695
      %v6444 = vpow.pop %v6443
      %v6445 = vmul.f32 %v5819, 1.442695
      %v6446 = vpow.pop %v6445
      %v6447 = vmul.f32 %v5820, 1.442695
      %v6448 = vpow.pop %v6447
      %v6449 = vmul.f32 %v5821, 1.442695
      %v6450 = vpow.pop %v6449
      %v6451 = vmul.f32 %v5822, 1.442695
      %v6452 = vpow.pop %v6451
      %v6453 = vmul.f32 %v5823, 1.442695
      %v6454 = vpow.pop %v6453
      %v6455 = vmul.f32 %v5824, 1.442695
      %v6456 = vpow.pop %v6455
      %v6457 = vmul.f32 %v5825, 1.442695
      %v6458 = vpow.pop %v6457
      %v6459 = vmul.f32 %v5826, 1.442695
      %v6460 = vpow.pop %v6459
      %v6461 = vmul.f32 %v5827, 1.442695
      %v6462 = vpow.pop %v6461
      %v6463 = vmul.f32 %v5828, 1.442695
      %v6464 = vpow.pop %v6463
      %v6465 = vmul.f32 %v5829, 1.442695
      %v6466 = vpow.pop %v6465
      %v6467 = vmul.f32 %v5830, 1.442695
      %v6468 = vpow.pop %v6467
      %v6469 = vmul.f32 %v5831, 1.442695
      %v6470 = vpow.pop %v6469
      %v6471 = vmul.f32 %v5832, 1.442695
      %v6472 = vpow.pop %v6471
      %v6473 = vmul.f32 %v5833, 1.442695
      %v6474 = vpow.pop %v6473
      %v6475 = vmul.f32 %v5834, 1.442695
      %v6476 = vpow.pop %v6475
      %v6477 = vmul.f32 %v5835, 1.442695
      %v6478 = vpow.pop %v6477
      %v6479 = vmul.f32 %v5836, 1.442695
      %v6480 = vpow.pop %v6479
      %v6481 = vmul.f32 %v5837, 1.442695
      %v6482 = vpow.pop %v6481
      %v6483 = vmul.f32 %v5838, 1.442695
      %v6484 = vpow.pop %v6483
      %v6485 = vmul.f32 %v5839, 1.442695
      %v6486 = vpow.pop %v6485
      %v6487 = vmul.f32 %v5840, 1.442695
      %v6488 = vpow.pop %v6487
      %v6489 = vmul.f32 %v5841, 1.442695
      %v6490 = vpow.pop %v6489
      %v6491 = vmul.f32 %v5842, 1.442695
      %v6492 = vpow.pop %v6491
      %v6493 = vmul.f32 %v5843, 1.442695
      %v6494 = vpow.pop %v6493
      %v6495 = vmul.f32 %v5844, 1.442695
      %v6496 = vpow.pop %v6495
      %v6497 = vmul.f32 %v5845, 1.442695
      %v6498 = vpow.pop %v6497
      %v6499 = vmul.f32 %v5846, 1.442695
      %v6500 = vpow.pop %v6499
      %v6501 = vmul.f32 %v5847, 1.442695
      %v6502 = vpow.pop %v6501
      %v6503 = vmul.f32 %v5848, 1.442695
      %v6504 = vpow.pop %v6503
      %v6505 = vmul.f32 %v5849, 1.442695
      %v6506 = vpow.pop %v6505
      %v6507 = vmul.f32 %v5850, 1.442695
      %v6508 = vpow.pop %v6507
      %v6509 = vmul.f32 %v5851, 1.442695
      %v6510 = vpow.pop %v6509
      %v6511 = vmul.f32 %v5852, 1.442695
      %v6512 = vpow.pop %v6511
      %v6513 = vmul.f32 %v5853, 1.442695
      %v6514 = vpow.pop %v6513
      %v6515 = vmul.f32 %v5854, 1.442695
      %v6516 = vpow.pop %v6515
      %v6517 = vmul.f32 %v5855, 1.442695
      %v6518 = vpow.pop %v6517
      %v6519 = vmul.f32 %v5856, 1.442695
      %v6520 = vpow.pop %v6519
      %v6521 = vmul.f32 %v5857, 1.442695
      %v6522 = vpow.pop %v6521
      %v6523 = vmul.f32 %v5858, 1.442695
      %v6524 = vpow.pop %v6523
      %v6525 = vmul.f32 %v5859, 1.442695
      %v6526 = vpow.pop %v6525
      %v6527 = vmul.f32 %v5860, 1.442695
      %v6528 = vpow.pop %v6527
      %v6529 = vmul.f32 %v5861, 1.442695
      %v6530 = vpow.pop %v6529
      %v6531 = vmul.f32 %v5862, 1.442695
      %v6532 = vpow.pop %v6531
      %v6533 = vmul.f32 %v5863, 1.442695
      %v6534 = vpow.pop %v6533
      %v6535 = vmul.f32 %v5864, 1.442695
      %v6536 = vpow.pop %v6535
      %v6537 = vmul.f32 %v5865, 1.442695
      %v6538 = vpow.pop %v6537
      %v6539 = vmul.f32 %v5866, 1.442695
      %v6540 = vpow.pop %v6539
      %v6541 = vmul.f32 %v5867, 1.442695
      %v6542 = vpow.pop %v6541
      %v6543 = vmul.f32 %v5868, 1.442695
      %v6544 = vpow.pop %v6543
      %v6545 = vmul.f32 %v5869, 1.442695
      %v6546 = vpow.pop %v6545
      %v6547 = vmul.f32 %v5870, 1.442695
      %v6548 = vpow.pop %v6547
      %v6549 = vmul.f32 %v5871, 1.442695
      %v6550 = vpow.pop %v6549
      %v6551 = vmul.f32 %v5872, 1.442695
      %v6552 = vpow.pop %v6551
      %v6553 = vmul.f32 %v5873, 1.442695
      %v6554 = vpow.pop %v6553
      %v6555 = vmul.f32 %v5874, 1.442695
      %v6556 = vpow.pop %v6555
      %v6557 = vmul.f32 %v5875, 1.442695
      %v6558 = vpow.pop %v6557
      %v6559 = vmul.f32 %v5876, 1.442695
      %v6560 = vpow.pop %v6559
      %v6561 = vmul.f32 %v5877, 1.442695
      %v6562 = vpow.pop %v6561
      %v6563 = vmul.f32 %v5878, 1.442695
      %v6564 = vpow.pop %v6563
      %v6565 = vmul.f32 %v5879, 1.442695
      %v6566 = vpow.pop %v6565
      %v6567 = vmul.f32 %v5880, 1.442695
      %v6568 = vpow.pop %v6567
      %v6569 = vmul.f32 %v5881, 1.442695
      %v6570 = vpow.pop %v6569
      %v6571 = vmul.f32 %v5882, 1.442695
      %v6572 = vpow.pop %v6571
      %v6573 = vmul.f32 %v5883, 1.442695
      %v6574 = vpow.pop %v6573
      %v6575 = vmul.f32 %v5884, 1.442695
      %v6576 = vpow.pop %v6575
      %v6577 = vmul.f32 %v5885, 1.442695
      %v6578 = vpow.pop %v6577
      %v6579 = vmul.f32 %v5886, 1.442695
      %v6580 = vpow.pop %v6579
      %v6581 = vmul.f32 %v5887, 1.442695
      %v6582 = vpow.pop %v6581
      %v6583 = vmul.f32 %v5888, 1.442695
      %v6584 = vpow.pop %v6583
      %v6585 = vmul.f32 %v5889, 1.442695
      %v6586 = vpow.pop %v6585
      %v6587 = vmul.f32 %v5890, 1.442695
      %v6588 = vpow.pop %v6587
      %v6589 = vmul.f32 %v5891, 1.442695
      %v6590 = vpow.pop %v6589
      %v6591 = vmul.f32 %v5892, 1.442695
      %v6592 = vpow.pop %v6591
      %v6593 = vmul.f32 %v5893, 1.442695
      %v6594 = vpow.pop %v6593
      %v6595 = vmul.f32 %v5894, 1.442695
      %v6596 = vpow.pop %v6595
      %v6597 = vmul.f32 %v5895, 1.442695
      %v6598 = vpow.pop %v6597
      %v6599 = vmul.f32 %v5896, 1.442695
      %v6600 = vpow.pop %v6599
      %v6601 = vmul.f32 %v5897, 1.442695
      %v6602 = vpow.pop %v6601
      %v6603 = vmul.f32 %v5898, 1.442695
      %v6604 = vpow.pop %v6603
      %v6605 = vmul.f32 %v5899, 1.442695
      %v6606 = vpow.pop %v6605
      %v6607 = vmul.f32 %v5900, 1.442695
      %v6608 = vpow.pop %v6607
      %v6609 = vmul.f32 %v5901, 1.442695
      %v6610 = vpow.pop %v6609
      %v6611 = vmul.f32 %v5902, 1.442695
      %v6612 = vpow.pop %v6611
      %v6613 = vmul.f32 %v5903, 1.442695
      %v6614 = vpow.pop %v6613
      %v6615 = vmul.f32 %v5904, 1.442695
      %v6616 = vpow.pop %v6615
      %v6617 = vmul.f32 %v5905, 1.442695
      %v6618 = vpow.pop %v6617
      %v6619 = vmul.f32 %v5906, 1.442695
      %v6620 = vpow.pop %v6619
      %v6621 = vmul.f32 %v5907, 1.442695
      %v6622 = vpow.pop %v6621
      %v6623 = vmul.f32 %v5908, 1.442695
      %v6624 = vpow.pop %v6623
      %v6625 = vmul.f32 %v5909, 1.442695
      %v6626 = vpow.pop %v6625
      %v6627 = vmul.f32 %v5910, 1.442695
      %v6628 = vpow.pop %v6627
      %v6629 = vmul.f32 %v5911, 1.442695
      %v6630 = vpow.pop %v6629
      %v6631 = vmul.f32 %v5912, 1.442695
      %v6632 = vpow.pop %v6631
      %v6633 = vmul.f32 %v5913, 1.442695
      %v6634 = vpow.pop %v6633
      %v6635 = vmul.f32 %v5914, 1.442695
      %v6636 = vpow.pop %v6635
      %v6637 = vmul.f32 %v5915, 1.442695
      %v6638 = vpow.pop %v6637
      %v6639 = vmul.f32 %v5916, 1.442695
      %v6640 = vpow.pop %v6639
      %v6641 = vmul.f32 %v5917, 1.442695
      %v6642 = vpow.pop %v6641
      %v6643 = vmul.f32 %v5918, 1.442695
      %v6644 = vpow.pop %v6643
      %v6645 = vmul.f32 %v5919, 1.442695
      %v6646 = vpow.pop %v6645
      %v6647 = vmul.f32 %v5920, 1.442695
      %v6648 = vpow.pop %v6647
      %v6649 = vmul.f32 %v5921, 1.442695
      %v6650 = vpow.pop %v6649
      %v6651 = vmul.f32 %v5922, 1.442695
      %v6652 = vpow.pop %v6651
      %v6653 = vmul.f32 %v5923, 1.442695
      %v6654 = vpow.pop %v6653
      %v6655 = vmul.f32 %v5924, 1.442695
      %v6656 = vpow.pop %v6655
      %v6657 = vmul.f32 %v5925, 1.442695
      %v6658 = vpow.pop %v6657
      %v6659 = vmul.f32 %v5926, 1.442695
      %v6660 = vpow.pop %v6659
      %v6661 = vmul.f32 %v5927, 1.442695
      %v6662 = vpow.pop %v6661
      %v6663 = vmul.f32 %v5928, 1.442695
      %v6664 = vpow.pop %v6663
      %v6665 = vmul.f32 %v5929, 1.442695
      %v6666 = vpow.pop %v6665
      %v6667 = vmul.f32 %v5930, 1.442695
      %v6668 = vpow.pop %v6667
      %v6669 = vmul.f32 %v5931, 1.442695
      %v6670 = vpow.pop %v6669
      %v6671 = vmul.f32 %v5932, 1.442695
      %v6672 = vpow.pop %v6671
      %v6673 = vmul.f32 %v5933, 1.442695
      %v6674 = vpow.pop %v6673
      %v6675 = vmul.f32 %v5934, 1.442695
      %v6676 = vpow.pop %v6675
      %v6677 = vmul.f32 %v5935, 1.442695
      %v6678 = vpow.pop %v6677
      %v6679 = vmul.f32 %v5936, 1.442695
      %v6680 = vpow.pop %v6679
      %v6681 = vmul.f32 %v5937, 1.442695
      %v6682 = vpow.pop %v6681
      %v6683 = vmul.f32 %v5938, 1.442695
      %v6684 = vpow.pop %v6683
      %v6685 = vmul.f32 %v5939, 1.442695
      %v6686 = vpow.pop %v6685
      %v6687 = vmul.f32 %v5940, 1.442695
      %v6688 = vpow.pop %v6687
      %v6689 = vmul.f32 %v5941, 1.442695
      %v6690 = vpow.pop %v6689
      %v6691 = vmul.f32 %v5942, 1.442695
      %v6692 = vpow.pop %v6691
      %v6693 = vmul.f32 %v5943, 1.442695
      %v6694 = vpow.pop %v6693
      %v6695 = vmul.f32 %v5944, 1.442695
      %v6696 = vpow.pop %v6695
      %v6697 = vmul.f32 %v5945, 1.442695
      %v6698 = vpow.pop %v6697
      %v6699 = vmul.f32 %v5946, 1.442695
      %v6700 = vpow.pop %v6699
      %v6701 = vmul.f32 %v5947, 1.442695
      %v6702 = vpow.pop %v6701
      %v6703 = vmul.f32 %v5948, 1.442695
      %v6704 = vpow.pop %v6703
      %v6705 = vmul.f32 %v5949, 1.442695
      %v6706 = vpow.pop %v6705
      %v6707 = vmul.f32 %v5950, 1.442695
      %v6708 = vpow.pop %v6707
      %v6709 = vmul.f32 %v5951, 1.442695
      %v6710 = vpow.pop %v6709
      %v6711 = vmul.f32 %v5952, 1.442695
      %v6712 = vpow.pop %v6711
      %v6713 = vmul.f32 %v5953, 1.442695
      %v6714 = vpow.pop %v6713
      %v6715 = vmul.f32 %v5954, 1.442695
      %v6716 = vpow.pop %v6715
      %v6717 = vmul.f32 %v5955, 1.442695
      %v6718 = vpow.pop %v6717
      %v6719 = vmul.f32 %v5956, 1.442695
      %v6720 = vpow.pop %v6719
      %v6721 = vmul.f32 %v5957, 1.442695
      %v6722 = vpow.pop %v6721
      %v6723 = vmul.f32 %v5958, 1.442695
      %v6724 = vpow.pop %v6723
      %v6725 = vmul.f32 %v5959, 1.442695
      %v6726 = vpow.pop %v6725
      %v6727 = vmul.f32 %v5960, 1.442695
      %v6728 = vpow.pop %v6727
      %v6729 = vmul.f32 %v5961, 1.442695
      %v6730 = vpow.pop %v6729
      %v6731 = vmul.f32 %v5962, 1.442695
      %v6732 = vpow.pop %v6731
      %v6733 = vmul.f32 %v5963, 1.442695
      %v6734 = vpow.pop %v6733
      %v6735 = vmul.f32 %v5964, 1.442695
      %v6736 = vpow.pop %v6735
      %v6737 = vmul.f32 %v5965, 1.442695
      %v6738 = vpow.pop %v6737
      %v6739 = vmul.f32 %v5966, 1.442695
      %v6740 = vpow.pop %v6739
      %v6741 = vmul.f32 %v5967, 1.442695
      %v6742 = vpow.pop %v6741
      %v6743 = vmul.f32 %v5968, 1.442695
      %v6744 = vpow.pop %v6743
      %v6745 = vmul.f32 %v5969, 1.442695
      %v6746 = vpow.pop %v6745
      %v6747 = vmul.f32 %v5970, 1.442695
      %v6748 = vpow.pop %v6747
      %v6749 = vmul.f32 %v5971, 1.442695
      %v6750 = vpow.pop %v6749
      %v6751 = vmul.f32 %v5972, 1.442695
      %v6752 = vpow.pop %v6751
      %v6753 = vmul.f32 %v5973, 1.442695
      %v6754 = vpow.pop %v6753
      %v6755 = vmul.f32 %v5974, 1.442695
      %v6756 = vpow.pop %v6755
      %v6757 = vmul.f32 %v5975, 1.442695
      %v6758 = vpow.pop %v6757
      %v6759 = vmul.f32 %v5976, 1.442695
      %v6760 = vpow.pop %v6759
      %v6761 = vmul.f32 %v5977, 1.442695
      %v6762 = vpow.pop %v6761
      %v6763 = vmul.f32 %v5978, 1.442695
      %v6764 = vpow.pop %v6763
      %v6765 = vmul.f32 %v5979, 1.442695
      %v6766 = vpow.pop %v6765
      %v6767 = vmul.f32 %v5980, 1.442695
      %v6768 = vpow.pop %v6767
      %v6769 = vmul.f32 %v5981, 1.442695
      %v6770 = vpow.pop %v6769
      %v6771 = vmul.f32 %v5982, 1.442695
      %v6772 = vpow.pop %v6771
      %v6773 = vmul.f32 %v5983, 1.442695
      %v6774 = vpow.pop %v6773
      %v6775 = vmul.f32 %v5984, 1.442695
      %v6776 = vpow.pop %v6775
      %v6777 = vmul.f32 %v5985, 1.442695
      %v6778 = vpow.pop %v6777
      %v6779 = vmul.f32 %v5986, 1.442695
      %v6780 = vpow.pop %v6779
      %v6781 = vmul.f32 %v5987, 1.442695
      %v6782 = vpow.pop %v6781
      %v6783 = vmul.f32 %v5988, 1.442695
      %v6784 = vpow.pop %v6783
      %v6785 = vmul.f32 %v5989, 1.442695
      %v6786 = vpow.pop %v6785
      %v6787 = vmul.f32 %v5990, 1.442695
      %v6788 = vpow.pop %v6787
      %v6789 = vmul.f32 %v5991, 1.442695
      %v6790 = vpow.pop %v6789
      %v6791 = vmul.f32 %v5992, 1.442695
      %v6792 = vpow.pop %v6791
      %v6793 = vmul.f32 %v5993, 1.442695
      %v6794 = vpow.pop %v6793
      %v6795 = vmul.f32 %v5994, 1.442695
      %v6796 = vpow.pop %v6795
      %v6797 = vmul.f32 %v5995, 1.442695
      %v6798 = vpow.pop %v6797
      %v6799 = vmul.f32 %v5996, 1.442695
      %v6800 = vpow.pop %v6799
      %v6801 = vmul.f32 %v5997, 1.442695
      %v6802 = vpow.pop %v6801
      %v6803 = vmul.f32 %v5998, 1.442695
      %v6804 = vpow.pop %v6803
      %v6805 = vmul.f32 %v5999, 1.442695
      %v6806 = vpow.pop %v6805
      %v6807 = vmul.f32 %v6000, 1.442695
      %v6808 = vpow.pop %v6807
      %v6809 = vmul.f32 %v6001, 1.442695
      %v6810 = vpow.pop %v6809
      %v6811 = vmul.f32 %v6002, 1.442695
      %v6812 = vpow.pop %v6811
      %v6813 = vmul.f32 %v6003, 1.442695
      %v6814 = vpow.pop %v6813
      %v6815 = vmul.f32 %v6004, 1.442695
      %v6816 = vpow.pop %v6815
      %v6817 = vmul.f32 %v6005, 1.442695
      %v6818 = vpow.pop %v6817
      %v6819 = vmul.f32 %v6006, 1.442695
      %v6820 = vpow.pop %v6819
      %v6821 = vmul.f32 %v6007, 1.442695
      %v6822 = vpow.pop %v6821
      %v6823 = vmul.f32 %v6008, 1.442695
      %v6824 = vpow.pop %v6823
      %v6825 = vmul.f32 %v6009, 1.442695
      %v6826 = vpow.pop %v6825
      %v6827 = vmul.f32 %v6010, 1.442695
      %v6828 = vpow.pop %v6827
      %v6829 = vmul.f32 %v6011, 1.442695
      %v6830 = vpow.pop %v6829
      %v6831 = vmul.f32 %v6012, 1.442695
      %v6832 = vpow.pop %v6831
      %v6833 = vmul.f32 %v6013, 1.442695
      %v6834 = vpow.pop %v6833
      %v6835 = vmul.f32 %v6014, 1.442695
      %v6836 = vpow.pop %v6835
      %v6837 = vmul.f32 %v6015, 1.442695
      %v6838 = vpow.pop %v6837
      %v6839 = vmul.f32 %v6016, 1.442695
      %v6840 = vpow.pop %v6839
      %v6841 = vmul.f32 %v6017, 1.442695
      %v6842 = vpow.pop %v6841
      %v6843 = vmul.f32 %v6018, 1.442695
      %v6844 = vpow.pop %v6843
      %v6845 = vmul.f32 %v6019, 1.442695
      %v6846 = vpow.pop %v6845
      %v6847 = vmul.f32 %v6020, 1.442695
      %v6848 = vpow.pop %v6847
      %v6849 = vmul.f32 %v6021, 1.442695
      %v6850 = vpow.pop %v6849
      %v6851 = vmul.f32 %v6022, 1.442695
      %v6852 = vpow.pop %v6851
      %v6853 = vmul.f32 %v6023, 1.442695
      %v6854 = vpow.pop %v6853
      %v6855 = vmul.f32 %v6024, 1.442695
      %v6856 = vpow.pop %v6855
      %v6857 = vmul.f32 %v6025, 1.442695
      %v6858 = vpow.pop %v6857
      %v6859 = vmul.f32 %v6026, 1.442695
      %v6860 = vpow.pop %v6859
      %v6861 = vmul.f32 %v6027, 1.442695
      %v6862 = vpow.pop %v6861
      %v6863 = vmul.f32 %v6028, 1.442695
      %v6864 = vpow.pop %v6863
      %v6865 = vmul.f32 %v6029, 1.442695
      %v6866 = vpow.pop %v6865
      %v6867 = vmul.f32 %v6030, 1.442695
      %v6868 = vpow.pop %v6867
      %v6869 = vmul.f32 %v6031, 1.442695
      %v6870 = vpow.pop %v6869
      %v6871 = vmul.f32 %v6032, 1.442695
      %v6872 = vpow.pop %v6871
      %v6873 = vmul.f32 %v6033, 1.442695
      %v6874 = vpow.pop %v6873
      %v6875 = vmul.f32 %v6034, 1.442695
      %v6876 = vpow.pop %v6875
      %v6877 = vmul.f32 %v6035, 1.442695
      %v6878 = vpow.pop %v6877
      %v6879 = vmul.f32 %v6036, 1.442695
      %v6880 = vpow.pop %v6879
      %v6881 = vmul.f32 %v6037, 1.442695
      %v6882 = vpow.pop %v6881
      %v6883 = vmul.f32 %v6038, 1.442695
      %v6884 = vpow.pop %v6883
      %v6885 = vmul.f32 %v6039, 1.442695
      %v6886 = vpow.pop %v6885
      %v6887 = vmul.f32 %v6040, 1.442695
      %v6888 = vpow.pop %v6887
      %v6889 = vmul.f32 %v6041, 1.442695
      %v6890 = vpow.pop %v6889
      %v6891 = vmul.f32 %v6042, 1.442695
      %v6892 = vpow.pop %v6891
      %v6893 = vmul.f32 %v6043, 1.442695
      %v6894 = vpow.pop %v6893
      %v6895 = vmul.f32 %v6044, 1.442695
      %v6896 = vpow.pop %v6895
      %v6897 = vmul.f32 %v6045, 1.442695
      %v6898 = vpow.pop %v6897
      %v6899 = vmul.f32 %v6046, 1.442695
      %v6900 = vpow.pop %v6899
      %v6901 = vmul.f32 %v6047, 1.442695
      %v6902 = vpow.pop %v6901
      %v6903 = vmul.f32 %v6048, 1.442695
      %v6904 = vpow.pop %v6903
      %v6905 = vmul.f32 %v6049, 1.442695
      %v6906 = vpow.pop %v6905
      %v6907 = vmul.f32 %v6050, 1.442695
      %v6908 = vpow.pop %v6907
      %v6909 = vmul.f32 %v6051, 1.442695
      %v6910 = vpow.pop %v6909
      %v6911 = vmul.f32 %v6052, 1.442695
      %v6912 = vpow.pop %v6911
      %v6913 = vmul.f32 %v6053, 1.442695
      %v6914 = vpow.pop %v6913
      %v6915 = vmul.f32 %v6054, 1.442695
      %v6916 = vpow.pop %v6915
      %v6917 = vmul.f32 %v6055, 1.442695
      %v6918 = vpow.pop %v6917
      %v6919 = vmul.f32 %v6056, 1.442695
      %v6920 = vpow.pop %v6919
      %v6921 = vmul.f32 %v6057, 1.442695
      %v6922 = vpow.pop %v6921
      %v6923 = vmul.f32 %v6058, 1.442695
      %v6924 = vpow.pop %v6923
      %v6925 = vmul.f32 %v6059, 1.442695
      %v6926 = vpow.pop %v6925
      %v6927 = vmul.f32 %v6060, 1.442695
      %v6928 = vpow.pop %v6927
      %v6929 = vmul.f32 %v6061, 1.442695
      %v6930 = vpow.pop %v6929
      %v6931 = vmul.f32 %v6062, 1.442695
      %v6932 = vpow.pop %v6931
      %v6933 = vmul.f32 %v6063, 1.442695
      %v6934 = vpow.pop %v6933
      %v6935 = vmul.f32 %v6064, 1.442695
      %v6936 = vpow.pop %v6935
      %v6937 = vmul.f32 %v6065, 1.442695
      %v6938 = vpow.pop %v6937
      %v6939 = vmul.f32 %v6066, 1.442695
      %v6940 = vpow.pop %v6939
      %v6941 = vmul.f32 %v6067, 1.442695
      %v6942 = vpow.pop %v6941
      %v6943 = vmul.f32 %v6068, 1.442695
      %v6944 = vpow.pop %v6943
      %v6945 = vmul.f32 %v6069, 1.442695
      %v6946 = vpow.pop %v6945
      %v6947 = vmul.f32 %v6070, 1.442695
      %v6948 = vpow.pop %v6947
      %v6949 = vmul.f32 %v6071, 1.442695
      %v6950 = vpow.pop %v6949
      %v6951 = vmul.f32 %v6072, 1.442695
      %v6952 = vpow.pop %v6951
      %v6953 = vmul.f32 %v6073, 1.442695
      %v6954 = vpow.pop %v6953
      %v6955 = vmul.f32 %v6074, 1.442695
      %v6956 = vpow.pop %v6955
      %v6957 = vmul.f32 %v6075, 1.442695
      %v6958 = vpow.pop %v6957
      %v6959 = vmul.f32 %v6076, 1.442695
      %v6960 = vpow.pop %v6959
      %v6961 = vmul.f32 %v6077, 1.442695
      %v6962 = vpow.pop %v6961
      %v6963 = vmul.f32 %v6078, 1.442695
      %v6964 = vpow.pop %v6963
      %v6965 = vmul.f32 %v6079, 1.442695
      %v6966 = vpow.pop %v6965
      %v6967 = vmul.f32 %v6080, 1.442695
      %v6968 = vpow.pop %v6967
      %v6969 = vmul.f32 %v6081, 1.442695
      %v6970 = vpow.pop %v6969
      %v6971 = vmul.f32 %v6082, 1.442695
      %v6972 = vpow.pop %v6971
      %v6973 = vmul.f32 %v6083, 1.442695
      %v6974 = vpow.pop %v6973
      %v6975 = vmul.f32 %v6084, 1.442695
      %v6976 = vpow.pop %v6975
      %v6977 = vmul.f32 %v6085, 1.442695
      %v6978 = vpow.pop %v6977
      %v6979 = vmul.f32 %v6086, 1.442695
      %v6980 = vpow.pop %v6979
      %v6981 = vmul.f32 %v6087, 1.442695
      %v6982 = vpow.pop %v6981
      %v6983 = vmul.f32 %v6088, 1.442695
      %v6984 = vpow.pop %v6983
      %v6985 = vmul.f32 %v6089, 1.442695
      %v6986 = vpow.pop %v6985
      %v6987 = vmul.f32 %v6090, 1.442695
      %v6988 = vpow.pop %v6987
      %v6989 = vmul.f32 %v6091, 1.442695
      %v6990 = vpow.pop %v6989
      %v6991 = vmul.f32 %v6092, 1.442695
      %v6992 = vpow.pop %v6991
      %v6993 = vmul.f32 %v6093, 1.442695
      %v6994 = vpow.pop %v6993
      %v6995 = vmul.f32 %v6094, 1.442695
      %v6996 = vpow.pop %v6995
      %v6997 = vmul.f32 %v6095, 1.442695
      %v6998 = vpow.pop %v6997
      %v6999 = vmul.f32 %v6096, 1.442695
      %v7000 = vpow.pop %v6999
      %v7001 = vmul.f32 %v6097, 1.442695
      %v7002 = vpow.pop %v7001
      %v7003 = vmul.f32 %v6098, 1.442695
      %v7004 = vpow.pop %v7003
      %v7005 = vmul.f32 %v6099, 1.442695
      %v7006 = vpow.pop %v7005
      %v7007 = vmul.f32 %v6100, 1.442695
      %v7008 = vpow.pop %v7007
      %v7009 = vmul.f32 %v6101, 1.442695
      %v7010 = vpow.pop %v7009
      %v7011 = vmul.f32 %v6102, 1.442695
      %v7012 = vpow.pop %v7011
      %v7013 = vmul.f32 %v6103, 1.442695
      %v7014 = vpow.pop %v7013
      %v7015 = vmul.f32 %v6104, 1.442695
      %v7016 = vpow.pop %v7015
      %v7017 = vmul.f32 %v6105, 1.442695
      %v7018 = vpow.pop %v7017
      %v7019 = vmul.f32 %v6106, 1.442695
      %v7020 = vpow.pop %v7019
      %v7021 = vmul.f32 %v6107, 1.442695
      %v7022 = vpow.pop %v7021
      %v7023 = vmul.f32 %v6108, 1.442695
      %v7024 = vpow.pop %v7023
      %v7025 = vmul.f32 %v6109, 1.442695
      %v7026 = vpow.pop %v7025
      %v7027 = vmul.f32 %v6110, 1.442695
      %v7028 = vpow.pop %v7027
      %v7029 = vmul.f32 %v6111, 1.442695
      %v7030 = vpow.pop %v7029
      %v7031 = vmul.f32 %v6112, 1.442695
      %v7032 = vpow.pop %v7031
      %v7033 = vmul.f32 %v6113, 1.442695
      %v7034 = vpow.pop %v7033
      %v7035 = vmul.f32 %v6114, 1.442695
      %v7036 = vpow.pop %v7035
      %v7037 = vmul.f32 %v6115, 1.442695
      %v7038 = vpow.pop %v7037
      %v7039 = vmul.f32 %v6116, 1.442695
      %v7040 = vpow.pop %v7039
      %v7041 = vmul.f32 %v6117, 1.442695
      %v7042 = vpow.pop %v7041
      %v7043 = vmul.f32 %v6118, 1.442695
      %v7044 = vpow.pop %v7043
      %v7045 = vmul.f32 %v6119, 1.442695
      %v7046 = vpow.pop %v7045
      %v7047 = vmul.f32 %v6120, 1.442695
      %v7048 = vpow.pop %v7047
      %v7049 = vmul.f32 %v6121, 1.442695
      %v7050 = vpow.pop %v7049
      %v7051 = vmul.f32 %v6122, 1.442695
      %v7052 = vpow.pop %v7051
      %v7053 = vmul.f32 %v6123, 1.442695
      %v7054 = vpow.pop %v7053
      %v7055 = vmul.f32 %v6124, 1.442695
      %v7056 = vpow.pop %v7055
      %v7057 = vmul.f32 %v6125, 1.442695
      %v7058 = vpow.pop %v7057
      %v7059 = vmul.f32 %v6126, 1.442695
      %v7060 = vpow.pop %v7059
      %v7061 = vmul.f32 %v6127, 1.442695
      %v7062 = vpow.pop %v7061
      %v7063 = vmul.f32 %v6128, 1.442695
      %v7064 = vpow.pop %v7063
      %v7065 = vmul.f32 %v6129, 1.442695
      %v7066 = vpow.pop %v7065
      %v7067 = vmul.f32 %v6130, 1.442695
      %v7068 = vpow.pop %v7067
      %v7069 = vmul.f32 %v6131, 1.442695
      %v7070 = vpow.pop %v7069
      %v7071 = vmul.f32 %v6132, 1.442695
      %v7072 = vpow.pop %v7071
      %v7073 = vmul.f32 %v6133, 1.442695
      %v7074 = vpow.pop %v7073
      %v7075 = vmul.f32 %v6134, 1.442695
      %v7076 = vpow.pop %v7075
      %v7077 = vmul.f32 %v6135, 1.442695
      %v7078 = vpow.pop %v7077
      %v7079 = vmul.f32 %v6136, 1.442695
      %v7080 = vpow.pop %v7079
      %v7081 = vmul.f32 %v6137, 1.442695
      %v7082 = vpow.pop %v7081
      %v7083 = vmul.f32 %v6138, 1.442695
      %v7084 = vpow.pop %v7083
      %v7085 = vmul.f32 %v6139, 1.442695
      %v7086 = vpow.pop %v7085
      %v7087 = vmul.f32 %v6140, 1.442695
      %v7088 = vpow.pop %v7087
      %v7089 = vmul.f32 %v6141, 1.442695
      %v7090 = vpow.pop %v7089
      %v7091 = vmul.f32 %v6142, 1.442695
      %v7092 = vpow.pop %v7091
      %v7093 = vmul.f32 %v6143, 1.442695
      %v7094 = vpow.pop %v7093
      %v7095 = vmul.f32 %v6144, 1.442695
      %v7096 = vpow.pop %v7095
      %v7097 = vmul.f32 %v6145, 1.442695
      %v7098 = vpow.pop %v7097
      %v7099 = vmul.f32 %v6146, 1.442695
      %v7100 = vpow.pop %v7099
      %v7101 = vmul.f32 %v6147, 1.442695
      %v7102 = vpow.pop %v7101
      %v7103 = vmul.f32 %v6148, 1.442695
      %v7104 = vpow.pop %v7103
      %v7105 = vmul.f32 %v6149, 1.442695
      %v7106 = vpow.pop %v7105
      %v7107 = vmul.f32 %v6150, 1.442695
      %v7108 = vpow.pop %v7107
      %v7109 = vmul.f32 %v6151, 1.442695
      %v7110 = vpow.pop %v7109
      %v7111 = vmul.f32 %v6152, 1.442695
      %v7112 = vpow.pop %v7111
      %v7113 = vmul.f32 %v6153, 1.442695
      %v7114 = vpow.pop %v7113
      %v7115 = vmul.f32 %v6154, 1.442695
      %v7116 = vpow.pop %v7115
      %v7117 = vmul.f32 %v6155, 1.442695
      %v7118 = vpow.pop %v7117
      %v7119 = vmul.f32 %v6156, 1.442695
      %v7120 = vpow.pop %v7119
      %v7121 = vmul.f32 %v6157, 1.442695
      %v7122 = vpow.pop %v7121
      %v7123 = vmul.f32 %v6158, 1.442695
      %v7124 = vpow.pop %v7123
      %v7125 = vmul.f32 %v6159, 1.442695
      %v7126 = vpow.pop %v7125
      %v7127 = vmul.f32 %v6160, 1.442695
      %v7128 = vpow.pop %v7127
      %v7129 = vmul.f32 %v6161, 1.442695
      %v7130 = vpow.pop %v7129
      %v7131 = vmul.f32 %v6162, 1.442695
      %v7132 = vpow.pop %v7131
      %v7133 = vmul.f32 %v6163, 1.442695
      %v7134 = vpow.pop %v7133
      %v7135 = vmul.f32 %v6164, 1.442695
      %v7136 = vpow.pop %v7135
      %v7137 = vmul.f32 %v6165, 1.442695
      %v7138 = vpow.pop %v7137
      %v7139 = vmul.f32 %v6166, 1.442695
      %v7140 = vpow.pop %v7139
      %v7141 = vmul.f32 %v6167, 1.442695
      %v7142 = vpow.pop %v7141
      %v7143 = vmul.f32 %v6168, 1.442695
      %v7144 = vpow.pop %v7143
      %v7145 = vmul.f32 %v6169, 1.442695
      %v7146 = vpow.pop %v7145
      %v7147 = vmul.f32 %v6170, 1.442695
      %v7148 = vpow.pop %v7147
      %v7149 = vmul.f32 %v6171, 1.442695
      %v7150 = vpow.pop %v7149
      %v7151 = vmul.f32 %v6172, 1.442695
      %v7152 = vpow.pop %v7151
      %v7153 = vmul.f32 %v6173, 1.442695
      %v7154 = vpow.pop %v7153
      %v7155 = vmul.f32 %v6174, 1.442695
      %v7156 = vpow.pop %v7155
      %v7157 = vmul.f32 %v6175, 1.442695
      %v7158 = vpow.pop %v7157
      %v7159 = vmul.f32 %v6176, 1.442695
      %v7160 = vpow.pop %v7159
      %v7161 = vmul.f32 %v6177, 1.442695
      %v7162 = vpow.pop %v7161
      %v7163 = vmul.f32 %v6178, 1.442695
      %v7164 = vpow.pop %v7163
      %v7165 = vmul.f32 %v6179, 1.442695
      %v7166 = vpow.pop %v7165
      %v7167 = vmul.f32 %v6180, 1.442695
      %v7168 = vpow.pop %v7167
      %v7169 = vmul.f32 %v6181, 1.442695
      %v7170 = vpow.pop %v7169
      %v7171 = vmul.f32 %v6182, 1.442695
      %v7172 = vpow.pop %v7171
      %v7173 = vmul.f32 %v6183, 1.442695
      %v7174 = vpow.pop %v7173
      %v7175 = vmul.f32 %v6184, 1.442695
      %v7176 = vpow.pop %v7175
      %v7177 = vmul.f32 %v6185, 1.442695
      %v7178 = vpow.pop %v7177
      %v7179 = vmul.f32 %v6186, 1.442695
      %v7180 = vpow.pop %v7179
      %v7181 = vmul.f32 %v6187, 1.442695
      %v7182 = vpow.pop %v7181
      %v7183 = vmul.f32 %v6188, 1.442695
      %v7184 = vpow.pop %v7183
      %v7185 = vmul.f32 %v6189, 1.442695
      %v7186 = vpow.pop %v7185
      %v7187 = vmul.f32 %v6190, 1.442695
      %v7188 = vpow.pop %v7187
      %v7189 = vmul.f32 %v6191, 1.442695
      %v7190 = vpow.pop %v7189
      %v7191 = vmul.f32 %v6192, 1.442695
      %v7192 = vpow.pop %v7191
      %v7193 = vmul.f32 %v6193, 1.442695
      %v7194 = vpow.pop %v7193
      %v7195 = vmul.f32 %v6194, 1.442695
      %v7196 = vpow.pop %v7195
      %v7197 = vmul.f32 %v6195, 1.442695
      %v7198 = vpow.pop %v7197
      %v7199 = vmul.f32 %v6196, 1.442695
      %v7200 = vpow.pop %v7199
      %v7201 = vmul.f32 %v6197, 1.442695
      %v7202 = vpow.pop %v7201
      %v7203 = vmul.f32 %v6198, 1.442695
      %v7204 = vpow.pop %v7203
      %v7205 = vmul.f32 %v6199, 1.442695
      %v7206 = vpow.pop %v7205
      %v7207 = vmul.f32 %v6200, 1.442695
      %v7208 = vpow.pop %v7207
      %v7209 = vmul.f32 %v6201, 1.442695
      %v7210 = vpow.pop %v7209
      %v7211 = vmul.f32 %v6202, 1.442695
      %v7212 = vpow.pop %v7211
      %v7213 = vmul.f32 %v6203, 1.442695
      %v7214 = vpow.pop %v7213
      %v7215 = vmul.f32 %v6204, 1.442695
      %v7216 = vpow.pop %v7215
      %v7217 = vmul.f32 %v6205, 1.442695
      %v7218 = vpow.pop %v7217
      %v7219 = vmul.f32 %v6206, 1.442695
      %v7220 = vpow.pop %v7219
      %v7221 = vmul.f32 %v6207, 1.442695
      %v7222 = vpow.pop %v7221
      %v7223 = vmul.f32 %v6208, 1.442695
      %v7224 = vpow.pop %v7223
      %v7225 = vmul.f32 %v6209, 1.442695
      %v7226 = vpow.pop %v7225
      %v7227 = vmul.f32 %v6210, 1.442695
      %v7228 = vpow.pop %v7227
      %v7229 = vmul.f32 %v6211, 1.442695
      %v7230 = vpow.pop %v7229
      %v7231 = vmul.f32 %v6212, 1.442695
      %v7232 = vpow.pop %v7231
      %v7233 = vmul.f32 %v6213, 1.442695
      %v7234 = vpow.pop %v7233
      %v7235 = vmul.f32 %v6214, 1.442695
      %v7236 = vpow.pop %v7235
      %v7237 = vmul.f32 %v6215, 1.442695
      %v7238 = vpow.pop %v7237
      %v7239 = vmul.f32 %v6216, 1.442695
      %v7240 = vpow.pop %v7239
      %v7241 = vadd.f32 %v6218, %v6220
      %7242 = vadd.xlane.f32.xlu0 %v7241
      %v7243 = vpop.xlane.xlu0 %7242
      %v7244 = vadd.f32 %v6222, %v6224
      %7245 = vadd.xlane.f32.xlu0 %v7244
      %v7246 = vpop.xlane.xlu0 %7245
      %v7247 = vadd.f32 %v6226, %v6228
      %7248 = vadd.xlane.f32.xlu0 %v7247
      %v7249 = vpop.xlane.xlu0 %7248
      %v7250 = vadd.f32 %v6230, %v6232
      %7251 = vadd.xlane.f32.xlu0 %v7250
      %v7252 = vpop.xlane.xlu0 %7251
      %v7253 = vadd.f32 %v6234, %v6236
      %7254 = vadd.xlane.f32.xlu0 %v7253
      %v7255 = vpop.xlane.xlu0 %7254
      %v7256 = vadd.f32 %v6238, %v6240
      %7257 = vadd.xlane.f32.xlu0 %v7256
      %v7258 = vpop.xlane.xlu0 %7257
      %v7259 = vadd.f32 %v6242, %v6244
      %7260 = vadd.xlane.f32.xlu0 %v7259
      %v7261 = vpop.xlane.xlu0 %7260
      %v7262 = vadd.f32 %v6246, %v6248
      %7263 = vadd.xlane.f32.xlu0 %v7262
      %v7264 = vpop.xlane.xlu0 %7263
      %v7265 = vadd.f32 %v6250, %v6252
      %7266 = vadd.xlane.f32.xlu0 %v7265
      %v7267 = vpop.xlane.xlu0 %7266
      %v7268 = vadd.f32 %v6254, %v6256
      %7269 = vadd.xlane.f32.xlu0 %v7268
      %v7270 = vpop.xlane.xlu0 %7269
      %v7271 = vadd.f32 %v6258, %v6260
      %7272 = vadd.xlane.f32.xlu0 %v7271
      %v7273 = vpop.xlane.xlu0 %7272
      %v7274 = vadd.f32 %v6262, %v6264
      %7275 = vadd.xlane.f32.xlu0 %v7274
      %v7276 = vpop.xlane.xlu0 %7275
      %v7277 = vadd.f32 %v6266, %v6268
      %7278 = vadd.xlane.f32.xlu0 %v7277
      %v7279 = vpop.xlane.xlu0 %7278
      %v7280 = vadd.f32 %v6270, %v6272
      %7281 = vadd.xlane.f32.xlu0 %v7280
      %v7282 = vpop.xlane.xlu0 %7281
      %v7283 = vadd.f32 %v6274, %v6276
      %7284 = vadd.xlane.f32.xlu0 %v7283
      %v7285 = vpop.xlane.xlu0 %7284
      %v7286 = vadd.f32 %v6278, %v6280
      %7287 = vadd.xlane.f32.xlu0 %v7286
      %v7288 = vpop.xlane.xlu0 %7287
      %v7289 = vadd.f32 %v6282, %v6284
      %7290 = vadd.xlane.f32.xlu0 %v7289
      %v7291 = vpop.xlane.xlu0 %7290
      %v7292 = vadd.f32 %v6286, %v6288
      %7293 = vadd.xlane.f32.xlu0 %v7292
      %v7294 = vpop.xlane.xlu0 %7293
      %v7295 = vadd.f32 %v6290, %v6292
      %7296 = vadd.xlane.f32.xlu0 %v7295
      %v7297 = vpop.xlane.xlu0 %7296
      %v7298 = vadd.f32 %v6294, %v6296
      %7299 = vadd.xlane.f32.xlu0 %v7298
      %v7300 = vpop.xlane.xlu0 %7299
      %v7301 = vadd.f32 %v6298, %v6300
      %7302 = vadd.xlane.f32.xlu0 %v7301
      %v7303 = vpop.xlane.xlu0 %7302
      %v7304 = vadd.f32 %v6302, %v6304
      %7305 = vadd.xlane.f32.xlu0 %v7304
      %v7306 = vpop.xlane.xlu0 %7305
      %v7307 = vadd.f32 %v6306, %v6308
      %7308 = vadd.xlane.f32.xlu0 %v7307
      %v7309 = vpop.xlane.xlu0 %7308
      %v7310 = vadd.f32 %v6310, %v6312
      %7311 = vadd.xlane.f32.xlu0 %v7310
      %v7312 = vpop.xlane.xlu0 %7311
      %v7313 = vadd.f32 %v6314, %v6316
      %7314 = vadd.xlane.f32.xlu0 %v7313
      %v7315 = vpop.xlane.xlu0 %7314
      %v7316 = vadd.f32 %v6318, %v6320
      %7317 = vadd.xlane.f32.xlu0 %v7316
      %v7318 = vpop.xlane.xlu0 %7317
      %v7319 = vadd.f32 %v6322, %v6324
      %7320 = vadd.xlane.f32.xlu0 %v7319
      %v7321 = vpop.xlane.xlu0 %7320
      %v7322 = vadd.f32 %v6326, %v6328
      %7323 = vadd.xlane.f32.xlu0 %v7322
      %v7324 = vpop.xlane.xlu0 %7323
      %v7325 = vadd.f32 %v6330, %v6332
      %7326 = vadd.xlane.f32.xlu0 %v7325
      %v7327 = vpop.xlane.xlu0 %7326
      %v7328 = vadd.f32 %v6334, %v6336
      %7329 = vadd.xlane.f32.xlu0 %v7328
      %v7330 = vpop.xlane.xlu0 %7329
      %v7331 = vadd.f32 %v6338, %v6340
      %7332 = vadd.xlane.f32.xlu0 %v7331
      %v7333 = vpop.xlane.xlu0 %7332
      %v7334 = vadd.f32 %v6342, %v6344
      %7335 = vadd.xlane.f32.xlu0 %v7334
      %v7336 = vpop.xlane.xlu0 %7335
      %v7337 = vadd.f32 %v6346, %v6348
      %7338 = vadd.xlane.f32.xlu0 %v7337
      %v7339 = vpop.xlane.xlu0 %7338
      %v7340 = vadd.f32 %v6350, %v6352
      %7341 = vadd.xlane.f32.xlu0 %v7340
      %v7342 = vpop.xlane.xlu0 %7341
      %v7343 = vadd.f32 %v6354, %v6356
      %7344 = vadd.xlane.f32.xlu0 %v7343
      %v7345 = vpop.xlane.xlu0 %7344
      %v7346 = vadd.f32 %v6358, %v6360
      %7347 = vadd.xlane.f32.xlu0 %v7346
      %v7348 = vpop.xlane.xlu0 %7347
      %v7349 = vadd.f32 %v6362, %v6364
      %7350 = vadd.xlane.f32.xlu0 %v7349
      %v7351 = vpop.xlane.xlu0 %7350
      %v7352 = vadd.f32 %v6366, %v6368
      %7353 = vadd.xlane.f32.xlu0 %v7352
      %v7354 = vpop.xlane.xlu0 %7353
      %v7355 = vadd.f32 %v6370, %v6372
      %7356 = vadd.xlane.f32.xlu0 %v7355
      %v7357 = vpop.xlane.xlu0 %7356
      %v7358 = vadd.f32 %v6374, %v6376
      %7359 = vadd.xlane.f32.xlu0 %v7358
      %v7360 = vpop.xlane.xlu0 %7359
      %v7361 = vadd.f32 %v6378, %v6380
      %7362 = vadd.xlane.f32.xlu0 %v7361
      %v7363 = vpop.xlane.xlu0 %7362
      %v7364 = vadd.f32 %v6382, %v6384
      %7365 = vadd.xlane.f32.xlu0 %v7364
      %v7366 = vpop.xlane.xlu0 %7365
      %v7367 = vadd.f32 %v6386, %v6388
      %7368 = vadd.xlane.f32.xlu0 %v7367
      %v7369 = vpop.xlane.xlu0 %7368
      %v7370 = vadd.f32 %v6390, %v6392
      %7371 = vadd.xlane.f32.xlu0 %v7370
      %v7372 = vpop.xlane.xlu0 %7371
      %v7373 = vadd.f32 %v6394, %v6396
      %7374 = vadd.xlane.f32.xlu0 %v7373
      %v7375 = vpop.xlane.xlu0 %7374
      %v7376 = vadd.f32 %v6398, %v6400
      %7377 = vadd.xlane.f32.xlu0 %v7376
      %v7378 = vpop.xlane.xlu0 %7377
      %v7379 = vadd.f32 %v6402, %v6404
      %7380 = vadd.xlane.f32.xlu0 %v7379
      %v7381 = vpop.xlane.xlu0 %7380
      %v7382 = vadd.f32 %v6406, %v6408
      %7383 = vadd.xlane.f32.xlu0 %v7382
      %v7384 = vpop.xlane.xlu0 %7383
      %v7385 = vadd.f32 %v6410, %v6412
      %7386 = vadd.xlane.f32.xlu0 %v7385
      %v7387 = vpop.xlane.xlu0 %7386
      %v7388 = vadd.f32 %v6414, %v6416
      %7389 = vadd.xlane.f32.xlu0 %v7388
      %v7390 = vpop.xlane.xlu0 %7389
      %v7391 = vadd.f32 %v6418, %v6420
      %7392 = vadd.xlane.f32.xlu0 %v7391
      %v7393 = vpop.xlane.xlu0 %7392
      %v7394 = vadd.f32 %v6422, %v6424
      %7395 = vadd.xlane.f32.xlu0 %v7394
      %v7396 = vpop.xlane.xlu0 %7395
      %v7397 = vadd.f32 %v6426, %v6428
      %7398 = vadd.xlane.f32.xlu0 %v7397
      %v7399 = vpop.xlane.xlu0 %7398
      %v7400 = vadd.f32 %v6430, %v6432
      %7401 = vadd.xlane.f32.xlu0 %v7400
      %v7402 = vpop.xlane.xlu0 %7401
      %v7403 = vadd.f32 %v6434, %v6436
      %7404 = vadd.xlane.f32.xlu0 %v7403
      %v7405 = vpop.xlane.xlu0 %7404
      %v7406 = vadd.f32 %v6438, %v6440
      %7407 = vadd.xlane.f32.xlu0 %v7406
      %v7408 = vpop.xlane.xlu0 %7407
      %v7409 = vadd.f32 %v6442, %v6444
      %7410 = vadd.xlane.f32.xlu0 %v7409
      %v7411 = vpop.xlane.xlu0 %7410
      %v7412 = vadd.f32 %v6446, %v6448
      %7413 = vadd.xlane.f32.xlu0 %v7412
      %v7414 = vpop.xlane.xlu0 %7413
      %v7415 = vadd.f32 %v6450, %v6452
      %7416 = vadd.xlane.f32.xlu0 %v7415
      %v7417 = vpop.xlane.xlu0 %7416
      %v7418 = vadd.f32 %v6454, %v6456
      %7419 = vadd.xlane.f32.xlu0 %v7418
      %v7420 = vpop.xlane.xlu0 %7419
      %v7421 = vadd.f32 %v6458, %v6460
      %7422 = vadd.xlane.f32.xlu0 %v7421
      %v7423 = vpop.xlane.xlu0 %7422
      %v7424 = vadd.f32 %v6462, %v6464
      %7425 = vadd.xlane.f32.xlu0 %v7424
      %v7426 = vpop.xlane.xlu0 %7425
      %v7427 = vadd.f32 %v6466, %v6468
      %7428 = vadd.xlane.f32.xlu0 %v7427
      %v7429 = vpop.xlane.xlu0 %7428
      %v7430 = vadd.f32 %v6470, %v6472
      %7431 = vadd.xlane.f32.xlu0 %v7430
      %v7432 = vpop.xlane.xlu0 %7431
      %v7433 = vadd.f32 %v6474, %v6476
      %7434 = vadd.xlane.f32.xlu0 %v7433
      %v7435 = vpop.xlane.xlu0 %7434
      %v7436 = vadd.f32 %v6478, %v6480
      %7437 = vadd.xlane.f32.xlu0 %v7436
      %v7438 = vpop.xlane.xlu0 %7437
      %v7439 = vadd.f32 %v6482, %v6484
      %7440 = vadd.xlane.f32.xlu0 %v7439
      %v7441 = vpop.xlane.xlu0 %7440
      %v7442 = vadd.f32 %v6486, %v6488
      %7443 = vadd.xlane.f32.xlu0 %v7442
      %v7444 = vpop.xlane.xlu0 %7443
      %v7445 = vadd.f32 %v6490, %v6492
      %7446 = vadd.xlane.f32.xlu0 %v7445
      %v7447 = vpop.xlane.xlu0 %7446
      %v7448 = vadd.f32 %v6494, %v6496
      %7449 = vadd.xlane.f32.xlu0 %v7448
      %v7450 = vpop.xlane.xlu0 %7449
      %v7451 = vadd.f32 %v6498, %v6500
      %7452 = vadd.xlane.f32.xlu0 %v7451
      %v7453 = vpop.xlane.xlu0 %7452
      %v7454 = vadd.f32 %v6502, %v6504
      %7455 = vadd.xlane.f32.xlu0 %v7454
      %v7456 = vpop.xlane.xlu0 %7455
      %v7457 = vadd.f32 %v6506, %v6508
      %7458 = vadd.xlane.f32.xlu0 %v7457
      %v7459 = vpop.xlane.xlu0 %7458
      %v7460 = vadd.f32 %v6510, %v6512
      %7461 = vadd.xlane.f32.xlu0 %v7460
      %v7462 = vpop.xlane.xlu0 %7461
      %v7463 = vadd.f32 %v6514, %v6516
      %7464 = vadd.xlane.f32.xlu0 %v7463
      %v7465 = vpop.xlane.xlu0 %7464
      %v7466 = vadd.f32 %v6518, %v6520
      %7467 = vadd.xlane.f32.xlu0 %v7466
      %v7468 = vpop.xlane.xlu0 %7467
      %v7469 = vadd.f32 %v6522, %v6524
      %7470 = vadd.xlane.f32.xlu0 %v7469
      %v7471 = vpop.xlane.xlu0 %7470
      %v7472 = vadd.f32 %v6526, %v6528
      %7473 = vadd.xlane.f32.xlu0 %v7472
      %v7474 = vpop.xlane.xlu0 %7473
      %v7475 = vadd.f32 %v6530, %v6532
      %7476 = vadd.xlane.f32.xlu0 %v7475
      %v7477 = vpop.xlane.xlu0 %7476
      %v7478 = vadd.f32 %v6534, %v6536
      %7479 = vadd.xlane.f32.xlu0 %v7478
      %v7480 = vpop.xlane.xlu0 %7479
      %v7481 = vadd.f32 %v6538, %v6540
      %7482 = vadd.xlane.f32.xlu0 %v7481
      %v7483 = vpop.xlane.xlu0 %7482
      %v7484 = vadd.f32 %v6542, %v6544
      %7485 = vadd.xlane.f32.xlu0 %v7484
      %v7486 = vpop.xlane.xlu0 %7485
      %v7487 = vadd.f32 %v6546, %v6548
      %7488 = vadd.xlane.f32.xlu0 %v7487
      %v7489 = vpop.xlane.xlu0 %7488
      %v7490 = vadd.f32 %v6550, %v6552
      %7491 = vadd.xlane.f32.xlu0 %v7490
      %v7492 = vpop.xlane.xlu0 %7491
      %v7493 = vadd.f32 %v6554, %v6556
      %7494 = vadd.xlane.f32.xlu0 %v7493
      %v7495 = vpop.xlane.xlu0 %7494
      %v7496 = vadd.f32 %v6558, %v6560
      %7497 = vadd.xlane.f32.xlu0 %v7496
      %v7498 = vpop.xlane.xlu0 %7497
      %v7499 = vadd.f32 %v6562, %v6564
      %7500 = vadd.xlane.f32.xlu0 %v7499
      %v7501 = vpop.xlane.xlu0 %7500
      %v7502 = vadd.f32 %v6566, %v6568
      %7503 = vadd.xlane.f32.xlu0 %v7502
      %v7504 = vpop.xlane.xlu0 %7503
      %v7505 = vadd.f32 %v6570, %v6572
      %7506 = vadd.xlane.f32.xlu0 %v7505
      %v7507 = vpop.xlane.xlu0 %7506
      %v7508 = vadd.f32 %v6574, %v6576
      %7509 = vadd.xlane.f32.xlu0 %v7508
      %v7510 = vpop.xlane.xlu0 %7509
      %v7511 = vadd.f32 %v6578, %v6580
      %7512 = vadd.xlane.f32.xlu0 %v7511
      %v7513 = vpop.xlane.xlu0 %7512
      %v7514 = vadd.f32 %v6582, %v6584
      %7515 = vadd.xlane.f32.xlu0 %v7514
      %v7516 = vpop.xlane.xlu0 %7515
      %v7517 = vadd.f32 %v6586, %v6588
      %7518 = vadd.xlane.f32.xlu0 %v7517
      %v7519 = vpop.xlane.xlu0 %7518
      %v7520 = vadd.f32 %v6590, %v6592
      %7521 = vadd.xlane.f32.xlu0 %v7520
      %v7522 = vpop.xlane.xlu0 %7521
      %v7523 = vadd.f32 %v6594, %v6596
      %7524 = vadd.xlane.f32.xlu0 %v7523
      %v7525 = vpop.xlane.xlu0 %7524
      %v7526 = vadd.f32 %v6598, %v6600
      %7527 = vadd.xlane.f32.xlu0 %v7526
      %v7528 = vpop.xlane.xlu0 %7527
      %v7529 = vadd.f32 %v6602, %v6604
      %7530 = vadd.xlane.f32.xlu0 %v7529
      %v7531 = vpop.xlane.xlu0 %7530
      %v7532 = vadd.f32 %v6606, %v6608
      %7533 = vadd.xlane.f32.xlu0 %v7532
      %v7534 = vpop.xlane.xlu0 %7533
      %v7535 = vadd.f32 %v6610, %v6612
      %7536 = vadd.xlane.f32.xlu0 %v7535
      %v7537 = vpop.xlane.xlu0 %7536
      %v7538 = vadd.f32 %v6614, %v6616
      %7539 = vadd.xlane.f32.xlu0 %v7538
      %v7540 = vpop.xlane.xlu0 %7539
      %v7541 = vadd.f32 %v6618, %v6620
      %7542 = vadd.xlane.f32.xlu0 %v7541
      %v7543 = vpop.xlane.xlu0 %7542
      %v7544 = vadd.f32 %v6622, %v6624
      %7545 = vadd.xlane.f32.xlu0 %v7544
      %v7546 = vpop.xlane.xlu0 %7545
      %v7547 = vadd.f32 %v6626, %v6628
      %7548 = vadd.xlane.f32.xlu0 %v7547
      %v7549 = vpop.xlane.xlu0 %7548
      %v7550 = vadd.f32 %v6630, %v6632
      %7551 = vadd.xlane.f32.xlu0 %v7550
      %v7552 = vpop.xlane.xlu0 %7551
      %v7553 = vadd.f32 %v6634, %v6636
      %7554 = vadd.xlane.f32.xlu0 %v7553
      %v7555 = vpop.xlane.xlu0 %7554
      %v7556 = vadd.f32 %v6638, %v6640
      %7557 = vadd.xlane.f32.xlu0 %v7556
      %v7558 = vpop.xlane.xlu0 %7557
      %v7559 = vadd.f32 %v6642, %v6644
      %7560 = vadd.xlane.f32.xlu0 %v7559
      %v7561 = vpop.xlane.xlu0 %7560
      %v7562 = vadd.f32 %v6646, %v6648
      %7563 = vadd.xlane.f32.xlu0 %v7562
      %v7564 = vpop.xlane.xlu0 %7563
      %v7565 = vadd.f32 %v6650, %v6652
      %7566 = vadd.xlane.f32.xlu0 %v7565
      %v7567 = vpop.xlane.xlu0 %7566
      %v7568 = vadd.f32 %v6654, %v6656
      %7569 = vadd.xlane.f32.xlu0 %v7568
      %v7570 = vpop.xlane.xlu0 %7569
      %v7571 = vadd.f32 %v6658, %v6660
      %7572 = vadd.xlane.f32.xlu0 %v7571
      %v7573 = vpop.xlane.xlu0 %7572
      %v7574 = vadd.f32 %v6662, %v6664
      %7575 = vadd.xlane.f32.xlu0 %v7574
      %v7576 = vpop.xlane.xlu0 %7575
      %v7577 = vadd.f32 %v6666, %v6668
      %7578 = vadd.xlane.f32.xlu0 %v7577
      %v7579 = vpop.xlane.xlu0 %7578
      %v7580 = vadd.f32 %v6670, %v6672
      %7581 = vadd.xlane.f32.xlu0 %v7580
      %v7582 = vpop.xlane.xlu0 %7581
      %v7583 = vadd.f32 %v6674, %v6676
      %7584 = vadd.xlane.f32.xlu0 %v7583
      %v7585 = vpop.xlane.xlu0 %7584
      %v7586 = vadd.f32 %v6678, %v6680
      %7587 = vadd.xlane.f32.xlu0 %v7586
      %v7588 = vpop.xlane.xlu0 %7587
      %v7589 = vadd.f32 %v6682, %v6684
      %7590 = vadd.xlane.f32.xlu0 %v7589
      %v7591 = vpop.xlane.xlu0 %7590
      %v7592 = vadd.f32 %v6686, %v6688
      %7593 = vadd.xlane.f32.xlu0 %v7592
      %v7594 = vpop.xlane.xlu0 %7593
      %v7595 = vadd.f32 %v6690, %v6692
      %7596 = vadd.xlane.f32.xlu0 %v7595
      %v7597 = vpop.xlane.xlu0 %7596
      %v7598 = vadd.f32 %v6694, %v6696
      %7599 = vadd.xlane.f32.xlu0 %v7598
      %v7600 = vpop.xlane.xlu0 %7599
      %v7601 = vadd.f32 %v6698, %v6700
      %7602 = vadd.xlane.f32.xlu0 %v7601
      %v7603 = vpop.xlane.xlu0 %7602
      %v7604 = vadd.f32 %v6702, %v6704
      %7605 = vadd.xlane.f32.xlu0 %v7604
      %v7606 = vpop.xlane.xlu0 %7605
      %v7607 = vadd.f32 %v6706, %v6708
      %7608 = vadd.xlane.f32.xlu0 %v7607
      %v7609 = vpop.xlane.xlu0 %7608
      %v7610 = vadd.f32 %v6710, %v6712
      %7611 = vadd.xlane.f32.xlu0 %v7610
      %v7612 = vpop.xlane.xlu0 %7611
      %v7613 = vadd.f32 %v6714, %v6716
      %7614 = vadd.xlane.f32.xlu0 %v7613
      %v7615 = vpop.xlane.xlu0 %7614
      %v7616 = vadd.f32 %v6718, %v6720
      %7617 = vadd.xlane.f32.xlu0 %v7616
      %v7618 = vpop.xlane.xlu0 %7617
      %v7619 = vadd.f32 %v6722, %v6724
      %7620 = vadd.xlane.f32.xlu0 %v7619
      %v7621 = vpop.xlane.xlu0 %7620
      %v7622 = vadd.f32 %v6726, %v6728
      %7623 = vadd.xlane.f32.xlu0 %v7622
      %v7624 = vpop.xlane.xlu0 %7623
      %v7625 = vadd.f32 %v6730, %v6732
      %7626 = vadd.xlane.f32.xlu0 %v7625
      %v7627 = vpop.xlane.xlu0 %7626
      %v7628 = vadd.f32 %v6734, %v6736
      %7629 = vadd.xlane.f32.xlu0 %v7628
      %v7630 = vpop.xlane.xlu0 %7629
      %v7631 = vadd.f32 %v6738, %v6740
      %7632 = vadd.xlane.f32.xlu0 %v7631
      %v7633 = vpop.xlane.xlu0 %7632
      %v7634 = vadd.f32 %v6742, %v6744
      %7635 = vadd.xlane.f32.xlu0 %v7634
      %v7636 = vpop.xlane.xlu0 %7635
      %v7637 = vadd.f32 %v6746, %v6748
      %7638 = vadd.xlane.f32.xlu0 %v7637
      %v7639 = vpop.xlane.xlu0 %7638
      %v7640 = vadd.f32 %v6750, %v6752
      %7641 = vadd.xlane.f32.xlu0 %v7640
      %v7642 = vpop.xlane.xlu0 %7641
      %v7643 = vadd.f32 %v6754, %v6756
      %7644 = vadd.xlane.f32.xlu0 %v7643
      %v7645 = vpop.xlane.xlu0 %7644
      %v7646 = vadd.f32 %v6758, %v6760
      %7647 = vadd.xlane.f32.xlu0 %v7646
      %v7648 = vpop.xlane.xlu0 %7647
      %v7649 = vadd.f32 %v6762, %v6764
      %7650 = vadd.xlane.f32.xlu0 %v7649
      %v7651 = vpop.xlane.xlu0 %7650
      %v7652 = vadd.f32 %v6766, %v6768
      %7653 = vadd.xlane.f32.xlu0 %v7652
      %v7654 = vpop.xlane.xlu0 %7653
      %v7655 = vadd.f32 %v6770, %v6772
      %7656 = vadd.xlane.f32.xlu0 %v7655
      %v7657 = vpop.xlane.xlu0 %7656
      %v7658 = vadd.f32 %v6774, %v6776
      %7659 = vadd.xlane.f32.xlu0 %v7658
      %v7660 = vpop.xlane.xlu0 %7659
      %v7661 = vadd.f32 %v6778, %v6780
      %7662 = vadd.xlane.f32.xlu0 %v7661
      %v7663 = vpop.xlane.xlu0 %7662
      %v7664 = vadd.f32 %v6782, %v6784
      %7665 = vadd.xlane.f32.xlu0 %v7664
      %v7666 = vpop.xlane.xlu0 %7665
      %v7667 = vadd.f32 %v6786, %v6788
      %7668 = vadd.xlane.f32.xlu0 %v7667
      %v7669 = vpop.xlane.xlu0 %7668
      %v7670 = vadd.f32 %v6790, %v6792
      %7671 = vadd.xlane.f32.xlu0 %v7670
      %v7672 = vpop.xlane.xlu0 %7671
      %v7673 = vadd.f32 %v6794, %v6796
      %7674 = vadd.xlane.f32.xlu0 %v7673
      %v7675 = vpop.xlane.xlu0 %7674
      %v7676 = vadd.f32 %v6798, %v6800
      %7677 = vadd.xlane.f32.xlu0 %v7676
      %v7678 = vpop.xlane.xlu0 %7677
      %v7679 = vadd.f32 %v6802, %v6804
      %7680 = vadd.xlane.f32.xlu0 %v7679
      %v7681 = vpop.xlane.xlu0 %7680
      %v7682 = vadd.f32 %v6806, %v6808
      %7683 = vadd.xlane.f32.xlu0 %v7682
      %v7684 = vpop.xlane.xlu0 %7683
      %v7685 = vadd.f32 %v6810, %v6812
      %7686 = vadd.xlane.f32.xlu0 %v7685
      %v7687 = vpop.xlane.xlu0 %7686
      %v7688 = vadd.f32 %v6814, %v6816
      %7689 = vadd.xlane.f32.xlu0 %v7688
      %v7690 = vpop.xlane.xlu0 %7689
      %v7691 = vadd.f32 %v6818, %v6820
      %7692 = vadd.xlane.f32.xlu0 %v7691
      %v7693 = vpop.xlane.xlu0 %7692
      %v7694 = vadd.f32 %v6822, %v6824
      %7695 = vadd.xlane.f32.xlu0 %v7694
      %v7696 = vpop.xlane.xlu0 %7695
      %v7697 = vadd.f32 %v6826, %v6828
      %7698 = vadd.xlane.f32.xlu0 %v7697
      %v7699 = vpop.xlane.xlu0 %7698
      %v7700 = vadd.f32 %v6830, %v6832
      %7701 = vadd.xlane.f32.xlu0 %v7700
      %v7702 = vpop.xlane.xlu0 %7701
      %v7703 = vadd.f32 %v6834, %v6836
      %7704 = vadd.xlane.f32.xlu0 %v7703
      %v7705 = vpop.xlane.xlu0 %7704
      %v7706 = vadd.f32 %v6838, %v6840
      %7707 = vadd.xlane.f32.xlu0 %v7706
      %v7708 = vpop.xlane.xlu0 %7707
      %v7709 = vadd.f32 %v6842, %v6844
      %7710 = vadd.xlane.f32.xlu0 %v7709
      %v7711 = vpop.xlane.xlu0 %7710
      %v7712 = vadd.f32 %v6846, %v6848
      %7713 = vadd.xlane.f32.xlu0 %v7712
      %v7714 = vpop.xlane.xlu0 %7713
      %v7715 = vadd.f32 %v6850, %v6852
      %7716 = vadd.xlane.f32.xlu0 %v7715
      %v7717 = vpop.xlane.xlu0 %7716
      %v7718 = vadd.f32 %v6854, %v6856
      %7719 = vadd.xlane.f32.xlu0 %v7718
      %v7720 = vpop.xlane.xlu0 %7719
      %v7721 = vadd.f32 %v6858, %v6860
      %7722 = vadd.xlane.f32.xlu0 %v7721
      %v7723 = vpop.xlane.xlu0 %7722
      %v7724 = vadd.f32 %v6862, %v6864
      %7725 = vadd.xlane.f32.xlu0 %v7724
      %v7726 = vpop.xlane.xlu0 %7725
      %v7727 = vadd.f32 %v6866, %v6868
      %7728 = vadd.xlane.f32.xlu0 %v7727
      %v7729 = vpop.xlane.xlu0 %7728
      %v7730 = vadd.f32 %v6870, %v6872
      %7731 = vadd.xlane.f32.xlu0 %v7730
      %v7732 = vpop.xlane.xlu0 %7731
      %v7733 = vadd.f32 %v6874, %v6876
      %7734 = vadd.xlane.f32.xlu0 %v7733
      %v7735 = vpop.xlane.xlu0 %7734
      %v7736 = vadd.f32 %v6878, %v6880
      %7737 = vadd.xlane.f32.xlu0 %v7736
      %v7738 = vpop.xlane.xlu0 %7737
      %v7739 = vadd.f32 %v6882, %v6884
      %7740 = vadd.xlane.f32.xlu0 %v7739
      %v7741 = vpop.xlane.xlu0 %7740
      %v7742 = vadd.f32 %v6886, %v6888
      %7743 = vadd.xlane.f32.xlu0 %v7742
      %v7744 = vpop.xlane.xlu0 %7743
      %v7745 = vadd.f32 %v6890, %v6892
      %7746 = vadd.xlane.f32.xlu0 %v7745
      %v7747 = vpop.xlane.xlu0 %7746
      %v7748 = vadd.f32 %v6894, %v6896
      %7749 = vadd.xlane.f32.xlu0 %v7748
      %v7750 = vpop.xlane.xlu0 %7749
      %v7751 = vadd.f32 %v6898, %v6900
      %7752 = vadd.xlane.f32.xlu0 %v7751
      %v7753 = vpop.xlane.xlu0 %7752
      %v7754 = vadd.f32 %v6902, %v6904
      %7755 = vadd.xlane.f32.xlu0 %v7754
      %v7756 = vpop.xlane.xlu0 %7755
      %v7757 = vadd.f32 %v6906, %v6908
      %7758 = vadd.xlane.f32.xlu0 %v7757
      %v7759 = vpop.xlane.xlu0 %7758
      %v7760 = vadd.f32 %v6910, %v6912
      %7761 = vadd.xlane.f32.xlu0 %v7760
      %v7762 = vpop.xlane.xlu0 %7761
      %v7763 = vadd.f32 %v6914, %v6916
      %7764 = vadd.xlane.f32.xlu0 %v7763
      %v7765 = vpop.xlane.xlu0 %7764
      %v7766 = vadd.f32 %v6918, %v6920
      %7767 = vadd.xlane.f32.xlu0 %v7766
      %v7768 = vpop.xlane.xlu0 %7767
      %v7769 = vadd.f32 %v6922, %v6924
      %7770 = vadd.xlane.f32.xlu0 %v7769
      %v7771 = vpop.xlane.xlu0 %7770
      %v7772 = vadd.f32 %v6926, %v6928
      %7773 = vadd.xlane.f32.xlu0 %v7772
      %v7774 = vpop.xlane.xlu0 %7773
      %v7775 = vadd.f32 %v6930, %v6932
      %7776 = vadd.xlane.f32.xlu0 %v7775
      %v7777 = vpop.xlane.xlu0 %7776
      %v7778 = vadd.f32 %v6934, %v6936
      %7779 = vadd.xlane.f32.xlu0 %v7778
      %v7780 = vpop.xlane.xlu0 %7779
      %v7781 = vadd.f32 %v6938, %v6940
      %7782 = vadd.xlane.f32.xlu0 %v7781
      %v7783 = vpop.xlane.xlu0 %7782
      %v7784 = vadd.f32 %v6942, %v6944
      %7785 = vadd.xlane.f32.xlu0 %v7784
      %v7786 = vpop.xlane.xlu0 %7785
      %v7787 = vadd.f32 %v6946, %v6948
      %7788 = vadd.xlane.f32.xlu0 %v7787
      %v7789 = vpop.xlane.xlu0 %7788
      %v7790 = vadd.f32 %v6950, %v6952
      %7791 = vadd.xlane.f32.xlu0 %v7790
      %v7792 = vpop.xlane.xlu0 %7791
      %v7793 = vadd.f32 %v6954, %v6956
      %7794 = vadd.xlane.f32.xlu0 %v7793
      %v7795 = vpop.xlane.xlu0 %7794
      %v7796 = vadd.f32 %v6958, %v6960
      %7797 = vadd.xlane.f32.xlu0 %v7796
      %v7798 = vpop.xlane.xlu0 %7797
      %v7799 = vadd.f32 %v6962, %v6964
      %7800 = vadd.xlane.f32.xlu0 %v7799
      %v7801 = vpop.xlane.xlu0 %7800
      %v7802 = vadd.f32 %v6966, %v6968
      %7803 = vadd.xlane.f32.xlu0 %v7802
      %v7804 = vpop.xlane.xlu0 %7803
      %v7805 = vadd.f32 %v6970, %v6972
      %7806 = vadd.xlane.f32.xlu0 %v7805
      %v7807 = vpop.xlane.xlu0 %7806
      %v7808 = vadd.f32 %v6974, %v6976
      %7809 = vadd.xlane.f32.xlu0 %v7808
      %v7810 = vpop.xlane.xlu0 %7809
      %v7811 = vadd.f32 %v6978, %v6980
      %7812 = vadd.xlane.f32.xlu0 %v7811
      %v7813 = vpop.xlane.xlu0 %7812
      %v7814 = vadd.f32 %v6982, %v6984
      %7815 = vadd.xlane.f32.xlu0 %v7814
      %v7816 = vpop.xlane.xlu0 %7815
      %v7817 = vadd.f32 %v6986, %v6988
      %7818 = vadd.xlane.f32.xlu0 %v7817
      %v7819 = vpop.xlane.xlu0 %7818
      %v7820 = vadd.f32 %v6990, %v6992
      %7821 = vadd.xlane.f32.xlu0 %v7820
      %v7822 = vpop.xlane.xlu0 %7821
      %v7823 = vadd.f32 %v6994, %v6996
      %7824 = vadd.xlane.f32.xlu0 %v7823
      %v7825 = vpop.xlane.xlu0 %7824
      %v7826 = vadd.f32 %v6998, %v7000
      %7827 = vadd.xlane.f32.xlu0 %v7826
      %v7828 = vpop.xlane.xlu0 %7827
      %v7829 = vadd.f32 %v7002, %v7004
      %7830 = vadd.xlane.f32.xlu0 %v7829
      %v7831 = vpop.xlane.xlu0 %7830
      %v7832 = vadd.f32 %v7006, %v7008
      %7833 = vadd.xlane.f32.xlu0 %v7832
      %v7834 = vpop.xlane.xlu0 %7833
      %v7835 = vadd.f32 %v7010, %v7012
      %7836 = vadd.xlane.f32.xlu0 %v7835
      %v7837 = vpop.xlane.xlu0 %7836
      %v7838 = vadd.f32 %v7014, %v7016
      %7839 = vadd.xlane.f32.xlu0 %v7838
      %v7840 = vpop.xlane.xlu0 %7839
      %v7841 = vadd.f32 %v7018, %v7020
      %7842 = vadd.xlane.f32.xlu0 %v7841
      %v7843 = vpop.xlane.xlu0 %7842
      %v7844 = vadd.f32 %v7022, %v7024
      %7845 = vadd.xlane.f32.xlu0 %v7844
      %v7846 = vpop.xlane.xlu0 %7845
      %v7847 = vadd.f32 %v7026, %v7028
      %7848 = vadd.xlane.f32.xlu0 %v7847
      %v7849 = vpop.xlane.xlu0 %7848
      %v7850 = vadd.f32 %v7030, %v7032
      %7851 = vadd.xlane.f32.xlu0 %v7850
      %v7852 = vpop.xlane.xlu0 %7851
      %v7853 = vadd.f32 %v7034, %v7036
      %7854 = vadd.xlane.f32.xlu0 %v7853
      %v7855 = vpop.xlane.xlu0 %7854
      %v7856 = vadd.f32 %v7038, %v7040
      %7857 = vadd.xlane.f32.xlu0 %v7856
      %v7858 = vpop.xlane.xlu0 %7857
      %v7859 = vadd.f32 %v7042, %v7044
      %7860 = vadd.xlane.f32.xlu0 %v7859
      %v7861 = vpop.xlane.xlu0 %7860
      %v7862 = vadd.f32 %v7046, %v7048
      %7863 = vadd.xlane.f32.xlu0 %v7862
      %v7864 = vpop.xlane.xlu0 %7863
      %v7865 = vadd.f32 %v7050, %v7052
      %7866 = vadd.xlane.f32.xlu0 %v7865
      %v7867 = vpop.xlane.xlu0 %7866
      %v7868 = vadd.f32 %v7054, %v7056
      %7869 = vadd.xlane.f32.xlu0 %v7868
      %v7870 = vpop.xlane.xlu0 %7869
      %v7871 = vadd.f32 %v7058, %v7060
      %7872 = vadd.xlane.f32.xlu0 %v7871
      %v7873 = vpop.xlane.xlu0 %7872
      %v7874 = vadd.f32 %v7062, %v7064
      %7875 = vadd.xlane.f32.xlu0 %v7874
      %v7876 = vpop.xlane.xlu0 %7875
      %v7877 = vadd.f32 %v7066, %v7068
      %7878 = vadd.xlane.f32.xlu0 %v7877
      %v7879 = vpop.xlane.xlu0 %7878
      %v7880 = vadd.f32 %v7070, %v7072
      %7881 = vadd.xlane.f32.xlu0 %v7880
      %v7882 = vpop.xlane.xlu0 %7881
      %v7883 = vadd.f32 %v7074, %v7076
      %7884 = vadd.xlane.f32.xlu0 %v7883
      %v7885 = vpop.xlane.xlu0 %7884
      %v7886 = vadd.f32 %v7078, %v7080
      %7887 = vadd.xlane.f32.xlu0 %v7886
      %v7888 = vpop.xlane.xlu0 %7887
      %v7889 = vadd.f32 %v7082, %v7084
      %7890 = vadd.xlane.f32.xlu0 %v7889
      %v7891 = vpop.xlane.xlu0 %7890
      %v7892 = vadd.f32 %v7086, %v7088
      %7893 = vadd.xlane.f32.xlu0 %v7892
      %v7894 = vpop.xlane.xlu0 %7893
      %v7895 = vadd.f32 %v7090, %v7092
      %7896 = vadd.xlane.f32.xlu0 %v7895
      %v7897 = vpop.xlane.xlu0 %7896
      %v7898 = vadd.f32 %v7094, %v7096
      %7899 = vadd.xlane.f32.xlu0 %v7898
      %v7900 = vpop.xlane.xlu0 %7899
      %v7901 = vadd.f32 %v7098, %v7100
      %7902 = vadd.xlane.f32.xlu0 %v7901
      %v7903 = vpop.xlane.xlu0 %7902
      %v7904 = vadd.f32 %v7102, %v7104
      %7905 = vadd.xlane.f32.xlu0 %v7904
      %v7906 = vpop.xlane.xlu0 %7905
      %v7907 = vadd.f32 %v7106, %v7108
      %7908 = vadd.xlane.f32.xlu0 %v7907
      %v7909 = vpop.xlane.xlu0 %7908
      %v7910 = vadd.f32 %v7110, %v7112
      %7911 = vadd.xlane.f32.xlu0 %v7910
      %v7912 = vpop.xlane.xlu0 %7911
      %v7913 = vadd.f32 %v7114, %v7116
      %7914 = vadd.xlane.f32.xlu0 %v7913
      %v7915 = vpop.xlane.xlu0 %7914
      %v7916 = vadd.f32 %v7118, %v7120
      %7917 = vadd.xlane.f32.xlu0 %v7916
      %v7918 = vpop.xlane.xlu0 %7917
      %v7919 = vadd.f32 %v7122, %v7124
      %7920 = vadd.xlane.f32.xlu0 %v7919
      %v7921 = vpop.xlane.xlu0 %7920
      %v7922 = vadd.f32 %v7126, %v7128
      %7923 = vadd.xlane.f32.xlu0 %v7922
      %v7924 = vpop.xlane.xlu0 %7923
      %v7925 = vadd.f32 %v7130, %v7132
      %7926 = vadd.xlane.f32.xlu0 %v7925
      %v7927 = vpop.xlane.xlu0 %7926
      %v7928 = vadd.f32 %v7134, %v7136
      %7929 = vadd.xlane.f32.xlu0 %v7928
      %v7930 = vpop.xlane.xlu0 %7929
      %v7931 = vadd.f32 %v7138, %v7140
      %7932 = vadd.xlane.f32.xlu0 %v7931
      %v7933 = vpop.xlane.xlu0 %7932
      %v7934 = vadd.f32 %v7142, %v7144
      %7935 = vadd.xlane.f32.xlu0 %v7934
      %v7936 = vpop.xlane.xlu0 %7935
      %v7937 = vadd.f32 %v7146, %v7148
      %7938 = vadd.xlane.f32.xlu0 %v7937
      %v7939 = vpop.xlane.xlu0 %7938
      %v7940 = vadd.f32 %v7150, %v7152
      %7941 = vadd.xlane.f32.xlu0 %v7940
      %v7942 = vpop.xlane.xlu0 %7941
      %v7943 = vadd.f32 %v7154, %v7156
      %7944 = vadd.xlane.f32.xlu0 %v7943
      %v7945 = vpop.xlane.xlu0 %7944
      %v7946 = vadd.f32 %v7158, %v7160
      %7947 = vadd.xlane.f32.xlu0 %v7946
      %v7948 = vpop.xlane.xlu0 %7947
      %v7949 = vadd.f32 %v7162, %v7164
      %7950 = vadd.xlane.f32.xlu0 %v7949
      %v7951 = vpop.xlane.xlu0 %7950
      %v7952 = vadd.f32 %v7166, %v7168
      %7953 = vadd.xlane.f32.xlu0 %v7952
      %v7954 = vpop.xlane.xlu0 %7953
      %v7955 = vadd.f32 %v7170, %v7172
      %7956 = vadd.xlane.f32.xlu0 %v7955
      %v7957 = vpop.xlane.xlu0 %7956
      %v7958 = vadd.f32 %v7174, %v7176
      %7959 = vadd.xlane.f32.xlu0 %v7958
      %v7960 = vpop.xlane.xlu0 %7959
      %v7961 = vadd.f32 %v7178, %v7180
      %7962 = vadd.xlane.f32.xlu0 %v7961
      %v7963 = vpop.xlane.xlu0 %7962
      %v7964 = vadd.f32 %v7182, %v7184
      %7965 = vadd.xlane.f32.xlu0 %v7964
      %v7966 = vpop.xlane.xlu0 %7965
      %v7967 = vadd.f32 %v7186, %v7188
      %7968 = vadd.xlane.f32.xlu0 %v7967
      %v7969 = vpop.xlane.xlu0 %7968
      %v7970 = vadd.f32 %v7190, %v7192
      %7971 = vadd.xlane.f32.xlu0 %v7970
      %v7972 = vpop.xlane.xlu0 %7971
      %v7973 = vadd.f32 %v7194, %v7196
      %7974 = vadd.xlane.f32.xlu0 %v7973
      %v7975 = vpop.xlane.xlu0 %7974
      %v7976 = vadd.f32 %v7198, %v7200
      %7977 = vadd.xlane.f32.xlu0 %v7976
      %v7978 = vpop.xlane.xlu0 %7977
      %v7979 = vadd.f32 %v7202, %v7204
      %7980 = vadd.xlane.f32.xlu0 %v7979
      %v7981 = vpop.xlane.xlu0 %7980
      %v7982 = vadd.f32 %v7206, %v7208
      %7983 = vadd.xlane.f32.xlu0 %v7982
      %v7984 = vpop.xlane.xlu0 %7983
      %v7985 = vadd.f32 %v7210, %v7212
      %7986 = vadd.xlane.f32.xlu0 %v7985
      %v7987 = vpop.xlane.xlu0 %7986
      %v7988 = vadd.f32 %v7214, %v7216
      %7989 = vadd.xlane.f32.xlu0 %v7988
      %v7990 = vpop.xlane.xlu0 %7989
      %v7991 = vadd.f32 %v7218, %v7220
      %7992 = vadd.xlane.f32.xlu0 %v7991
      %v7993 = vpop.xlane.xlu0 %7992
      %v7994 = vadd.f32 %v7222, %v7224
      %7995 = vadd.xlane.f32.xlu0 %v7994
      %v7996 = vpop.xlane.xlu0 %7995
      %v7997 = vadd.f32 %v7226, %v7228
      %7998 = vadd.xlane.f32.xlu0 %v7997
      %v7999 = vpop.xlane.xlu0 %7998
      %v8000 = vadd.f32 %v7230, %v7232
      %8001 = vadd.xlane.f32.xlu0 %v8000
      %v8002 = vpop.xlane.xlu0 %8001
      %v8003 = vadd.f32 %v7234, %v7236
      %8004 = vadd.xlane.f32.xlu0 %v8003
      %v8005 = vpop.xlane.xlu0 %8004
      %v8006 = vadd.f32 %v7238, %v7240
      %8007 = vadd.xlane.f32.xlu0 %v8006
      %v8008 = vpop.xlane.xlu0 %8007
      %v8017 = vcombine.low %v459, %v461
      %v8018 = vcombine.high %v459, %v461
      %v8019 = vcombine.low %v465, %v467
      %v8020 = vcombine.high %v465, %v467
      %v8021 = vcombine.low %v471, %v473
      %v8022 = vcombine.high %v471, %v473
      %v8023 = vcombine.low %v477, %v479
      %v8024 = vcombine.high %v477, %v479
      %v8033 = vcombine.high %v8017, %v8017
      %8035 = vmatprep.subr.mxu0 %v6280
      %8036 = vmatpush1.xpose.msra.mxu0 %v6278
      %8037 = vmatprep.subr.mxu0 %v6276
      %8038 = vmatpush1.xpose.msra.mxu0 %v6274
      %8039 = vmatprep.subr.mxu0 %v6272
      %8040 = vmatpush1.xpose.msra.mxu0 %v6270
      %8041 = vmatprep.subr.mxu0 %v6268
      %8042 = vmatpush1.xpose.msra.mxu0 %v6266
      %8043 = vmatprep.subr.mxu0 %v6264
      %8044 = vmatpush1.xpose.msra.mxu0 %v6262
      %8045 = vmatprep.subr.mxu0 %v6260
      %8046 = vmatpush1.xpose.msra.mxu0 %v6258
      %8047 = vmatprep.subr.mxu0 %v6256
      %8048 = vmatpush1.xpose.msra.mxu0 %v6254
      %8049 = vmatprep.subr.mxu0 %v6252
      %8050 = vmatpush1.xpose.msra.mxu0 %v6250
      %8051 = vmatprep.subr.mxu0 %v6248
      %8052 = vmatpush1.xpose.msra.mxu0 %v6246
      %8053 = vmatprep.subr.mxu0 %v6244
      %8054 = vmatpush1.xpose.msra.mxu0 %v6242
      %8055 = vmatprep.subr.mxu0 %v6240
      %8056 = vmatpush1.xpose.msra.mxu0 %v6238
      %8057 = vmatprep.subr.mxu0 %v6236
      %8058 = vmatpush1.xpose.msra.mxu0 %v6234
      %8059 = vmatprep.subr.mxu0 %v6232
      %8060 = vmatpush1.xpose.msra.mxu0 %v6230
      %8061 = vmatprep.subr.mxu0 %v6228
      %8062 = vmatpush1.xpose.msra.mxu0 %v6226
      %8063 = vmatprep.subr.mxu0 %v6224
      %8064 = vmatpush1.xpose.msra.mxu0 %v6222
      %8065 = vmatprep.subr.mxu0 %v6220
      %8066 = vmatpush1.xpose.msra.mxu0 %v6218
      %8067 = vmatprep.subr.mxu0 %v6344
      %8068 = vmatpush2.xpose.msra.mxu0 %v6342
      %8069 = vmatprep.subr.mxu0 %v6340
      %8070 = vmatpush2.xpose.msra.mxu0 %v6338
      %8071 = vmatprep.subr.mxu0 %v6336
      %8072 = vmatpush2.xpose.msra.mxu0 %v6334
      %8073 = vmatprep.subr.mxu0 %v6332
      %8074 = vmatpush2.xpose.msra.mxu0 %v6330
      %8075 = vmatprep.subr.mxu0 %v6328
      %8076 = vmatpush2.xpose.msra.mxu0 %v6326
      %8077 = vmatprep.subr.mxu0 %v6324
      %8078 = vmatpush2.xpose.msra.mxu0 %v6322
      %8079 = vmatprep.subr.mxu0 %v6320
      %8080 = vmatpush2.xpose.msra.mxu0 %v6318
      %8081 = vmatprep.subr.mxu0 %v6316
      %8082 = vmatpush2.xpose.msra.mxu0 %v6314
      %8083 = vmatprep.subr.mxu0 %v6312
      %8084 = vmatpush2.xpose.msra.mxu0 %v6310
      %8085 = vmatprep.subr.mxu0 %v6308
      %8086 = vmatpush2.xpose.msra.mxu0 %v6306
      %8087 = vmatprep.subr.mxu0 %v6304
      %8088 = vmatpush2.xpose.msra.mxu0 %v6302
      %8089 = vmatprep.subr.mxu0 %v6300
      %8090 = vmatpush2.xpose.msra.mxu0 %v6298
      %8091 = vmatprep.subr.mxu0 %v6296
      %8092 = vmatpush2.xpose.msra.mxu0 %v6294
      %8093 = vmatprep.subr.mxu0 %v6292
      %8094 = vmatpush2.xpose.msra.mxu0 %v6290
      %8095 = vmatprep.subr.mxu0 %v6288
      %8096 = vmatpush2.xpose.msra.mxu0 %v6286
      %8097 = vmatprep.subr.mxu0 %v6284
      %8098 = vmatpush2.xpose.msra.mxu0 %v6282
      %8099 = vmatprep.mubr.f32.mxu0 %v8033
      %8100 = vmatmul.mubr.f32.gmra.mxu0 %v8017
      %v8101 = vpop.f32.mrf.mxu0
      %v8102 = vadd.f32 0.0, %v8101
      %v8103 = vpop.f32.mrf.mxu0
      %v8104 = vadd.f32 0.0, %v8103
      %8105 = vdwg.mxu0
      %v8106 = vcombine.high %v8018, %v8018
      %8108 = vmatprep.subr.mxu0 %v6408
      %8109 = vmatpush1.xpose.msra.mxu0 %v6406
      %8110 = vmatprep.subr.mxu0 %v6404
      %8111 = vmatpush1.xpose.msra.mxu0 %v6402
      %8112 = vmatprep.subr.mxu0 %v6400
      %8113 = vmatpush1.xpose.msra.mxu0 %v6398
      %8114 = vmatprep.subr.mxu0 %v6396
      %8115 = vmatpush1.xpose.msra.mxu0 %v6394
      %8116 = vmatprep.subr.mxu0 %v6392
      %8117 = vmatpush1.xpose.msra.mxu0 %v6390
      %8118 = vmatprep.subr.mxu0 %v6388
      %8119 = vmatpush1.xpose.msra.mxu0 %v6386
      %8120 = vmatprep.subr.mxu0 %v6384
      %8121 = vmatpush1.xpose.msra.mxu0 %v6382
      %8122 = vmatprep.subr.mxu0 %v6380
      %8123 = vmatpush1.xpose.msra.mxu0 %v6378
      %8124 = vmatprep.subr.mxu0 %v6376
      %8125 = vmatpush1.xpose.msra.mxu0 %v6374
      %8126 = vmatprep.subr.mxu0 %v6372
      %8127 = vmatpush1.xpose.msra.mxu0 %v6370
      %8128 = vmatprep.subr.mxu0 %v6368
      %8129 = vmatpush1.xpose.msra.mxu0 %v6366
      %8130 = vmatprep.subr.mxu0 %v6364
      %8131 = vmatpush1.xpose.msra.mxu0 %v6362
      %8132 = vmatprep.subr.mxu0 %v6360
      %8133 = vmatpush1.xpose.msra.mxu0 %v6358
      %8134 = vmatprep.subr.mxu0 %v6356
      %8135 = vmatpush1.xpose.msra.mxu0 %v6354
      %8136 = vmatprep.subr.mxu0 %v6352
      %8137 = vmatpush1.xpose.msra.mxu0 %v6350
      %8138 = vmatprep.subr.mxu0 %v6348
      %8139 = vmatpush1.xpose.msra.mxu0 %v6346
      %8140 = vmatprep.subr.mxu0 %v6472
      %8141 = vmatpush2.xpose.msra.mxu0 %v6470
      %8142 = vmatprep.subr.mxu0 %v6468
      %8143 = vmatpush2.xpose.msra.mxu0 %v6466
      %8144 = vmatprep.subr.mxu0 %v6464
      %8145 = vmatpush2.xpose.msra.mxu0 %v6462
      %8146 = vmatprep.subr.mxu0 %v6460
      %8147 = vmatpush2.xpose.msra.mxu0 %v6458
      %8148 = vmatprep.subr.mxu0 %v6456
      %8149 = vmatpush2.xpose.msra.mxu0 %v6454
      %8150 = vmatprep.subr.mxu0 %v6452
      %8151 = vmatpush2.xpose.msra.mxu0 %v6450
      %8152 = vmatprep.subr.mxu0 %v6448
      %8153 = vmatpush2.xpose.msra.mxu0 %v6446
      %8154 = vmatprep.subr.mxu0 %v6444
      %8155 = vmatpush2.xpose.msra.mxu0 %v6442
      %8156 = vmatprep.subr.mxu0 %v6440
      %8157 = vmatpush2.xpose.msra.mxu0 %v6438
      %8158 = vmatprep.subr.mxu0 %v6436
      %8159 = vmatpush2.xpose.msra.mxu0 %v6434
      %8160 = vmatprep.subr.mxu0 %v6432
      %8161 = vmatpush2.xpose.msra.mxu0 %v6430
      %8162 = vmatprep.subr.mxu0 %v6428
      %8163 = vmatpush2.xpose.msra.mxu0 %v6426
      %8164 = vmatprep.subr.mxu0 %v6424
      %8165 = vmatpush2.xpose.msra.mxu0 %v6422
      %8166 = vmatprep.subr.mxu0 %v6420
      %8167 = vmatpush2.xpose.msra.mxu0 %v6418
      %8168 = vmatprep.subr.mxu0 %v6416
      %8169 = vmatpush2.xpose.msra.mxu0 %v6414
      %8170 = vmatprep.subr.mxu0 %v6412
      %8171 = vmatpush2.xpose.msra.mxu0 %v6410
      %8172 = vmatprep.mubr.f32.mxu0 %v8106
      %8173 = vmatmul.mubr.f32.gmra.mxu0 %v8018
      %v8174 = vpop.f32.mrf.mxu0
      %v8175 = vadd.f32 0.0, %v8174
      %v8176 = vpop.f32.mrf.mxu0
      %v8177 = vadd.f32 0.0, %v8176
      %8178 = vdwg.mxu0
      %v8179 = vcombine.high %v8019, %v8019
      %8181 = vmatprep.subr.mxu0 %v6536
      %8182 = vmatpush1.xpose.msra.mxu0 %v6534
      %8183 = vmatprep.subr.mxu0 %v6532
      %8184 = vmatpush1.xpose.msra.mxu0 %v6530
      %8185 = vmatprep.subr.mxu0 %v6528
      %8186 = vmatpush1.xpose.msra.mxu0 %v6526
      %8187 = vmatprep.subr.mxu0 %v6524
      %8188 = vmatpush1.xpose.msra.mxu0 %v6522
      %8189 = vmatprep.subr.mxu0 %v6520
      %8190 = vmatpush1.xpose.msra.mxu0 %v6518
      %8191 = vmatprep.subr.mxu0 %v6516
      %8192 = vmatpush1.xpose.msra.mxu0 %v6514
      %8193 = vmatprep.subr.mxu0 %v6512
      %8194 = vmatpush1.xpose.msra.mxu0 %v6510
      %8195 = vmatprep.subr.mxu0 %v6508
      %8196 = vmatpush1.xpose.msra.mxu0 %v6506
      %8197 = vmatprep.subr.mxu0 %v6504
      %8198 = vmatpush1.xpose.msra.mxu0 %v6502
      %8199 = vmatprep.subr.mxu0 %v6500
      %8200 = vmatpush1.xpose.msra.mxu0 %v6498
      %8201 = vmatprep.subr.mxu0 %v6496
      %8202 = vmatpush1.xpose.msra.mxu0 %v6494
      %8203 = vmatprep.subr.mxu0 %v6492
      %8204 = vmatpush1.xpose.msra.mxu0 %v6490
      %8205 = vmatprep.subr.mxu0 %v6488
      %8206 = vmatpush1.xpose.msra.mxu0 %v6486
      %8207 = vmatprep.subr.mxu0 %v6484
      %8208 = vmatpush1.xpose.msra.mxu0 %v6482
      %8209 = vmatprep.subr.mxu0 %v6480
      %8210 = vmatpush1.xpose.msra.mxu0 %v6478
      %8211 = vmatprep.subr.mxu0 %v6476
      %8212 = vmatpush1.xpose.msra.mxu0 %v6474
      %8213 = vmatprep.subr.mxu0 %v6600
      %8214 = vmatpush2.xpose.msra.mxu0 %v6598
      %8215 = vmatprep.subr.mxu0 %v6596
      %8216 = vmatpush2.xpose.msra.mxu0 %v6594
      %8217 = vmatprep.subr.mxu0 %v6592
      %8218 = vmatpush2.xpose.msra.mxu0 %v6590
      %8219 = vmatprep.subr.mxu0 %v6588
      %8220 = vmatpush2.xpose.msra.mxu0 %v6586
      %8221 = vmatprep.subr.mxu0 %v6584
      %8222 = vmatpush2.xpose.msra.mxu0 %v6582
      %8223 = vmatprep.subr.mxu0 %v6580
      %8224 = vmatpush2.xpose.msra.mxu0 %v6578
      %8225 = vmatprep.subr.mxu0 %v6576
      %8226 = vmatpush2.xpose.msra.mxu0 %v6574
      %8227 = vmatprep.subr.mxu0 %v6572
      %8228 = vmatpush2.xpose.msra.mxu0 %v6570
      %8229 = vmatprep.subr.mxu0 %v6568
      %8230 = vmatpush2.xpose.msra.mxu0 %v6566
      %8231 = vmatprep.subr.mxu0 %v6564
      %8232 = vmatpush2.xpose.msra.mxu0 %v6562
      %8233 = vmatprep.subr.mxu0 %v6560
      %8234 = vmatpush2.xpose.msra.mxu0 %v6558
      %8235 = vmatprep.subr.mxu0 %v6556
      %8236 = vmatpush2.xpose.msra.mxu0 %v6554
      %8237 = vmatprep.subr.mxu0 %v6552
      %8238 = vmatpush2.xpose.msra.mxu0 %v6550
      %8239 = vmatprep.subr.mxu0 %v6548
      %8240 = vmatpush2.xpose.msra.mxu0 %v6546
      %8241 = vmatprep.subr.mxu0 %v6544
      %8242 = vmatpush2.xpose.msra.mxu0 %v6542
      %8243 = vmatprep.subr.mxu0 %v6540
      %8244 = vmatpush2.xpose.msra.mxu0 %v6538
      %8245 = vmatprep.mubr.f32.mxu0 %v8179
      %8246 = vmatmul.mubr.f32.gmra.mxu0 %v8019
      %v8247 = vpop.f32.mrf.mxu0
      %v8248 = vadd.f32 0.0, %v8247
      %v8249 = vpop.f32.mrf.mxu0
      %v8250 = vadd.f32 0.0, %v8249
      %8251 = vdwg.mxu0
      %v8252 = vcombine.high %v8020, %v8020
      %8254 = vmatprep.subr.mxu0 %v6664
      %8255 = vmatpush1.xpose.msra.mxu0 %v6662
      %8256 = vmatprep.subr.mxu0 %v6660
      %8257 = vmatpush1.xpose.msra.mxu0 %v6658
      %8258 = vmatprep.subr.mxu0 %v6656
      %8259 = vmatpush1.xpose.msra.mxu0 %v6654
      %8260 = vmatprep.subr.mxu0 %v6652
      %8261 = vmatpush1.xpose.msra.mxu0 %v6650
      %8262 = vmatprep.subr.mxu0 %v6648
      %8263 = vmatpush1.xpose.msra.mxu0 %v6646
      %8264 = vmatprep.subr.mxu0 %v6644
      %8265 = vmatpush1.xpose.msra.mxu0 %v6642
      %8266 = vmatprep.subr.mxu0 %v6640
      %8267 = vmatpush1.xpose.msra.mxu0 %v6638
      %8268 = vmatprep.subr.mxu0 %v6636
      %8269 = vmatpush1.xpose.msra.mxu0 %v6634
      %8270 = vmatprep.subr.mxu0 %v6632
      %8271 = vmatpush1.xpose.msra.mxu0 %v6630
      %8272 = vmatprep.subr.mxu0 %v6628
      %8273 = vmatpush1.xpose.msra.mxu0 %v6626
      %8274 = vmatprep.subr.mxu0 %v6624
      %8275 = vmatpush1.xpose.msra.mxu0 %v6622
      %8276 = vmatprep.subr.mxu0 %v6620
      %8277 = vmatpush1.xpose.msra.mxu0 %v6618
      %8278 = vmatprep.subr.mxu0 %v6616
      %8279 = vmatpush1.xpose.msra.mxu0 %v6614
      %8280 = vmatprep.subr.mxu0 %v6612
      %8281 = vmatpush1.xpose.msra.mxu0 %v6610
      %8282 = vmatprep.subr.mxu0 %v6608
      %8283 = vmatpush1.xpose.msra.mxu0 %v6606
      %8284 = vmatprep.subr.mxu0 %v6604
      %8285 = vmatpush1.xpose.msra.mxu0 %v6602
      %8286 = vmatprep.subr.mxu0 %v6728
      %8287 = vmatpush2.xpose.msra.mxu0 %v6726
      %8288 = vmatprep.subr.mxu0 %v6724
      %8289 = vmatpush2.xpose.msra.mxu0 %v6722
      %8290 = vmatprep.subr.mxu0 %v6720
      %8291 = vmatpush2.xpose.msra.mxu0 %v6718
      %8292 = vmatprep.subr.mxu0 %v6716
      %8293 = vmatpush2.xpose.msra.mxu0 %v6714
      %8294 = vmatprep.subr.mxu0 %v6712
      %8295 = vmatpush2.xpose.msra.mxu0 %v6710
      %8296 = vmatprep.subr.mxu0 %v6708
      %8297 = vmatpush2.xpose.msra.mxu0 %v6706
      %8298 = vmatprep.subr.mxu0 %v6704
      %8299 = vmatpush2.xpose.msra.mxu0 %v6702
      %8300 = vmatprep.subr.mxu0 %v6700
      %8301 = vmatpush2.xpose.msra.mxu0 %v6698
      %8302 = vmatprep.subr.mxu0 %v6696
      %8303 = vmatpush2.xpose.msra.mxu0 %v6694
      %8304 = vmatprep.subr.mxu0 %v6692
      %8305 = vmatpush2.xpose.msra.mxu0 %v6690
      %8306 = vmatprep.subr.mxu0 %v6688
      %8307 = vmatpush2.xpose.msra.mxu0 %v6686
      %8308 = vmatprep.subr.mxu0 %v6684
      %8309 = vmatpush2.xpose.msra.mxu0 %v6682
      %8310 = vmatprep.subr.mxu0 %v6680
      %8311 = vmatpush2.xpose.msra.mxu0 %v6678
      %8312 = vmatprep.subr.mxu0 %v6676
      %8313 = vmatpush2.xpose.msra.mxu0 %v6674
      %8314 = vmatprep.subr.mxu0 %v6672
      %8315 = vmatpush2.xpose.msra.mxu0 %v6670
      %8316 = vmatprep.subr.mxu0 %v6668
      %8317 = vmatpush2.xpose.msra.mxu0 %v6666
      %8318 = vmatprep.mubr.f32.mxu0 %v8252
      %8319 = vmatmul.mubr.f32.gmra.mxu0 %v8020
      %v8320 = vpop.f32.mrf.mxu0
      %v8321 = vadd.f32 0.0, %v8320
      %v8322 = vpop.f32.mrf.mxu0
      %v8323 = vadd.f32 0.0, %v8322
      %8324 = vdwg.mxu0
      %v8325 = vcombine.high %v8021, %v8021
      %8327 = vmatprep.subr.mxu0 %v6792
      %8328 = vmatpush1.xpose.msra.mxu0 %v6790
      %8329 = vmatprep.subr.mxu0 %v6788
      %8330 = vmatpush1.xpose.msra.mxu0 %v6786
      %8331 = vmatprep.subr.mxu0 %v6784
      %8332 = vmatpush1.xpose.msra.mxu0 %v6782
      %8333 = vmatprep.subr.mxu0 %v6780
      %8334 = vmatpush1.xpose.msra.mxu0 %v6778
      %8335 = vmatprep.subr.mxu0 %v6776
      %8336 = vmatpush1.xpose.msra.mxu0 %v6774
      %8337 = vmatprep.subr.mxu0 %v6772
      %8338 = vmatpush1.xpose.msra.mxu0 %v6770
      %8339 = vmatprep.subr.mxu0 %v6768
      %8340 = vmatpush1.xpose.msra.mxu0 %v6766
      %8341 = vmatprep.subr.mxu0 %v6764
      %8342 = vmatpush1.xpose.msra.mxu0 %v6762
      %8343 = vmatprep.subr.mxu0 %v6760
      %8344 = vmatpush1.xpose.msra.mxu0 %v6758
      %8345 = vmatprep.subr.mxu0 %v6756
      %8346 = vmatpush1.xpose.msra.mxu0 %v6754
      %8347 = vmatprep.subr.mxu0 %v6752
      %8348 = vmatpush1.xpose.msra.mxu0 %v6750
      %8349 = vmatprep.subr.mxu0 %v6748
      %8350 = vmatpush1.xpose.msra.mxu0 %v6746
      %8351 = vmatprep.subr.mxu0 %v6744
      %8352 = vmatpush1.xpose.msra.mxu0 %v6742
      %8353 = vmatprep.subr.mxu0 %v6740
      %8354 = vmatpush1.xpose.msra.mxu0 %v6738
      %8355 = vmatprep.subr.mxu0 %v6736
      %8356 = vmatpush1.xpose.msra.mxu0 %v6734
      %8357 = vmatprep.subr.mxu0 %v6732
      %8358 = vmatpush1.xpose.msra.mxu0 %v6730
      %8359 = vmatprep.subr.mxu0 %v6856
      %8360 = vmatpush2.xpose.msra.mxu0 %v6854
      %8361 = vmatprep.subr.mxu0 %v6852
      %8362 = vmatpush2.xpose.msra.mxu0 %v6850
      %8363 = vmatprep.subr.mxu0 %v6848
      %8364 = vmatpush2.xpose.msra.mxu0 %v6846
      %8365 = vmatprep.subr.mxu0 %v6844
      %8366 = vmatpush2.xpose.msra.mxu0 %v6842
      %8367 = vmatprep.subr.mxu0 %v6840
      %8368 = vmatpush2.xpose.msra.mxu0 %v6838
      %8369 = vmatprep.subr.mxu0 %v6836
      %8370 = vmatpush2.xpose.msra.mxu0 %v6834
      %8371 = vmatprep.subr.mxu0 %v6832
      %8372 = vmatpush2.xpose.msra.mxu0 %v6830
      %8373 = vmatprep.subr.mxu0 %v6828
      %8374 = vmatpush2.xpose.msra.mxu0 %v6826
      %8375 = vmatprep.subr.mxu0 %v6824
      %8376 = vmatpush2.xpose.msra.mxu0 %v6822
      %8377 = vmatprep.subr.mxu0 %v6820
      %8378 = vmatpush2.xpose.msra.mxu0 %v6818
      %8379 = vmatprep.subr.mxu0 %v6816
      %8380 = vmatpush2.xpose.msra.mxu0 %v6814
      %8381 = vmatprep.subr.mxu0 %v6812
      %8382 = vmatpush2.xpose.msra.mxu0 %v6810
      %8383 = vmatprep.subr.mxu0 %v6808
      %8384 = vmatpush2.xpose.msra.mxu0 %v6806
      %8385 = vmatprep.subr.mxu0 %v6804
      %8386 = vmatpush2.xpose.msra.mxu0 %v6802
      %8387 = vmatprep.subr.mxu0 %v6800
      %8388 = vmatpush2.xpose.msra.mxu0 %v6798
      %8389 = vmatprep.subr.mxu0 %v6796
      %8390 = vmatpush2.xpose.msra.mxu0 %v6794
      %8391 = vmatprep.mubr.f32.mxu0 %v8325
      %8392 = vmatmul.mubr.f32.gmra.mxu0 %v8021
      %v8393 = vpop.f32.mrf.mxu0
      %v8394 = vadd.f32 0.0, %v8393
      %v8395 = vpop.f32.mrf.mxu0
      %v8396 = vadd.f32 0.0, %v8395
      %8397 = vdwg.mxu0
      %v8398 = vcombine.high %v8022, %v8022
      %8400 = vmatprep.subr.mxu0 %v6920
      %8401 = vmatpush1.xpose.msra.mxu0 %v6918
      %8402 = vmatprep.subr.mxu0 %v6916
      %8403 = vmatpush1.xpose.msra.mxu0 %v6914
      %8404 = vmatprep.subr.mxu0 %v6912
      %8405 = vmatpush1.xpose.msra.mxu0 %v6910
      %8406 = vmatprep.subr.mxu0 %v6908
      %8407 = vmatpush1.xpose.msra.mxu0 %v6906
      %8408 = vmatprep.subr.mxu0 %v6904
      %8409 = vmatpush1.xpose.msra.mxu0 %v6902
      %8410 = vmatprep.subr.mxu0 %v6900
      %8411 = vmatpush1.xpose.msra.mxu0 %v6898
      %8412 = vmatprep.subr.mxu0 %v6896
      %8413 = vmatpush1.xpose.msra.mxu0 %v6894
      %8414 = vmatprep.subr.mxu0 %v6892
      %8415 = vmatpush1.xpose.msra.mxu0 %v6890
      %8416 = vmatprep.subr.mxu0 %v6888
      %8417 = vmatpush1.xpose.msra.mxu0 %v6886
      %8418 = vmatprep.subr.mxu0 %v6884
      %8419 = vmatpush1.xpose.msra.mxu0 %v6882
      %8420 = vmatprep.subr.mxu0 %v6880
      %8421 = vmatpush1.xpose.msra.mxu0 %v6878
      %8422 = vmatprep.subr.mxu0 %v6876
      %8423 = vmatpush1.xpose.msra.mxu0 %v6874
      %8424 = vmatprep.subr.mxu0 %v6872
      %8425 = vmatpush1.xpose.msra.mxu0 %v6870
      %8426 = vmatprep.subr.mxu0 %v6868
      %8427 = vmatpush1.xpose.msra.mxu0 %v6866
      %8428 = vmatprep.subr.mxu0 %v6864
      %8429 = vmatpush1.xpose.msra.mxu0 %v6862
      %8430 = vmatprep.subr.mxu0 %v6860
      %8431 = vmatpush1.xpose.msra.mxu0 %v6858
      %8432 = vmatprep.subr.mxu0 %v6984
      %8433 = vmatpush2.xpose.msra.mxu0 %v6982
      %8434 = vmatprep.subr.mxu0 %v6980
      %8435 = vmatpush2.xpose.msra.mxu0 %v6978
      %8436 = vmatprep.subr.mxu0 %v6976
      %8437 = vmatpush2.xpose.msra.mxu0 %v6974
      %8438 = vmatprep.subr.mxu0 %v6972
      %8439 = vmatpush2.xpose.msra.mxu0 %v6970
      %8440 = vmatprep.subr.mxu0 %v6968
      %8441 = vmatpush2.xpose.msra.mxu0 %v6966
      %8442 = vmatprep.subr.mxu0 %v6964
      %8443 = vmatpush2.xpose.msra.mxu0 %v6962
      %8444 = vmatprep.subr.mxu0 %v6960
      %8445 = vmatpush2.xpose.msra.mxu0 %v6958
      %8446 = vmatprep.subr.mxu0 %v6956
      %8447 = vmatpush2.xpose.msra.mxu0 %v6954
      %8448 = vmatprep.subr.mxu0 %v6952
      %8449 = vmatpush2.xpose.msra.mxu0 %v6950
      %8450 = vmatprep.subr.mxu0 %v6948
      %8451 = vmatpush2.xpose.msra.mxu0 %v6946
      %8452 = vmatprep.subr.mxu0 %v6944
      %8453 = vmatpush2.xpose.msra.mxu0 %v6942
      %8454 = vmatprep.subr.mxu0 %v6940
      %8455 = vmatpush2.xpose.msra.mxu0 %v6938
      %8456 = vmatprep.subr.mxu0 %v6936
      %8457 = vmatpush2.xpose.msra.mxu0 %v6934
      %8458 = vmatprep.subr.mxu0 %v6932
      %8459 = vmatpush2.xpose.msra.mxu0 %v6930
      %8460 = vmatprep.subr.mxu0 %v6928
      %8461 = vmatpush2.xpose.msra.mxu0 %v6926
      %8462 = vmatprep.subr.mxu0 %v6924
      %8463 = vmatpush2.xpose.msra.mxu0 %v6922
      %8464 = vmatprep.mubr.f32.mxu0 %v8398
      %8465 = vmatmul.mubr.f32.gmra.mxu0 %v8022
      %v8466 = vpop.f32.mrf.mxu0
      %v8467 = vadd.f32 0.0, %v8466
      %v8468 = vpop.f32.mrf.mxu0
      %v8469 = vadd.f32 0.0, %v8468
      %8470 = vdwg.mxu0
      %v8471 = vcombine.high %v8023, %v8023
      %8473 = vmatprep.subr.mxu0 %v7048
      %8474 = vmatpush1.xpose.msra.mxu0 %v7046
      %8475 = vmatprep.subr.mxu0 %v7044
      %8476 = vmatpush1.xpose.msra.mxu0 %v7042
      %8477 = vmatprep.subr.mxu0 %v7040
      %8478 = vmatpush1.xpose.msra.mxu0 %v7038
      %8479 = vmatprep.subr.mxu0 %v7036
      %8480 = vmatpush1.xpose.msra.mxu0 %v7034
      %8481 = vmatprep.subr.mxu0 %v7032
      %8482 = vmatpush1.xpose.msra.mxu0 %v7030
      %8483 = vmatprep.subr.mxu0 %v7028
      %8484 = vmatpush1.xpose.msra.mxu0 %v7026
      %8485 = vmatprep.subr.mxu0 %v7024
      %8486 = vmatpush1.xpose.msra.mxu0 %v7022
      %8487 = vmatprep.subr.mxu0 %v7020
      %8488 = vmatpush1.xpose.msra.mxu0 %v7018
      %8489 = vmatprep.subr.mxu0 %v7016
      %8490 = vmatpush1.xpose.msra.mxu0 %v7014
      %8491 = vmatprep.subr.mxu0 %v7012
      %8492 = vmatpush1.xpose.msra.mxu0 %v7010
      %8493 = vmatprep.subr.mxu0 %v7008
      %8494 = vmatpush1.xpose.msra.mxu0 %v7006
      %8495 = vmatprep.subr.mxu0 %v7004
      %8496 = vmatpush1.xpose.msra.mxu0 %v7002
      %8497 = vmatprep.subr.mxu0 %v7000
      %8498 = vmatpush1.xpose.msra.mxu0 %v6998
      %8499 = vmatprep.subr.mxu0 %v6996
      %8500 = vmatpush1.xpose.msra.mxu0 %v6994
      %8501 = vmatprep.subr.mxu0 %v6992
      %8502 = vmatpush1.xpose.msra.mxu0 %v6990
      %8503 = vmatprep.subr.mxu0 %v6988
      %8504 = vmatpush1.xpose.msra.mxu0 %v6986
      %8505 = vmatprep.subr.mxu0 %v7112
      %8506 = vmatpush2.xpose.msra.mxu0 %v7110
      %8507 = vmatprep.subr.mxu0 %v7108
      %8508 = vmatpush2.xpose.msra.mxu0 %v7106
      %8509 = vmatprep.subr.mxu0 %v7104
      %8510 = vmatpush2.xpose.msra.mxu0 %v7102
      %8511 = vmatprep.subr.mxu0 %v7100
      %8512 = vmatpush2.xpose.msra.mxu0 %v7098
      %8513 = vmatprep.subr.mxu0 %v7096
      %8514 = vmatpush2.xpose.msra.mxu0 %v7094
      %8515 = vmatprep.subr.mxu0 %v7092
      %8516 = vmatpush2.xpose.msra.mxu0 %v7090
      %8517 = vmatprep.subr.mxu0 %v7088
      %8518 = vmatpush2.xpose.msra.mxu0 %v7086
      %8519 = vmatprep.subr.mxu0 %v7084
      %8520 = vmatpush2.xpose.msra.mxu0 %v7082
      %8521 = vmatprep.subr.mxu0 %v7080
      %8522 = vmatpush2.xpose.msra.mxu0 %v7078
      %8523 = vmatprep.subr.mxu0 %v7076
      %8524 = vmatpush2.xpose.msra.mxu0 %v7074
      %8525 = vmatprep.subr.mxu0 %v7072
      %8526 = vmatpush2.xpose.msra.mxu0 %v7070
      %8527 = vmatprep.subr.mxu0 %v7068
      %8528 = vmatpush2.xpose.msra.mxu0 %v7066
      %8529 = vmatprep.subr.mxu0 %v7064
      %8530 = vmatpush2.xpose.msra.mxu0 %v7062
      %8531 = vmatprep.subr.mxu0 %v7060
      %8532 = vmatpush2.xpose.msra.mxu0 %v7058
      %8533 = vmatprep.subr.mxu0 %v7056
      %8534 = vmatpush2.xpose.msra.mxu0 %v7054
      %8535 = vmatprep.subr.mxu0 %v7052
      %8536 = vmatpush2.xpose.msra.mxu0 %v7050
      %8537 = vmatprep.mubr.f32.mxu0 %v8471
      %8538 = vmatmul.mubr.f32.gmra.mxu0 %v8023
      %v8539 = vpop.f32.mrf.mxu0
      %v8540 = vadd.f32 0.0, %v8539
      %v8541 = vpop.f32.mrf.mxu0
      %v8542 = vadd.f32 0.0, %v8541
      %8543 = vdwg.mxu0
      %v8544 = vcombine.high %v8024, %v8024
      %8546 = vmatprep.subr.mxu0 %v7176
      %8547 = vmatpush1.xpose.msra.mxu0 %v7174
      %8548 = vmatprep.subr.mxu0 %v7172
      %8549 = vmatpush1.xpose.msra.mxu0 %v7170
      %8550 = vmatprep.subr.mxu0 %v7168
      %8551 = vmatpush1.xpose.msra.mxu0 %v7166
      %8552 = vmatprep.subr.mxu0 %v7164
      %8553 = vmatpush1.xpose.msra.mxu0 %v7162
      %8554 = vmatprep.subr.mxu0 %v7160
      %8555 = vmatpush1.xpose.msra.mxu0 %v7158
      %8556 = vmatprep.subr.mxu0 %v7156
      %8557 = vmatpush1.xpose.msra.mxu0 %v7154
      %8558 = vmatprep.subr.mxu0 %v7152
      %8559 = vmatpush1.xpose.msra.mxu0 %v7150
      %8560 = vmatprep.subr.mxu0 %v7148
      %8561 = vmatpush1.xpose.msra.mxu0 %v7146
      %8562 = vmatprep.subr.mxu0 %v7144
      %8563 = vmatpush1.xpose.msra.mxu0 %v7142
      %8564 = vmatprep.subr.mxu0 %v7140
      %8565 = vmatpush1.xpose.msra.mxu0 %v7138
      %8566 = vmatprep.subr.mxu0 %v7136
      %8567 = vmatpush1.xpose.msra.mxu0 %v7134
      %8568 = vmatprep.subr.mxu0 %v7132
      %8569 = vmatpush1.xpose.msra.mxu0 %v7130
      %8570 = vmatprep.subr.mxu0 %v7128
      %8571 = vmatpush1.xpose.msra.mxu0 %v7126
      %8572 = vmatprep.subr.mxu0 %v7124
      %8573 = vmatpush1.xpose.msra.mxu0 %v7122
      %8574 = vmatprep.subr.mxu0 %v7120
      %8575 = vmatpush1.xpose.msra.mxu0 %v7118
      %8576 = vmatprep.subr.mxu0 %v7116
      %8577 = vmatpush1.xpose.msra.mxu0 %v7114
      %8578 = vmatprep.subr.mxu0 %v7240
      %8579 = vmatpush2.xpose.msra.mxu0 %v7238
      %8580 = vmatprep.subr.mxu0 %v7236
      %8581 = vmatpush2.xpose.msra.mxu0 %v7234
      %8582 = vmatprep.subr.mxu0 %v7232
      %8583 = vmatpush2.xpose.msra.mxu0 %v7230
      %8584 = vmatprep.subr.mxu0 %v7228
      %8585 = vmatpush2.xpose.msra.mxu0 %v7226
      %8586 = vmatprep.subr.mxu0 %v7224
      %8587 = vmatpush2.xpose.msra.mxu0 %v7222
      %8588 = vmatprep.subr.mxu0 %v7220
      %8589 = vmatpush2.xpose.msra.mxu0 %v7218
      %8590 = vmatprep.subr.mxu0 %v7216
      %8591 = vmatpush2.xpose.msra.mxu0 %v7214
      %8592 = vmatprep.subr.mxu0 %v7212
      %8593 = vmatpush2.xpose.msra.mxu0 %v7210
      %8594 = vmatprep.subr.mxu0 %v7208
      %8595 = vmatpush2.xpose.msra.mxu0 %v7206
      %8596 = vmatprep.subr.mxu0 %v7204
      %8597 = vmatpush2.xpose.msra.mxu0 %v7202
      %8598 = vmatprep.subr.mxu0 %v7200
      %8599 = vmatpush2.xpose.msra.mxu0 %v7198
      %8600 = vmatprep.subr.mxu0 %v7196
      %8601 = vmatpush2.xpose.msra.mxu0 %v7194
      %8602 = vmatprep.subr.mxu0 %v7192
      %8603 = vmatpush2.xpose.msra.mxu0 %v7190
      %8604 = vmatprep.subr.mxu0 %v7188
      %8605 = vmatpush2.xpose.msra.mxu0 %v7186
      %8606 = vmatprep.subr.mxu0 %v7184
      %8607 = vmatpush2.xpose.msra.mxu0 %v7182
      %8608 = vmatprep.subr.mxu0 %v7180
      %8609 = vmatpush2.xpose.msra.mxu0 %v7178
      %8610 = vmatprep.mubr.f32.mxu0 %v8544
      %8611 = vmatmul.mubr.f32.gmra.mxu0 %v8024
      %v8612 = vpop.f32.mrf.mxu0
      %v8613 = vadd.f32 0.0, %v8612
      %v8614 = vpop.f32.mrf.mxu0
      %v8615 = vadd.f32 0.0, %v8614
      %8616 = vdwg.mxu0
      %v8617 = vrcp.pop %v7243
      %v8618 = vrcp.pop %v7246
      %v8619 = vrcp.pop %v7249
      %v8620 = vrcp.pop %v7252
      %v8621 = vrcp.pop %v7255
      %v8622 = vrcp.pop %v7258
      %v8623 = vrcp.pop %v7261
      %v8624 = vrcp.pop %v7264
      %v8625 = vrcp.pop %v7267
      %v8626 = vrcp.pop %v7270
      %v8627 = vrcp.pop %v7273
      %v8628 = vrcp.pop %v7276
      %v8629 = vrcp.pop %v7279
      %v8630 = vrcp.pop %v7282
      %v8631 = vrcp.pop %v7285
      %v8632 = vrcp.pop %v7288
      %v8633 = vrcp.pop %v7291
      %v8634 = vrcp.pop %v7294
      %v8635 = vrcp.pop %v7297
      %v8636 = vrcp.pop %v7300
      %v8637 = vrcp.pop %v7303
      %v8638 = vrcp.pop %v7306
      %v8639 = vrcp.pop %v7309
      %v8640 = vrcp.pop %v7312
      %v8641 = vrcp.pop %v7315
      %v8642 = vrcp.pop %v7318
      %v8643 = vrcp.pop %v7321
      %v8644 = vrcp.pop %v7324
      %v8645 = vrcp.pop %v7327
      %v8646 = vrcp.pop %v7330
      %v8647 = vrcp.pop %v7333
      %v8648 = vrcp.pop %v7336
      %v8649 = vrcp.pop %v7339
      %v8650 = vrcp.pop %v7342
      %v8651 = vrcp.pop %v7345
      %v8652 = vrcp.pop %v7348
      %v8653 = vrcp.pop %v7351
      %v8654 = vrcp.pop %v7354
      %v8655 = vrcp.pop %v7357
      %v8656 = vrcp.pop %v7360
      %v8657 = vrcp.pop %v7363
      %v8658 = vrcp.pop %v7366
      %v8659 = vrcp.pop %v7369
      %v8660 = vrcp.pop %v7372
      %v8661 = vrcp.pop %v7375
      %v8662 = vrcp.pop %v7378
      %v8663 = vrcp.pop %v7381
      %v8664 = vrcp.pop %v7384
      %v8665 = vrcp.pop %v7387
      %v8666 = vrcp.pop %v7390
      %v8667 = vrcp.pop %v7393
      %v8668 = vrcp.pop %v7396
      %v8669 = vrcp.pop %v7399
      %v8670 = vrcp.pop %v7402
      %v8671 = vrcp.pop %v7405
      %v8672 = vrcp.pop %v7408
      %v8673 = vrcp.pop %v7411
      %v8674 = vrcp.pop %v7414
      %v8675 = vrcp.pop %v7417
      %v8676 = vrcp.pop %v7420
      %v8677 = vrcp.pop %v7423
      %v8678 = vrcp.pop %v7426
      %v8679 = vrcp.pop %v7429
      %v8680 = vrcp.pop %v7432
      %v8681 = vrcp.pop %v7435
      %v8682 = vrcp.pop %v7438
      %v8683 = vrcp.pop %v7441
      %v8684 = vrcp.pop %v7444
      %v8685 = vrcp.pop %v7447
      %v8686 = vrcp.pop %v7450
      %v8687 = vrcp.pop %v7453
      %v8688 = vrcp.pop %v7456
      %v8689 = vrcp.pop %v7459
      %v8690 = vrcp.pop %v7462
      %v8691 = vrcp.pop %v7465
      %v8692 = vrcp.pop %v7468
      %v8693 = vrcp.pop %v7471
      %v8694 = vrcp.pop %v7474
      %v8695 = vrcp.pop %v7477
      %v8696 = vrcp.pop %v7480
      %v8697 = vrcp.pop %v7483
      %v8698 = vrcp.pop %v7486
      %v8699 = vrcp.pop %v7489
      %v8700 = vrcp.pop %v7492
      %v8701 = vrcp.pop %v7495
      %v8702 = vrcp.pop %v7498
      %v8703 = vrcp.pop %v7501
      %v8704 = vrcp.pop %v7504
      %v8705 = vrcp.pop %v7507
      %v8706 = vrcp.pop %v7510
      %v8707 = vrcp.pop %v7513
      %v8708 = vrcp.pop %v7516
      %v8709 = vrcp.pop %v7519
      %v8710 = vrcp.pop %v7522
      %v8711 = vrcp.pop %v7525
      %v8712 = vrcp.pop %v7528
      %v8713 = vrcp.pop %v7531
      %v8714 = vrcp.pop %v7534
      %v8715 = vrcp.pop %v7537
      %v8716 = vrcp.pop %v7540
      %v8717 = vrcp.pop %v7543
      %v8718 = vrcp.pop %v7546
      %v8719 = vrcp.pop %v7549
      %v8720 = vrcp.pop %v7552
      %v8721 = vrcp.pop %v7555
      %v8722 = vrcp.pop %v7558
      %v8723 = vrcp.pop %v7561
      %v8724 = vrcp.pop %v7564
      %v8725 = vrcp.pop %v7567
      %v8726 = vrcp.pop %v7570
      %v8727 = vrcp.pop %v7573
      %v8728 = vrcp.pop %v7576
      %v8729 = vrcp.pop %v7579
      %v8730 = vrcp.pop %v7582
      %v8731 = vrcp.pop %v7585
      %v8732 = vrcp.pop %v7588
      %v8733 = vrcp.pop %v7591
      %v8734 = vrcp.pop %v7594
      %v8735 = vrcp.pop %v7597
      %v8736 = vrcp.pop %v7600
      %v8737 = vrcp.pop %v7603
      %v8738 = vrcp.pop %v7606
      %v8739 = vrcp.pop %v7609
      %v8740 = vrcp.pop %v7612
      %v8741 = vrcp.pop %v7615
      %v8742 = vrcp.pop %v7618
      %v8743 = vrcp.pop %v7621
      %v8744 = vrcp.pop %v7624
      %v8745 = vrcp.pop %v7627
      %v8746 = vrcp.pop %v7630
      %v8747 = vrcp.pop %v7633
      %v8748 = vrcp.pop %v7636
      %v8749 = vrcp.pop %v7639
      %v8750 = vrcp.pop %v7642
      %v8751 = vrcp.pop %v7645
      %v8752 = vrcp.pop %v7648
      %v8753 = vrcp.pop %v7651
      %v8754 = vrcp.pop %v7654
      %v8755 = vrcp.pop %v7657
      %v8756 = vrcp.pop %v7660
      %v8757 = vrcp.pop %v7663
      %v8758 = vrcp.pop %v7666
      %v8759 = vrcp.pop %v7669
      %v8760 = vrcp.pop %v7672
      %v8761 = vrcp.pop %v7675
      %v8762 = vrcp.pop %v7678
      %v8763 = vrcp.pop %v7681
      %v8764 = vrcp.pop %v7684
      %v8765 = vrcp.pop %v7687
      %v8766 = vrcp.pop %v7690
      %v8767 = vrcp.pop %v7693
      %v8768 = vrcp.pop %v7696
      %v8769 = vrcp.pop %v7699
      %v8770 = vrcp.pop %v7702
      %v8771 = vrcp.pop %v7705
      %v8772 = vrcp.pop %v7708
      %v8773 = vrcp.pop %v7711
      %v8774 = vrcp.pop %v7714
      %v8775 = vrcp.pop %v7717
      %v8776 = vrcp.pop %v7720
      %v8777 = vrcp.pop %v7723
      %v8778 = vrcp.pop %v7726
      %v8779 = vrcp.pop %v7729
      %v8780 = vrcp.pop %v7732
      %v8781 = vrcp.pop %v7735
      %v8782 = vrcp.pop %v7738
      %v8783 = vrcp.pop %v7741
      %v8784 = vrcp.pop %v7744
      %v8785 = vrcp.pop %v7747
      %v8786 = vrcp.pop %v7750
      %v8787 = vrcp.pop %v7753
      %v8788 = vrcp.pop %v7756
      %v8789 = vrcp.pop %v7759
      %v8790 = vrcp.pop %v7762
      %v8791 = vrcp.pop %v7765
      %v8792 = vrcp.pop %v7768
      %v8793 = vrcp.pop %v7771
      %v8794 = vrcp.pop %v7774
      %v8795 = vrcp.pop %v7777
      %v8796 = vrcp.pop %v7780
      %v8797 = vrcp.pop %v7783
      %v8798 = vrcp.pop %v7786
      %v8799 = vrcp.pop %v7789
      %v8800 = vrcp.pop %v7792
      %v8801 = vrcp.pop %v7795
      %v8802 = vrcp.pop %v7798
      %v8803 = vrcp.pop %v7801
      %v8804 = vrcp.pop %v7804
      %v8805 = vrcp.pop %v7807
      %v8806 = vrcp.pop %v7810
      %v8807 = vrcp.pop %v7813
      %v8808 = vrcp.pop %v7816
      %v8809 = vrcp.pop %v7819
      %v8810 = vrcp.pop %v7822
      %v8811 = vrcp.pop %v7825
      %v8812 = vrcp.pop %v7828
      %v8813 = vrcp.pop %v7831
      %v8814 = vrcp.pop %v7834
      %v8815 = vrcp.pop %v7837
      %v8816 = vrcp.pop %v7840
      %v8817 = vrcp.pop %v7843
      %v8818 = vrcp.pop %v7846
      %v8819 = vrcp.pop %v7849
      %v8820 = vrcp.pop %v7852
      %v8821 = vrcp.pop %v7855
      %v8822 = vrcp.pop %v7858
      %v8823 = vrcp.pop %v7861
      %v8824 = vrcp.pop %v7864
      %v8825 = vrcp.pop %v7867
      %v8826 = vrcp.pop %v7870
      %v8827 = vrcp.pop %v7873
      %v8828 = vrcp.pop %v7876
      %v8829 = vrcp.pop %v7879
      %v8830 = vrcp.pop %v7882
      %v8831 = vrcp.pop %v7885
      %v8832 = vrcp.pop %v7888
      %v8833 = vrcp.pop %v7891
      %v8834 = vrcp.pop %v7894
      %v8835 = vrcp.pop %v7897
      %v8836 = vrcp.pop %v7900
      %v8837 = vrcp.pop %v7903
      %v8838 = vrcp.pop %v7906
      %v8839 = vrcp.pop %v7909
      %v8840 = vrcp.pop %v7912
      %v8841 = vrcp.pop %v7915
      %v8842 = vrcp.pop %v7918
      %v8843 = vrcp.pop %v7921
      %v8844 = vrcp.pop %v7924
      %v8845 = vrcp.pop %v7927
      %v8846 = vrcp.pop %v7930
      %v8847 = vrcp.pop %v7933
      %v8848 = vrcp.pop %v7936
      %v8849 = vrcp.pop %v7939
      %v8850 = vrcp.pop %v7942
      %v8851 = vrcp.pop %v7945
      %v8852 = vrcp.pop %v7948
      %v8853 = vrcp.pop %v7951
      %v8854 = vrcp.pop %v7954
      %v8855 = vrcp.pop %v7957
      %v8856 = vrcp.pop %v7960
      %v8857 = vrcp.pop %v7963
      %v8858 = vrcp.pop %v7966
      %v8859 = vrcp.pop %v7969
      %v8860 = vrcp.pop %v7972
      %v8861 = vrcp.pop %v7975
      %v8862 = vrcp.pop %v7978
      %v8863 = vrcp.pop %v7981
      %v8864 = vrcp.pop %v7984
      %v8865 = vrcp.pop %v7987
      %v8866 = vrcp.pop %v7990
      %v8867 = vrcp.pop %v7993
      %v8868 = vrcp.pop %v7996
      %v8869 = vrcp.pop %v7999
      %v8870 = vrcp.pop %v8002
      %v8871 = vrcp.pop %v8005
      %v8872 = vrcp.pop %v8008
      %v9129 = vlaneseq
      %v9130 = vand.u32 %v9129, 127
      %v9131 = vlaneseq
      %v9132 = vshrl.u32 %v9131, 7
      %v9133 = vsub.s32 %v9130, %v9132
      %v9134 = vrot.slane %v8617, %v9133
      %v9135 = vadd.s32 %v9130, 4294967288
      %v9136 = vlaneseq
      %v9137 = vshrl.u32 %v9136, 7
      %v9138 = vsub.s32 %v9135, %v9137
      %v9139 = vrot.slane %v8618, %v9138
      %vm9140 = vcmask 130112
      %v9141 = vsel %vm9140, %v9139, %v9134
      %v9142 = vadd.s32 %v9130, 4294967280
      %v9143 = vlaneseq
      %v9144 = vshrl.u32 %v9143, 7
      %v9145 = vsub.s32 %v9142, %v9144
      %v9146 = vrot.slane %v8619, %v9145
      %vm9147 = vcmask 195712
      %v9148 = vsel %vm9147, %v9146, %v9141
      %v9149 = vadd.s32 %v9130, 4294967272
      %v9150 = vlaneseq
      %v9151 = vshrl.u32 %v9150, 7
      %v9152 = vsub.s32 %v9149, %v9151
      %v9153 = vrot.slane %v8620, %v9152
      %vm9154 = vcmask 261312
      %v9155 = vsel %vm9154, %v9153, %v9148
      %v9156 = vadd.s32 %v9130, 4294967264
      %v9157 = vlaneseq
      %v9158 = vshrl.u32 %v9157, 7
      %v9159 = vsub.s32 %v9156, %v9158
      %v9160 = vrot.slane %v8621, %v9159
      %vm9161 = vcmask 326912
      %v9162 = vsel %vm9161, %v9160, %v9155
      %v9163 = vadd.s32 %v9130, 4294967256
      %v9164 = vlaneseq
      %v9165 = vshrl.u32 %v9164, 7
      %v9166 = vsub.s32 %v9163, %v9165
      %v9167 = vrot.slane %v8622, %v9166
      %vm9168 = vcmask 392512
      %v9169 = vsel %vm9168, %v9167, %v9162
      %v9170 = vadd.s32 %v9130, 4294967248
      %v9171 = vlaneseq
      %v9172 = vshrl.u32 %v9171, 7
      %v9173 = vsub.s32 %v9170, %v9172
      %v9174 = vrot.slane %v8623, %v9173
      %vm9175 = vcmask 458112
      %v9176 = vsel %vm9175, %v9174, %v9169
      %v9177 = vadd.s32 %v9130, 4294967240
      %v9178 = vlaneseq
      %v9179 = vshrl.u32 %v9178, 7
      %v9180 = vsub.s32 %v9177, %v9179
      %v9181 = vrot.slane %v8624, %v9180
      %vm9182 = vcmask 523712
      %v9183 = vsel %vm9182, %v9181, %v9176
      %v9184 = vadd.s32 %v9130, 4294967232
      %v9185 = vlaneseq
      %v9186 = vshrl.u32 %v9185, 7
      %v9187 = vsub.s32 %v9184, %v9186
      %v9188 = vrot.slane %v8625, %v9187
      %vm9189 = vcmask 589312
      %v9190 = vsel %vm9189, %v9188, %v9183
      %v9191 = vadd.s32 %v9130, 4294967224
      %v9192 = vlaneseq
      %v9193 = vshrl.u32 %v9192, 7
      %v9194 = vsub.s32 %v9191, %v9193
      %v9195 = vrot.slane %v8626, %v9194
      %vm9196 = vcmask 654912
      %v9197 = vsel %vm9196, %v9195, %v9190
      %v9198 = vadd.s32 %v9130, 4294967216
      %v9199 = vlaneseq
      %v9200 = vshrl.u32 %v9199, 7
      %v9201 = vsub.s32 %v9198, %v9200
      %v9202 = vrot.slane %v8627, %v9201
      %vm9203 = vcmask 720512
      %v9204 = vsel %vm9203, %v9202, %v9197
      %v9205 = vadd.s32 %v9130, 4294967208
      %v9206 = vlaneseq
      %v9207 = vshrl.u32 %v9206, 7
      %v9208 = vsub.s32 %v9205, %v9207
      %v9209 = vrot.slane %v8628, %v9208
      %vm9210 = vcmask 786112
      %v9211 = vsel %vm9210, %v9209, %v9204
      %v9212 = vadd.s32 %v9130, 4294967200
      %v9213 = vlaneseq
      %v9214 = vshrl.u32 %v9213, 7
      %v9215 = vsub.s32 %v9212, %v9214
      %v9216 = vrot.slane %v8629, %v9215
      %vm9217 = vcmask 851712
      %v9218 = vsel %vm9217, %v9216, %v9211
      %v9219 = vadd.s32 %v9130, 4294967192
      %v9220 = vlaneseq
      %v9221 = vshrl.u32 %v9220, 7
      %v9222 = vsub.s32 %v9219, %v9221
      %v9223 = vrot.slane %v8630, %v9222
      %vm9224 = vcmask 917312
      %v9225 = vsel %vm9224, %v9223, %v9218
      %v9226 = vadd.s32 %v9130, 4294967184
      %v9227 = vlaneseq
      %v9228 = vshrl.u32 %v9227, 7
      %v9229 = vsub.s32 %v9226, %v9228
      %v9230 = vrot.slane %v8631, %v9229
      %vm9231 = vcmask 982912
      %v9232 = vsel %vm9231, %v9230, %v9225
      %v9233 = vadd.s32 %v9130, 4294967176
      %v9234 = vlaneseq
      %v9235 = vshrl.u32 %v9234, 7
      %v9236 = vsub.s32 %v9233, %v9235
      %v9237 = vrot.slane %v8632, %v9236
      %vm9238 = vcmask 1048512
      %v9239 = vsel %vm9238, %v9237, %v9232
      %v9240 = vlaneseq
      %v9241 = vshrl.u32 %v9240, 7
      %v9242 = vsub.s32 %v9130, %v9241
      %v9243 = vrot.slane %v8633, %v9242
      %v9244 = vlaneseq
      %v9245 = vshrl.u32 %v9244, 7
      %v9246 = vsub.s32 %v9135, %v9245
      %v9247 = vrot.slane %v8634, %v9246
      %v9248 = vsel %vm9140, %v9247, %v9243
      %v9249 = vlaneseq
      %v9250 = vshrl.u32 %v9249, 7
      %v9251 = vsub.s32 %v9142, %v9250
      %v9252 = vrot.slane %v8635, %v9251
      %v9253 = vsel %vm9147, %v9252, %v9248
      %v9254 = vlaneseq
      %v9255 = vshrl.u32 %v9254, 7
      %v9256 = vsub.s32 %v9149, %v9255
      %v9257 = vrot.slane %v8636, %v9256
      %v9258 = vsel %vm9154, %v9257, %v9253
      %v9259 = vlaneseq
      %v9260 = vshrl.u32 %v9259, 7
      %v9261 = vsub.s32 %v9156, %v9260
      %v9262 = vrot.slane %v8637, %v9261
      %v9263 = vsel %vm9161, %v9262, %v9258
      %v9264 = vlaneseq
      %v9265 = vshrl.u32 %v9264, 7
      %v9266 = vsub.s32 %v9163, %v9265
      %v9267 = vrot.slane %v8638, %v9266
      %v9268 = vsel %vm9168, %v9267, %v9263
      %v9269 = vlaneseq
      %v9270 = vshrl.u32 %v9269, 7
      %v9271 = vsub.s32 %v9170, %v9270
      %v9272 = vrot.slane %v8639, %v9271
      %v9273 = vsel %vm9175, %v9272, %v9268
      %v9274 = vlaneseq
      %v9275 = vshrl.u32 %v9274, 7
      %v9276 = vsub.s32 %v9177, %v9275
      %v9277 = vrot.slane %v8640, %v9276
      %v9278 = vsel %vm9182, %v9277, %v9273
      %v9279 = vlaneseq
      %v9280 = vshrl.u32 %v9279, 7
      %v9281 = vsub.s32 %v9184, %v9280
      %v9282 = vrot.slane %v8641, %v9281
      %v9283 = vsel %vm9189, %v9282, %v9278
      %v9284 = vlaneseq
      %v9285 = vshrl.u32 %v9284, 7
      %v9286 = vsub.s32 %v9191, %v9285
      %v9287 = vrot.slane %v8642, %v9286
      %v9288 = vsel %vm9196, %v9287, %v9283
      %v9289 = vlaneseq
      %v9290 = vshrl.u32 %v9289, 7
      %v9291 = vsub.s32 %v9198, %v9290
      %v9292 = vrot.slane %v8643, %v9291
      %v9293 = vsel %vm9203, %v9292, %v9288
      %v9294 = vlaneseq
      %v9295 = vshrl.u32 %v9294, 7
      %v9296 = vsub.s32 %v9205, %v9295
      %v9297 = vrot.slane %v8644, %v9296
      %v9298 = vsel %vm9210, %v9297, %v9293
      %v9299 = vlaneseq
      %v9300 = vshrl.u32 %v9299, 7
      %v9301 = vsub.s32 %v9212, %v9300
      %v9302 = vrot.slane %v8645, %v9301
      %v9303 = vsel %vm9217, %v9302, %v9298
      %v9304 = vlaneseq
      %v9305 = vshrl.u32 %v9304, 7
      %v9306 = vsub.s32 %v9219, %v9305
      %v9307 = vrot.slane %v8646, %v9306
      %v9308 = vsel %vm9224, %v9307, %v9303
      %v9309 = vlaneseq
      %v9310 = vshrl.u32 %v9309, 7
      %v9311 = vsub.s32 %v9226, %v9310
      %v9312 = vrot.slane %v8647, %v9311
      %v9313 = vsel %vm9231, %v9312, %v9308
      %v9314 = vlaneseq
      %v9315 = vshrl.u32 %v9314, 7
      %v9316 = vsub.s32 %v9233, %v9315
      %v9317 = vrot.slane %v8648, %v9316
      %v9318 = vsel %vm9238, %v9317, %v9313
      %v9319 = vlaneseq
      %v9320 = vshrl.u32 %v9319, 7
      %v9321 = vsub.s32 %v9130, %v9320
      %v9322 = vrot.slane %v8649, %v9321
      %v9323 = vlaneseq
      %v9324 = vshrl.u32 %v9323, 7
      %v9325 = vsub.s32 %v9135, %v9324
      %v9326 = vrot.slane %v8650, %v9325
      %v9327 = vsel %vm9140, %v9326, %v9322
      %v9328 = vlaneseq
      %v9329 = vshrl.u32 %v9328, 7
      %v9330 = vsub.s32 %v9142, %v9329
      %v9331 = vrot.slane %v8651, %v9330
      %v9332 = vsel %vm9147, %v9331, %v9327
      %v9333 = vlaneseq
      %v9334 = vshrl.u32 %v9333, 7
      %v9335 = vsub.s32 %v9149, %v9334
      %v9336 = vrot.slane %v8652, %v9335
      %v9337 = vsel %vm9154, %v9336, %v9332
      %v9338 = vlaneseq
      %v9339 = vshrl.u32 %v9338, 7
      %v9340 = vsub.s32 %v9156, %v9339
      %v9341 = vrot.slane %v8653, %v9340
      %v9342 = vsel %vm9161, %v9341, %v9337
      %v9343 = vlaneseq
      %v9344 = vshrl.u32 %v9343, 7
      %v9345 = vsub.s32 %v9163, %v9344
      %v9346 = vrot.slane %v8654, %v9345
      %v9347 = vsel %vm9168, %v9346, %v9342
      %v9348 = vlaneseq
      %v9349 = vshrl.u32 %v9348, 7
      %v9350 = vsub.s32 %v9170, %v9349
      %v9351 = vrot.slane %v8655, %v9350
      %v9352 = vsel %vm9175, %v9351, %v9347
      %v9353 = vlaneseq
      %v9354 = vshrl.u32 %v9353, 7
      %v9355 = vsub.s32 %v9177, %v9354
      %v9356 = vrot.slane %v8656, %v9355
      %v9357 = vsel %vm9182, %v9356, %v9352
      %v9358 = vlaneseq
      %v9359 = vshrl.u32 %v9358, 7
      %v9360 = vsub.s32 %v9184, %v9359
      %v9361 = vrot.slane %v8657, %v9360
      %v9362 = vsel %vm9189, %v9361, %v9357
      %v9363 = vlaneseq
      %v9364 = vshrl.u32 %v9363, 7
      %v9365 = vsub.s32 %v9191, %v9364
      %v9366 = vrot.slane %v8658, %v9365
      %v9367 = vsel %vm9196, %v9366, %v9362
      %v9368 = vlaneseq
      %v9369 = vshrl.u32 %v9368, 7
      %v9370 = vsub.s32 %v9198, %v9369
      %v9371 = vrot.slane %v8659, %v9370
      %v9372 = vsel %vm9203, %v9371, %v9367
      %v9373 = vlaneseq
      %v9374 = vshrl.u32 %v9373, 7
      %v9375 = vsub.s32 %v9205, %v9374
      %v9376 = vrot.slane %v8660, %v9375
      %v9377 = vsel %vm9210, %v9376, %v9372
      %v9378 = vlaneseq
      %v9379 = vshrl.u32 %v9378, 7
      %v9380 = vsub.s32 %v9212, %v9379
      %v9381 = vrot.slane %v8661, %v9380
      %v9382 = vsel %vm9217, %v9381, %v9377
      %v9383 = vlaneseq
      %v9384 = vshrl.u32 %v9383, 7
      %v9385 = vsub.s32 %v9219, %v9384
      %v9386 = vrot.slane %v8662, %v9385
      %v9387 = vsel %vm9224, %v9386, %v9382
      %v9388 = vlaneseq
      %v9389 = vshrl.u32 %v9388, 7
      %v9390 = vsub.s32 %v9226, %v9389
      %v9391 = vrot.slane %v8663, %v9390
      %v9392 = vsel %vm9231, %v9391, %v9387
      %v9393 = vlaneseq
      %v9394 = vshrl.u32 %v9393, 7
      %v9395 = vsub.s32 %v9233, %v9394
      %v9396 = vrot.slane %v8664, %v9395
      %v9397 = vsel %vm9238, %v9396, %v9392
      %v9398 = vlaneseq
      %v9399 = vshrl.u32 %v9398, 7
      %v9400 = vsub.s32 %v9130, %v9399
      %v9401 = vrot.slane %v8665, %v9400
      %v9402 = vlaneseq
      %v9403 = vshrl.u32 %v9402, 7
      %v9404 = vsub.s32 %v9135, %v9403
      %v9405 = vrot.slane %v8666, %v9404
      %v9406 = vsel %vm9140, %v9405, %v9401
      %v9407 = vlaneseq
      %v9408 = vshrl.u32 %v9407, 7
      %v9409 = vsub.s32 %v9142, %v9408
      %v9410 = vrot.slane %v8667, %v9409
      %v9411 = vsel %vm9147, %v9410, %v9406
      %v9412 = vlaneseq
      %v9413 = vshrl.u32 %v9412, 7
      %v9414 = vsub.s32 %v9149, %v9413
      %v9415 = vrot.slane %v8668, %v9414
      %v9416 = vsel %vm9154, %v9415, %v9411
      %v9417 = vlaneseq
      %v9418 = vshrl.u32 %v9417, 7
      %v9419 = vsub.s32 %v9156, %v9418
      %v9420 = vrot.slane %v8669, %v9419
      %v9421 = vsel %vm9161, %v9420, %v9416
      %v9422 = vlaneseq
      %v9423 = vshrl.u32 %v9422, 7
      %v9424 = vsub.s32 %v9163, %v9423
      %v9425 = vrot.slane %v8670, %v9424
      %v9426 = vsel %vm9168, %v9425, %v9421
      %v9427 = vlaneseq
      %v9428 = vshrl.u32 %v9427, 7
      %v9429 = vsub.s32 %v9170, %v9428
      %v9430 = vrot.slane %v8671, %v9429
      %v9431 = vsel %vm9175, %v9430, %v9426
      %v9432 = vlaneseq
      %v9433 = vshrl.u32 %v9432, 7
      %v9434 = vsub.s32 %v9177, %v9433
      %v9435 = vrot.slane %v8672, %v9434
      %v9436 = vsel %vm9182, %v9435, %v9431
      %v9437 = vlaneseq
      %v9438 = vshrl.u32 %v9437, 7
      %v9439 = vsub.s32 %v9184, %v9438
      %v9440 = vrot.slane %v8673, %v9439
      %v9441 = vsel %vm9189, %v9440, %v9436
      %v9442 = vlaneseq
      %v9443 = vshrl.u32 %v9442, 7
      %v9444 = vsub.s32 %v9191, %v9443
      %v9445 = vrot.slane %v8674, %v9444
      %v9446 = vsel %vm9196, %v9445, %v9441
      %v9447 = vlaneseq
      %v9448 = vshrl.u32 %v9447, 7
      %v9449 = vsub.s32 %v9198, %v9448
      %v9450 = vrot.slane %v8675, %v9449
      %v9451 = vsel %vm9203, %v9450, %v9446
      %v9452 = vlaneseq
      %v9453 = vshrl.u32 %v9452, 7
      %v9454 = vsub.s32 %v9205, %v9453
      %v9455 = vrot.slane %v8676, %v9454
      %v9456 = vsel %vm9210, %v9455, %v9451
      %v9457 = vlaneseq
      %v9458 = vshrl.u32 %v9457, 7
      %v9459 = vsub.s32 %v9212, %v9458
      %v9460 = vrot.slane %v8677, %v9459
      %v9461 = vsel %vm9217, %v9460, %v9456
      %v9462 = vlaneseq
      %v9463 = vshrl.u32 %v9462, 7
      %v9464 = vsub.s32 %v9219, %v9463
      %v9465 = vrot.slane %v8678, %v9464
      %v9466 = vsel %vm9224, %v9465, %v9461
      %v9467 = vlaneseq
      %v9468 = vshrl.u32 %v9467, 7
      %v9469 = vsub.s32 %v9226, %v9468
      %v9470 = vrot.slane %v8679, %v9469
      %v9471 = vsel %vm9231, %v9470, %v9466
      %v9472 = vlaneseq
      %v9473 = vshrl.u32 %v9472, 7
      %v9474 = vsub.s32 %v9233, %v9473
      %v9475 = vrot.slane %v8680, %v9474
      %v9476 = vsel %vm9238, %v9475, %v9471
      %v9477 = vlaneseq
      %v9478 = vshrl.u32 %v9477, 7
      %v9479 = vsub.s32 %v9130, %v9478
      %v9480 = vrot.slane %v8681, %v9479
      %v9481 = vlaneseq
      %v9482 = vshrl.u32 %v9481, 7
      %v9483 = vsub.s32 %v9135, %v9482
      %v9484 = vrot.slane %v8682, %v9483
      %v9485 = vsel %vm9140, %v9484, %v9480
      %v9486 = vlaneseq
      %v9487 = vshrl.u32 %v9486, 7
      %v9488 = vsub.s32 %v9142, %v9487
      %v9489 = vrot.slane %v8683, %v9488
      %v9490 = vsel %vm9147, %v9489, %v9485
      %v9491 = vlaneseq
      %v9492 = vshrl.u32 %v9491, 7
      %v9493 = vsub.s32 %v9149, %v9492
      %v9494 = vrot.slane %v8684, %v9493
      %v9495 = vsel %vm9154, %v9494, %v9490
      %v9496 = vlaneseq
      %v9497 = vshrl.u32 %v9496, 7
      %v9498 = vsub.s32 %v9156, %v9497
      %v9499 = vrot.slane %v8685, %v9498
      %v9500 = vsel %vm9161, %v9499, %v9495
      %v9501 = vlaneseq
      %v9502 = vshrl.u32 %v9501, 7
      %v9503 = vsub.s32 %v9163, %v9502
      %v9504 = vrot.slane %v8686, %v9503
      %v9505 = vsel %vm9168, %v9504, %v9500
      %v9506 = vlaneseq
      %v9507 = vshrl.u32 %v9506, 7
      %v9508 = vsub.s32 %v9170, %v9507
      %v9509 = vrot.slane %v8687, %v9508
      %v9510 = vsel %vm9175, %v9509, %v9505
      %v9511 = vlaneseq
      %v9512 = vshrl.u32 %v9511, 7
      %v9513 = vsub.s32 %v9177, %v9512
      %v9514 = vrot.slane %v8688, %v9513
      %v9515 = vsel %vm9182, %v9514, %v9510
      %v9516 = vlaneseq
      %v9517 = vshrl.u32 %v9516, 7
      %v9518 = vsub.s32 %v9184, %v9517
      %v9519 = vrot.slane %v8689, %v9518
      %v9520 = vsel %vm9189, %v9519, %v9515
      %v9521 = vlaneseq
      %v9522 = vshrl.u32 %v9521, 7
      %v9523 = vsub.s32 %v9191, %v9522
      %v9524 = vrot.slane %v8690, %v9523
      %v9525 = vsel %vm9196, %v9524, %v9520
      %v9526 = vlaneseq
      %v9527 = vshrl.u32 %v9526, 7
      %v9528 = vsub.s32 %v9198, %v9527
      %v9529 = vrot.slane %v8691, %v9528
      %v9530 = vsel %vm9203, %v9529, %v9525
      %v9531 = vlaneseq
      %v9532 = vshrl.u32 %v9531, 7
      %v9533 = vsub.s32 %v9205, %v9532
      %v9534 = vrot.slane %v8692, %v9533
      %v9535 = vsel %vm9210, %v9534, %v9530
      %v9536 = vlaneseq
      %v9537 = vshrl.u32 %v9536, 7
      %v9538 = vsub.s32 %v9212, %v9537
      %v9539 = vrot.slane %v8693, %v9538
      %v9540 = vsel %vm9217, %v9539, %v9535
      %v9541 = vlaneseq
      %v9542 = vshrl.u32 %v9541, 7
      %v9543 = vsub.s32 %v9219, %v9542
      %v9544 = vrot.slane %v8694, %v9543
      %v9545 = vsel %vm9224, %v9544, %v9540
      %v9546 = vlaneseq
      %v9547 = vshrl.u32 %v9546, 7
      %v9548 = vsub.s32 %v9226, %v9547
      %v9549 = vrot.slane %v8695, %v9548
      %v9550 = vsel %vm9231, %v9549, %v9545
      %v9551 = vlaneseq
      %v9552 = vshrl.u32 %v9551, 7
      %v9553 = vsub.s32 %v9233, %v9552
      %v9554 = vrot.slane %v8696, %v9553
      %v9555 = vsel %vm9238, %v9554, %v9550
      %v9556 = vlaneseq
      %v9557 = vshrl.u32 %v9556, 7
      %v9558 = vsub.s32 %v9130, %v9557
      %v9559 = vrot.slane %v8697, %v9558
      %v9560 = vlaneseq
      %v9561 = vshrl.u32 %v9560, 7
      %v9562 = vsub.s32 %v9135, %v9561
      %v9563 = vrot.slane %v8698, %v9562
      %v9564 = vsel %vm9140, %v9563, %v9559
      %v9565 = vlaneseq
      %v9566 = vshrl.u32 %v9565, 7
      %v9567 = vsub.s32 %v9142, %v9566
      %v9568 = vrot.slane %v8699, %v9567
      %v9569 = vsel %vm9147, %v9568, %v9564
      %v9570 = vlaneseq
      %v9571 = vshrl.u32 %v9570, 7
      %v9572 = vsub.s32 %v9149, %v9571
      %v9573 = vrot.slane %v8700, %v9572
      %v9574 = vsel %vm9154, %v9573, %v9569
      %v9575 = vlaneseq
      %v9576 = vshrl.u32 %v9575, 7
      %v9577 = vsub.s32 %v9156, %v9576
      %v9578 = vrot.slane %v8701, %v9577
      %v9579 = vsel %vm9161, %v9578, %v9574
      %v9580 = vlaneseq
      %v9581 = vshrl.u32 %v9580, 7
      %v9582 = vsub.s32 %v9163, %v9581
      %v9583 = vrot.slane %v8702, %v9582
      %v9584 = vsel %vm9168, %v9583, %v9579
      %v9585 = vlaneseq
      %v9586 = vshrl.u32 %v9585, 7
      %v9587 = vsub.s32 %v9170, %v9586
      %v9588 = vrot.slane %v8703, %v9587
      %v9589 = vsel %vm9175, %v9588, %v9584
      %v9590 = vlaneseq
      %v9591 = vshrl.u32 %v9590, 7
      %v9592 = vsub.s32 %v9177, %v9591
      %v9593 = vrot.slane %v8704, %v9592
      %v9594 = vsel %vm9182, %v9593, %v9589
      %v9595 = vlaneseq
      %v9596 = vshrl.u32 %v9595, 7
      %v9597 = vsub.s32 %v9184, %v9596
      %v9598 = vrot.slane %v8705, %v9597
      %v9599 = vsel %vm9189, %v9598, %v9594
      %v9600 = vlaneseq
      %v9601 = vshrl.u32 %v9600, 7
      %v9602 = vsub.s32 %v9191, %v9601
      %v9603 = vrot.slane %v8706, %v9602
      %v9604 = vsel %vm9196, %v9603, %v9599
      %v9605 = vlaneseq
      %v9606 = vshrl.u32 %v9605, 7
      %v9607 = vsub.s32 %v9198, %v9606
      %v9608 = vrot.slane %v8707, %v9607
      %v9609 = vsel %vm9203, %v9608, %v9604
      %v9610 = vlaneseq
      %v9611 = vshrl.u32 %v9610, 7
      %v9612 = vsub.s32 %v9205, %v9611
      %v9613 = vrot.slane %v8708, %v9612
      %v9614 = vsel %vm9210, %v9613, %v9609
      %v9615 = vlaneseq
      %v9616 = vshrl.u32 %v9615, 7
      %v9617 = vsub.s32 %v9212, %v9616
      %v9618 = vrot.slane %v8709, %v9617
      %v9619 = vsel %vm9217, %v9618, %v9614
      %v9620 = vlaneseq
      %v9621 = vshrl.u32 %v9620, 7
      %v9622 = vsub.s32 %v9219, %v9621
      %v9623 = vrot.slane %v8710, %v9622
      %v9624 = vsel %vm9224, %v9623, %v9619
      %v9625 = vlaneseq
      %v9626 = vshrl.u32 %v9625, 7
      %v9627 = vsub.s32 %v9226, %v9626
      %v9628 = vrot.slane %v8711, %v9627
      %v9629 = vsel %vm9231, %v9628, %v9624
      %v9630 = vlaneseq
      %v9631 = vshrl.u32 %v9630, 7
      %v9632 = vsub.s32 %v9233, %v9631
      %v9633 = vrot.slane %v8712, %v9632
      %v9634 = vsel %vm9238, %v9633, %v9629
      %v9635 = vlaneseq
      %v9636 = vshrl.u32 %v9635, 7
      %v9637 = vsub.s32 %v9130, %v9636
      %v9638 = vrot.slane %v8713, %v9637
      %v9639 = vlaneseq
      %v9640 = vshrl.u32 %v9639, 7
      %v9641 = vsub.s32 %v9135, %v9640
      %v9642 = vrot.slane %v8714, %v9641
      %v9643 = vsel %vm9140, %v9642, %v9638
      %v9644 = vlaneseq
      %v9645 = vshrl.u32 %v9644, 7
      %v9646 = vsub.s32 %v9142, %v9645
      %v9647 = vrot.slane %v8715, %v9646
      %v9648 = vsel %vm9147, %v9647, %v9643
      %v9649 = vlaneseq
      %v9650 = vshrl.u32 %v9649, 7
      %v9651 = vsub.s32 %v9149, %v9650
      %v9652 = vrot.slane %v8716, %v9651
      %v9653 = vsel %vm9154, %v9652, %v9648
      %v9654 = vlaneseq
      %v9655 = vshrl.u32 %v9654, 7
      %v9656 = vsub.s32 %v9156, %v9655
      %v9657 = vrot.slane %v8717, %v9656
      %v9658 = vsel %vm9161, %v9657, %v9653
      %v9659 = vlaneseq
      %v9660 = vshrl.u32 %v9659, 7
      %v9661 = vsub.s32 %v9163, %v9660
      %v9662 = vrot.slane %v8718, %v9661
      %v9663 = vsel %vm9168, %v9662, %v9658
      %v9664 = vlaneseq
      %v9665 = vshrl.u32 %v9664, 7
      %v9666 = vsub.s32 %v9170, %v9665
      %v9667 = vrot.slane %v8719, %v9666
      %v9668 = vsel %vm9175, %v9667, %v9663
      %v9669 = vlaneseq
      %v9670 = vshrl.u32 %v9669, 7
      %v9671 = vsub.s32 %v9177, %v9670
      %v9672 = vrot.slane %v8720, %v9671
      %v9673 = vsel %vm9182, %v9672, %v9668
      %v9674 = vlaneseq
      %v9675 = vshrl.u32 %v9674, 7
      %v9676 = vsub.s32 %v9184, %v9675
      %v9677 = vrot.slane %v8721, %v9676
      %v9678 = vsel %vm9189, %v9677, %v9673
      %v9679 = vlaneseq
      %v9680 = vshrl.u32 %v9679, 7
      %v9681 = vsub.s32 %v9191, %v9680
      %v9682 = vrot.slane %v8722, %v9681
      %v9683 = vsel %vm9196, %v9682, %v9678
      %v9684 = vlaneseq
      %v9685 = vshrl.u32 %v9684, 7
      %v9686 = vsub.s32 %v9198, %v9685
      %v9687 = vrot.slane %v8723, %v9686
      %v9688 = vsel %vm9203, %v9687, %v9683
      %v9689 = vlaneseq
      %v9690 = vshrl.u32 %v9689, 7
      %v9691 = vsub.s32 %v9205, %v9690
      %v9692 = vrot.slane %v8724, %v9691
      %v9693 = vsel %vm9210, %v9692, %v9688
      %v9694 = vlaneseq
      %v9695 = vshrl.u32 %v9694, 7
      %v9696 = vsub.s32 %v9212, %v9695
      %v9697 = vrot.slane %v8725, %v9696
      %v9698 = vsel %vm9217, %v9697, %v9693
      %v9699 = vlaneseq
      %v9700 = vshrl.u32 %v9699, 7
      %v9701 = vsub.s32 %v9219, %v9700
      %v9702 = vrot.slane %v8726, %v9701
      %v9703 = vsel %vm9224, %v9702, %v9698
      %v9704 = vlaneseq
      %v9705 = vshrl.u32 %v9704, 7
      %v9706 = vsub.s32 %v9226, %v9705
      %v9707 = vrot.slane %v8727, %v9706
      %v9708 = vsel %vm9231, %v9707, %v9703
      %v9709 = vlaneseq
      %v9710 = vshrl.u32 %v9709, 7
      %v9711 = vsub.s32 %v9233, %v9710
      %v9712 = vrot.slane %v8728, %v9711
      %v9713 = vsel %vm9238, %v9712, %v9708
      %v9714 = vlaneseq
      %v9715 = vshrl.u32 %v9714, 7
      %v9716 = vsub.s32 %v9130, %v9715
      %v9717 = vrot.slane %v8729, %v9716
      %v9718 = vlaneseq
      %v9719 = vshrl.u32 %v9718, 7
      %v9720 = vsub.s32 %v9135, %v9719
      %v9721 = vrot.slane %v8730, %v9720
      %v9722 = vsel %vm9140, %v9721, %v9717
      %v9723 = vlaneseq
      %v9724 = vshrl.u32 %v9723, 7
      %v9725 = vsub.s32 %v9142, %v9724
      %v9726 = vrot.slane %v8731, %v9725
      %v9727 = vsel %vm9147, %v9726, %v9722
      %v9728 = vlaneseq
      %v9729 = vshrl.u32 %v9728, 7
      %v9730 = vsub.s32 %v9149, %v9729
      %v9731 = vrot.slane %v8732, %v9730
      %v9732 = vsel %vm9154, %v9731, %v9727
      %v9733 = vlaneseq
      %v9734 = vshrl.u32 %v9733, 7
      %v9735 = vsub.s32 %v9156, %v9734
      %v9736 = vrot.slane %v8733, %v9735
      %v9737 = vsel %vm9161, %v9736, %v9732
      %v9738 = vlaneseq
      %v9739 = vshrl.u32 %v9738, 7
      %v9740 = vsub.s32 %v9163, %v9739
      %v9741 = vrot.slane %v8734, %v9740
      %v9742 = vsel %vm9168, %v9741, %v9737
      %v9743 = vlaneseq
      %v9744 = vshrl.u32 %v9743, 7
      %v9745 = vsub.s32 %v9170, %v9744
      %v9746 = vrot.slane %v8735, %v9745
      %v9747 = vsel %vm9175, %v9746, %v9742
      %v9748 = vlaneseq
      %v9749 = vshrl.u32 %v9748, 7
      %v9750 = vsub.s32 %v9177, %v9749
      %v9751 = vrot.slane %v8736, %v9750
      %v9752 = vsel %vm9182, %v9751, %v9747
      %v9753 = vlaneseq
      %v9754 = vshrl.u32 %v9753, 7
      %v9755 = vsub.s32 %v9184, %v9754
      %v9756 = vrot.slane %v8737, %v9755
      %v9757 = vsel %vm9189, %v9756, %v9752
      %v9758 = vlaneseq
      %v9759 = vshrl.u32 %v9758, 7
      %v9760 = vsub.s32 %v9191, %v9759
      %v9761 = vrot.slane %v8738, %v9760
      %v9762 = vsel %vm9196, %v9761, %v9757
      %v9763 = vlaneseq
      %v9764 = vshrl.u32 %v9763, 7
      %v9765 = vsub.s32 %v9198, %v9764
      %v9766 = vrot.slane %v8739, %v9765
      %v9767 = vsel %vm9203, %v9766, %v9762
      %v9768 = vlaneseq
      %v9769 = vshrl.u32 %v9768, 7
      %v9770 = vsub.s32 %v9205, %v9769
      %v9771 = vrot.slane %v8740, %v9770
      %v9772 = vsel %vm9210, %v9771, %v9767
      %v9773 = vlaneseq
      %v9774 = vshrl.u32 %v9773, 7
      %v9775 = vsub.s32 %v9212, %v9774
      %v9776 = vrot.slane %v8741, %v9775
      %v9777 = vsel %vm9217, %v9776, %v9772
      %v9778 = vlaneseq
      %v9779 = vshrl.u32 %v9778, 7
      %v9780 = vsub.s32 %v9219, %v9779
      %v9781 = vrot.slane %v8742, %v9780
      %v9782 = vsel %vm9224, %v9781, %v9777
      %v9783 = vlaneseq
      %v9784 = vshrl.u32 %v9783, 7
      %v9785 = vsub.s32 %v9226, %v9784
      %v9786 = vrot.slane %v8743, %v9785
      %v9787 = vsel %vm9231, %v9786, %v9782
      %v9788 = vlaneseq
      %v9789 = vshrl.u32 %v9788, 7
      %v9790 = vsub.s32 %v9233, %v9789
      %v9791 = vrot.slane %v8744, %v9790
      %v9792 = vsel %vm9238, %v9791, %v9787
      %v9793 = vlaneseq
      %v9794 = vshrl.u32 %v9793, 7
      %v9795 = vsub.s32 %v9130, %v9794
      %v9796 = vrot.slane %v8745, %v9795
      %v9797 = vlaneseq
      %v9798 = vshrl.u32 %v9797, 7
      %v9799 = vsub.s32 %v9135, %v9798
      %v9800 = vrot.slane %v8746, %v9799
      %v9801 = vsel %vm9140, %v9800, %v9796
      %v9802 = vlaneseq
      %v9803 = vshrl.u32 %v9802, 7
      %v9804 = vsub.s32 %v9142, %v9803
      %v9805 = vrot.slane %v8747, %v9804
      %v9806 = vsel %vm9147, %v9805, %v9801
      %v9807 = vlaneseq
      %v9808 = vshrl.u32 %v9807, 7
      %v9809 = vsub.s32 %v9149, %v9808
      %v9810 = vrot.slane %v8748, %v9809
      %v9811 = vsel %vm9154, %v9810, %v9806
      %v9812 = vlaneseq
      %v9813 = vshrl.u32 %v9812, 7
      %v9814 = vsub.s32 %v9156, %v9813
      %v9815 = vrot.slane %v8749, %v9814
      %v9816 = vsel %vm9161, %v9815, %v9811
      %v9817 = vlaneseq
      %v9818 = vshrl.u32 %v9817, 7
      %v9819 = vsub.s32 %v9163, %v9818
      %v9820 = vrot.slane %v8750, %v9819
      %v9821 = vsel %vm9168, %v9820, %v9816
      %v9822 = vlaneseq
      %v9823 = vshrl.u32 %v9822, 7
      %v9824 = vsub.s32 %v9170, %v9823
      %v9825 = vrot.slane %v8751, %v9824
      %v9826 = vsel %vm9175, %v9825, %v9821
      %v9827 = vlaneseq
      %v9828 = vshrl.u32 %v9827, 7
      %v9829 = vsub.s32 %v9177, %v9828
      %v9830 = vrot.slane %v8752, %v9829
      %v9831 = vsel %vm9182, %v9830, %v9826
      %v9832 = vlaneseq
      %v9833 = vshrl.u32 %v9832, 7
      %v9834 = vsub.s32 %v9184, %v9833
      %v9835 = vrot.slane %v8753, %v9834
      %v9836 = vsel %vm9189, %v9835, %v9831
      %v9837 = vlaneseq
      %v9838 = vshrl.u32 %v9837, 7
      %v9839 = vsub.s32 %v9191, %v9838
      %v9840 = vrot.slane %v8754, %v9839
      %v9841 = vsel %vm9196, %v9840, %v9836
      %v9842 = vlaneseq
      %v9843 = vshrl.u32 %v9842, 7
      %v9844 = vsub.s32 %v9198, %v9843
      %v9845 = vrot.slane %v8755, %v9844
      %v9846 = vsel %vm9203, %v9845, %v9841
      %v9847 = vlaneseq
      %v9848 = vshrl.u32 %v9847, 7
      %v9849 = vsub.s32 %v9205, %v9848
      %v9850 = vrot.slane %v8756, %v9849
      %v9851 = vsel %vm9210, %v9850, %v9846
      %v9852 = vlaneseq
      %v9853 = vshrl.u32 %v9852, 7
      %v9854 = vsub.s32 %v9212, %v9853
      %v9855 = vrot.slane %v8757, %v9854
      %v9856 = vsel %vm9217, %v9855, %v9851
      %v9857 = vlaneseq
      %v9858 = vshrl.u32 %v9857, 7
      %v9859 = vsub.s32 %v9219, %v9858
      %v9860 = vrot.slane %v8758, %v9859
      %v9861 = vsel %vm9224, %v9860, %v9856
      %v9862 = vlaneseq
      %v9863 = vshrl.u32 %v9862, 7
      %v9864 = vsub.s32 %v9226, %v9863
      %v9865 = vrot.slane %v8759, %v9864
      %v9866 = vsel %vm9231, %v9865, %v9861
      %v9867 = vlaneseq
      %v9868 = vshrl.u32 %v9867, 7
      %v9869 = vsub.s32 %v9233, %v9868
      %v9870 = vrot.slane %v8760, %v9869
      %v9871 = vsel %vm9238, %v9870, %v9866
      %v9872 = vlaneseq
      %v9873 = vshrl.u32 %v9872, 7
      %v9874 = vsub.s32 %v9130, %v9873
      %v9875 = vrot.slane %v8761, %v9874
      %v9876 = vlaneseq
      %v9877 = vshrl.u32 %v9876, 7
      %v9878 = vsub.s32 %v9135, %v9877
      %v9879 = vrot.slane %v8762, %v9878
      %v9880 = vsel %vm9140, %v9879, %v9875
      %v9881 = vlaneseq
      %v9882 = vshrl.u32 %v9881, 7
      %v9883 = vsub.s32 %v9142, %v9882
      %v9884 = vrot.slane %v8763, %v9883
      %v9885 = vsel %vm9147, %v9884, %v9880
      %v9886 = vlaneseq
      %v9887 = vshrl.u32 %v9886, 7
      %v9888 = vsub.s32 %v9149, %v9887
      %v9889 = vrot.slane %v8764, %v9888
      %v9890 = vsel %vm9154, %v9889, %v9885
      %v9891 = vlaneseq
      %v9892 = vshrl.u32 %v9891, 7
      %v9893 = vsub.s32 %v9156, %v9892
      %v9894 = vrot.slane %v8765, %v9893
      %v9895 = vsel %vm9161, %v9894, %v9890
      %v9896 = vlaneseq
      %v9897 = vshrl.u32 %v9896, 7
      %v9898 = vsub.s32 %v9163, %v9897
      %v9899 = vrot.slane %v8766, %v9898
      %v9900 = vsel %vm9168, %v9899, %v9895
      %v9901 = vlaneseq
      %v9902 = vshrl.u32 %v9901, 7
      %v9903 = vsub.s32 %v9170, %v9902
      %v9904 = vrot.slane %v8767, %v9903
      %v9905 = vsel %vm9175, %v9904, %v9900
      %v9906 = vlaneseq
      %v9907 = vshrl.u32 %v9906, 7
      %v9908 = vsub.s32 %v9177, %v9907
      %v9909 = vrot.slane %v8768, %v9908
      %v9910 = vsel %vm9182, %v9909, %v9905
      %v9911 = vlaneseq
      %v9912 = vshrl.u32 %v9911, 7
      %v9913 = vsub.s32 %v9184, %v9912
      %v9914 = vrot.slane %v8769, %v9913
      %v9915 = vsel %vm9189, %v9914, %v9910
      %v9916 = vlaneseq
      %v9917 = vshrl.u32 %v9916, 7
      %v9918 = vsub.s32 %v9191, %v9917
      %v9919 = vrot.slane %v8770, %v9918
      %v9920 = vsel %vm9196, %v9919, %v9915
      %v9921 = vlaneseq
      %v9922 = vshrl.u32 %v9921, 7
      %v9923 = vsub.s32 %v9198, %v9922
      %v9924 = vrot.slane %v8771, %v9923
      %v9925 = vsel %vm9203, %v9924, %v9920
      %v9926 = vlaneseq
      %v9927 = vshrl.u32 %v9926, 7
      %v9928 = vsub.s32 %v9205, %v9927
      %v9929 = vrot.slane %v8772, %v9928
      %v9930 = vsel %vm9210, %v9929, %v9925
      %v9931 = vlaneseq
      %v9932 = vshrl.u32 %v9931, 7
      %v9933 = vsub.s32 %v9212, %v9932
      %v9934 = vrot.slane %v8773, %v9933
      %v9935 = vsel %vm9217, %v9934, %v9930
      %v9936 = vlaneseq
      %v9937 = vshrl.u32 %v9936, 7
      %v9938 = vsub.s32 %v9219, %v9937
      %v9939 = vrot.slane %v8774, %v9938
      %v9940 = vsel %vm9224, %v9939, %v9935
      %v9941 = vlaneseq
      %v9942 = vshrl.u32 %v9941, 7
      %v9943 = vsub.s32 %v9226, %v9942
      %v9944 = vrot.slane %v8775, %v9943
      %v9945 = vsel %vm9231, %v9944, %v9940
      %v9946 = vlaneseq
      %v9947 = vshrl.u32 %v9946, 7
      %v9948 = vsub.s32 %v9233, %v9947
      %v9949 = vrot.slane %v8776, %v9948
      %v9950 = vsel %vm9238, %v9949, %v9945
      %v9951 = vlaneseq
      %v9952 = vshrl.u32 %v9951, 7
      %v9953 = vsub.s32 %v9130, %v9952
      %v9954 = vrot.slane %v8777, %v9953
      %v9955 = vlaneseq
      %v9956 = vshrl.u32 %v9955, 7
      %v9957 = vsub.s32 %v9135, %v9956
      %v9958 = vrot.slane %v8778, %v9957
      %v9959 = vsel %vm9140, %v9958, %v9954
      %v9960 = vlaneseq
      %v9961 = vshrl.u32 %v9960, 7
      %v9962 = vsub.s32 %v9142, %v9961
      %v9963 = vrot.slane %v8779, %v9962
      %v9964 = vsel %vm9147, %v9963, %v9959
      %v9965 = vlaneseq
      %v9966 = vshrl.u32 %v9965, 7
      %v9967 = vsub.s32 %v9149, %v9966
      %v9968 = vrot.slane %v8780, %v9967
      %v9969 = vsel %vm9154, %v9968, %v9964
      %v9970 = vlaneseq
      %v9971 = vshrl.u32 %v9970, 7
      %v9972 = vsub.s32 %v9156, %v9971
      %v9973 = vrot.slane %v8781, %v9972
      %v9974 = vsel %vm9161, %v9973, %v9969
      %v9975 = vlaneseq
      %v9976 = vshrl.u32 %v9975, 7
      %v9977 = vsub.s32 %v9163, %v9976
      %v9978 = vrot.slane %v8782, %v9977
      %v9979 = vsel %vm9168, %v9978, %v9974
      %v9980 = vlaneseq
      %v9981 = vshrl.u32 %v9980, 7
      %v9982 = vsub.s32 %v9170, %v9981
      %v9983 = vrot.slane %v8783, %v9982
      %v9984 = vsel %vm9175, %v9983, %v9979
      %v9985 = vlaneseq
      %v9986 = vshrl.u32 %v9985, 7
      %v9987 = vsub.s32 %v9177, %v9986
      %v9988 = vrot.slane %v8784, %v9987
      %v9989 = vsel %vm9182, %v9988, %v9984
      %v9990 = vlaneseq
      %v9991 = vshrl.u32 %v9990, 7
      %v9992 = vsub.s32 %v9184, %v9991
      %v9993 = vrot.slane %v8785, %v9992
      %v9994 = vsel %vm9189, %v9993, %v9989
      %v9995 = vlaneseq
      %v9996 = vshrl.u32 %v9995, 7
      %v9997 = vsub.s32 %v9191, %v9996
      %v9998 = vrot.slane %v8786, %v9997
      %v9999 = vsel %vm9196, %v9998, %v9994
      %v10000 = vlaneseq
      %v10001 = vshrl.u32 %v10000, 7
      %v10002 = vsub.s32 %v9198, %v10001
      %v10003 = vrot.slane %v8787, %v10002
      %v10004 = vsel %vm9203, %v10003, %v9999
      %v10005 = vlaneseq
      %v10006 = vshrl.u32 %v10005, 7
      %v10007 = vsub.s32 %v9205, %v10006
      %v10008 = vrot.slane %v8788, %v10007
      %v10009 = vsel %vm9210, %v10008, %v10004
      %v10010 = vlaneseq
      %v10011 = vshrl.u32 %v10010, 7
      %v10012 = vsub.s32 %v9212, %v10011
      %v10013 = vrot.slane %v8789, %v10012
      %v10014 = vsel %vm9217, %v10013, %v10009
      %v10015 = vlaneseq
      %v10016 = vshrl.u32 %v10015, 7
      %v10017 = vsub.s32 %v9219, %v10016
      %v10018 = vrot.slane %v8790, %v10017
      %v10019 = vsel %vm9224, %v10018, %v10014
      %v10020 = vlaneseq
      %v10021 = vshrl.u32 %v10020, 7
      %v10022 = vsub.s32 %v9226, %v10021
      %v10023 = vrot.slane %v8791, %v10022
      %v10024 = vsel %vm9231, %v10023, %v10019
      %v10025 = vlaneseq
      %v10026 = vshrl.u32 %v10025, 7
      %v10027 = vsub.s32 %v9233, %v10026
      %v10028 = vrot.slane %v8792, %v10027
      %v10029 = vsel %vm9238, %v10028, %v10024
      %v10030 = vlaneseq
      %v10031 = vshrl.u32 %v10030, 7
      %v10032 = vsub.s32 %v9130, %v10031
      %v10033 = vrot.slane %v8793, %v10032
      %v10034 = vlaneseq
      %v10035 = vshrl.u32 %v10034, 7
      %v10036 = vsub.s32 %v9135, %v10035
      %v10037 = vrot.slane %v8794, %v10036
      %v10038 = vsel %vm9140, %v10037, %v10033
      %v10039 = vlaneseq
      %v10040 = vshrl.u32 %v10039, 7
      %v10041 = vsub.s32 %v9142, %v10040
      %v10042 = vrot.slane %v8795, %v10041
      %v10043 = vsel %vm9147, %v10042, %v10038
      %v10044 = vlaneseq
      %v10045 = vshrl.u32 %v10044, 7
      %v10046 = vsub.s32 %v9149, %v10045
      %v10047 = vrot.slane %v8796, %v10046
      %v10048 = vsel %vm9154, %v10047, %v10043
      %v10049 = vlaneseq
      %v10050 = vshrl.u32 %v10049, 7
      %v10051 = vsub.s32 %v9156, %v10050
      %v10052 = vrot.slane %v8797, %v10051
      %v10053 = vsel %vm9161, %v10052, %v10048
      %v10054 = vlaneseq
      %v10055 = vshrl.u32 %v10054, 7
      %v10056 = vsub.s32 %v9163, %v10055
      %v10057 = vrot.slane %v8798, %v10056
      %v10058 = vsel %vm9168, %v10057, %v10053
      %v10059 = vlaneseq
      %v10060 = vshrl.u32 %v10059, 7
      %v10061 = vsub.s32 %v9170, %v10060
      %v10062 = vrot.slane %v8799, %v10061
      %v10063 = vsel %vm9175, %v10062, %v10058
      %v10064 = vlaneseq
      %v10065 = vshrl.u32 %v10064, 7
      %v10066 = vsub.s32 %v9177, %v10065
      %v10067 = vrot.slane %v8800, %v10066
      %v10068 = vsel %vm9182, %v10067, %v10063
      %v10069 = vlaneseq
      %v10070 = vshrl.u32 %v10069, 7
      %v10071 = vsub.s32 %v9184, %v10070
      %v10072 = vrot.slane %v8801, %v10071
      %v10073 = vsel %vm9189, %v10072, %v10068
      %v10074 = vlaneseq
      %v10075 = vshrl.u32 %v10074, 7
      %v10076 = vsub.s32 %v9191, %v10075
      %v10077 = vrot.slane %v8802, %v10076
      %v10078 = vsel %vm9196, %v10077, %v10073
      %v10079 = vlaneseq
      %v10080 = vshrl.u32 %v10079, 7
      %v10081 = vsub.s32 %v9198, %v10080
      %v10082 = vrot.slane %v8803, %v10081
      %v10083 = vsel %vm9203, %v10082, %v10078
      %v10084 = vlaneseq
      %v10085 = vshrl.u32 %v10084, 7
      %v10086 = vsub.s32 %v9205, %v10085
      %v10087 = vrot.slane %v8804, %v10086
      %v10088 = vsel %vm9210, %v10087, %v10083
      %v10089 = vlaneseq
      %v10090 = vshrl.u32 %v10089, 7
      %v10091 = vsub.s32 %v9212, %v10090
      %v10092 = vrot.slane %v8805, %v10091
      %v10093 = vsel %vm9217, %v10092, %v10088
      %v10094 = vlaneseq
      %v10095 = vshrl.u32 %v10094, 7
      %v10096 = vsub.s32 %v9219, %v10095
      %v10097 = vrot.slane %v8806, %v10096
      %v10098 = vsel %vm9224, %v10097, %v10093
      %v10099 = vlaneseq
      %v10100 = vshrl.u32 %v10099, 7
      %v10101 = vsub.s32 %v9226, %v10100
      %v10102 = vrot.slane %v8807, %v10101
      %v10103 = vsel %vm9231, %v10102, %v10098
      %v10104 = vlaneseq
      %v10105 = vshrl.u32 %v10104, 7
      %v10106 = vsub.s32 %v9233, %v10105
      %v10107 = vrot.slane %v8808, %v10106
      %v10108 = vsel %vm9238, %v10107, %v10103
      %v10109 = vlaneseq
      %v10110 = vshrl.u32 %v10109, 7
      %v10111 = vsub.s32 %v9130, %v10110
      %v10112 = vrot.slane %v8809, %v10111
      %v10113 = vlaneseq
      %v10114 = vshrl.u32 %v10113, 7
      %v10115 = vsub.s32 %v9135, %v10114
      %v10116 = vrot.slane %v8810, %v10115
      %v10117 = vsel %vm9140, %v10116, %v10112
      %v10118 = vlaneseq
      %v10119 = vshrl.u32 %v10118, 7
      %v10120 = vsub.s32 %v9142, %v10119
      %v10121 = vrot.slane %v8811, %v10120
      %v10122 = vsel %vm9147, %v10121, %v10117
      %v10123 = vlaneseq
      %v10124 = vshrl.u32 %v10123, 7
      %v10125 = vsub.s32 %v9149, %v10124
      %v10126 = vrot.slane %v8812, %v10125
      %v10127 = vsel %vm9154, %v10126, %v10122
      %v10128 = vlaneseq
      %v10129 = vshrl.u32 %v10128, 7
      %v10130 = vsub.s32 %v9156, %v10129
      %v10131 = vrot.slane %v8813, %v10130
      %v10132 = vsel %vm9161, %v10131, %v10127
      %v10133 = vlaneseq
      %v10134 = vshrl.u32 %v10133, 7
      %v10135 = vsub.s32 %v9163, %v10134
      %v10136 = vrot.slane %v8814, %v10135
      %v10137 = vsel %vm9168, %v10136, %v10132
      %v10138 = vlaneseq
      %v10139 = vshrl.u32 %v10138, 7
      %v10140 = vsub.s32 %v9170, %v10139
      %v10141 = vrot.slane %v8815, %v10140
      %v10142 = vsel %vm9175, %v10141, %v10137
      %v10143 = vlaneseq
      %v10144 = vshrl.u32 %v10143, 7
      %v10145 = vsub.s32 %v9177, %v10144
      %v10146 = vrot.slane %v8816, %v10145
      %v10147 = vsel %vm9182, %v10146, %v10142
      %v10148 = vlaneseq
      %v10149 = vshrl.u32 %v10148, 7
      %v10150 = vsub.s32 %v9184, %v10149
      %v10151 = vrot.slane %v8817, %v10150
      %v10152 = vsel %vm9189, %v10151, %v10147
      %v10153 = vlaneseq
      %v10154 = vshrl.u32 %v10153, 7
      %v10155 = vsub.s32 %v9191, %v10154
      %v10156 = vrot.slane %v8818, %v10155
      %v10157 = vsel %vm9196, %v10156, %v10152
      %v10158 = vlaneseq
      %v10159 = vshrl.u32 %v10158, 7
      %v10160 = vsub.s32 %v9198, %v10159
      %v10161 = vrot.slane %v8819, %v10160
      %v10162 = vsel %vm9203, %v10161, %v10157
      %v10163 = vlaneseq
      %v10164 = vshrl.u32 %v10163, 7
      %v10165 = vsub.s32 %v9205, %v10164
      %v10166 = vrot.slane %v8820, %v10165
      %v10167 = vsel %vm9210, %v10166, %v10162
      %v10168 = vlaneseq
      %v10169 = vshrl.u32 %v10168, 7
      %v10170 = vsub.s32 %v9212, %v10169
      %v10171 = vrot.slane %v8821, %v10170
      %v10172 = vsel %vm9217, %v10171, %v10167
      %v10173 = vlaneseq
      %v10174 = vshrl.u32 %v10173, 7
      %v10175 = vsub.s32 %v9219, %v10174
      %v10176 = vrot.slane %v8822, %v10175
      %v10177 = vsel %vm9224, %v10176, %v10172
      %v10178 = vlaneseq
      %v10179 = vshrl.u32 %v10178, 7
      %v10180 = vsub.s32 %v9226, %v10179
      %v10181 = vrot.slane %v8823, %v10180
      %v10182 = vsel %vm9231, %v10181, %v10177
      %v10183 = vlaneseq
      %v10184 = vshrl.u32 %v10183, 7
      %v10185 = vsub.s32 %v9233, %v10184
      %v10186 = vrot.slane %v8824, %v10185
      %v10187 = vsel %vm9238, %v10186, %v10182
      %v10188 = vlaneseq
      %v10189 = vshrl.u32 %v10188, 7
      %v10190 = vsub.s32 %v9130, %v10189
      %v10191 = vrot.slane %v8825, %v10190
      %v10192 = vlaneseq
      %v10193 = vshrl.u32 %v10192, 7
      %v10194 = vsub.s32 %v9135, %v10193
      %v10195 = vrot.slane %v8826, %v10194
      %v10196 = vsel %vm9140, %v10195, %v10191
      %v10197 = vlaneseq
      %v10198 = vshrl.u32 %v10197, 7
      %v10199 = vsub.s32 %v9142, %v10198
      %v10200 = vrot.slane %v8827, %v10199
      %v10201 = vsel %vm9147, %v10200, %v10196
      %v10202 = vlaneseq
      %v10203 = vshrl.u32 %v10202, 7
      %v10204 = vsub.s32 %v9149, %v10203
      %v10205 = vrot.slane %v8828, %v10204
      %v10206 = vsel %vm9154, %v10205, %v10201
      %v10207 = vlaneseq
      %v10208 = vshrl.u32 %v10207, 7
      %v10209 = vsub.s32 %v9156, %v10208
      %v10210 = vrot.slane %v8829, %v10209
      %v10211 = vsel %vm9161, %v10210, %v10206
      %v10212 = vlaneseq
      %v10213 = vshrl.u32 %v10212, 7
      %v10214 = vsub.s32 %v9163, %v10213
      %v10215 = vrot.slane %v8830, %v10214
      %v10216 = vsel %vm9168, %v10215, %v10211
      %v10217 = vlaneseq
      %v10218 = vshrl.u32 %v10217, 7
      %v10219 = vsub.s32 %v9170, %v10218
      %v10220 = vrot.slane %v8831, %v10219
      %v10221 = vsel %vm9175, %v10220, %v10216
      %v10222 = vlaneseq
      %v10223 = vshrl.u32 %v10222, 7
      %v10224 = vsub.s32 %v9177, %v10223
      %v10225 = vrot.slane %v8832, %v10224
      %v10226 = vsel %vm9182, %v10225, %v10221
      %v10227 = vlaneseq
      %v10228 = vshrl.u32 %v10227, 7
      %v10229 = vsub.s32 %v9184, %v10228
      %v10230 = vrot.slane %v8833, %v10229
      %v10231 = vsel %vm9189, %v10230, %v10226
      %v10232 = vlaneseq
      %v10233 = vshrl.u32 %v10232, 7
      %v10234 = vsub.s32 %v9191, %v10233
      %v10235 = vrot.slane %v8834, %v10234
      %v10236 = vsel %vm9196, %v10235, %v10231
      %v10237 = vlaneseq
      %v10238 = vshrl.u32 %v10237, 7
      %v10239 = vsub.s32 %v9198, %v10238
      %v10240 = vrot.slane %v8835, %v10239
      %v10241 = vsel %vm9203, %v10240, %v10236
      %v10242 = vlaneseq
      %v10243 = vshrl.u32 %v10242, 7
      %v10244 = vsub.s32 %v9205, %v10243
      %v10245 = vrot.slane %v8836, %v10244
      %v10246 = vsel %vm9210, %v10245, %v10241
      %v10247 = vlaneseq
      %v10248 = vshrl.u32 %v10247, 7
      %v10249 = vsub.s32 %v9212, %v10248
      %v10250 = vrot.slane %v8837, %v10249
      %v10251 = vsel %vm9217, %v10250, %v10246
      %v10252 = vlaneseq
      %v10253 = vshrl.u32 %v10252, 7
      %v10254 = vsub.s32 %v9219, %v10253
      %v10255 = vrot.slane %v8838, %v10254
      %v10256 = vsel %vm9224, %v10255, %v10251
      %v10257 = vlaneseq
      %v10258 = vshrl.u32 %v10257, 7
      %v10259 = vsub.s32 %v9226, %v10258
      %v10260 = vrot.slane %v8839, %v10259
      %v10261 = vsel %vm9231, %v10260, %v10256
      %v10262 = vlaneseq
      %v10263 = vshrl.u32 %v10262, 7
      %v10264 = vsub.s32 %v9233, %v10263
      %v10265 = vrot.slane %v8840, %v10264
      %v10266 = vsel %vm9238, %v10265, %v10261
      %v10267 = vlaneseq
      %v10268 = vshrl.u32 %v10267, 7
      %v10269 = vsub.s32 %v9130, %v10268
      %v10270 = vrot.slane %v8841, %v10269
      %v10271 = vlaneseq
      %v10272 = vshrl.u32 %v10271, 7
      %v10273 = vsub.s32 %v9135, %v10272
      %v10274 = vrot.slane %v8842, %v10273
      %v10275 = vsel %vm9140, %v10274, %v10270
      %v10276 = vlaneseq
      %v10277 = vshrl.u32 %v10276, 7
      %v10278 = vsub.s32 %v9142, %v10277
      %v10279 = vrot.slane %v8843, %v10278
      %v10280 = vsel %vm9147, %v10279, %v10275
      %v10281 = vlaneseq
      %v10282 = vshrl.u32 %v10281, 7
      %v10283 = vsub.s32 %v9149, %v10282
      %v10284 = vrot.slane %v8844, %v10283
      %v10285 = vsel %vm9154, %v10284, %v10280
      %v10286 = vlaneseq
      %v10287 = vshrl.u32 %v10286, 7
      %v10288 = vsub.s32 %v9156, %v10287
      %v10289 = vrot.slane %v8845, %v10288
      %v10290 = vsel %vm9161, %v10289, %v10285
      %v10291 = vlaneseq
      %v10292 = vshrl.u32 %v10291, 7
      %v10293 = vsub.s32 %v9163, %v10292
      %v10294 = vrot.slane %v8846, %v10293
      %v10295 = vsel %vm9168, %v10294, %v10290
      %v10296 = vlaneseq
      %v10297 = vshrl.u32 %v10296, 7
      %v10298 = vsub.s32 %v9170, %v10297
      %v10299 = vrot.slane %v8847, %v10298
      %v10300 = vsel %vm9175, %v10299, %v10295
      %v10301 = vlaneseq
      %v10302 = vshrl.u32 %v10301, 7
      %v10303 = vsub.s32 %v9177, %v10302
      %v10304 = vrot.slane %v8848, %v10303
      %v10305 = vsel %vm9182, %v10304, %v10300
      %v10306 = vlaneseq
      %v10307 = vshrl.u32 %v10306, 7
      %v10308 = vsub.s32 %v9184, %v10307
      %v10309 = vrot.slane %v8849, %v10308
      %v10310 = vsel %vm9189, %v10309, %v10305
      %v10311 = vlaneseq
      %v10312 = vshrl.u32 %v10311, 7
      %v10313 = vsub.s32 %v9191, %v10312
      %v10314 = vrot.slane %v8850, %v10313
      %v10315 = vsel %vm9196, %v10314, %v10310
      %v10316 = vlaneseq
      %v10317 = vshrl.u32 %v10316, 7
      %v10318 = vsub.s32 %v9198, %v10317
      %v10319 = vrot.slane %v8851, %v10318
      %v10320 = vsel %vm9203, %v10319, %v10315
      %v10321 = vlaneseq
      %v10322 = vshrl.u32 %v10321, 7
      %v10323 = vsub.s32 %v9205, %v10322
      %v10324 = vrot.slane %v8852, %v10323
      %v10325 = vsel %vm9210, %v10324, %v10320
      %v10326 = vlaneseq
      %v10327 = vshrl.u32 %v10326, 7
      %v10328 = vsub.s32 %v9212, %v10327
      %v10329 = vrot.slane %v8853, %v10328
      %v10330 = vsel %vm9217, %v10329, %v10325
      %v10331 = vlaneseq
      %v10332 = vshrl.u32 %v10331, 7
      %v10333 = vsub.s32 %v9219, %v10332
      %v10334 = vrot.slane %v8854, %v10333
      %v10335 = vsel %vm9224, %v10334, %v10330
      %v10336 = vlaneseq
      %v10337 = vshrl.u32 %v10336, 7
      %v10338 = vsub.s32 %v9226, %v10337
      %v10339 = vrot.slane %v8855, %v10338
      %v10340 = vsel %vm9231, %v10339, %v10335
      %v10341 = vlaneseq
      %v10342 = vshrl.u32 %v10341, 7
      %v10343 = vsub.s32 %v9233, %v10342
      %v10344 = vrot.slane %v8856, %v10343
      %v10345 = vsel %vm9238, %v10344, %v10340
      %v10346 = vlaneseq
      %v10347 = vshrl.u32 %v10346, 7
      %v10348 = vsub.s32 %v9130, %v10347
      %v10349 = vrot.slane %v8857, %v10348
      %v10350 = vlaneseq
      %v10351 = vshrl.u32 %v10350, 7
      %v10352 = vsub.s32 %v9135, %v10351
      %v10353 = vrot.slane %v8858, %v10352
      %v10354 = vsel %vm9140, %v10353, %v10349
      %v10355 = vlaneseq
      %v10356 = vshrl.u32 %v10355, 7
      %v10357 = vsub.s32 %v9142, %v10356
      %v10358 = vrot.slane %v8859, %v10357
      %v10359 = vsel %vm9147, %v10358, %v10354
      %v10360 = vlaneseq
      %v10361 = vshrl.u32 %v10360, 7
      %v10362 = vsub.s32 %v9149, %v10361
      %v10363 = vrot.slane %v8860, %v10362
      %v10364 = vsel %vm9154, %v10363, %v10359
      %v10365 = vlaneseq
      %v10366 = vshrl.u32 %v10365, 7
      %v10367 = vsub.s32 %v9156, %v10366
      %v10368 = vrot.slane %v8861, %v10367
      %v10369 = vsel %vm9161, %v10368, %v10364
      %v10370 = vlaneseq
      %v10371 = vshrl.u32 %v10370, 7
      %v10372 = vsub.s32 %v9163, %v10371
      %v10373 = vrot.slane %v8862, %v10372
      %v10374 = vsel %vm9168, %v10373, %v10369
      %v10375 = vlaneseq
      %v10376 = vshrl.u32 %v10375, 7
      %v10377 = vsub.s32 %v9170, %v10376
      %v10378 = vrot.slane %v8863, %v10377
      %v10379 = vsel %vm9175, %v10378, %v10374
      %v10380 = vlaneseq
      %v10381 = vshrl.u32 %v10380, 7
      %v10382 = vsub.s32 %v9177, %v10381
      %v10383 = vrot.slane %v8864, %v10382
      %v10384 = vsel %vm9182, %v10383, %v10379
      %v10385 = vlaneseq
      %v10386 = vshrl.u32 %v10385, 7
      %v10387 = vsub.s32 %v9184, %v10386
      %v10388 = vrot.slane %v8865, %v10387
      %v10389 = vsel %vm9189, %v10388, %v10384
      %v10390 = vlaneseq
      %v10391 = vshrl.u32 %v10390, 7
      %v10392 = vsub.s32 %v9191, %v10391
      %v10393 = vrot.slane %v8866, %v10392
      %v10394 = vsel %vm9196, %v10393, %v10389
      %v10395 = vlaneseq
      %v10396 = vshrl.u32 %v10395, 7
      %v10397 = vsub.s32 %v9198, %v10396
      %v10398 = vrot.slane %v8867, %v10397
      %v10399 = vsel %vm9203, %v10398, %v10394
      %v10400 = vlaneseq
      %v10401 = vshrl.u32 %v10400, 7
      %v10402 = vsub.s32 %v9205, %v10401
      %v10403 = vrot.slane %v8868, %v10402
      %v10404 = vsel %vm9210, %v10403, %v10399
      %v10405 = vlaneseq
      %v10406 = vshrl.u32 %v10405, 7
      %v10407 = vsub.s32 %v9212, %v10406
      %v10408 = vrot.slane %v8869, %v10407
      %v10409 = vsel %vm9217, %v10408, %v10404
      %v10410 = vlaneseq
      %v10411 = vshrl.u32 %v10410, 7
      %v10412 = vsub.s32 %v9219, %v10411
      %v10413 = vrot.slane %v8870, %v10412
      %v10414 = vsel %vm9224, %v10413, %v10409
      %v10415 = vlaneseq
      %v10416 = vshrl.u32 %v10415, 7
      %v10417 = vsub.s32 %v9226, %v10416
      %v10418 = vrot.slane %v8871, %v10417
      %v10419 = vsel %vm9231, %v10418, %v10414
      %v10420 = vlaneseq
      %v10421 = vshrl.u32 %v10420, 7
      %v10422 = vsub.s32 %v9233, %v10421
      %v10423 = vrot.slane %v8872, %v10422
      %v10424 = vsel %vm9238, %v10423, %v10419
      %vm10425 = vcmask 1042434
      %v10426 = vsel %vm10425, %v9239, %v9239
      %vm10427 = vcmask 1043459
      %v10428 = vsel %vm10427, %v9239, %v10426
      %v10429 = vsel %vm10425, %v9318, %v9318
      %v10430 = vsel %vm10427, %v9318, %v10429
      %v10431 = vsel %vm10425, %v9397, %v9397
      %v10432 = vsel %vm10427, %v9397, %v10431
      %v10433 = vsel %vm10425, %v9476, %v9476
      %v10434 = vsel %vm10427, %v9476, %v10433
      %v10435 = vsel %vm10425, %v9555, %v9555
      %v10436 = vsel %vm10427, %v9555, %v10435
      %v10437 = vsel %vm10425, %v9634, %v9634
      %v10438 = vsel %vm10427, %v9634, %v10437
      %v10439 = vsel %vm10425, %v9713, %v9713
      %v10440 = vsel %vm10427, %v9713, %v10439
      %v10441 = vsel %vm10425, %v9792, %v9792
      %v10442 = vsel %vm10427, %v9792, %v10441
      %v10443 = vsel %vm10425, %v9871, %v9871
      %v10444 = vsel %vm10427, %v9871, %v10443
      %v10445 = vsel %vm10425, %v9950, %v9950
      %v10446 = vsel %vm10427, %v9950, %v10445
      %v10447 = vsel %vm10425, %v10029, %v10029
      %v10448 = vsel %vm10427, %v10029, %v10447
      %v10449 = vsel %vm10425, %v10108, %v10108
      %v10450 = vsel %vm10427, %v10108, %v10449
      %v10451 = vsel %vm10425, %v10187, %v10187
      %v10452 = vsel %vm10427, %v10187, %v10451
      %v10453 = vsel %vm10425, %v10266, %v10266
      %v10454 = vsel %vm10427, %v10266, %v10453
      %v10455 = vsel %vm10425, %v10345, %v10345
      %v10456 = vsel %vm10427, %v10345, %v10455
      %v10457 = vsel %vm10425, %v10424, %v10424
      %v10458 = vsel %vm10427, %v10424, %v10457
      %v10475 = vmul.f32 %v8102, %v10428
      %v10476 = vmul.f32 %v8104, %v10430
      %v10477 = vmul.f32 %v8175, %v10432
      %v10478 = vmul.f32 %v8177, %v10434
      %v10479 = vmul.f32 %v8248, %v10436
      %v10480 = vmul.f32 %v8250, %v10438
      %v10481 = vmul.f32 %v8321, %v10440
      %v10482 = vmul.f32 %v8323, %v10442
      %v10483 = vmul.f32 %v8394, %v10444
      %v10484 = vmul.f32 %v8396, %v10446
      %v10485 = vmul.f32 %v8467, %v10448
      %v10486 = vmul.f32 %v8469, %v10450
      %v10487 = vmul.f32 %v8540, %v10452
      %v10488 = vmul.f32 %v8542, %v10454
      %v10489 = vmul.f32 %v8613, %v10456
      %v10490 = vmul.f32 %v8615, %v10458
      %v10507 = vcombine.low %v10475, %v10476
      %v10508 = vcombine.low %v10477, %v10478
      %v10509 = vcombine.low %v10479, %v10480
      %v10510 = vcombine.low %v10481, %v10482
      %v10511 = vcombine.low %v10483, %v10484
      %v10512 = vcombine.low %v10485, %v10486
      %v10513 = vcombine.low %v10487, %v10488
      %v10514 = vcombine.low %v10489, %v10490
      %10523 = vst [vmem:[#allocation2] sm:$0xff] 0.0
      %10524 = vst [vmem:[#allocation2 + $0x8] sm:$0xff] 0.0
      %vm10525 = vcmask 277504
      %10526 = vst.msk [vmem:[#allocation2 + $0x10] sm:$0xff] %vm10525, 0.0
      %10527 = vst [vmem:[#allocation2 + $0x18] sm:$0xff] 0.0
      %10528 = vst [vmem:[#allocation2 + $0x20] sm:$0xff] 0.0
      %10529 = vst.msk [vmem:[#allocation2 + $0x28] sm:$0xff] %vm10525, 0.0
      %10530 = vst [vmem:[#allocation2 + $0x30] sm:$0xff] 0.0
      %10531 = vst [vmem:[#allocation2 + $0x38] sm:$0xff] 0.0
      %10532 = vst.msk [vmem:[#allocation2 + $0x40] sm:$0xff] %vm10525, 0.0
      %10533 = vst [vmem:[#allocation2 + $0x48] sm:$0xff] 0.0
      %10534 = vst [vmem:[#allocation2 + $0x50] sm:$0xff] 0.0
      %10535 = vst.msk [vmem:[#allocation2 + $0x58] sm:$0xff] %vm10525, 0.0
      %10536 = vrot.lane.b32.xlu0 %v459, 17
      %v10537 = vpop.permute.xlu0 %10536
      %10538 = vrot.lane.b32.xlu0 %v461, 17
      %v10539 = vpop.permute.xlu0 %10538
      %10540 = vrot.lane.b32.xlu0 %v465, 17
      %v10541 = vpop.permute.xlu0 %10540
      %10542 = vrot.lane.b32.xlu0 %v467, 17
      %v10543 = vpop.permute.xlu0 %10542
      %10544 = vrot.lane.b32.xlu0 %v471, 17
      %v10545 = vpop.permute.xlu0 %10544
      %10546 = vrot.lane.b32.xlu0 %v473, 17
      %v10547 = vpop.permute.xlu0 %10546
      %10548 = vrot.lane.b32.xlu0 %v477, 17
      %v10549 = vpop.permute.xlu0 %10548
      %10550 = vrot.lane.b32.xlu0 %v479, 17
      %v10551 = vpop.permute.xlu0 %10550
      %vm10552 = vcmask 138240
      %v10553 = vsel %vm10552, %v10537, %v10539
      %v10554 = vsel %vm10552, %v10541, %v10543
      %v10555 = vsel %vm10552, %v10545, %v10547
      %v10556 = vsel %vm10552, %v10549, %v10551
      %vm10569 = vcmask 1047688
      %10570 = vst.msk [vmem:[#allocation2] sm:$0xff] %vm10569, %v10537
      %10571 = vst [vmem:[#allocation2 + $0x8] sm:$0xff] %v10553
      %10572 = vst.msk [vmem:[#allocation2 + $0x10] sm:$0xff] %vm10552, %v10539
      %10573 = vst.msk [vmem:[#allocation2 + $0x18] sm:$0xff] %vm10569, %v10541
      %10574 = vst [vmem:[#allocation2 + $0x20] sm:$0xff] %v10554
      %10575 = vst.msk [vmem:[#allocation2 + $0x28] sm:$0xff] %vm10552, %v10543
      %10576 = vst.msk [vmem:[#allocation2 + $0x30] sm:$0xff] %vm10569, %v10545
      %10577 = vst [vmem:[#allocation2 + $0x38] sm:$0xff] %v10555
      %10578 = vst.msk [vmem:[#allocation2 + $0x40] sm:$0xff] %vm10552, %v10547
      %10579 = vst.msk [vmem:[#allocation2 + $0x48] sm:$0xff] %vm10569, %v10549
      %10580 = vst [vmem:[#allocation2 + $0x50] sm:$0xff] %v10556
      %10581 = vst.msk [vmem:[#allocation2 + $0x58] sm:$0xff] %vm10552, %v10551
      %v10582 = vadd.s32 %v9130, 128
      %vm10583 = vcmp.lt.s32.totalorder %v9130, 0
      %v10584 = vsub.s32 0, %v9130
      %v10585 = vsel %vm10583, %v10584, %v9130
      %v10586 = vshrl.u32 %v10585, 4
      %v10587 = vand.u32 %v10585, 15
      %v10588 = vsub.s32 0, %v10587
      %v10589 = vsel %vm10583, %v10588, %v10587
      %vm10590 = vcmp.lt.s32.totalorder %v10582, 0
      %v10591 = vsub.s32 0, %v10582
      %v10592 = vsel %vm10590, %v10591, %v10582
      %v10593 = vshrl.u32 %v10592, 4
      %v10594 = vand.u32 %v10592, 15
      %v10595 = vsub.s32 0, %v10594
      %v10596 = vsel %vm10590, %v10595, %v10594
      %vm10597 = vcmp.ne.s32.totalorder %v10589, 0
      %vm10598 = vcmp.ne.s32.totalorder %v10596, 0
      %vm10599 = vcmp.lt.s32.totalorder %v10589, 0
      %vm10600 = vcmp.lt.s32.totalorder %v10596, 0
      %vm10601 = vmand %vm10599, %vm10597
      %vm10602 = vmand %vm10600, %vm10598
      %v10603 = vadd.s32 %v10589, 16
      %v10604 = vadd.s32 %v10596, 16
      %v10605 = vsel %vm10601, %v10603, %v10589
      %v10606 = vsel %vm10602, %v10604, %v10596
      %v10607 = vld [vmem:[%s3] sm:$0xff]
      %v10608 = vld [vmem:[%s3 + $0x8] sm:$0xff]
      %v10609 = vld [vmem:[%s3 + $0x10] sm:$0xff]
      %v10610 = vld [vmem:[%s3 + $0x18] sm:$0xff]
      %v10611 = vld [vmem:[%s4] sm:$0xff]
      %v10612 = vld [vmem:[%s4 + $0x8] sm:$0xff]
      %v10613 = vld [vmem:[%s4 + $0x10] sm:$0xff]
      %v10614 = vld [vmem:[%s4 + $0x18] sm:$0xff]
      %10616 = vset.pattern.permute.xlu0 0
      %10617 = vperm.xlu0 %10616, %v10611
      %v10618 = vpop.permute.xlu0 %10617
      %10620 = vset.pattern.permute.xlu0 0
      %10621 = vperm.xlu0 %10620, %v10612
      %v10622 = vpop.permute.xlu0 %10621
      %10624 = vset.pattern.permute.xlu0 0
      %10625 = vperm.xlu0 %10624, %v10613
      %v10626 = vpop.permute.xlu0 %10625
      %10628 = vset.pattern.permute.xlu0 0
      %10629 = vperm.xlu0 %10628, %v10614
      %v10630 = vpop.permute.xlu0 %10629
      %v10632 = vunpack.c.l.s4 839922192
      %v10633 = vunpack.c.0.s8 %v10632
      %v10634 = vlaneseq
      %v10635 = vshrl.u32 %v10634, 7
      %v10636 = vsub.s32 %v10633, %v10635
      %v10637 = vrot.slane %v10618, %v10636
      %v10639 = vunpack.c.l.s4 1985246804
      %v10640 = vunpack.c.0.s8 %v10639
      %v10641 = vlaneseq
      %v10642 = vshrl.u32 %v10641, 7
      %v10643 = vsub.s32 %v10640, %v10642
      %v10644 = vrot.slane %v10618, %v10643
      %v10646 = vunpack.c.l.s4 839922192
      %v10647 = vunpack.c.0.s8 %v10646
      %v10648 = vlaneseq
      %v10649 = vshrl.u32 %v10648, 7
      %v10650 = vsub.s32 %v10647, %v10649
      %v10651 = vrot.slane %v10622, %v10650
      %v10653 = vunpack.c.l.s4 1985246804
      %v10654 = vunpack.c.0.s8 %v10653
      %v10655 = vlaneseq
      %v10656 = vshrl.u32 %v10655, 7
      %v10657 = vsub.s32 %v10654, %v10656
      %v10658 = vrot.slane %v10622, %v10657
      %v10660 = vunpack.c.l.s4 839922192
      %v10661 = vunpack.c.0.s8 %v10660
      %v10662 = vlaneseq
      %v10663 = vshrl.u32 %v10662, 7
      %v10664 = vsub.s32 %v10661, %v10663
      %v10665 = vrot.slane %v10626, %v10664
      %v10667 = vunpack.c.l.s4 1985246804
      %v10668 = vunpack.c.0.s8 %v10667
      %v10669 = vlaneseq
      %v10670 = vshrl.u32 %v10669, 7
      %v10671 = vsub.s32 %v10668, %v10670
      %v10672 = vrot.slane %v10626, %v10671
      %v10674 = vunpack.c.l.s4 839922192
      %v10675 = vunpack.c.0.s8 %v10674
      %v10676 = vlaneseq
      %v10677 = vshrl.u32 %v10676, 7
      %v10678 = vsub.s32 %v10675, %v10677
      %v10679 = vrot.slane %v10630, %v10678
      %v10681 = vunpack.c.l.s4 1985246804
      %v10682 = vunpack.c.0.s8 %v10681
      %v10683 = vlaneseq
      %v10684 = vshrl.u32 %v10683, 7
      %v10685 = vsub.s32 %v10682, %v10684
      %v10686 = vrot.slane %v10630, %v10685
      %v10695 = vadd.f32 %v10507, %v10637
      %v10696 = vadd.f32 %v10508, %v10644
      %v10697 = vadd.f32 %v10509, %v10651
      %v10698 = vadd.f32 %v10510, %v10658
      %v10699 = vadd.f32 %v10511, %v10665
      %v10700 = vadd.f32 %v10512, %v10672
      %v10701 = vadd.f32 %v10513, %v10679
      %v10702 = vadd.f32 %v10514, %v10686
      %v10703 = vld [vmem:[#allocation2] sm:$0xff]
      %v10704 = vld [vmem:[#allocation2 + $0x8] sm:$0xff]
      %v10705 = vld [vmem:[#allocation2 + $0x18] sm:$0xff]
      %v10706 = vld [vmem:[#allocation2 + $0x20] sm:$0xff]
      %v10707 = vld [vmem:[#allocation2 + $0x30] sm:$0xff]
      %v10708 = vld [vmem:[#allocation2 + $0x38] sm:$0xff]
      %v10709 = vld [vmem:[#allocation2 + $0x48] sm:$0xff]
      %v10710 = vld [vmem:[#allocation2 + $0x50] sm:$0xff]
      %vm10711 = vcmp.ge.s32.totalorder %v10605, 1
      %vm10712 = vcmp.ge.s32.totalorder %v10606, 1
      %v10713 = vsel %vm10711, %v10703, 0.0
      %v10714 = vsel %vm10712, %v10704, 0.0
      %v10715 = vsel %vm10711, %v10705, 0.0
      %v10716 = vsel %vm10712, %v10706, 0.0
      %v10717 = vsel %vm10711, %v10707, 0.0
      %v10718 = vsel %vm10712, %v10708, 0.0
      %v10719 = vsel %vm10711, %v10709, 0.0
      %v10720 = vsel %vm10712, %v10710, 0.0
      %10722 = vset.pattern.permute.xlu0 0
      %10723 = vperm.xlu0 %10722, %v10607
      %v10724 = vpop.permute.xlu0 %10723
      %10727 = vset.pattern.permute.xlu0 0
      %10728 = vperm.xlu0 %10727, %v10608
      %v10729 = vpop.permute.xlu0 %10728
      %10732 = vset.pattern.permute.xlu0 0
      %10733 = vperm.xlu0 %10732, %v10609
      %v10734 = vpop.permute.xlu0 %10733
      %10737 = vset.pattern.permute.xlu0 0
      %10738 = vperm.xlu0 %10737, %v10610
      %v10739 = vpop.permute.xlu0 %10738
      %v10741 = vmul.f32 %v10713, %v10724
      %v10742 = vmul.f32 %v10714, %v10724
      %v10743 = vmul.f32 %v10715, %v10729
      %v10744 = vmul.f32 %v10716, %v10729
      %v10745 = vmul.f32 %v10717, %v10734
      %v10746 = vmul.f32 %v10718, %v10734
      %v10747 = vmul.f32 %v10719, %v10739
      %v10748 = vmul.f32 %v10720, %v10739
      %v10757 = vcombine.low %v10741, %v10742
      %v10758 = vcombine.high %v10741, %v10742
      %v10759 = vcombine.low %v10743, %v10744
      %v10760 = vcombine.high %v10743, %v10744
      %v10761 = vcombine.low %v10745, %v10746
      %v10762 = vcombine.high %v10745, %v10746
      %v10763 = vcombine.low %v10747, %v10748
      %v10764 = vcombine.high %v10747, %v10748
      %v10773 = vadd.f32 %v10695, %v10757
      %v10774 = vadd.f32 %v10696, %v10758
      %v10775 = vadd.f32 %v10697, %v10759
      %v10776 = vadd.f32 %v10698, %v10760
      %v10777 = vadd.f32 %v10699, %v10761
      %v10778 = vadd.f32 %v10700, %v10762
      %v10779 = vadd.f32 %v10701, %v10763
      %v10780 = vadd.f32 %v10702, %v10764
      %v10781 = vld [vmem:[#allocation2] sm:$0xff]
      %v10782 = vld [vmem:[#allocation2 + $0x8] sm:$0xff]
      %v10783 = vld [vmem:[#allocation2 + $0x10] sm:$0xff]
      %v10784 = vld [vmem:[#allocation2 + $0x18] sm:$0xff]
      %v10785 = vld [vmem:[#allocation2 + $0x20] sm:$0xff]
      %v10786 = vld [vmem:[#allocation2 + $0x28] sm:$0xff]
      %v10787 = vld [vmem:[#allocation2 + $0x30] sm:$0xff]
      %v10788 = vld [vmem:[#allocation2 + $0x38] sm:$0xff]
      %v10789 = vld [vmem:[#allocation2 + $0x40] sm:$0xff]
      %v10790 = vld [vmem:[#allocation2 + $0x48] sm:$0xff]
      %v10791 = vld [vmem:[#allocation2 + $0x50] sm:$0xff]
      %v10792 = vld [vmem:[#allocation2 + $0x58] sm:$0xff]
      %10793 = vset.pattern.permute.xlu0 1
      %10794 = vperm.xlu0 %10793, %v10607
      %v10795 = vpop.permute.xlu0 %10794
      %10797 = vset.pattern.permute.xlu0 1
      %10798 = vperm.xlu0 %10797, %v10608
      %v10799 = vpop.permute.xlu0 %10798
      %10801 = vset.pattern.permute.xlu0 1
      %10802 = vperm.xlu0 %10801, %v10609
      %v10803 = vpop.permute.xlu0 %10802
      %10805 = vset.pattern.permute.xlu0 1
      %10806 = vperm.xlu0 %10805, %v10610
      %v10807 = vpop.permute.xlu0 %10806
      %v10809 = vmul.f32 %v10781, %v10795
      %v10810 = vmul.f32 %v10782, %v10795
      %v10811 = vmul.f32 %v10783, %v10795
      %v10812 = vmul.f32 %v10784, %v10799
      %v10813 = vmul.f32 %v10785, %v10799
      %v10814 = vmul.f32 %v10786, %v10799
      %v10815 = vmul.f32 %v10787, %v10803
      %v10816 = vmul.f32 %v10788, %v10803
      %v10817 = vmul.f32 %v10789, %v10803
      %v10818 = vmul.f32 %v10790, %v10807
      %v10819 = vmul.f32 %v10791, %v10807
      %v10820 = vmul.f32 %v10792, %v10807
      %v10833 = vcombine.low %v10809, %v10810
      %v10834 = vcombine.high %v10809, %v10810
      %v10835 = vcombine.high %v10811, %v10811
      %v10836 = vcombine.low %v10812, %v10813
      %v10837 = vcombine.high %v10812, %v10813
      %v10838 = vcombine.high %v10814, %v10814
      %v10839 = vcombine.low %v10815, %v10816
      %v10840 = vcombine.high %v10815, %v10816
      %v10841 = vcombine.high %v10817, %v10817
      %v10842 = vcombine.low %v10818, %v10819
      %v10843 = vcombine.high %v10818, %v10819
      %v10844 = vcombine.high %v10820, %v10820
      %10845 = vrot.lane.b32.xlu0 %v10833, 127
      %v10846 = vpop.permute.xlu0 %10845
      %10847 = vrot.lane.b32.xlu0 %v10811, 127
      %v10848 = vpop.permute.xlu0 %10847
      %10849 = vrot.lane.b32.xlu0 %v10834, 127
      %v10850 = vpop.permute.xlu0 %10849
      %10851 = vrot.lane.b32.xlu0 %v10835, 127
      %v10852 = vpop.permute.xlu0 %10851
      %10853 = vrot.lane.b32.xlu0 %v10836, 127
      %v10854 = vpop.permute.xlu0 %10853
      %10855 = vrot.lane.b32.xlu0 %v10814, 127
      %v10856 = vpop.permute.xlu0 %10855
      %10857 = vrot.lane.b32.xlu0 %v10837, 127
      %v10858 = vpop.permute.xlu0 %10857
      %10859 = vrot.lane.b32.xlu0 %v10838, 127
      %v10860 = vpop.permute.xlu0 %10859
      %10861 = vrot.lane.b32.xlu0 %v10839, 127
      %v10862 = vpop.permute.xlu0 %10861
      %10863 = vrot.lane.b32.xlu0 %v10817, 127
      %v10864 = vpop.permute.xlu0 %10863
      %10865 = vrot.lane.b32.xlu0 %v10840, 127
      %v10866 = vpop.permute.xlu0 %10865
      %10867 = vrot.lane.b32.xlu0 %v10841, 127
      %v10868 = vpop.permute.xlu0 %10867
      %10869 = vrot.lane.b32.xlu0 %v10842, 127
      %v10870 = vpop.permute.xlu0 %10869
      %10871 = vrot.lane.b32.xlu0 %v10820, 127
      %v10872 = vpop.permute.xlu0 %10871
      %10873 = vrot.lane.b32.xlu0 %v10843, 127
      %v10874 = vpop.permute.xlu0 %10873
      %10875 = vrot.lane.b32.xlu0 %v10844, 127
      %v10876 = vpop.permute.xlu0 %10875
      %v10877 = vrot.slane %v10846, 4
      %v10878 = vrot.slane %v10848, 4
      %v10879 = vrot.slane %v10850, 4
      %v10880 = vrot.slane %v10852, 4
      %v10881 = vrot.slane %v10854, 4
      %v10882 = vrot.slane %v10856, 4
      %v10883 = vrot.slane %v10858, 4
      %v10884 = vrot.slane %v10860, 4
      %v10885 = vrot.slane %v10862, 4
      %v10886 = vrot.slane %v10864, 4
      %v10887 = vrot.slane %v10866, 4
      %v10888 = vrot.slane %v10868, 4
      %v10889 = vrot.slane %v10870, 4
      %v10890 = vrot.slane %v10872, 4
      %v10891 = vrot.slane %v10874, 4
      %v10892 = vrot.slane %v10876, 4
      %vm10893 = vcmask 1043456
      %v10894 = vsel %vm10893, %v10877, %v10878
      %vm10895 = vcmask 1039360
      %v10896 = vsel %vm10895, %v10846, %v10894
      %v10897 = vsel %vm10893, %v10879, %v10880
      %v10898 = vsel %vm10895, %v10850, %v10897
      %v10899 = vsel %vm10893, %v10881, %v10882
      %v10900 = vsel %vm10895, %v10854, %v10899
      %v10901 = vsel %vm10893, %v10883, %v10884
      %v10902 = vsel %vm10895, %v10858, %v10901
      %v10903 = vsel %vm10893, %v10885, %v10886
      %v10904 = vsel %vm10895, %v10862, %v10903
      %v10905 = vsel %vm10893, %v10887, %v10888
      %v10906 = vsel %vm10895, %v10866, %v10905
      %v10907 = vsel %vm10893, %v10889, %v10890
      %v10908 = vsel %vm10895, %v10870, %v10907
      %v10909 = vsel %vm10893, %v10891, %v10892
      %v10910 = vsel %vm10895, %v10874, %v10909
      %v10919 = vadd.f32 %v10773, %v10896
      %v10920 = vadd.f32 %v10774, %v10898
      %v10921 = vadd.f32 %v10775, %v10900
      %v10922 = vadd.f32 %v10776, %v10902
      %v10923 = vadd.f32 %v10777, %v10904
      %v10924 = vadd.f32 %v10778, %v10906
      %v10925 = vadd.f32 %v10779, %v10908
      %v10926 = vadd.f32 %v10780, %v10910
      %v10927 = vld [vmem:[#allocation2] sm:$0xff]
      %v10928 = vld [vmem:[#allocation2 + $0x8] sm:$0xff]
      %v10929 = vld [vmem:[#allocation2 + $0x10] sm:$0xff]
      %v10930 = vld [vmem:[#allocation2 + $0x18] sm:$0xff]
      %v10931 = vld [vmem:[#allocation2 + $0x20] sm:$0xff]
      %v10932 = vld [vmem:[#allocation2 + $0x28] sm:$0xff]
      %v10933 = vld [vmem:[#allocation2 + $0x30] sm:$0xff]
      %v10934 = vld [vmem:[#allocation2 + $0x38] sm:$0xff]
      %v10935 = vld [vmem:[#allocation2 + $0x40] sm:$0xff]
      %v10936 = vld [vmem:[#allocation2 + $0x48] sm:$0xff]
      %v10937 = vld [vmem:[#allocation2 + $0x50] sm:$0xff]
      %v10938 = vld [vmem:[#allocation2 + $0x58] sm:$0xff]
      %vm10939 = vcmp.le.s32.totalorder %v10605, 14
      %vm10940 = vcmp.le.s32.totalorder %v10606, 14
      %10953 = vrot.lane.b32.xlu0 %v10927, 126
      %v10954 = vpop.permute.xlu0 %10953
      %10955 = vrot.lane.b32.xlu0 %v10928, 126
      %v10956 = vpop.permute.xlu0 %10955
      %10957 = vrot.lane.b32.xlu0 %v10929, 126
      %v10958 = vpop.permute.xlu0 %10957
      %10959 = vrot.lane.b32.xlu0 %v10930, 126
      %v10960 = vpop.permute.xlu0 %10959
      %10961 = vrot.lane.b32.xlu0 %v10931, 126
      %v10962 = vpop.permute.xlu0 %10961
      %10963 = vrot.lane.b32.xlu0 %v10932, 126
      %v10964 = vpop.permute.xlu0 %10963
      %10965 = vrot.lane.b32.xlu0 %v10933, 126
      %v10966 = vpop.permute.xlu0 %10965
      %10967 = vrot.lane.b32.xlu0 %v10934, 126
      %v10968 = vpop.permute.xlu0 %10967
      %10969 = vrot.lane.b32.xlu0 %v10935, 126
      %v10970 = vpop.permute.xlu0 %10969
      %10971 = vrot.lane.b32.xlu0 %v10936, 126
      %v10972 = vpop.permute.xlu0 %10971
      %10973 = vrot.lane.b32.xlu0 %v10937, 126
      %v10974 = vpop.permute.xlu0 %10973
      %10975 = vrot.lane.b32.xlu0 %v10938, 126
      %v10976 = vpop.permute.xlu0 %10975
      %vm10977 = vcmask 1031168
      %v10978 = vsel %vm10977, %v10954, %v10956
      %v10979 = vsel %vm10977, %v10956, %v10958
      %v10980 = vsel %vm10977, %v10960, %v10962
      %v10981 = vsel %vm10977, %v10962, %v10964
      %v10982 = vsel %vm10977, %v10966, %v10968
      %v10983 = vsel %vm10977, %v10968, %v10970
      %v10984 = vsel %vm10977, %v10972, %v10974
      %v10985 = vsel %vm10977, %v10974, %v10976
      %v10994 = vsel %vm10939, %v10978, 0.0
      %v10995 = vsel %vm10940, %v10979, 0.0
      %v10996 = vsel %vm10939, %v10980, 0.0
      %v10997 = vsel %vm10940, %v10981, 0.0
      %v10998 = vsel %vm10939, %v10982, 0.0
      %v10999 = vsel %vm10940, %v10983, 0.0
      %v11000 = vsel %vm10939, %v10984, 0.0
      %v11001 = vsel %vm10940, %v10985, 0.0
      %11002 = vset.pattern.permute.xlu0 2
      %11003 = vperm.xlu0 %11002, %v10607
      %v11004 = vpop.permute.xlu0 %11003
      %11006 = vset.pattern.permute.xlu0 2
      %11007 = vperm.xlu0 %11006, %v10608
      %v11008 = vpop.permute.xlu0 %11007
      %11010 = vset.pattern.permute.xlu0 2
      %11011 = vperm.xlu0 %11010, %v10609
      %v11012 = vpop.permute.xlu0 %11011
      %11014 = vset.pattern.permute.xlu0 2
      %11015 = vperm.xlu0 %11014, %v10610
      %v11016 = vpop.permute.xlu0 %11015
      %v11018 = vmul.f32 %v10994, %v11004
      %v11019 = vmul.f32 %v10995, %v11004
      %v11020 = vmul.f32 %v10996, %v11008
      %v11021 = vmul.f32 %v10997, %v11008
      %v11022 = vmul.f32 %v10998, %v11012
      %v11023 = vmul.f32 %v10999, %v11012
      %v11024 = vmul.f32 %v11000, %v11016
      %v11025 = vmul.f32 %v11001, %v11016
      %v11034 = vcombine.low %v11018, %v11019
      %v11035 = vcombine.high %v11018, %v11019
      %v11036 = vcombine.low %v11020, %v11021
      %v11037 = vcombine.high %v11020, %v11021
      %v11038 = vcombine.low %v11022, %v11023
      %v11039 = vcombine.high %v11022, %v11023
      %v11040 = vcombine.low %v11024, %v11025
      %v11041 = vcombine.high %v11024, %v11025
      %v11050 = vadd.f32 %v10919, %v11034
      %v11051 = vadd.f32 %v10920, %v11035
      %v11052 = vadd.f32 %v10921, %v11036
      %v11053 = vadd.f32 %v10922, %v11037
      %v11054 = vadd.f32 %v10923, %v11038
      %v11055 = vadd.f32 %v10924, %v11039
      %v11056 = vadd.f32 %v10925, %v11040
      %v11057 = vadd.f32 %v10926, %v11041
      %v11058 = vld [vmem:[#allocation2] sm:$0xff]
      %v11059 = vld [vmem:[#allocation2 + $0x8] sm:$0xff]
      %v11060 = vld [vmem:[#allocation2 + $0x10] sm:$0xff]
      %v11061 = vld [vmem:[#allocation2 + $0x18] sm:$0xff]
      %v11062 = vld [vmem:[#allocation2 + $0x20] sm:$0xff]
      %v11063 = vld [vmem:[#allocation2 + $0x28] sm:$0xff]
      %v11064 = vld [vmem:[#allocation2 + $0x30] sm:$0xff]
      %v11065 = vld [vmem:[#allocation2 + $0x38] sm:$0xff]
      %v11066 = vld [vmem:[#allocation2 + $0x40] sm:$0xff]
      %v11067 = vld [vmem:[#allocation2 + $0x48] sm:$0xff]
      %v11068 = vld [vmem:[#allocation2 + $0x50] sm:$0xff]
      %v11069 = vld [vmem:[#allocation2 + $0x58] sm:$0xff]
      %11082 = vrot.lane.b32.xlu0 %v11058, 112
      %v11083 = vpop.permute.xlu0 %11082
      %11084 = vrot.lane.b32.xlu0 %v11059, 112
      %v11085 = vpop.permute.xlu0 %11084
      %11086 = vrot.lane.b32.xlu0 %v11060, 112
      %v11087 = vpop.permute.xlu0 %11086
      %11088 = vrot.lane.b32.xlu0 %v11061, 112
      %v11089 = vpop.permute.xlu0 %11088
      %11090 = vrot.lane.b32.xlu0 %v11062, 112
      %v11091 = vpop.permute.xlu0 %11090
      %11092 = vrot.lane.b32.xlu0 %v11063, 112
      %v11093 = vpop.permute.xlu0 %11092
      %11094 = vrot.lane.b32.xlu0 %v11064, 112
      %v11095 = vpop.permute.xlu0 %11094
      %11096 = vrot.lane.b32.xlu0 %v11065, 112
      %v11097 = vpop.permute.xlu0 %11096
      %11098 = vrot.lane.b32.xlu0 %v11066, 112
      %v11099 = vpop.permute.xlu0 %11098
      %11100 = vrot.lane.b32.xlu0 %v11067, 112
      %v11101 = vpop.permute.xlu0 %11100
      %11102 = vrot.lane.b32.xlu0 %v11068, 112
      %v11103 = vpop.permute.xlu0 %11102
      %11104 = vrot.lane.b32.xlu0 %v11069, 112
      %v11105 = vpop.permute.xlu0 %11104
      %vm11106 = vcmask 916480
      %v11107 = vsel %vm11106, %v11083, %v11085
      %v11108 = vsel %vm11106, %v11085, %v11087
      %v11109 = vsel %vm11106, %v11089, %v11091
      %v11110 = vsel %vm11106, %v11091, %v11093
      %v11111 = vsel %vm11106, %v11095, %v11097
      %v11112 = vsel %vm11106, %v11097, %v11099
      %v11113 = vsel %vm11106, %v11101, %v11103
      %v11114 = vsel %vm11106, %v11103, %v11105
      %v11123 = vsel %vm10711, %v11107, 0.0
      %v11124 = vsel %vm10712, %v11108, 0.0
      %v11125 = vsel %vm10711, %v11109, 0.0
      %v11126 = vsel %vm10712, %v11110, 0.0
      %v11127 = vsel %vm10711, %v11111, 0.0
      %v11128 = vsel %vm10712, %v11112, 0.0
      %v11129 = vsel %vm10711, %v11113, 0.0
      %v11130 = vsel %vm10712, %v11114, 0.0
      %11131 = vset.pattern.permute.xlu0 3
      %11132 = vperm.xlu0 %11131, %v10607
      %v11133 = vpop.permute.xlu0 %11132
      %11135 = vset.pattern.permute.xlu0 3
      %11136 = vperm.xlu0 %11135, %v10608
      %v11137 = vpop.permute.xlu0 %11136
      %11139 = vset.pattern.permute.xlu0 3
      %11140 = vperm.xlu0 %11139, %v10609
      %v11141 = vpop.permute.xlu0 %11140
      %11143 = vset.pattern.permute.xlu0 3
      %11144 = vperm.xlu0 %11143, %v10610
      %v11145 = vpop.permute.xlu0 %11144
      %v11147 = vmul.f32 %v11123, %v11133
      %v11148 = vmul.f32 %v11124, %v11133
      %v11149 = vmul.f32 %v11125, %v11137
      %v11150 = vmul.f32 %v11126, %v11137
      %v11151 = vmul.f32 %v11127, %v11141
      %v11152 = vmul.f32 %v11128, %v11141
      %v11153 = vmul.f32 %v11129, %v11145
      %v11154 = vmul.f32 %v11130, %v11145
      %v11163 = vcombine.low %v11147, %v11148
      %v11164 = vcombine.high %v11147, %v11148
      %v11165 = vcombine.low %v11149, %v11150
      %v11166 = vcombine.high %v11149, %v11150
      %v11167 = vcombine.low %v11151, %v11152
      %v11168 = vcombine.high %v11151, %v11152
      %v11169 = vcombine.low %v11153, %v11154
      %v11170 = vcombine.high %v11153, %v11154
      %v11179 = vadd.f32 %v11050, %v11163
      %v11180 = vadd.f32 %v11051, %v11164
      %v11181 = vadd.f32 %v11052, %v11165
      %v11182 = vadd.f32 %v11053, %v11166
      %v11183 = vadd.f32 %v11054, %v11167
      %v11184 = vadd.f32 %v11055, %v11168
      %v11185 = vadd.f32 %v11056, %v11169
      %v11186 = vadd.f32 %v11057, %v11170
      %v11187 = vld [vmem:[#allocation2] sm:$0xff]
      %v11188 = vld [vmem:[#allocation2 + $0x8] sm:$0xff]
      %v11189 = vld [vmem:[#allocation2 + $0x10] sm:$0xff]
      %v11190 = vld [vmem:[#allocation2 + $0x18] sm:$0xff]
      %v11191 = vld [vmem:[#allocation2 + $0x20] sm:$0xff]
      %v11192 = vld [vmem:[#allocation2 + $0x28] sm:$0xff]
      %v11193 = vld [vmem:[#allocation2 + $0x30] sm:$0xff]
      %v11194 = vld [vmem:[#allocation2 + $0x38] sm:$0xff]
      %v11195 = vld [vmem:[#allocation2 + $0x40] sm:$0xff]
      %v11196 = vld [vmem:[#allocation2 + $0x48] sm:$0xff]
      %v11197 = vld [vmem:[#allocation2 + $0x50] sm:$0xff]
      %v11198 = vld [vmem:[#allocation2 + $0x58] sm:$0xff]
      %11199 = vset.pattern.permute.xlu0 4
      %11200 = vperm.xlu0 %11199, %v10607
      %v11201 = vpop.permute.xlu0 %11200
      %11203 = vset.pattern.permute.xlu0 4
      %11204 = vperm.xlu0 %11203, %v10608
      %v11205 = vpop.permute.xlu0 %11204
      %11207 = vset.pattern.permute.xlu0 4
      %11208 = vperm.xlu0 %11207, %v10609
      %v11209 = vpop.permute.xlu0 %11208
      %11211 = vset.pattern.permute.xlu0 4
      %11212 = vperm.xlu0 %11211, %v10610
      %v11213 = vpop.permute.xlu0 %11212
      %v11215 = vmul.f32 %v11187, %v11201
      %v11216 = vmul.f32 %v11188, %v11201
      %v11217 = vmul.f32 %v11189, %v11201
      %v11218 = vmul.f32 %v11190, %v11205
      %v11219 = vmul.f32 %v11191, %v11205
      %v11220 = vmul.f32 %v11192, %v11205
      %v11221 = vmul.f32 %v11193, %v11209
      %v11222 = vmul.f32 %v11194, %v11209
      %v11223 = vmul.f32 %v11195, %v11209
      %v11224 = vmul.f32 %v11196, %v11213
      %v11225 = vmul.f32 %v11197, %v11213
      %v11226 = vmul.f32 %v11198, %v11213
      %v11239 = vcombine.low %v11215, %v11216
      %v11240 = vcombine.high %v11215, %v11216
      %v11241 = vcombine.high %v11217, %v11217
      %v11242 = vcombine.low %v11218, %v11219
      %v11243 = vcombine.high %v11218, %v11219
      %v11244 = vcombine.high %v11220, %v11220
      %v11245 = vcombine.low %v11221, %v11222
      %v11246 = vcombine.high %v11221, %v11222
      %v11247 = vcombine.high %v11223, %v11223
      %v11248 = vcombine.low %v11224, %v11225
      %v11249 = vcombine.high %v11224, %v11225
      %v11250 = vcombine.high %v11226, %v11226
      %11251 = vrot.lane.b32.xlu0 %v11239, 111
      %v11252 = vpop.permute.xlu0 %11251
      %11253 = vrot.lane.b32.xlu0 %v11217, 111
      %v11254 = vpop.permute.xlu0 %11253
      %11255 = vrot.lane.b32.xlu0 %v11240, 111
      %v11256 = vpop.permute.xlu0 %11255
      %11257 = vrot.lane.b32.xlu0 %v11241, 111
      %v11258 = vpop.permute.xlu0 %11257
      %11259 = vrot.lane.b32.xlu0 %v11242, 111
      %v11260 = vpop.permute.xlu0 %11259
      %11261 = vrot.lane.b32.xlu0 %v11220, 111
      %v11262 = vpop.permute.xlu0 %11261
      %11263 = vrot.lane.b32.xlu0 %v11243, 111
      %v11264 = vpop.permute.xlu0 %11263
      %11265 = vrot.lane.b32.xlu0 %v11244, 111
      %v11266 = vpop.permute.xlu0 %11265
      %11267 = vrot.lane.b32.xlu0 %v11245, 111
      %v11268 = vpop.permute.xlu0 %11267
      %11269 = vrot.lane.b32.xlu0 %v11223, 111
      %v11270 = vpop.permute.xlu0 %11269
      %11271 = vrot.lane.b32.xlu0 %v11246, 111
      %v11272 = vpop.permute.xlu0 %11271
      %11273 = vrot.lane.b32.xlu0 %v11247, 111
      %v11274 = vpop.permute.xlu0 %11273
      %11275 = vrot.lane.b32.xlu0 %v11248, 111
      %v11276 = vpop.permute.xlu0 %11275
      %11277 = vrot.lane.b32.xlu0 %v11226, 111
      %v11278 = vpop.permute.xlu0 %11277
      %11279 = vrot.lane.b32.xlu0 %v11249, 111
      %v11280 = vpop.permute.xlu0 %11279
      %11281 = vrot.lane.b32.xlu0 %v11250, 111
      %v11282 = vpop.permute.xlu0 %11281
      %v11283 = vrot.slane %v11252, 4
      %v11284 = vrot.slane %v11254, 4
      %v11285 = vrot.slane %v11256, 4
      %v11286 = vrot.slane %v11258, 4
      %v11287 = vrot.slane %v11260, 4
      %v11288 = vrot.slane %v11262, 4
      %v11289 = vrot.slane %v11264, 4
      %v11290 = vrot.slane %v11266, 4
      %v11291 = vrot.slane %v11268, 4
      %v11292 = vrot.slane %v11270, 4
      %v11293 = vrot.slane %v11272, 4
      %v11294 = vrot.slane %v11274, 4
      %v11295 = vrot.slane %v11276, 4
      %v11296 = vrot.slane %v11278, 4
      %v11297 = vrot.slane %v11280, 4
      %v11298 = vrot.slane %v11282, 4
      %v11299 = vsel %vm10893, %v11283, %v11284
      %vm11300 = vcmask 908288
      %v11301 = vsel %vm11300, %v11252, %v11299
      %v11302 = vsel %vm10893, %v11285, %v11286
      %v11303 = vsel %vm11300, %v11256, %v11302
      %v11304 = vsel %vm10893, %v11287, %v11288
      %v11305 = vsel %vm11300, %v11260, %v11304
      %v11306 = vsel %vm10893, %v11289, %v11290
      %v11307 = vsel %vm11300, %v11264, %v11306
      %v11308 = vsel %vm10893, %v11291, %v11292
      %v11309 = vsel %vm11300, %v11268, %v11308
      %v11310 = vsel %vm10893, %v11293, %v11294
      %v11311 = vsel %vm11300, %v11272, %v11310
      %v11312 = vsel %vm10893, %v11295, %v11296
      %v11313 = vsel %vm11300, %v11276, %v11312
      %v11314 = vsel %vm10893, %v11297, %v11298
      %v11315 = vsel %vm11300, %v11280, %v11314
      %v11324 = vadd.f32 %v11179, %v11301
      %v11325 = vadd.f32 %v11180, %v11303
      %v11326 = vadd.f32 %v11181, %v11305
      %v11327 = vadd.f32 %v11182, %v11307
      %v11328 = vadd.f32 %v11183, %v11309
      %v11329 = vadd.f32 %v11184, %v11311
      %v11330 = vadd.f32 %v11185, %v11313
      %v11331 = vadd.f32 %v11186, %v11315
      %v11332 = vld [vmem:[#allocation2] sm:$0xff]
      %v11333 = vld [vmem:[#allocation2 + $0x8] sm:$0xff]
      %v11334 = vld [vmem:[#allocation2 + $0x10] sm:$0xff]
      %v11335 = vld [vmem:[#allocation2 + $0x18] sm:$0xff]
      %v11336 = vld [vmem:[#allocation2 + $0x20] sm:$0xff]
      %v11337 = vld [vmem:[#allocation2 + $0x28] sm:$0xff]
      %v11338 = vld [vmem:[#allocation2 + $0x30] sm:$0xff]
      %v11339 = vld [vmem:[#allocation2 + $0x38] sm:$0xff]
      %v11340 = vld [vmem:[#allocation2 + $0x40] sm:$0xff]
      %v11341 = vld [vmem:[#allocation2 + $0x48] sm:$0xff]
      %v11342 = vld [vmem:[#allocation2 + $0x50] sm:$0xff]
      %v11343 = vld [vmem:[#allocation2 + $0x58] sm:$0xff]
      %11356 = vrot.lane.b32.xlu0 %v11332, 110
      %v11357 = vpop.permute.xlu0 %11356
      %11358 = vrot.lane.b32.xlu0 %v11333, 110
      %v11359 = vpop.permute.xlu0 %11358
      %11360 = vrot.lane.b32.xlu0 %v11334, 110
      %v11361 = vpop.permute.xlu0 %11360
      %11362 = vrot.lane.b32.xlu0 %v11335, 110
      %v11363 = vpop.permute.xlu0 %11362
      %11364 = vrot.lane.b32.xlu0 %v11336, 110
      %v11365 = vpop.permute.xlu0 %11364
      %11366 = vrot.lane.b32.xlu0 %v11337, 110
      %v11367 = vpop.permute.xlu0 %11366
      %11368 = vrot.lane.b32.xlu0 %v11338, 110
      %v11369 = vpop.permute.xlu0 %11368
      %11370 = vrot.lane.b32.xlu0 %v11339, 110
      %v11371 = vpop.permute.xlu0 %11370
      %11372 = vrot.lane.b32.xlu0 %v11340, 110
      %v11373 = vpop.permute.xlu0 %11372
      %11374 = vrot.lane.b32.xlu0 %v11341, 110
      %v11375 = vpop.permute.xlu0 %11374
      %11376 = vrot.lane.b32.xlu0 %v11342, 110
      %v11377 = vpop.permute.xlu0 %11376
      %11378 = vrot.lane.b32.xlu0 %v11343, 110
      %v11379 = vpop.permute.xlu0 %11378
      %vm11380 = vcmask 900096
      %v11381 = vsel %vm11380, %v11357, %v11359
      %v11382 = vsel %vm11380, %v11359, %v11361
      %v11383 = vsel %vm11380, %v11363, %v11365
      %v11384 = vsel %vm11380, %v11365, %v11367
      %v11385 = vsel %vm11380, %v11369, %v11371
      %v11386 = vsel %vm11380, %v11371, %v11373
      %v11387 = vsel %vm11380, %v11375, %v11377
      %v11388 = vsel %vm11380, %v11377, %v11379
      %v11397 = vsel %vm10939, %v11381, 0.0
      %v11398 = vsel %vm10940, %v11382, 0.0
      %v11399 = vsel %vm10939, %v11383, 0.0
      %v11400 = vsel %vm10940, %v11384, 0.0
      %v11401 = vsel %vm10939, %v11385, 0.0
      %v11402 = vsel %vm10940, %v11386, 0.0
      %v11403 = vsel %vm10939, %v11387, 0.0
      %v11404 = vsel %vm10940, %v11388, 0.0
      %11405 = vset.pattern.permute.xlu0 5
      %11406 = vperm.xlu0 %11405, %v10607
      %v11407 = vpop.permute.xlu0 %11406
      %11409 = vset.pattern.permute.xlu0 5
      %11410 = vperm.xlu0 %11409, %v10608
      %v11411 = vpop.permute.xlu0 %11410
      %11413 = vset.pattern.permute.xlu0 5
      %11414 = vperm.xlu0 %11413, %v10609
      %v11415 = vpop.permute.xlu0 %11414
      %11417 = vset.pattern.permute.xlu0 5
      %11418 = vperm.xlu0 %11417, %v10610
      %v11419 = vpop.permute.xlu0 %11418
      %v11421 = vmul.f32 %v11397, %v11407
      %v11422 = vmul.f32 %v11398, %v11407
      %v11423 = vmul.f32 %v11399, %v11411
      %v11424 = vmul.f32 %v11400, %v11411
      %v11425 = vmul.f32 %v11401, %v11415
      %v11426 = vmul.f32 %v11402, %v11415
      %v11427 = vmul.f32 %v11403, %v11419
      %v11428 = vmul.f32 %v11404, %v11419
      %v11437 = vcombine.low %v11421, %v11422
      %v11438 = vcombine.high %v11421, %v11422
      %v11439 = vcombine.low %v11423, %v11424
      %v11440 = vcombine.high %v11423, %v11424
      %v11441 = vcombine.low %v11425, %v11426
      %v11442 = vcombine.high %v11425, %v11426
      %v11443 = vcombine.low %v11427, %v11428
      %v11444 = vcombine.high %v11427, %v11428
      %v11453 = vadd.f32 %v11324, %v11437
      %v11454 = vadd.f32 %v11325, %v11438
      %v11455 = vadd.f32 %v11326, %v11439
      %v11456 = vadd.f32 %v11327, %v11440
      %v11457 = vadd.f32 %v11328, %v11441
      %v11458 = vadd.f32 %v11329, %v11442
      %v11459 = vadd.f32 %v11330, %v11443
      %v11460 = vadd.f32 %v11331, %v11444
      %v11461 = vld [vmem:[#allocation2] sm:$0xff]
      %v11462 = vld [vmem:[#allocation2 + $0x8] sm:$0xff]
      %v11463 = vld [vmem:[#allocation2 + $0x10] sm:$0xff]
      %v11464 = vld [vmem:[#allocation2 + $0x18] sm:$0xff]
      %v11465 = vld [vmem:[#allocation2 + $0x20] sm:$0xff]
      %v11466 = vld [vmem:[#allocation2 + $0x28] sm:$0xff]
      %v11467 = vld [vmem:[#allocation2 + $0x30] sm:$0xff]
      %v11468 = vld [vmem:[#allocation2 + $0x38] sm:$0xff]
      %v11469 = vld [vmem:[#allocation2 + $0x40] sm:$0xff]
      %v11470 = vld [vmem:[#allocation2 + $0x48] sm:$0xff]
      %v11471 = vld [vmem:[#allocation2 + $0x50] sm:$0xff]
      %v11472 = vld [vmem:[#allocation2 + $0x58] sm:$0xff]
      %11485 = vrot.lane.b32.xlu0 %v11461, 96
      %v11486 = vpop.permute.xlu0 %11485
      %11487 = vrot.lane.b32.xlu0 %v11462, 96
      %v11488 = vpop.permute.xlu0 %11487
      %11489 = vrot.lane.b32.xlu0 %v11463, 96
      %v11490 = vpop.permute.xlu0 %11489
      %11491 = vrot.lane.b32.xlu0 %v11464, 96
      %v11492 = vpop.permute.xlu0 %11491
      %11493 = vrot.lane.b32.xlu0 %v11465, 96
      %v11494 = vpop.permute.xlu0 %11493
      %11495 = vrot.lane.b32.xlu0 %v11466, 96
      %v11496 = vpop.permute.xlu0 %11495
      %11497 = vrot.lane.b32.xlu0 %v11467, 96
      %v11498 = vpop.permute.xlu0 %11497
      %11499 = vrot.lane.b32.xlu0 %v11468, 96
      %v11500 = vpop.permute.xlu0 %11499
      %11501 = vrot.lane.b32.xlu0 %v11469, 96
      %v11502 = vpop.permute.xlu0 %11501
      %11503 = vrot.lane.b32.xlu0 %v11470, 96
      %v11504 = vpop.permute.xlu0 %11503
      %11505 = vrot.lane.b32.xlu0 %v11471, 96
      %v11506 = vpop.permute.xlu0 %11505
      %11507 = vrot.lane.b32.xlu0 %v11472, 96
      %v11508 = vpop.permute.xlu0 %11507
      %vm11509 = vcmask 785408
      %v11510 = vsel %vm11509, %v11486, %v11488
      %v11511 = vsel %vm11509, %v11488, %v11490
      %v11512 = vsel %vm11509, %v11492, %v11494
      %v11513 = vsel %vm11509, %v11494, %v11496
      %v11514 = vsel %vm11509, %v11498, %v11500
      %v11515 = vsel %vm11509, %v11500, %v11502
      %v11516 = vsel %vm11509, %v11504, %v11506
      %v11517 = vsel %vm11509, %v11506, %v11508
      %v11526 = vsel %vm10711, %v11510, 0.0
      %v11527 = vsel %vm10712, %v11511, 0.0
      %v11528 = vsel %vm10711, %v11512, 0.0
      %v11529 = vsel %vm10712, %v11513, 0.0
      %v11530 = vsel %vm10711, %v11514, 0.0
      %v11531 = vsel %vm10712, %v11515, 0.0
      %v11532 = vsel %vm10711, %v11516, 0.0
      %v11533 = vsel %vm10712, %v11517, 0.0
      %11534 = vset.pattern.permute.xlu0 6
      %11535 = vperm.xlu0 %11534, %v10607
      %v11536 = vpop.permute.xlu0 %11535
      %11538 = vset.pattern.permute.xlu0 6
      %11539 = vperm.xlu0 %11538, %v10608
      %v11540 = vpop.permute.xlu0 %11539
      %11542 = vset.pattern.permute.xlu0 6
      %11543 = vperm.xlu0 %11542, %v10609
      %v11544 = vpop.permute.xlu0 %11543
      %11546 = vset.pattern.permute.xlu0 6
      %11547 = vperm.xlu0 %11546, %v10610
      %v11548 = vpop.permute.xlu0 %11547
      %v11550 = vmul.f32 %v11526, %v11536
      %v11551 = vmul.f32 %v11527, %v11536
      %v11552 = vmul.f32 %v11528, %v11540
      %v11553 = vmul.f32 %v11529, %v11540
      %v11554 = vmul.f32 %v11530, %v11544
      %v11555 = vmul.f32 %v11531, %v11544
      %v11556 = vmul.f32 %v11532, %v11548
      %v11557 = vmul.f32 %v11533, %v11548
      %v11566 = vcombine.low %v11550, %v11551
      %v11567 = vcombine.high %v11550, %v11551
      %v11568 = vcombine.low %v11552, %v11553
      %v11569 = vcombine.high %v11552, %v11553
      %v11570 = vcombine.low %v11554, %v11555
      %v11571 = vcombine.high %v11554, %v11555
      %v11572 = vcombine.low %v11556, %v11557
      %v11573 = vcombine.high %v11556, %v11557
      %v11582 = vadd.f32 %v11453, %v11566
      %v11583 = vadd.f32 %v11454, %v11567
      %v11584 = vadd.f32 %v11455, %v11568
      %v11585 = vadd.f32 %v11456, %v11569
      %v11586 = vadd.f32 %v11457, %v11570
      %v11587 = vadd.f32 %v11458, %v11571
      %v11588 = vadd.f32 %v11459, %v11572
      %v11589 = vadd.f32 %v11460, %v11573
      %v11590 = vld [vmem:[#allocation2] sm:$0xff]
      %v11591 = vld [vmem:[#allocation2 + $0x8] sm:$0xff]
      %v11592 = vld [vmem:[#allocation2 + $0x10] sm:$0xff]
      %v11593 = vld [vmem:[#allocation2 + $0x18] sm:$0xff]
      %v11594 = vld [vmem:[#allocation2 + $0x20] sm:$0xff]
      %v11595 = vld [vmem:[#allocation2 + $0x28] sm:$0xff]
      %v11596 = vld [vmem:[#allocation2 + $0x30] sm:$0xff]
      %v11597 = vld [vmem:[#allocation2 + $0x38] sm:$0xff]
      %v11598 = vld [vmem:[#allocation2 + $0x40] sm:$0xff]
      %v11599 = vld [vmem:[#allocation2 + $0x48] sm:$0xff]
      %v11600 = vld [vmem:[#allocation2 + $0x50] sm:$0xff]
      %v11601 = vld [vmem:[#allocation2 + $0x58] sm:$0xff]
      %11602 = vset.pattern.permute.xlu0 7
      %11603 = vperm.xlu0 %11602, %v10607
      %v11604 = vpop.permute.xlu0 %11603
      %11606 = vset.pattern.permute.xlu0 7
      %11607 = vperm.xlu0 %11606, %v10608
      %v11608 = vpop.permute.xlu0 %11607
      %11610 = vset.pattern.permute.xlu0 7
      %11611 = vperm.xlu0 %11610, %v10609
      %v11612 = vpop.permute.xlu0 %11611
      %11614 = vset.pattern.permute.xlu0 7
      %11615 = vperm.xlu0 %11614, %v10610
      %v11616 = vpop.permute.xlu0 %11615
      %v11618 = vmul.f32 %v11590, %v11604
      %v11619 = vmul.f32 %v11591, %v11604
      %v11620 = vmul.f32 %v11592, %v11604
      %v11621 = vmul.f32 %v11593, %v11608
      %v11622 = vmul.f32 %v11594, %v11608
      %v11623 = vmul.f32 %v11595, %v11608
      %v11624 = vmul.f32 %v11596, %v11612
      %v11625 = vmul.f32 %v11597, %v11612
      %v11626 = vmul.f32 %v11598, %v11612
      %v11627 = vmul.f32 %v11599, %v11616
      %v11628 = vmul.f32 %v11600, %v11616
      %v11629 = vmul.f32 %v11601, %v11616
      %v11642 = vcombine.low %v11618, %v11619
      %v11643 = vcombine.high %v11618, %v11619
      %v11644 = vcombine.high %v11620, %v11620
      %v11645 = vcombine.low %v11621, %v11622
      %v11646 = vcombine.high %v11621, %v11622
      %v11647 = vcombine.high %v11623, %v11623
      %v11648 = vcombine.low %v11624, %v11625
      %v11649 = vcombine.high %v11624, %v11625
      %v11650 = vcombine.high %v11626, %v11626
      %v11651 = vcombine.low %v11627, %v11628
      %v11652 = vcombine.high %v11627, %v11628
      %v11653 = vcombine.high %v11629, %v11629
      %11654 = vrot.lane.b32.xlu0 %v11642, 95
      %v11655 = vpop.permute.xlu0 %11654
      %11656 = vrot.lane.b32.xlu0 %v11620, 95
      %v11657 = vpop.permute.xlu0 %11656
      %11658 = vrot.lane.b32.xlu0 %v11643, 95
      %v11659 = vpop.permute.xlu0 %11658
      %11660 = vrot.lane.b32.xlu0 %v11644, 95
      %v11661 = vpop.permute.xlu0 %11660
      %11662 = vrot.lane.b32.xlu0 %v11645, 95
      %v11663 = vpop.permute.xlu0 %11662
      %11664 = vrot.lane.b32.xlu0 %v11623, 95
      %v11665 = vpop.permute.xlu0 %11664
      %11666 = vrot.lane.b32.xlu0 %v11646, 95
      %v11667 = vpop.permute.xlu0 %11666
      %11668 = vrot.lane.b32.xlu0 %v11647, 95
      %v11669 = vpop.permute.xlu0 %11668
      %11670 = vrot.lane.b32.xlu0 %v11648, 95
      %v11671 = vpop.permute.xlu0 %11670
      %11672 = vrot.lane.b32.xlu0 %v11626, 95
      %v11673 = vpop.permute.xlu0 %11672
      %11674 = vrot.lane.b32.xlu0 %v11649, 95
      %v11675 = vpop.permute.xlu0 %11674
      %11676 = vrot.lane.b32.xlu0 %v11650, 95
      %v11677 = vpop.permute.xlu0 %11676
      %11678 = vrot.lane.b32.xlu0 %v11651, 95
      %v11679 = vpop.permute.xlu0 %11678
      %11680 = vrot.lane.b32.xlu0 %v11629, 95
      %v11681 = vpop.permute.xlu0 %11680
      %11682 = vrot.lane.b32.xlu0 %v11652, 95
      %v11683 = vpop.permute.xlu0 %11682
      %11684 = vrot.lane.b32.xlu0 %v11653, 95
      %v11685 = vpop.permute.xlu0 %11684
      %v11686 = vrot.slane %v11655, 4
      %v11687 = vrot.slane %v11657, 4
      %v11688 = vrot.slane %v11659, 4
      %v11689 = vrot.slane %v11661, 4
      %v11690 = vrot.slane %v11663, 4
      %v11691 = vrot.slane %v11665, 4
      %v11692 = vrot.slane %v11667, 4
      %v11693 = vrot.slane %v11669, 4
      %v11694 = vrot.slane %v11671, 4
      %v11695 = vrot.slane %v11673, 4
      %v11696 = vrot.slane %v11675, 4
      %v11697 = vrot.slane %v11677, 4
      %v11698 = vrot.slane %v11679, 4
      %v11699 = vrot.slane %v11681, 4
      %v11700 = vrot.slane %v11683, 4
      %v11701 = vrot.slane %v11685, 4
      %v11702 = vsel %vm10893, %v11686, %v11687
      %vm11703 = vcmask 777216
      %v11704 = vsel %vm11703, %v11655, %v11702
      %v11705 = vsel %vm10893, %v11688, %v11689
      %v11706 = vsel %vm11703, %v11659, %v11705
      %v11707 = vsel %vm10893, %v11690, %v11691
      %v11708 = vsel %vm11703, %v11663, %v11707
      %v11709 = vsel %vm10893, %v11692, %v11693
      %v11710 = vsel %vm11703, %v11667, %v11709
      %v11711 = vsel %vm10893, %v11694, %v11695
      %v11712 = vsel %vm11703, %v11671, %v11711
      %v11713 = vsel %vm10893, %v11696, %v11697
      %v11714 = vsel %vm11703, %v11675, %v11713
      %v11715 = vsel %vm10893, %v11698, %v11699
      %v11716 = vsel %vm11703, %v11679, %v11715
      %v11717 = vsel %vm10893, %v11700, %v11701
      %v11718 = vsel %vm11703, %v11683, %v11717
      %v11727 = vadd.f32 %v11582, %v11704
      %v11728 = vadd.f32 %v11583, %v11706
      %v11729 = vadd.f32 %v11584, %v11708
      %v11730 = vadd.f32 %v11585, %v11710
      %v11731 = vadd.f32 %v11586, %v11712
      %v11732 = vadd.f32 %v11587, %v11714
      %v11733 = vadd.f32 %v11588, %v11716
      %v11734 = vadd.f32 %v11589, %v11718
      %v11735 = vld [vmem:[#allocation2] sm:$0xff]
      %v11736 = vld [vmem:[#allocation2 + $0x8] sm:$0xff]
      %v11737 = vld [vmem:[#allocation2 + $0x10] sm:$0xff]
      %v11738 = vld [vmem:[#allocation2 + $0x18] sm:$0xff]
      %v11739 = vld [vmem:[#allocation2 + $0x20] sm:$0xff]
      %v11740 = vld [vmem:[#allocation2 + $0x28] sm:$0xff]
      %v11741 = vld [vmem:[#allocation2 + $0x30] sm:$0xff]
      %v11742 = vld [vmem:[#allocation2 + $0x38] sm:$0xff]
      %v11743 = vld [vmem:[#allocation2 + $0x40] sm:$0xff]
      %v11744 = vld [vmem:[#allocation2 + $0x48] sm:$0xff]
      %v11745 = vld [vmem:[#allocation2 + $0x50] sm:$0xff]
      %v11746 = vld [vmem:[#allocation2 + $0x58] sm:$0xff]
      %11759 = vrot.lane.b32.xlu0 %v11735, 94
      %v11760 = vpop.permute.xlu0 %11759
      %11761 = vrot.lane.b32.xlu0 %v11736, 94
      %v11762 = vpop.permute.xlu0 %11761
      %11763 = vrot.lane.b32.xlu0 %v11737, 94
      %v11764 = vpop.permute.xlu0 %11763
      %11765 = vrot.lane.b32.xlu0 %v11738, 94
      %v11766 = vpop.permute.xlu0 %11765
      %11767 = vrot.lane.b32.xlu0 %v11739, 94
      %v11768 = vpop.permute.xlu0 %11767
      %11769 = vrot.lane.b32.xlu0 %v11740, 94
      %v11770 = vpop.permute.xlu0 %11769
      %11771 = vrot.lane.b32.xlu0 %v11741, 94
      %v11772 = vpop.permute.xlu0 %11771
      %11773 = vrot.lane.b32.xlu0 %v11742, 94
      %v11774 = vpop.permute.xlu0 %11773
      %11775 = vrot.lane.b32.xlu0 %v11743, 94
      %v11776 = vpop.permute.xlu0 %11775
      %11777 = vrot.lane.b32.xlu0 %v11744, 94
      %v11778 = vpop.permute.xlu0 %11777
      %11779 = vrot.lane.b32.xlu0 %v11745, 94
      %v11780 = vpop.permute.xlu0 %11779
      %11781 = vrot.lane.b32.xlu0 %v11746, 94
      %v11782 = vpop.permute.xlu0 %11781
      %vm11783 = vcmask 769024
      %v11784 = vsel %vm11783, %v11760, %v11762
      %v11785 = vsel %vm11783, %v11762, %v11764
      %v11786 = vsel %vm11783, %v11766, %v11768
      %v11787 = vsel %vm11783, %v11768, %v11770
      %v11788 = vsel %vm11783, %v11772, %v11774
      %v11789 = vsel %vm11783, %v11774, %v11776
      %v11790 = vsel %vm11783, %v11778, %v11780
      %v11791 = vsel %vm11783, %v11780, %v11782
      %v11800 = vsel %vm10939, %v11784, 0.0
      %v11801 = vsel %vm10940, %v11785, 0.0
      %v11802 = vsel %vm10939, %v11786, 0.0
      %v11803 = vsel %vm10940, %v11787, 0.0
      %v11804 = vsel %vm10939, %v11788, 0.0
      %v11805 = vsel %vm10940, %v11789, 0.0
      %v11806 = vsel %vm10939, %v11790, 0.0
      %v11807 = vsel %vm10940, %v11791, 0.0
      %11808 = vset.pattern.permute.xlu0 8
      %11809 = vperm.xlu0 %11808, %v10607
      %v11810 = vpop.permute.xlu0 %11809
      %11812 = vset.pattern.permute.xlu0 8
      %11813 = vperm.xlu0 %11812, %v10608
      %v11814 = vpop.permute.xlu0 %11813
      %11816 = vset.pattern.permute.xlu0 8
      %11817 = vperm.xlu0 %11816, %v10609
      %v11818 = vpop.permute.xlu0 %11817
      %11820 = vset.pattern.permute.xlu0 8
      %11821 = vperm.xlu0 %11820, %v10610
      %v11822 = vpop.permute.xlu0 %11821
      %v11824 = vmul.f32 %v11800, %v11810
      %v11825 = vmul.f32 %v11801, %v11810
      %v11826 = vmul.f32 %v11802, %v11814
      %v11827 = vmul.f32 %v11803, %v11814
      %v11828 = vmul.f32 %v11804, %v11818
      %v11829 = vmul.f32 %v11805, %v11818
      %v11830 = vmul.f32 %v11806, %v11822
      %v11831 = vmul.f32 %v11807, %v11822
      %v11840 = vcombine.low %v11824, %v11825
      %v11841 = vcombine.high %v11824, %v11825
      %v11842 = vcombine.low %v11826, %v11827
      %v11843 = vcombine.high %v11826, %v11827
      %v11844 = vcombine.low %v11828, %v11829
      %v11845 = vcombine.high %v11828, %v11829
      %v11846 = vcombine.low %v11830, %v11831
      %v11847 = vcombine.high %v11830, %v11831
      %v11856 = vadd.f32 %v11727, %v11840
      %v11857 = vadd.f32 %v11728, %v11841
      %v11858 = vadd.f32 %v11729, %v11842
      %v11859 = vadd.f32 %v11730, %v11843
      %v11860 = vadd.f32 %v11731, %v11844
      %v11861 = vadd.f32 %v11732, %v11845
      %v11862 = vadd.f32 %v11733, %v11846
      %v11863 = vadd.f32 %v11734, %v11847
      %v11864 = vld [vmem:[%s5] sm:$0xff]
      %v11865 = vld [vmem:[%s5 + $0x8] sm:$0xff]
      %v11866 = vld [vmem:[%s5 + $0x10] sm:$0xff]
      %v11867 = vld [vmem:[%s5 + $0x18] sm:$0xff]
      %v11868 = vld [vmem:[%s6] sm:$0xff]
      %v11869 = vld [vmem:[%s6 + $0x8] sm:$0xff]
      %v11870 = vld [vmem:[%s6 + $0x10] sm:$0xff]
      %v11871 = vld [vmem:[%s6 + $0x18] sm:$0xff]
      %11873 = vset.pattern.permute.xlu0 0
      %11874 = vperm.xlu0 %11873, %v11868
      %v11875 = vpop.permute.xlu0 %11874
      %11878 = vset.pattern.permute.xlu0 0
      %11879 = vperm.xlu0 %11878, %v11869
      %v11880 = vpop.permute.xlu0 %11879
      %11883 = vset.pattern.permute.xlu0 0
      %11884 = vperm.xlu0 %11883, %v11870
      %v11885 = vpop.permute.xlu0 %11884
      %11888 = vset.pattern.permute.xlu0 0
      %11889 = vperm.xlu0 %11888, %v11871
      %v11890 = vpop.permute.xlu0 %11889
      %v11900 = vcombine.low %v11856, %v11857
      %v11901 = vcombine.high %v11856, %v11857
      %v11902 = vcombine.low %v11858, %v11859
      %v11903 = vcombine.high %v11858, %v11859
      %v11904 = vcombine.low %v11860, %v11861
      %v11905 = vcombine.high %v11860, %v11861
      %v11906 = vcombine.low %v11862, %v11863
      %v11907 = vcombine.high %v11862, %v11863
      %v11917 = vsel %vm343, %v11864, 0
      %v11920 = vsel %vm343, %v11865, 0
      %v11923 = vsel %vm343, %v11866, 0
      %v11926 = vsel %vm343, %v11867, 0
      %11928 = vmatprep.subr.mxu0 0.0
      %11929 = vmatpush1.msra.mxu0 0.0
      %11930 = vmatprep.subr.mxu0 0.0
      %11931 = vmatpush1.msra.mxu0 0.0
      %11932 = vmatprep.subr.mxu0 0.0
      %11933 = vmatpush1.msra.mxu0 0.0
      %11934 = vmatprep.subr.mxu0 0.0
      %11935 = vmatpush1.msra.mxu0 0.0
      %11936 = vmatprep.subr.mxu0 0.0
      %11937 = vmatpush1.msra.mxu0 0.0
      %11938 = vmatprep.subr.mxu0 0.0
      %11939 = vmatpush1.msra.mxu0 0.0
      %11940 = vmatprep.subr.mxu0 0.0
      %11941 = vmatpush1.msra.mxu0 0.0
      %11942 = vmatprep.subr.mxu0 0.0
      %11943 = vmatpush1.msra.mxu0 0.0
      %11944 = vmatprep.subr.mxu0 0.0
      %11945 = vmatpush1.msra.mxu0 0.0
      %11946 = vmatprep.subr.mxu0 0.0
      %11947 = vmatpush1.msra.mxu0 0.0
      %11948 = vmatprep.subr.mxu0 0.0
      %11949 = vmatpush1.msra.mxu0 0.0
      %11950 = vmatprep.subr.mxu0 0.0
      %11951 = vmatpush1.msra.mxu0 0.0
      %11952 = vmatprep.subr.mxu0 %v11907
      %11953 = vmatpush1.msra.mxu0 %v11906
      %11954 = vmatprep.subr.mxu0 %v11905
      %11955 = vmatpush1.msra.mxu0 %v11904
      %11956 = vmatprep.subr.mxu0 %v11903
      %11957 = vmatpush1.msra.mxu0 %v11902
      %11958 = vmatprep.subr.mxu0 %v11901
      %11959 = vmatpush1.msra.mxu0 %v11900
      %11960 = vmatprep.subr.mxu0 0.0
      %11961 = vmatpush2.msra.mxu0 0.0
      %11962 = vmatprep.subr.mxu0 0.0
      %11963 = vmatpush2.msra.mxu0 0.0
      %11964 = vmatprep.subr.mxu0 0.0
      %11965 = vmatpush2.msra.mxu0 0.0
      %11966 = vmatprep.subr.mxu0 0.0
      %11967 = vmatpush2.msra.mxu0 0.0
      %11968 = vmatprep.subr.mxu0 0.0
      %11969 = vmatpush2.msra.mxu0 0.0
      %11970 = vmatprep.subr.mxu0 0.0
      %11971 = vmatpush2.msra.mxu0 0.0
      %11972 = vmatprep.subr.mxu0 0.0
      %11973 = vmatpush2.msra.mxu0 0.0
      %11974 = vmatprep.subr.mxu0 0.0
      %11975 = vmatpush2.msra.mxu0 0.0
      %11976 = vmatprep.subr.mxu0 0.0
      %11977 = vmatpush2.msra.mxu0 0.0
      %11978 = vmatprep.subr.mxu0 0.0
      %11979 = vmatpush2.msra.mxu0 0.0
      %11980 = vmatprep.subr.mxu0 0.0
      %11981 = vmatpush2.msra.mxu0 0.0
      %11982 = vmatprep.subr.mxu0 0.0
      %11983 = vmatpush2.msra.mxu0 0.0
      %11984 = vmatprep.subr.mxu0 0.0
      %11985 = vmatpush2.msra.mxu0 0.0
      %11986 = vmatprep.subr.mxu0 0.0
      %11987 = vmatpush2.msra.mxu0 0.0
      %11988 = vmatprep.subr.mxu0 0.0
      %11989 = vmatpush2.msra.mxu0 0.0
      %11990 = vmatprep.subr.mxu0 0.0
      %11991 = vmatpush2.msra.mxu0 0.0
      %11992 = vmatprep.mubr.f32.mxu0 0.0
      %11993 = vmatmul.mubr.f32.gmra.mxu0 %v11917
      %v11994 = vpop.f32.mrf.mxu0
      %v11995 = vadd.f32 %v11875, %v11994
      %v11996 = vpop.f32.mrf.mxu0
      %v11997 = vadd.f32 %v11875, %v11996
      %11998 = vmatprep.mubr.f32.mxu0 0.0
      %11999 = vmatmul.mubr.f32.gmra.mxu0 %v11920
      %v12000 = vpop.f32.mrf.mxu0
      %v12001 = vadd.f32 %v11880, %v12000
      %v12002 = vpop.f32.mrf.mxu0
      %v12003 = vadd.f32 %v11880, %v12002
      %12004 = vmatprep.mubr.f32.mxu0 0.0
      %12005 = vmatmul.mubr.f32.gmra.mxu0 %v11923
      %v12006 = vpop.f32.mrf.mxu0
      %v12007 = vadd.f32 %v11885, %v12006
      %v12008 = vpop.f32.mrf.mxu0
      %v12009 = vadd.f32 %v11885, %v12008
      %12010 = vmatprep.mubr.f32.mxu0 0.0
      %12011 = vmatmul.mubr.f32.gmra.mxu0 %v11926
      %v12012 = vpop.f32.mrf.mxu0
      %v12013 = vadd.f32 %v11890, %v12012
      %v12014 = vpop.f32.mrf.mxu0
      %v12015 = vadd.f32 %v11890, %v12014
      %12016 = vdwg.mxu0
      %12017 = vst [vmem:[%s278] sm:$0xff] %v11995
      %12018 = vst [vmem:[%s278 + $0x8] sm:$0xff] %v11997
      %12019 = vst [vmem:[%s278 + $0x10] sm:$0xff] %v12001
      %12020 = vst [vmem:[%s278 + $0x18] sm:$0xff] %v12003
      %12021 = vst [vmem:[%s278 + $0x20] sm:$0xff] %v12007
      %12022 = vst [vmem:[%s278 + $0x28] sm:$0xff] %v12009
      %12023 = vst [vmem:[%s278 + $0x30] sm:$0xff] %v12013
      %12024 = vst [vmem:[%s278 + $0x38] sm:$0xff] %v12015
      %p12025 = scmp.lt.s32.totalorder %s18, 1
      %s12026 = scalar_select %p12025, %s18, 1
      %s12027 = smul.addr %s12026, 8
      %s12028 = smul.addr %s12027, 8
      %s12029 = scalar_lea.vmem %s7, %s12028
      // Predicated region
      $region49: #{a_call__.1} parent=47 // pred_check
        %p12030 = pneg %p188
      $region50: #{a_call__.1} parent=47 // pred_check_branch
        %12032 = sbr.rel (%p12030) target = $region52
      $region51: #{a_call__.1} parent=47 // pred_region
        _
      $region52: #{a_call__.1} parent=47 // pred_fallthru
        _
    $region48: #{a_call__.1} parent=5 // pred_fallthru
      _
    %p12033 = scmp.le.s32.totalorder 2, %s13
    // Predicated region
    $region53: #{a_call__.1} parent=5 // pred_check
      %p12034 = pneg %p12033
    $region54: #{a_call__.1} parent=5 // pred_check_branch
      %12036 = sbr.rel (%p12034) target = $region56
    $region55: #{a_call__.1} parent=5 // pred_region
      %s12037 = ssub.s32 %s13, 2
      // Predicated region
      $region57: #{a_call__.1} parent=55 // pred_check
        %p12038 = pneg %p194
      $region58: #{a_call__.1} parent=55 // pred_check_branch
        %12040 = sbr.rel (%p12038) target = $region60
      $region59: #{a_call__.1} parent=55 // pred_region
        %p12041 = scmp.lt.s32.totalorder %s19, 1
        %s12042 = scalar_select %p12041, %s19, 1
        %s12043 = smul.addr %s12042, 8
        %s12044 = smul.addr %s12043, 8
        %s12045 = scalar_lea.vmem %s7, %s12044
      $region60: #{a_call__.1} parent=55 // pred_fallthru
        _
    $region56: #{a_call__.1} parent=5 // pred_fallthru
      _
  $region6: #{a_call__.1} parent=0 // loop_footer
    %s17 = sadd.s32 1, %s13
  $region7: #{a_call__.1} parent=0 // loop_footer_branch
    %12 = sbr.rel target = $region3
  $region8: #{a_call__.1} parent=0 // loop_exit
    _

</llo_original>
